<compile_context>
chip_gen: v6e
topology: v6e:2x2x1
jax: 0.10.0
libtpu: 0.0.40
codegen_flags: <defaults>
</compile_context>

<pallas_src>
import functools

import jax
import jax.numpy as jnp
from jax import lax
from jax.experimental import pallas as pl
from jax.experimental.pallas import tpu as pltpu

LEAKY_SLOPE = 0.01  # F.leaky_relu default
ATOM_SIZE = 51


def _leaky(v):
    return jnp.where(v > 0, v, LEAKY_SLOPE * v)


def _vmem():
    return pl.BlockSpec(memory_space=pltpu.MemorySpace.VMEM)


# ----------------------------------------------------------------------------
# Fused forward kernel
# ----------------------------------------------------------------------------
def _conv3x3(x_act, w_ref, b_ref, rows_out, width):
    """3x3 valid conv on the flat padded-stride layout via im2col + one matmul.

    x_act:  (rows_in, Cin) activation (flat index = b*H*W + y*width + x),
            bf16 for all layers except conv1 (f32 input, cast after concat).
    w_ref:  (9*Cin, Cout) bf16 weights, row = tap_k*Cin + cin, tap_k = dy*3+dx
    b_ref:  (1, Cout) f32
    """
    cols = [x_act[dy * width + dx: dy * width + dx + rows_out, :]
            for dy in range(3) for dx in range(3)]
    lhs = jnp.concatenate(cols, axis=-1).astype(jnp.bfloat16)   # (rows_out, 9*Cin)
    y = jnp.dot(lhs, w_ref[...], preferred_element_type=jnp.float32) + b_ref[...]
    return _leaky(y)


def _dueling_head(pooled, w1_ref, b1_ref, w2_ref, b2_ref, wAV_ref, bAV_ref,
                  G_ref, Sacc_ref, Sb_ref, Ssup_ref):
    """fc1 -> noisy fc2 -> fused A|V projection -> matmul-ized dueling softmax -> Q.

    G:    ((A+1)*atoms, A*atoms) = [[I - M], [T]]  (logit combination)
    Sacc: (A*atoms, A)   per-action ones          (softmax denominators)
    Sb:   (A, A*atoms)   per-action ones          (denominator broadcast)
    Ssup: (A*atoms, A)   per-action support       (support-weighted sum)
    """
    h = _leaky(jnp.dot(pooled.astype(jnp.bfloat16), w1_ref[...],
                       preferred_element_type=jnp.float32) + b1_ref[...])
    h = _leaky(jnp.dot(h.astype(jnp.bfloat16), w2_ref[...],
                       preferred_element_type=jnp.float32) + b2_ref[...])
    # one matmul for both branches: (B, H) @ (H, (A+1)*atoms) = [xA | xV]
    xAV = jnp.dot(h.astype(jnp.bfloat16), wAV_ref[...],
                  preferred_element_type=jnp.float32) + bAV_ref[...]
    # logits = xA + tile(xV) - tile(mean_actions(xA)), via one small f32 matmul
    logits = jnp.dot(xAV, G_ref[...], preferred_element_type=jnp.float32)  # (B, A*atoms)
    m = jnp.max(logits, axis=-1, keepdims=True)          # global row max (softmax-invariant)
    e = jnp.exp(logits - m)
    s = jnp.dot(e, Sacc_ref[...], preferred_element_type=jnp.float32)      # (B, A)
    rb = jnp.dot(1.0 / s, Sb_ref[...], preferred_element_type=jnp.float32)  # (B, A*atoms)
    dist = jnp.maximum(e * rb, 0.001)                    # clamp(min=0.001), no renorm
    return jnp.dot(dist, Ssup_ref[...], preferred_element_type=jnp.float32)  # (B, A)


def fused_forward_kernel(x_ref,
                         w1_ref, b1_ref, w2_ref, b2_ref, w3_ref, b3_ref,
                         w4_ref, b4_ref,
                         p1_ref, p2_ref,
                         h1w1_ref, h1b1_ref, h1w2_ref, h1b2_ref,
                         h1wAV_ref, h1bAV_ref, h1G_ref, h1Sacc_ref, h1Sb_ref, h1Ssup_ref,
                         h2w1_ref, h2b1_ref, h2w2_ref, h2b2_ref,
                         h2wAV_ref, h2bAV_ref, h2G_ref, h2Sacc_ref, h2Sb_ref, h2Ssup_ref,
                         q_ref,
                         *, width, r1, r2, r3, r4, inv_area1, inv_area2):
    # ---- conv stack: im2col + single bf16 MXU matmul per layer, one cast each ----
    a1 = _conv3x3(x_ref[...], w1_ref, b1_ref, r1, width).astype(jnp.bfloat16)   # (r1, 16)
    a2 = _conv3x3(a1, w2_ref, b2_ref, r2, width).astype(jnp.bfloat16)           # (r2, 32)
    a3 = _conv3x3(a2, w3_ref, b3_ref, r3, width).astype(jnp.bfloat16)           # (r3, 96)
    # a3 channel order: [conv3_2 (64) | conv3_1 (32)] -> conv4 reads the prefix
    a4 = _conv3x3(a3[:, :64], w4_ref, b4_ref, r4, width).astype(jnp.bfloat16)   # (r4, 64)

    # ---- spatial means: bf16 0/1 selection matmuls, scale applied in f32 ----
    pooled1 = jnp.dot(p1_ref[...], a3, preferred_element_type=jnp.float32) * inv_area1  # (B, 96)
    pooled2 = jnp.dot(p2_ref[...], a4, preferred_element_type=jnp.float32) * inv_area2  # (B, 64)

    # ---- dueling heads (head1 fc1 weight zero-padded to eat the 96-ch pool) ----
    q1 = _dueling_head(pooled1, h1w1_ref, h1b1_ref, h1w2_ref, h1b2_ref,
                       h1wAV_ref, h1bAV_ref, h1G_ref, h1Sacc_ref, h1Sb_ref, h1Ssup_ref)
    q2 = _dueling_head(pooled2, h2w1_ref, h2b1_ref, h2w2_ref, h2b2_ref,
                       h2wAV_ref, h2bAV_ref, h2G_ref, h2Sacc_ref, h2Sb_ref, h2Ssup_ref)

    # ---- single lane-contiguous output slab ----
    q_ref[...] = jnp.concatenate([q1, q2], axis=1)        # (B, 2 + 5)


# ----------------------------------------------------------------------------
# Wrapper
# ----------------------------------------------------------------------------
def _make_pool_select(batch, H, W, hv, wv, rows):
    """(batch, rows) bf16 0/1 matrix selecting the valid hv x wv region per batch."""
    p = jnp.arange(rows)
    b = p // (H * W)
    y = (p % (H * W)) // W
    x = p % W
    valid = (y < hv) & (x < wv)
    sel = (b[None, :] == jnp.arange(batch)[:, None]) & valid[None, :]
    return sel.astype(jnp.bfloat16)


@jax.jit
def deep_q_proj_forward(x_nchw, params):
    B, C, H, W = x_nchw.shape
    assert C == 1
    # NCHW with C==1 is already (b, y, x) order -> flat (B*H*W, 1), no transpose.
    x_flat = x_nchw.reshape(B * H * W, 1).astype(jnp.float32)

    shift = 2 * W + 2
    r0 = B * H * W
    r1, r2, r3, r4 = r0 - shift, r0 - 2 * shift, r0 - 3 * shift, r0 - 4 * shift

    pool1 = _make_pool_select(B, H, W, H - 6, W - 6, r3)   # conv3 output: (H-6)x(W-6)
    pool2 = _make_pool_select(B, H, W, H - 8, W - 8, r4)   # conv4 output: (H-8)x(W-8)

    kern = functools.partial(
        fused_forward_kernel, width=W, r1=r1, r2=r2, r3=r3, r4=r4,
        inv_area1=1.0 / float((H - 6) * (W - 6)),
        inv_area2=1.0 / float((H - 8) * (W - 8)))

    h1, h2 = params["head1"], params["head2"]
    q_all = pl.pallas_call(
        kern,
        out_shape=jax.ShapeDtypeStruct((B, 7), jnp.float32),
        in_specs=[_vmem()] * 31,
        out_specs=_vmem(),
    )(x_flat,
      params["w1"], params["b1"], params["w2"], params["b2"],
      params["w3"], params["b3"], params["w4"], params["b4"],
      pool1, pool2,
      h1["w1"], h1["b1"], h1["w2"], h1["b2"],
      h1["wAV"], h1["bAV"], h1["G"], h1["Sacc"], h1["Sb"], h1["Ssup"],
      h2["w1"], h2["b1"], h2["w2"], h2["b2"],
      h2["wAV"], h2["bAV"], h2["G"], h2["Sacc"], h2["Sb"], h2["Ssup"])
    return q_all[:, :2], q_all[:, 2:7]


# ----------------------------------------------------------------------------
# Parameters: raw (PyTorch-layout-equivalent, f32) + packed (kernel form)
# ----------------------------------------------------------------------------
def _scale_noise(key, size):
    x = jax.random.normal(key, (size,), jnp.float32)
    return jnp.sign(x) * jnp.sqrt(jnp.abs(x))


def init_raw_params(key):
    keys = iter(jax.random.split(key, 64))

    def conv_params(cin, cout):
        w = jax.random.normal(next(keys), (3, 3, cin, cout), jnp.float32) / jnp.sqrt(9.0 * cin)
        b = jax.random.normal(next(keys), (1, cout), jnp.float32) * 0.01
        return w, b                              # HWIO

    def linear_params(fin, fout):
        w = jax.random.normal(next(keys), (fin, fout), jnp.float32) / jnp.sqrt(float(fin))
        b = jax.random.normal(next(keys), (1, fout), jnp.float32) * 0.01
        return w, b

    def noisy_params(fin, fout, std_init=0.5):
        mu_range = 1.0 / jnp.sqrt(float(fin))
        w_mu = jax.random.uniform(next(keys), (fin, fout), jnp.float32, -mu_range, mu_range)
        b_mu = jax.random.uniform(next(keys), (1, fout), jnp.float32, -mu_range, mu_range)
        w_sig = jnp.full((fin, fout), std_init / jnp.sqrt(float(fin)), jnp.float32)
        b_sig = jnp.full((1, fout), std_init / jnp.sqrt(float(fout)), jnp.float32)
        eps_in = _scale_noise(next(keys), fin)
        eps_out = _scale_noise(next(keys), fout)
        w_eps = jnp.outer(eps_in, eps_out)
        b_eps = eps_out[None, :]
        return w_mu + w_sig * w_eps, b_mu + b_sig * b_eps   # effective noisy weights

    raw = {}
    raw["conv1"] = conv_params(1, 16)
    raw["conv2"] = conv_params(16, 32)
    raw["conv3_1"] = conv_params(32, 32)
    raw["conv3_2"] = conv_params(32, 64)
    raw["conv4_2"] = conv_params(64, 64)

    def make_head(fin, hid, n_actions):
        w1, b1 = linear_params(fin, hid)
        w2, b2 = noisy_params(hid, hid)
        wA, bA = noisy_params(hid, n_actions * ATOM_SIZE)
        wV, bV = noisy_params(hid, ATOM_SIZE)
        return dict(w1=w1, b1=b1, w2=w2, b2=b2, wA=wA, bA=bA, wV=wV, bV=bV)

    raw["head1"] = make_head(32, 64, 2)     # fc1_1 / fc2_1 / fc2_1A / fc2_1V
    raw["head2"] = make_head(64, 128, 5)    # fc1_2 / fc2_2 / fc2_2A / fc2_2V
    return raw


def _head_matrices(n_actions, atoms, support):
    """Precomputed f32 matrices that matmul-ize the dueling combination/softmax."""
    sup = jnp.asarray(support, jnp.float32).reshape(-1)
    AA = n_actions * atoms
    i = jnp.arange(AA)
    act = i // atoms
    atom = i % atoms
    same_atom = (atom[:, None] == atom[None, :]).astype(jnp.float32)            # (AA, AA)
    ImM = jnp.eye(AA, dtype=jnp.float32) - same_atom / float(n_actions)         # I - mean
    T = (jnp.arange(atoms)[:, None] == atom[None, :]).astype(jnp.float32)       # (atoms, AA)
    G = jnp.concatenate([ImM, T], axis=0)                                       # ((A+1)*atoms, AA)
    sel = (act[:, None] == jnp.arange(n_actions)[None, :]).astype(jnp.float32)  # (AA, A)
    Ssup = sel * sup[atom][:, None]                                             # (AA, A)
    return G, sel, sel.T, Ssup


def pack_params(raw, support1, support2, atoms=ATOM_SIZE):
    """Fuse / reorder / zero-pad / bf16-cast raw params into the kernel's layout."""
    bf = lambda a: a.astype(jnp.bfloat16)

    def taps(w):  # (3,3,Ci,Co) HWIO -> (9*Ci, Co), row = tap_k*Ci + ci
        return w.reshape(9, w.shape[2], w.shape[3]).reshape(9 * w.shape[2], w.shape[3])

    p = {}
    p["w1"], p["b1"] = bf(taps(raw["conv1"][0])), raw["conv1"][1]
    p["w2"], p["b2"] = bf(taps(raw["conv2"][0])), raw["conv2"][1]
    w31, b31 = raw["conv3_1"]
    w32, b32 = raw["conv3_2"]
    # output channel order [conv3_2 (64) | conv3_1 (32)] -> conv4 uses the prefix
    p["w3"] = bf(jnp.concatenate([taps(w32), taps(w31)], axis=-1))   # (288, 96)
    p["b3"] = jnp.concatenate([b32, b31], axis=-1)                   # (1, 96)
    p["w4"], p["b4"] = bf(taps(raw["conv4_2"][0])), raw["conv4_2"][1]  # (576, 64)

    def pack_head(h, n_actions, support, pad_before):
        w1 = h["w1"]
        if pad_before:   # channels [0, pad_before) of the pooled input are ignored
            w1 = jnp.concatenate(
                [jnp.zeros((pad_before, w1.shape[1]), jnp.float32), w1], axis=0)
        G, Sacc, Sb, Ssup = _head_matrices(n_actions, atoms, support)
        return dict(w1=bf(w1), b1=h["b1"], w2=bf(h["w2"]), b2=h["b2"],
                    wAV=bf(jnp.concatenate([h["wA"], h["wV"]], axis=-1)),
                    bAV=jnp.concatenate([h["bA"], h["bV"]], axis=-1),
                    G=G, Sacc=Sacc, Sb=Sb, Ssup=Ssup)

    p["head1"] = pack_head(raw["head1"], 2, support1, pad_before=64)  # reads conv3_1 chans
    p["head2"] = pack_head(raw["head2"], 5, support2, pad_before=0)
    return p


# ----------------------------------------------------------------------------
# Pure-JAX reference (same bf16 operand rounding points) for a sanity check
# ----------------------------------------------------------------------------
def reference_forward(x_nchw, raw, support1, support2):
    c = lambda a: a.astype(jnp.bfloat16)

    def conv(x, wb):
        w, b = wb
        y = lax.conv_general_dilated(c(x), c(w), (1, 1), "VALID",
                                     dimension_numbers=("NHWC", "HWIO", "NHWC"),
                                     preferred_element_type=jnp.float32)
        return _leaky(y + b.reshape(1, 1, 1, -1))

    x = jnp.transpose(x_nchw, (0, 2, 3, 1)).astype(jnp.float32)
    a1 = conv(x, raw["conv1"])
    a2 = conv(a1, raw["conv2"])
    a31 = conv(a2, raw["conv3_1"])
    a32 = conv(a2, raw["conv3_2"])
    a4 = conv(a32, raw["conv4_2"])
    p1 = jnp.mean(a31, axis=(1, 2))
    p2 = jnp.mean(a4, axis=(1, 2))

    def head(pooled, h, n_actions, sup):
        hh = _leaky(jnp.dot(c(pooled), c(h["w1"]), preferred_element_type=jnp.float32) + h["b1"])
        hh = _leaky(jnp.dot(c(hh), c(h["w2"]), preferred_element_type=jnp.float32) + h["b2"])
        xA = jnp.dot(c(hh), c(h["wA"]), preferred_element_type=jnp.float32) + h["bA"]
        xV = jnp.dot(c(hh), c(h["wV"]), preferred_element_type=jnp.float32) + h["bV"]
        xA = xA.reshape(-1, n_actions, ATOM_SIZE)
        xV = xV.reshape(-1, 1, ATOM_SIZE)
        lg = xA + xV - jnp.mean(xA, axis=1, keepdims=True)
        d = jnp.maximum(jax.nn.softmax(lg, axis=-1), 0.001)
        return jnp.sum(d * sup.reshape(1, 1, -1), axis=-1)

    return head(p1, raw["head1"], 2, support1), head(p2, raw["head2"], 5, support2)


if __name__ == "__main__":
    key = jax.random.PRNGKey(0)
    k_x, k_p = jax.random.split(key)

    B, C, H, W = 2, 1, 16, 16
    x = jax.random.normal(k_x, (B, C, H, W), jnp.float32)   # PyTorch-style NCHW input

    raw = init_raw_params(k_p)
    support1 = jnp.linspace(0.0, 10.0, ATOM_SIZE, dtype=jnp.float32)[None, :]   # (1, 51)
    support2 = jnp.linspace(-5.0, 5.0, ATOM_SIZE, dtype=jnp.float32)[None, :]   # (1, 51)
    params = pack_params(raw, support1, support2)

    q1, q2 = deep_q_proj_forward(x, params)
    q1 = jax.block_until_ready(q1)
    q2 = jax.block_until_ready(q2)

    assert q1.shape == (B, 2) and q2.shape == (B, 5)
    assert bool(jnp.all(jnp.isfinite(q1))) and bool(jnp.all(jnp.isfinite(q2)))

    ref1, ref2 = reference_forward(x, raw, support1, support2)
    assert bool(jnp.allclose(q1, ref1, atol=3e-2, rtol=3e-2))
    assert bool(jnp.allclose(q2, ref2, atol=3e-2, rtol=3e-2))
    print("KERNEL_OK")
</pallas_src>

<mosaic_0001>
module attributes {stable_mosaic.version = 11 : i64} {
  func.func @fused_forward_kernel(%arg0: memref<512x1xf32, #tpu.memory_space<vmem>>, %arg1: memref<9x16xbf16, #tpu.memory_space<vmem>>, %arg2: memref<1x16xf32, #tpu.memory_space<vmem>>, %arg3: memref<144x32xbf16, #tpu.memory_space<vmem>>, %arg4: memref<1x32xf32, #tpu.memory_space<vmem>>, %arg5: memref<288x96xbf16, #tpu.memory_space<vmem>>, %arg6: memref<1x96xf32, #tpu.memory_space<vmem>>, %arg7: memref<576x64xbf16, #tpu.memory_space<vmem>>, %arg8: memref<1x64xf32, #tpu.memory_space<vmem>>, %arg9: memref<2x410xbf16, #tpu.memory_space<vmem>>, %arg10: memref<2x376xbf16, #tpu.memory_space<vmem>>, %arg11: memref<96x64xbf16, #tpu.memory_space<vmem>>, %arg12: memref<1x64xf32, #tpu.memory_space<vmem>>, %arg13: memref<64x64xbf16, #tpu.memory_space<vmem>>, %arg14: memref<1x64xf32, #tpu.memory_space<vmem>>, %arg15: memref<64x153xbf16, #tpu.memory_space<vmem>>, %arg16: memref<1x153xf32, #tpu.memory_space<vmem>>, %arg17: memref<153x102xf32, #tpu.memory_space<vmem>>, %arg18: memref<102x2xf32, #tpu.memory_space<vmem>>, %arg19: memref<2x102xf32, #tpu.memory_space<vmem>>, %arg20: memref<102x2xf32, #tpu.memory_space<vmem>>, %arg21: memref<64x128xbf16, #tpu.memory_space<vmem>>, %arg22: memref<1x128xf32, #tpu.memory_space<vmem>>, %arg23: memref<128x128xbf16, #tpu.memory_space<vmem>>, %arg24: memref<1x128xf32, #tpu.memory_space<vmem>>, %arg25: memref<128x306xbf16, #tpu.memory_space<vmem>>, %arg26: memref<1x306xf32, #tpu.memory_space<vmem>>, %arg27: memref<306x255xf32, #tpu.memory_space<vmem>>, %arg28: memref<255x5xf32, #tpu.memory_space<vmem>>, %arg29: memref<5x255xf32, #tpu.memory_space<vmem>>, %arg30: memref<255x5xf32, #tpu.memory_space<vmem>>, %arg31: memref<2x7xf32, #tpu.memory_space<vmem>>) attributes {dimension_semantics = [], scalar_prefetch = 0 : i64, scratch_operands = 0 : i64, tpu.core_type = #tpu.core_type<tc>} {
    %c0 = arith.constant 0 : index
    %c0_0 = arith.constant 0 : index
    %0 = vector.load %arg0[%c0, %c0_0] : memref<512x1xf32, #tpu.memory_space<vmem>>, vector<512x1xf32>
    %1 = vector.extract_strided_slice %0 {offsets = [0, 0], sizes = [478, 1], strides = [1, 1]} : vector<512x1xf32> to vector<478x1xf32>
    %2 = vector.extract_strided_slice %0 {offsets = [1, 0], sizes = [478, 1], strides = [1, 1]} : vector<512x1xf32> to vector<478x1xf32>
    %3 = vector.extract_strided_slice %0 {offsets = [2, 0], sizes = [478, 1], strides = [1, 1]} : vector<512x1xf32> to vector<478x1xf32>
    %4 = vector.extract_strided_slice %0 {offsets = [16, 0], sizes = [478, 1], strides = [1, 1]} : vector<512x1xf32> to vector<478x1xf32>
    %5 = vector.extract_strided_slice %0 {offsets = [17, 0], sizes = [478, 1], strides = [1, 1]} : vector<512x1xf32> to vector<478x1xf32>
    %6 = vector.extract_strided_slice %0 {offsets = [18, 0], sizes = [478, 1], strides = [1, 1]} : vector<512x1xf32> to vector<478x1xf32>
    %7 = vector.extract_strided_slice %0 {offsets = [32, 0], sizes = [478, 1], strides = [1, 1]} : vector<512x1xf32> to vector<478x1xf32>
    %8 = vector.extract_strided_slice %0 {offsets = [33, 0], sizes = [478, 1], strides = [1, 1]} : vector<512x1xf32> to vector<478x1xf32>
    %9 = vector.extract_strided_slice %0 {offsets = [34, 0], sizes = [478, 1], strides = [1, 1]} : vector<512x1xf32> to vector<478x1xf32>
    %10 = tpu.concatenate %1, %2, %3, %4, %5, %6, %7, %8, %9 in 1 : vector<478x1xf32>, vector<478x1xf32>, vector<478x1xf32>, vector<478x1xf32>, vector<478x1xf32>, vector<478x1xf32>, vector<478x1xf32>, vector<478x1xf32>, vector<478x1xf32> -> vector<478x9xf32>
    %11 = arith.truncf %10 : vector<478x9xf32> to vector<478x9xbf16>
    %c0_1 = arith.constant 0 : index
    %c0_2 = arith.constant 0 : index
    %12 = vector.load %arg1[%c0_1, %c0_2] : memref<9x16xbf16, #tpu.memory_space<vmem>>, vector<9x16xbf16>
    %cst = arith.constant dense<0.000000e+00> : vector<478x16xf32>
    %13 = tpu.matmul %11, %12, %cst {dimension_numbers = #tpu.dot_dimension_numbers<[1], [0], [0], [1], [0, 0, 1, 1], [], []>} : vector<478x9xbf16>, vector<9x16xbf16>, vector<478x16xf32> -> vector<478x16xf32>
    %c0_3 = arith.constant 0 : index
    %c0_4 = arith.constant 0 : index
    %14 = vector.load %arg2[%c0_3, %c0_4] : memref<1x16xf32, #tpu.memory_space<vmem>>, vector<1x16xf32>
    %15 = vector.broadcast %14 : vector<1x16xf32> to vector<478x16xf32>
    %16 = arith.addf %13, %15 : vector<478x16xf32>
    %cst_5 = arith.constant 0.000000e+00 : f32
    %17 = vector.broadcast %cst_5 : f32 to vector<478x16xf32>
    %18 = arith.cmpf ogt, %16, %17 : vector<478x16xf32>
    %cst_6 = arith.constant 0.00999999977 : f32
    %19 = vector.broadcast %cst_6 : f32 to vector<478x16xf32>
    %20 = arith.mulf %19, %16 : vector<478x16xf32>
    %21 = arith.select %18, %16, %20 : vector<478x16xi1>, vector<478x16xf32>
    %22 = arith.truncf %21 : vector<478x16xf32> to vector<478x16xbf16>
    %23 = vector.extract_strided_slice %22 {offsets = [0, 0], sizes = [444, 16], strides = [1, 1]} : vector<478x16xbf16> to vector<444x16xbf16>
    %24 = vector.extract_strided_slice %22 {offsets = [1, 0], sizes = [444, 16], strides = [1, 1]} : vector<478x16xbf16> to vector<444x16xbf16>
    %25 = vector.extract_strided_slice %22 {offsets = [2, 0], sizes = [444, 16], strides = [1, 1]} : vector<478x16xbf16> to vector<444x16xbf16>
    %26 = vector.extract_strided_slice %22 {offsets = [16, 0], sizes = [444, 16], strides = [1, 1]} : vector<478x16xbf16> to vector<444x16xbf16>
    %27 = vector.extract_strided_slice %22 {offsets = [17, 0], sizes = [444, 16], strides = [1, 1]} : vector<478x16xbf16> to vector<444x16xbf16>
    %28 = vector.extract_strided_slice %22 {offsets = [18, 0], sizes = [444, 16], strides = [1, 1]} : vector<478x16xbf16> to vector<444x16xbf16>
    %29 = vector.extract_strided_slice %22 {offsets = [32, 0], sizes = [444, 16], strides = [1, 1]} : vector<478x16xbf16> to vector<444x16xbf16>
    %30 = vector.extract_strided_slice %22 {offsets = [33, 0], sizes = [444, 16], strides = [1, 1]} : vector<478x16xbf16> to vector<444x16xbf16>
    %31 = vector.extract_strided_slice %22 {offsets = [34, 0], sizes = [444, 16], strides = [1, 1]} : vector<478x16xbf16> to vector<444x16xbf16>
    %32 = tpu.concatenate %23, %24, %25, %26, %27, %28, %29, %30, %31 in 1 : vector<444x16xbf16>, vector<444x16xbf16>, vector<444x16xbf16>, vector<444x16xbf16>, vector<444x16xbf16>, vector<444x16xbf16>, vector<444x16xbf16>, vector<444x16xbf16>, vector<444x16xbf16> -> vector<444x144xbf16>
    %c0_7 = arith.constant 0 : index
    %c0_8 = arith.constant 0 : index
    %33 = vector.load %arg3[%c0_7, %c0_8] : memref<144x32xbf16, #tpu.memory_space<vmem>>, vector<144x32xbf16>
    %cst_9 = arith.constant dense<0.000000e+00> : vector<444x32xf32>
    %34 = tpu.matmul %32, %33, %cst_9 {dimension_numbers = #tpu.dot_dimension_numbers<[1], [0], [0], [1], [0, 0, 1, 1], [], []>} : vector<444x144xbf16>, vector<144x32xbf16>, vector<444x32xf32> -> vector<444x32xf32>
    %c0_10 = arith.constant 0 : index
    %c0_11 = arith.constant 0 : index
    %35 = vector.load %arg4[%c0_10, %c0_11] : memref<1x32xf32, #tpu.memory_space<vmem>>, vector<1x32xf32>
    %36 = vector.broadcast %35 : vector<1x32xf32> to vector<444x32xf32>
    %37 = arith.addf %34, %36 : vector<444x32xf32>
    %cst_12 = arith.constant 0.000000e+00 : f32
    %38 = vector.broadcast %cst_12 : f32 to vector<444x32xf32>
    %39 = arith.cmpf ogt, %37, %38 : vector<444x32xf32>
    %cst_13 = arith.constant 0.00999999977 : f32
    %40 = vector.broadcast %cst_13 : f32 to vector<444x32xf32>
    %41 = arith.mulf %40, %37 : vector<444x32xf32>
    %42 = arith.select %39, %37, %41 : vector<444x32xi1>, vector<444x32xf32>
    %43 = arith.truncf %42 : vector<444x32xf32> to vector<444x32xbf16>
    %44 = vector.extract_strided_slice %43 {offsets = [0, 0], sizes = [410, 32], strides = [1, 1]} : vector<444x32xbf16> to vector<410x32xbf16>
    %45 = vector.extract_strided_slice %43 {offsets = [1, 0], sizes = [410, 32], strides = [1, 1]} : vector<444x32xbf16> to vector<410x32xbf16>
    %46 = vector.extract_strided_slice %43 {offsets = [2, 0], sizes = [410, 32], strides = [1, 1]} : vector<444x32xbf16> to vector<410x32xbf16>
    %47 = vector.extract_strided_slice %43 {offsets = [16, 0], sizes = [410, 32], strides = [1, 1]} : vector<444x32xbf16> to vector<410x32xbf16>
    %48 = vector.extract_strided_slice %43 {offsets = [17, 0], sizes = [410, 32], strides = [1, 1]} : vector<444x32xbf16> to vector<410x32xbf16>
    %49 = vector.extract_strided_slice %43 {offsets = [18, 0], sizes = [410, 32], strides = [1, 1]} : vector<444x32xbf16> to vector<410x32xbf16>
    %50 = vector.extract_strided_slice %43 {offsets = [32, 0], sizes = [410, 32], strides = [1, 1]} : vector<444x32xbf16> to vector<410x32xbf16>
    %51 = vector.extract_strided_slice %43 {offsets = [33, 0], sizes = [410, 32], strides = [1, 1]} : vector<444x32xbf16> to vector<410x32xbf16>
    %52 = vector.extract_strided_slice %43 {offsets = [34, 0], sizes = [410, 32], strides = [1, 1]} : vector<444x32xbf16> to vector<410x32xbf16>
    %53 = tpu.concatenate %44, %45, %46, %47, %48, %49, %50, %51, %52 in 1 : vector<410x32xbf16>, vector<410x32xbf16>, vector<410x32xbf16>, vector<410x32xbf16>, vector<410x32xbf16>, vector<410x32xbf16>, vector<410x32xbf16>, vector<410x32xbf16>, vector<410x32xbf16> -> vector<410x288xbf16>
    %c0_14 = arith.constant 0 : index
    %c0_15 = arith.constant 0 : index
    %54 = vector.load %arg5[%c0_14, %c0_15] : memref<288x96xbf16, #tpu.memory_space<vmem>>, vector<288x96xbf16>
    %cst_16 = arith.constant dense<0.000000e+00> : vector<410x96xf32>
    %55 = tpu.matmul %53, %54, %cst_16 {dimension_numbers = #tpu.dot_dimension_numbers<[1], [0], [0], [1], [0, 0, 1, 1], [], []>} : vector<410x288xbf16>, vector<288x96xbf16>, vector<410x96xf32> -> vector<410x96xf32>
    %c0_17 = arith.constant 0 : index
    %c0_18 = arith.constant 0 : index
    %56 = vector.load %arg6[%c0_17, %c0_18] : memref<1x96xf32, #tpu.memory_space<vmem>>, vector<1x96xf32>
    %57 = vector.broadcast %56 : vector<1x96xf32> to vector<410x96xf32>
    %58 = arith.addf %55, %57 : vector<410x96xf32>
    %cst_19 = arith.constant 0.000000e+00 : f32
    %59 = vector.broadcast %cst_19 : f32 to vector<410x96xf32>
    %60 = arith.cmpf ogt, %58, %59 : vector<410x96xf32>
    %cst_20 = arith.constant 0.00999999977 : f32
    %61 = vector.broadcast %cst_20 : f32 to vector<410x96xf32>
    %62 = arith.mulf %61, %58 : vector<410x96xf32>
    %63 = arith.select %60, %58, %62 : vector<410x96xi1>, vector<410x96xf32>
    %64 = arith.truncf %63 : vector<410x96xf32> to vector<410x96xbf16>
    %65 = vector.extract_strided_slice %64 {offsets = [0, 0], sizes = [410, 64], strides = [1, 1]} : vector<410x96xbf16> to vector<410x64xbf16>
    %66 = vector.extract_strided_slice %65 {offsets = [0, 0], sizes = [376, 64], strides = [1, 1]} : vector<410x64xbf16> to vector<376x64xbf16>
    %67 = vector.extract_strided_slice %65 {offsets = [1, 0], sizes = [376, 64], strides = [1, 1]} : vector<410x64xbf16> to vector<376x64xbf16>
    %68 = vector.extract_strided_slice %65 {offsets = [2, 0], sizes = [376, 64], strides = [1, 1]} : vector<410x64xbf16> to vector<376x64xbf16>
    %69 = vector.extract_strided_slice %65 {offsets = [16, 0], sizes = [376, 64], strides = [1, 1]} : vector<410x64xbf16> to vector<376x64xbf16>
    %70 = vector.extract_strided_slice %65 {offsets = [17, 0], sizes = [376, 64], strides = [1, 1]} : vector<410x64xbf16> to vector<376x64xbf16>
    %71 = vector.extract_strided_slice %65 {offsets = [18, 0], sizes = [376, 64], strides = [1, 1]} : vector<410x64xbf16> to vector<376x64xbf16>
    %72 = vector.extract_strided_slice %65 {offsets = [32, 0], sizes = [376, 64], strides = [1, 1]} : vector<410x64xbf16> to vector<376x64xbf16>
    %73 = vector.extract_strided_slice %65 {offsets = [33, 0], sizes = [376, 64], strides = [1, 1]} : vector<410x64xbf16> to vector<376x64xbf16>
    %74 = vector.extract_strided_slice %65 {offsets = [34, 0], sizes = [376, 64], strides = [1, 1]} : vector<410x64xbf16> to vector<376x64xbf16>
    %75 = tpu.concatenate %66, %67, %68, %69, %70, %71, %72, %73, %74 in 1 : vector<376x64xbf16>, vector<376x64xbf16>, vector<376x64xbf16>, vector<376x64xbf16>, vector<376x64xbf16>, vector<376x64xbf16>, vector<376x64xbf16>, vector<376x64xbf16>, vector<376x64xbf16> -> vector<376x576xbf16>
    %c0_21 = arith.constant 0 : index
    %c0_22 = arith.constant 0 : index
    %76 = vector.load %arg7[%c0_21, %c0_22] : memref<576x64xbf16, #tpu.memory_space<vmem>>, vector<576x64xbf16>
    %cst_23 = arith.constant dense<0.000000e+00> : vector<376x64xf32>
    %77 = tpu.matmul %75, %76, %cst_23 {dimension_numbers = #tpu.dot_dimension_numbers<[1], [0], [0], [1], [0, 0, 1, 1], [], []>} : vector<376x576xbf16>, vector<576x64xbf16>, vector<376x64xf32> -> vector<376x64xf32>
    %c0_24 = arith.constant 0 : index
    %c0_25 = arith.constant 0 : index
    %78 = vector.load %arg8[%c0_24, %c0_25] : memref<1x64xf32, #tpu.memory_space<vmem>>, vector<1x64xf32>
    %79 = vector.broadcast %78 : vector<1x64xf32> to vector<376x64xf32>
    %80 = arith.addf %77, %79 : vector<376x64xf32>
    %cst_26 = arith.constant 0.000000e+00 : f32
    %81 = vector.broadcast %cst_26 : f32 to vector<376x64xf32>
    %82 = arith.cmpf ogt, %80, %81 : vector<376x64xf32>
    %cst_27 = arith.constant 0.00999999977 : f32
    %83 = vector.broadcast %cst_27 : f32 to vector<376x64xf32>
    %84 = arith.mulf %83, %80 : vector<376x64xf32>
    %85 = arith.select %82, %80, %84 : vector<376x64xi1>, vector<376x64xf32>
    %86 = arith.truncf %85 : vector<376x64xf32> to vector<376x64xbf16>
    %c0_28 = arith.constant 0 : index
    %c0_29 = arith.constant 0 : index
    %87 = vector.load %arg9[%c0_28, %c0_29] : memref<2x410xbf16, #tpu.memory_space<vmem>>, vector<2x410xbf16>
    %cst_30 = arith.constant dense<0.000000e+00> : vector<2x96xf32>
    %88 = tpu.matmul %87, %64, %cst_30 {dimension_numbers = #tpu.dot_dimension_numbers<[1], [0], [0], [1], [0, 0, 1, 1], [], []>} : vector<2x410xbf16>, vector<410x96xbf16>, vector<2x96xf32> -> vector<2x96xf32>
    %cst_31 = arith.constant 0.00999999977 : f32
    %89 = vector.broadcast %cst_31 : f32 to vector<2x96xf32>
    %90 = arith.mulf %88, %89 : vector<2x96xf32>
    %c0_32 = arith.constant 0 : index
    %c0_33 = arith.constant 0 : index
    %91 = vector.load %arg10[%c0_32, %c0_33] : memref<2x376xbf16, #tpu.memory_space<vmem>>, vector<2x376xbf16>
    %cst_34 = arith.constant dense<0.000000e+00> : vector<2x64xf32>
    %92 = tpu.matmul %91, %86, %cst_34 {dimension_numbers = #tpu.dot_dimension_numbers<[1], [0], [0], [1], [0, 0, 1, 1], [], []>} : vector<2x376xbf16>, vector<376x64xbf16>, vector<2x64xf32> -> vector<2x64xf32>
    %cst_35 = arith.constant 1.562500e-02 : f32
    %93 = vector.broadcast %cst_35 : f32 to vector<2x64xf32>
    %94 = arith.mulf %92, %93 : vector<2x64xf32>
    %95 = arith.truncf %90 : vector<2x96xf32> to vector<2x96xbf16>
    %c0_36 = arith.constant 0 : index
    %c0_37 = arith.constant 0 : index
    %96 = vector.load %arg11[%c0_36, %c0_37] : memref<96x64xbf16, #tpu.memory_space<vmem>>, vector<96x64xbf16>
    %cst_38 = arith.constant dense<0.000000e+00> : vector<2x64xf32>
    %97 = tpu.matmul %95, %96, %cst_38 {dimension_numbers = #tpu.dot_dimension_numbers<[1], [0], [0], [1], [0, 0, 1, 1], [], []>} : vector<2x96xbf16>, vector<96x64xbf16>, vector<2x64xf32> -> vector<2x64xf32>
    %c0_39 = arith.constant 0 : index
    %c0_40 = arith.constant 0 : index
    %98 = vector.load %arg12[%c0_39, %c0_40] : memref<1x64xf32, #tpu.memory_space<vmem>>, vector<1x64xf32>
    %99 = vector.broadcast %98 : vector<1x64xf32> to vector<2x64xf32>
    %100 = arith.addf %97, %99 : vector<2x64xf32>
    %cst_41 = arith.constant 0.000000e+00 : f32
    %101 = vector.broadcast %cst_41 : f32 to vector<2x64xf32>
    %102 = arith.cmpf ogt, %100, %101 : vector<2x64xf32>
    %cst_42 = arith.constant 0.00999999977 : f32
    %103 = vector.broadcast %cst_42 : f32 to vector<2x64xf32>
    %104 = arith.mulf %103, %100 : vector<2x64xf32>
    %105 = arith.select %102, %100, %104 : vector<2x64xi1>, vector<2x64xf32>
    %106 = arith.truncf %105 : vector<2x64xf32> to vector<2x64xbf16>
    %c0_43 = arith.constant 0 : index
    %c0_44 = arith.constant 0 : index
    %107 = vector.load %arg13[%c0_43, %c0_44] : memref<64x64xbf16, #tpu.memory_space<vmem>>, vector<64x64xbf16>
    %cst_45 = arith.constant dense<0.000000e+00> : vector<2x64xf32>
    %108 = tpu.matmul %106, %107, %cst_45 {dimension_numbers = #tpu.dot_dimension_numbers<[1], [0], [0], [1], [0, 0, 1, 1], [], []>} : vector<2x64xbf16>, vector<64x64xbf16>, vector<2x64xf32> -> vector<2x64xf32>
    %c0_46 = arith.constant 0 : index
    %c0_47 = arith.constant 0 : index
    %109 = vector.load %arg14[%c0_46, %c0_47] : memref<1x64xf32, #tpu.memory_space<vmem>>, vector<1x64xf32>
    %110 = vector.broadcast %109 : vector<1x64xf32> to vector<2x64xf32>
    %111 = arith.addf %108, %110 : vector<2x64xf32>
    %cst_48 = arith.constant 0.000000e+00 : f32
    %112 = vector.broadcast %cst_48 : f32 to vector<2x64xf32>
    %113 = arith.cmpf ogt, %111, %112 : vector<2x64xf32>
    %cst_49 = arith.constant 0.00999999977 : f32
    %114 = vector.broadcast %cst_49 : f32 to vector<2x64xf32>
    %115 = arith.mulf %114, %111 : vector<2x64xf32>
    %116 = arith.select %113, %111, %115 : vector<2x64xi1>, vector<2x64xf32>
    %117 = arith.truncf %116 : vector<2x64xf32> to vector<2x64xbf16>
    %c0_50 = arith.constant 0 : index
    %c0_51 = arith.constant 0 : index
    %118 = vector.load %arg15[%c0_50, %c0_51] : memref<64x153xbf16, #tpu.memory_space<vmem>>, vector<64x153xbf16>
    %cst_52 = arith.constant dense<0.000000e+00> : vector<2x153xf32>
    %119 = tpu.matmul %117, %118, %cst_52 {dimension_numbers = #tpu.dot_dimension_numbers<[1], [0], [0], [1], [0, 0, 1, 1], [], []>} : vector<2x64xbf16>, vector<64x153xbf16>, vector<2x153xf32> -> vector<2x153xf32>
    %c0_53 = arith.constant 0 : index
    %c0_54 = arith.constant 0 : index
    %120 = vector.load %arg16[%c0_53, %c0_54] : memref<1x153xf32, #tpu.memory_space<vmem>>, vector<1x153xf32>
    %121 = vector.broadcast %120 : vector<1x153xf32> to vector<2x153xf32>
    %122 = arith.addf %119, %121 : vector<2x153xf32>
    %c0_55 = arith.constant 0 : index
    %c0_56 = arith.constant 0 : index
    %123 = vector.load %arg17[%c0_55, %c0_56] : memref<153x102xf32, #tpu.memory_space<vmem>>, vector<153x102xf32>
    %cst_57 = arith.constant dense<0.000000e+00> : vector<2x102xf32>
    %124 = tpu.matmul %122, %123, %cst_57 {dimension_numbers = #tpu.dot_dimension_numbers<[1], [0], [0], [1], [0, 0, 1, 1], [], []>} : vector<2x153xf32>, vector<153x102xf32>, vector<2x102xf32> -> vector<2x102xf32>
    %cst_58 = arith.constant dense<0xFF800000> : vector<2xf32>
    %125 = vector.multi_reduction <maximumf>, %124, %cst_58 [1] : vector<2x102xf32> to vector<2xf32>
    %126 = vector.shape_cast %125 : vector<2xf32> to vector<2x1xf32>
    %127 = vector.broadcast %126 : vector<2x1xf32> to vector<2x102xf32>
    %128 = arith.subf %124, %127 : vector<2x102xf32>
    %129 = math.exp %128 : vector<2x102xf32>
    %c0_59 = arith.constant 0 : index
    %c0_60 = arith.constant 0 : index
    %130 = vector.load %arg18[%c0_59, %c0_60] : memref<102x2xf32, #tpu.memory_space<vmem>>, vector<102x2xf32>
    %cst_61 = arith.constant dense<0.000000e+00> : vector<2x2xf32>
    %131 = tpu.matmul %129, %130, %cst_61 {dimension_numbers = #tpu.dot_dimension_numbers<[1], [0], [0], [1], [0, 0, 1, 1], [], []>} : vector<2x102xf32>, vector<102x2xf32>, vector<2x2xf32> -> vector<2x2xf32>
    %cst_62 = arith.constant 1.000000e+00 : f32
    %132 = vector.broadcast %cst_62 : f32 to vector<2x2xf32>
    %133 = arith.divf %132, %131 : vector<2x2xf32>
    %c0_63 = arith.constant 0 : index
    %c0_64 = arith.constant 0 : index
    %134 = vector.load %arg19[%c0_63, %c0_64] : memref<2x102xf32, #tpu.memory_space<vmem>>, vector<2x102xf32>
    %cst_65 = arith.constant dense<0.000000e+00> : vector<2x102xf32>
    %135 = tpu.matmul %133, %134, %cst_65 {dimension_numbers = #tpu.dot_dimension_numbers<[1], [0], [0], [1], [0, 0, 1, 1], [], []>} : vector<2x2xf32>, vector<2x102xf32>, vector<2x102xf32> -> vector<2x102xf32>
    %136 = arith.mulf %129, %135 : vector<2x102xf32>
    %cst_66 = arith.constant 1.000000e-03 : f32
    %137 = vector.broadcast %cst_66 : f32 to vector<2x102xf32>
    %138 = arith.maximumf %136, %137 : vector<2x102xf32>
    %c0_67 = arith.constant 0 : index
    %c0_68 = arith.constant 0 : index
    %139 = vector.load %arg20[%c0_67, %c0_68] : memref<102x2xf32, #tpu.memory_space<vmem>>, vector<102x2xf32>
    %cst_69 = arith.constant dense<0.000000e+00> : vector<2x2xf32>
    %140 = tpu.matmul %138, %139, %cst_69 {dimension_numbers = #tpu.dot_dimension_numbers<[1], [0], [0], [1], [0, 0, 1, 1], [], []>} : vector<2x102xf32>, vector<102x2xf32>, vector<2x2xf32> -> vector<2x2xf32>
    %141 = arith.truncf %94 : vector<2x64xf32> to vector<2x64xbf16>
    %c0_70 = arith.constant 0 : index
    %c0_71 = arith.constant 0 : index
    %142 = vector.load %arg21[%c0_70, %c0_71] : memref<64x128xbf16, #tpu.memory_space<vmem>>, vector<64x128xbf16>
    %cst_72 = arith.constant dense<0.000000e+00> : vector<2x128xf32>
    %143 = tpu.matmul %141, %142, %cst_72 {dimension_numbers = #tpu.dot_dimension_numbers<[1], [0], [0], [1], [0, 0, 1, 1], [], []>} : vector<2x64xbf16>, vector<64x128xbf16>, vector<2x128xf32> -> vector<2x128xf32>
    %c0_73 = arith.constant 0 : index
    %c0_74 = arith.constant 0 : index
    %144 = vector.load %arg22[%c0_73, %c0_74] : memref<1x128xf32, #tpu.memory_space<vmem>>, vector<1x128xf32>
    %145 = vector.broadcast %144 : vector<1x128xf32> to vector<2x128xf32>
    %146 = arith.addf %143, %145 : vector<2x128xf32>
    %cst_75 = arith.constant 0.000000e+00 : f32
    %147 = vector.broadcast %cst_75 : f32 to vector<2x128xf32>
    %148 = arith.cmpf ogt, %146, %147 : vector<2x128xf32>
    %cst_76 = arith.constant 0.00999999977 : f32
    %149 = vector.broadcast %cst_76 : f32 to vector<2x128xf32>
    %150 = arith.mulf %149, %146 : vector<2x128xf32>
    %151 = arith.select %148, %146, %150 : vector<2x128xi1>, vector<2x128xf32>
    %152 = arith.truncf %151 : vector<2x128xf32> to vector<2x128xbf16>
    %c0_77 = arith.constant 0 : index
    %c0_78 = arith.constant 0 : index
    %153 = vector.load %arg23[%c0_77, %c0_78] : memref<128x128xbf16, #tpu.memory_space<vmem>>, vector<128x128xbf16>
    %cst_79 = arith.constant dense<0.000000e+00> : vector<2x128xf32>
    %154 = tpu.matmul %152, %153, %cst_79 {dimension_numbers = #tpu.dot_dimension_numbers<[1], [0], [0], [1], [0, 0, 1, 1], [], []>} : vector<2x128xbf16>, vector<128x128xbf16>, vector<2x128xf32> -> vector<2x128xf32>
    %c0_80 = arith.constant 0 : index
    %c0_81 = arith.constant 0 : index
    %155 = vector.load %arg24[%c0_80, %c0_81] : memref<1x128xf32, #tpu.memory_space<vmem>>, vector<1x128xf32>
    %156 = vector.broadcast %155 : vector<1x128xf32> to vector<2x128xf32>
    %157 = arith.addf %154, %156 : vector<2x128xf32>
    %cst_82 = arith.constant 0.000000e+00 : f32
    %158 = vector.broadcast %cst_82 : f32 to vector<2x128xf32>
    %159 = arith.cmpf ogt, %157, %158 : vector<2x128xf32>
    %cst_83 = arith.constant 0.00999999977 : f32
    %160 = vector.broadcast %cst_83 : f32 to vector<2x128xf32>
    %161 = arith.mulf %160, %157 : vector<2x128xf32>
    %162 = arith.select %159, %157, %161 : vector<2x128xi1>, vector<2x128xf32>
    %163 = arith.truncf %162 : vector<2x128xf32> to vector<2x128xbf16>
    %c0_84 = arith.constant 0 : index
    %c0_85 = arith.constant 0 : index
    %164 = vector.load %arg25[%c0_84, %c0_85] : memref<128x306xbf16, #tpu.memory_space<vmem>>, vector<128x306xbf16>
    %cst_86 = arith.constant dense<0.000000e+00> : vector<2x306xf32>
    %165 = tpu.matmul %163, %164, %cst_86 {dimension_numbers = #tpu.dot_dimension_numbers<[1], [0], [0], [1], [0, 0, 1, 1], [], []>} : vector<2x128xbf16>, vector<128x306xbf16>, vector<2x306xf32> -> vector<2x306xf32>
    %c0_87 = arith.constant 0 : index
    %c0_88 = arith.constant 0 : index
    %166 = vector.load %arg26[%c0_87, %c0_88] : memref<1x306xf32, #tpu.memory_space<vmem>>, vector<1x306xf32>
    %167 = vector.broadcast %166 : vector<1x306xf32> to vector<2x306xf32>
    %168 = arith.addf %165, %167 : vector<2x306xf32>
    %c0_89 = arith.constant 0 : index
    %c0_90 = arith.constant 0 : index
    %169 = vector.load %arg27[%c0_89, %c0_90] : memref<306x255xf32, #tpu.memory_space<vmem>>, vector<306x255xf32>
    %cst_91 = arith.constant dense<0.000000e+00> : vector<2x255xf32>
    %170 = tpu.matmul %168, %169, %cst_91 {dimension_numbers = #tpu.dot_dimension_numbers<[1], [0], [0], [1], [0, 0, 1, 1], [], []>} : vector<2x306xf32>, vector<306x255xf32>, vector<2x255xf32> -> vector<2x255xf32>
    %cst_92 = arith.constant dense<0xFF800000> : vector<2xf32>
    %171 = vector.multi_reduction <maximumf>, %170, %cst_92 [1] : vector<2x255xf32> to vector<2xf32>
    %172 = vector.shape_cast %171 : vector<2xf32> to vector<2x1xf32>
    %173 = vector.broadcast %172 : vector<2x1xf32> to vector<2x255xf32>
    %174 = arith.subf %170, %173 : vector<2x255xf32>
    %175 = math.exp %174 : vector<2x255xf32>
    %c0_93 = arith.constant 0 : index
    %c0_94 = arith.constant 0 : index
    %176 = vector.load %arg28[%c0_93, %c0_94] : memref<255x5xf32, #tpu.memory_space<vmem>>, vector<255x5xf32>
    %cst_95 = arith.constant dense<0.000000e+00> : vector<2x5xf32>
    %177 = tpu.matmul %175, %176, %cst_95 {dimension_numbers = #tpu.dot_dimension_numbers<[1], [0], [0], [1], [0, 0, 1, 1], [], []>} : vector<2x255xf32>, vector<255x5xf32>, vector<2x5xf32> -> vector<2x5xf32>
    %cst_96 = arith.constant 1.000000e+00 : f32
    %178 = vector.broadcast %cst_96 : f32 to vector<2x5xf32>
    %179 = arith.divf %178, %177 : vector<2x5xf32>
    %c0_97 = arith.constant 0 : index
    %c0_98 = arith.constant 0 : index
    %180 = vector.load %arg29[%c0_97, %c0_98] : memref<5x255xf32, #tpu.memory_space<vmem>>, vector<5x255xf32>
    %cst_99 = arith.constant dense<0.000000e+00> : vector<2x255xf32>
    %181 = tpu.matmul %179, %180, %cst_99 {dimension_numbers = #tpu.dot_dimension_numbers<[1], [0], [0], [1], [0, 0, 1, 1], [], []>} : vector<2x5xf32>, vector<5x255xf32>, vector<2x255xf32> -> vector<2x255xf32>
    %182 = arith.mulf %175, %181 : vector<2x255xf32>
    %cst_100 = arith.constant 1.000000e-03 : f32
    %183 = vector.broadcast %cst_100 : f32 to vector<2x255xf32>
    %184 = arith.maximumf %182, %183 : vector<2x255xf32>
    %c0_101 = arith.constant 0 : index
    %c0_102 = arith.constant 0 : index
    %185 = vector.load %arg30[%c0_101, %c0_102] : memref<255x5xf32, #tpu.memory_space<vmem>>, vector<255x5xf32>
    %cst_103 = arith.constant dense<0.000000e+00> : vector<2x5xf32>
    %186 = tpu.matmul %184, %185, %cst_103 {dimension_numbers = #tpu.dot_dimension_numbers<[1], [0], [0], [1], [0, 0, 1, 1], [], []>} : vector<2x255xf32>, vector<255x5xf32>, vector<2x5xf32> -> vector<2x5xf32>
    %187 = tpu.concatenate %140, %186 in 1 : vector<2x2xf32>, vector<2x5xf32> -> vector<2x7xf32>
    %c0_104 = arith.constant 0 : index
    %c0_105 = arith.constant 0 : index
    %188 = vector.load %arg31[%c0_104, %c0_105] : memref<2x7xf32, #tpu.memory_space<vmem>>, vector<2x7xf32>
    tpu.vector_store %arg31[%c0_104, %c0_105], %187 {strides = array<i32>} : memref<2x7xf32, #tpu.memory_space<vmem>>, vector<2x7xf32>,
    return
  }
}

</mosaic_0001>

<llo_original>
// kernel: deep_q_proj_forward.1
$region0: #{deep_q_proj_forward.1}
  #allocation0 [shape = 'u32[]', space=smem, size = 0x4, offset = 0x4, fixed_abs, tag = 'smem constant byte address 0x4 - core index']
  #allocation1 [shape = 'u32[144,128]{1,0:T(1,128)}', space=vmem, size = 0x12000, scoped, tag = 'internal scratch']
  %s0 = inlined_call_operand.smem [shape: u32[32], index: -1, kind: input, shape index: {}]
  %s1 = sld [smem:[%s0]]
  %s2 = scalar_lea.smem %s0, 1
  %s3 = sld [smem:[%s2]]
  %s4 = scalar_lea.smem %s0, 2
  %s5 = sld [smem:[%s4]]
  %s6 = scalar_lea.smem %s0, 3
  %s7 = sld [smem:[%s6]]
  %s8 = scalar_lea.smem %s0, 4
  %s9 = sld [smem:[%s8]]
  %s10 = scalar_lea.smem %s0, 5
  %s11 = sld [smem:[%s10]]
  %s12 = scalar_lea.smem %s0, 6
  %s13 = sld [smem:[%s12]]
  %s14 = scalar_lea.smem %s0, 7
  %s15 = sld [smem:[%s14]]
  %s16 = scalar_lea.smem %s0, 8
  %s17 = sld [smem:[%s16]]
  %s18 = scalar_lea.smem %s0, 9
  %s19 = sld [smem:[%s18]]
  %s20 = scalar_lea.smem %s0, 10
  %s21 = sld [smem:[%s20]]
  %s22 = scalar_lea.smem %s0, 11
  %s23 = sld [smem:[%s22]]
  %s24 = scalar_lea.smem %s0, 12
  %s25 = sld [smem:[%s24]]
  %s26 = scalar_lea.smem %s0, 13
  %s27 = sld [smem:[%s26]]
  %s28 = scalar_lea.smem %s0, 14
  %s29 = sld [smem:[%s28]]
  %s30 = scalar_lea.smem %s0, 15
  %s31 = sld [smem:[%s30]]
  %s32 = scalar_lea.smem %s0, 16
  %s33 = sld [smem:[%s32]]
  %s34 = scalar_lea.smem %s0, 17
  %s35 = sld [smem:[%s34]]
  %s36 = scalar_lea.smem %s0, 18
  %s37 = sld [smem:[%s36]]
  %s38 = scalar_lea.smem %s0, 19
  %s39 = sld [smem:[%s38]]
  %s40 = scalar_lea.smem %s0, 20
  %s41 = sld [smem:[%s40]]
  %s42 = scalar_lea.smem %s0, 21
  %s43 = sld [smem:[%s42]]
  %s44 = scalar_lea.smem %s0, 22
  %s45 = sld [smem:[%s44]]
  %s46 = scalar_lea.smem %s0, 23
  %s47 = sld [smem:[%s46]]
  %s48 = scalar_lea.smem %s0, 24
  %s49 = sld [smem:[%s48]]
  %s50 = scalar_lea.smem %s0, 25
  %s51 = sld [smem:[%s50]]
  %s52 = scalar_lea.smem %s0, 26
  %s53 = sld [smem:[%s52]]
  %s54 = scalar_lea.smem %s0, 27
  %s55 = sld [smem:[%s54]]
  %s56 = scalar_lea.smem %s0, 28
  %s57 = sld [smem:[%s56]]
  %s58 = scalar_lea.smem %s0, 29
  %s59 = sld [smem:[%s58]]
  %s60 = scalar_lea.smem %s0, 30
  %s61 = sld [smem:[%s60]]
  %s62 = scalar_lea.smem %s0, 31
  %s63 = sld [smem:[%s62]]
  %s64 = sld [smem:[#allocation0]]
  $region134: #{deep_q_proj_forward.1} parent=0
    _
  %s66 = ssub.s32 1, %s64
  %s67 = scalar_select 0, %s66, %s64
  // Predicated region
  $region2: #{deep_q_proj_forward.1} parent=0 // pred_check
    _
  $region3: #{deep_q_proj_forward.1} parent=0 // pred_check_branch
    %69 = sbr.rel (0) target = $region5
  $region4: #{deep_q_proj_forward.1} parent=0 // pred_region
    _
  $region5: #{deep_q_proj_forward.1} parent=0 // pred_fallthru
    _
  // Predicated region
  $region6: #{deep_q_proj_forward.1} parent=0 // pred_check
    _
  $region7: #{deep_q_proj_forward.1} parent=0 // pred_check_branch
    %71 = sbr.rel (0) target = $region9
  $region8: #{deep_q_proj_forward.1} parent=0 // pred_region
    _
  $region9: #{deep_q_proj_forward.1} parent=0 // pred_fallthru
    _
  // Predicated region
  $region10: #{deep_q_proj_forward.1} parent=0 // pred_check
    _
  $region11: #{deep_q_proj_forward.1} parent=0 // pred_check_branch
    %73 = sbr.rel (0) target = $region13
  $region12: #{deep_q_proj_forward.1} parent=0 // pred_region
    _
  $region13: #{deep_q_proj_forward.1} parent=0 // pred_fallthru
    _
  // Predicated region
  $region14: #{deep_q_proj_forward.1} parent=0 // pred_check
    _
  $region15: #{deep_q_proj_forward.1} parent=0 // pred_check_branch
    %75 = sbr.rel (0) target = $region17
  $region16: #{deep_q_proj_forward.1} parent=0 // pred_region
    _
  $region17: #{deep_q_proj_forward.1} parent=0 // pred_fallthru
    _
  // Predicated region
  $region18: #{deep_q_proj_forward.1} parent=0 // pred_check
    _
  $region19: #{deep_q_proj_forward.1} parent=0 // pred_check_branch
    %77 = sbr.rel (0) target = $region21
  $region20: #{deep_q_proj_forward.1} parent=0 // pred_region
    _
  $region21: #{deep_q_proj_forward.1} parent=0 // pred_fallthru
    _
  // Predicated region
  $region22: #{deep_q_proj_forward.1} parent=0 // pred_check
    _
  $region23: #{deep_q_proj_forward.1} parent=0 // pred_check_branch
    %79 = sbr.rel (0) target = $region25
  $region24: #{deep_q_proj_forward.1} parent=0 // pred_region
    _
  $region25: #{deep_q_proj_forward.1} parent=0 // pred_fallthru
    _
  // Predicated region
  $region26: #{deep_q_proj_forward.1} parent=0 // pred_check
    _
  $region27: #{deep_q_proj_forward.1} parent=0 // pred_check_branch
    %81 = sbr.rel (0) target = $region29
  $region28: #{deep_q_proj_forward.1} parent=0 // pred_region
    _
  $region29: #{deep_q_proj_forward.1} parent=0 // pred_fallthru
    _
  // Predicated region
  $region30: #{deep_q_proj_forward.1} parent=0 // pred_check
    _
  $region31: #{deep_q_proj_forward.1} parent=0 // pred_check_branch
    %83 = sbr.rel (0) target = $region33
  $region32: #{deep_q_proj_forward.1} parent=0 // pred_region
    _
  $region33: #{deep_q_proj_forward.1} parent=0 // pred_fallthru
    _
  // Predicated region
  $region34: #{deep_q_proj_forward.1} parent=0 // pred_check
    _
  $region35: #{deep_q_proj_forward.1} parent=0 // pred_check_branch
    %85 = sbr.rel (0) target = $region37
  $region36: #{deep_q_proj_forward.1} parent=0 // pred_region
    _
  $region37: #{deep_q_proj_forward.1} parent=0 // pred_fallthru
    _
  // Predicated region
  $region38: #{deep_q_proj_forward.1} parent=0 // pred_check
    _
  $region39: #{deep_q_proj_forward.1} parent=0 // pred_check_branch
    %87 = sbr.rel (0) target = $region41
  $region40: #{deep_q_proj_forward.1} parent=0 // pred_region
    _
  $region41: #{deep_q_proj_forward.1} parent=0 // pred_fallthru
    _
  // Predicated region
  $region42: #{deep_q_proj_forward.1} parent=0 // pred_check
    _
  $region43: #{deep_q_proj_forward.1} parent=0 // pred_check_branch
    %89 = sbr.rel (0) target = $region45
  $region44: #{deep_q_proj_forward.1} parent=0 // pred_region
    _
  $region45: #{deep_q_proj_forward.1} parent=0 // pred_fallthru
    _
  // Predicated region
  $region46: #{deep_q_proj_forward.1} parent=0 // pred_check
    _
  $region47: #{deep_q_proj_forward.1} parent=0 // pred_check_branch
    %91 = sbr.rel (0) target = $region49
  $region48: #{deep_q_proj_forward.1} parent=0 // pred_region
    _
  $region49: #{deep_q_proj_forward.1} parent=0 // pred_fallthru
    _
  // Predicated region
  $region50: #{deep_q_proj_forward.1} parent=0 // pred_check
    _
  $region51: #{deep_q_proj_forward.1} parent=0 // pred_check_branch
    %93 = sbr.rel (0) target = $region53
  $region52: #{deep_q_proj_forward.1} parent=0 // pred_region
    _
  $region53: #{deep_q_proj_forward.1} parent=0 // pred_fallthru
    _
  // Predicated region
  $region54: #{deep_q_proj_forward.1} parent=0 // pred_check
    _
  $region55: #{deep_q_proj_forward.1} parent=0 // pred_check_branch
    %95 = sbr.rel (0) target = $region57
  $region56: #{deep_q_proj_forward.1} parent=0 // pred_region
    _
  $region57: #{deep_q_proj_forward.1} parent=0 // pred_fallthru
    _
  // Predicated region
  $region58: #{deep_q_proj_forward.1} parent=0 // pred_check
    _
  $region59: #{deep_q_proj_forward.1} parent=0 // pred_check_branch
    %97 = sbr.rel (0) target = $region61
  $region60: #{deep_q_proj_forward.1} parent=0 // pred_region
    _
  $region61: #{deep_q_proj_forward.1} parent=0 // pred_fallthru
    _
  // Predicated region
  $region62: #{deep_q_proj_forward.1} parent=0 // pred_check
    _
  $region63: #{deep_q_proj_forward.1} parent=0 // pred_check_branch
    %99 = sbr.rel (0) target = $region65
  $region64: #{deep_q_proj_forward.1} parent=0 // pred_region
    _
  $region65: #{deep_q_proj_forward.1} parent=0 // pred_fallthru
    _
  // Predicated region
  $region66: #{deep_q_proj_forward.1} parent=0 // pred_check
    _
  $region67: #{deep_q_proj_forward.1} parent=0 // pred_check_branch
    %101 = sbr.rel (0) target = $region69
  $region68: #{deep_q_proj_forward.1} parent=0 // pred_region
    _
  $region69: #{deep_q_proj_forward.1} parent=0 // pred_fallthru
    _
  // Predicated region
  $region70: #{deep_q_proj_forward.1} parent=0 // pred_check
    _
  $region71: #{deep_q_proj_forward.1} parent=0 // pred_check_branch
    %103 = sbr.rel (0) target = $region73
  $region72: #{deep_q_proj_forward.1} parent=0 // pred_region
    _
  $region73: #{deep_q_proj_forward.1} parent=0 // pred_fallthru
    _
  // Predicated region
  $region74: #{deep_q_proj_forward.1} parent=0 // pred_check
    _
  $region75: #{deep_q_proj_forward.1} parent=0 // pred_check_branch
    %105 = sbr.rel (0) target = $region77
  $region76: #{deep_q_proj_forward.1} parent=0 // pred_region
    _
  $region77: #{deep_q_proj_forward.1} parent=0 // pred_fallthru
    _
  // Predicated region
  $region78: #{deep_q_proj_forward.1} parent=0 // pred_check
    _
  $region79: #{deep_q_proj_forward.1} parent=0 // pred_check_branch
    %107 = sbr.rel (0) target = $region81
  $region80: #{deep_q_proj_forward.1} parent=0 // pred_region
    _
  $region81: #{deep_q_proj_forward.1} parent=0 // pred_fallthru
    _
  // Predicated region
  $region82: #{deep_q_proj_forward.1} parent=0 // pred_check
    _
  $region83: #{deep_q_proj_forward.1} parent=0 // pred_check_branch
    %109 = sbr.rel (0) target = $region85
  $region84: #{deep_q_proj_forward.1} parent=0 // pred_region
    _
  $region85: #{deep_q_proj_forward.1} parent=0 // pred_fallthru
    _
  // Predicated region
  $region86: #{deep_q_proj_forward.1} parent=0 // pred_check
    _
  $region87: #{deep_q_proj_forward.1} parent=0 // pred_check_branch
    %111 = sbr.rel (0) target = $region89
  $region88: #{deep_q_proj_forward.1} parent=0 // pred_region
    _
  $region89: #{deep_q_proj_forward.1} parent=0 // pred_fallthru
    _
  // Predicated region
  $region90: #{deep_q_proj_forward.1} parent=0 // pred_check
    _
  $region91: #{deep_q_proj_forward.1} parent=0 // pred_check_branch
    %113 = sbr.rel (0) target = $region93
  $region92: #{deep_q_proj_forward.1} parent=0 // pred_region
    _
  $region93: #{deep_q_proj_forward.1} parent=0 // pred_fallthru
    _
  // Predicated region
  $region94: #{deep_q_proj_forward.1} parent=0 // pred_check
    _
  $region95: #{deep_q_proj_forward.1} parent=0 // pred_check_branch
    %115 = sbr.rel (0) target = $region97
  $region96: #{deep_q_proj_forward.1} parent=0 // pred_region
    _
  $region97: #{deep_q_proj_forward.1} parent=0 // pred_fallthru
    _
  // Predicated region
  $region98: #{deep_q_proj_forward.1} parent=0 // pred_check
    _
  $region99: #{deep_q_proj_forward.1} parent=0 // pred_check_branch
    %117 = sbr.rel (0) target = $region101
  $region100: #{deep_q_proj_forward.1} parent=0 // pred_region
    _
  $region101: #{deep_q_proj_forward.1} parent=0 // pred_fallthru
    _
  // Predicated region
  $region102: #{deep_q_proj_forward.1} parent=0 // pred_check
    _
  $region103: #{deep_q_proj_forward.1} parent=0 // pred_check_branch
    %119 = sbr.rel (0) target = $region105
  $region104: #{deep_q_proj_forward.1} parent=0 // pred_region
    _
  $region105: #{deep_q_proj_forward.1} parent=0 // pred_fallthru
    _
  // Predicated region
  $region106: #{deep_q_proj_forward.1} parent=0 // pred_check
    _
  $region107: #{deep_q_proj_forward.1} parent=0 // pred_check_branch
    %121 = sbr.rel (0) target = $region109
  $region108: #{deep_q_proj_forward.1} parent=0 // pred_region
    _
  $region109: #{deep_q_proj_forward.1} parent=0 // pred_fallthru
    _
  // Predicated region
  $region110: #{deep_q_proj_forward.1} parent=0 // pred_check
    _
  $region111: #{deep_q_proj_forward.1} parent=0 // pred_check_branch
    %123 = sbr.rel (0) target = $region113
  $region112: #{deep_q_proj_forward.1} parent=0 // pred_region
    _
  $region113: #{deep_q_proj_forward.1} parent=0 // pred_fallthru
    _
  // Predicated region
  $region114: #{deep_q_proj_forward.1} parent=0 // pred_check
    _
  $region115: #{deep_q_proj_forward.1} parent=0 // pred_check_branch
    %125 = sbr.rel (0) target = $region117
  $region116: #{deep_q_proj_forward.1} parent=0 // pred_region
    _
  $region117: #{deep_q_proj_forward.1} parent=0 // pred_fallthru
    _
  // Predicated region
  $region118: #{deep_q_proj_forward.1} parent=0 // pred_check
    _
  $region119: #{deep_q_proj_forward.1} parent=0 // pred_check_branch
    %127 = sbr.rel (0) target = $region121
  $region120: #{deep_q_proj_forward.1} parent=0 // pred_region
    _
  $region121: #{deep_q_proj_forward.1} parent=0 // pred_fallthru
    _
  // Predicated region
  $region122: #{deep_q_proj_forward.1} parent=0 // pred_check
    _
  $region123: #{deep_q_proj_forward.1} parent=0 // pred_check_branch
    %129 = sbr.rel (0) target = $region125
  $region124: #{deep_q_proj_forward.1} parent=0 // pred_region
    _
  $region125: #{deep_q_proj_forward.1} parent=0 // pred_fallthru
    _
  %v131 = vld [vmem:[%s1] sm:$0xff]
  %v132 = vld [vmem:[%s1 + $0x8] sm:$0xff]
  %v133 = vld [vmem:[%s1 + $0x10] sm:$0xff]
  %v134 = vld [vmem:[%s1 + $0x18] sm:$0xff]
  %v135 = vld [vmem:[%s1 + $0x20] sm:$0xff]
  %v136 = vld [vmem:[%s1 + $0x28] sm:$0xff]
  %v137 = vld [vmem:[%s1 + $0x30] sm:$0xff]
  %v138 = vld [vmem:[%s1 + $0x38] sm:$0xff]
  %v139 = vld [vmem:[%s1 + $0x40] sm:$0xff]
  %v140 = vld [vmem:[%s1 + $0x48] sm:$0xff]
  %v141 = vld [vmem:[%s1 + $0x50] sm:$0xff]
  %v142 = vld [vmem:[%s1 + $0x58] sm:$0xff]
  %v143 = vld [vmem:[%s1 + $0x60] sm:$0xff]
  %v144 = vld [vmem:[%s1 + $0x68] sm:$0xff]
  %v145 = vld [vmem:[%s1 + $0x70] sm:$0xff]
  %v146 = vld [vmem:[%s1 + $0x78] sm:$0xff]
  %v147 = vld [vmem:[%s1 + $0x80] sm:$0xff]
  %v148 = vld [vmem:[%s1 + $0x88] sm:$0xff]
  %v149 = vld [vmem:[%s1 + $0x90] sm:$0xff]
  %v150 = vld [vmem:[%s1 + $0x98] sm:$0xff]
  %v151 = vld [vmem:[%s1 + $0xa0] sm:$0xff]
  %v152 = vld [vmem:[%s1 + $0xa8] sm:$0xff]
  %v153 = vld [vmem:[%s1 + $0xb0] sm:$0xff]
  %v154 = vld [vmem:[%s1 + $0xb8] sm:$0xff]
  %v155 = vld [vmem:[%s1 + $0xc0] sm:$0xff]
  %v156 = vld [vmem:[%s1 + $0xc8] sm:$0xff]
  %v157 = vld [vmem:[%s1 + $0xd0] sm:$0xff]
  %v158 = vld [vmem:[%s1 + $0xd8] sm:$0xff]
  %v159 = vld [vmem:[%s1 + $0xe0] sm:$0xff]
  %v160 = vld [vmem:[%s1 + $0xe8] sm:$0xff]
  %v161 = vld [vmem:[%s1 + $0xf0] sm:$0xff]
  %v162 = vld [vmem:[%s1 + $0xf8] sm:$0xff]
  %v163 = vld [vmem:[%s1 + $0x100] sm:$0xff]
  %v164 = vld [vmem:[%s1 + $0x108] sm:$0xff]
  %v165 = vld [vmem:[%s1 + $0x110] sm:$0xff]
  %v166 = vld [vmem:[%s1 + $0x118] sm:$0xff]
  %v167 = vld [vmem:[%s1 + $0x120] sm:$0xff]
  %v168 = vld [vmem:[%s1 + $0x128] sm:$0xff]
  %v169 = vld [vmem:[%s1 + $0x130] sm:$0xff]
  %v170 = vld [vmem:[%s1 + $0x138] sm:$0xff]
  %v171 = vld [vmem:[%s1 + $0x140] sm:$0xff]
  %v172 = vld [vmem:[%s1 + $0x148] sm:$0xff]
  %v173 = vld [vmem:[%s1 + $0x150] sm:$0xff]
  %v174 = vld [vmem:[%s1 + $0x158] sm:$0xff]
  %v175 = vld [vmem:[%s1 + $0x160] sm:$0xff]
  %v176 = vld [vmem:[%s1 + $0x168] sm:$0xff]
  %v177 = vld [vmem:[%s1 + $0x170] sm:$0xff]
  %v178 = vld [vmem:[%s1 + $0x178] sm:$0xff]
  %v179 = vld [vmem:[%s1 + $0x180] sm:$0xff]
  %v180 = vld [vmem:[%s1 + $0x188] sm:$0xff]
  %v181 = vld [vmem:[%s1 + $0x190] sm:$0xff]
  %v182 = vld [vmem:[%s1 + $0x198] sm:$0xff]
  %v183 = vld [vmem:[%s1 + $0x1a0] sm:$0xff]
  %v184 = vld [vmem:[%s1 + $0x1a8] sm:$0xff]
  %v185 = vld [vmem:[%s1 + $0x1b0] sm:$0xff]
  %v186 = vld [vmem:[%s1 + $0x1b8] sm:$0xff]
  %v187 = vld [vmem:[%s1 + $0x1c0] sm:$0xff]
  %v188 = vld [vmem:[%s1 + $0x1c8] sm:$0xff]
  %v189 = vld [vmem:[%s1 + $0x1d0] sm:$0xff]
  %v190 = vld [vmem:[%s1 + $0x1d8] sm:$0xff]
  %v191 = vld [vmem:[%s1 + $0x1e0] sm:$0xff]
  %v192 = vld [vmem:[%s1 + $0x1e8] sm:$0xff]
  %v193 = vld [vmem:[%s1 + $0x1f0] sm:$0xff]
  %v194 = vld [vmem:[%s1 + $0x1f8] sm:$0xff]
  %vm255 = vcmask 1046528
  %v256 = vrot.slane %v131, 1
  %v257 = vrot.slane %v132, 1
  %v258 = vsel %vm255, %v256, %v257
  %v259 = vrot.slane %v133, 1
  %v260 = vsel %vm255, %v257, %v259
  %v261 = vrot.slane %v134, 1
  %v262 = vsel %vm255, %v259, %v261
  %v263 = vrot.slane %v135, 1
  %v264 = vsel %vm255, %v261, %v263
  %v265 = vrot.slane %v136, 1
  %v266 = vsel %vm255, %v263, %v265
  %v267 = vrot.slane %v137, 1
  %v268 = vsel %vm255, %v265, %v267
  %v269 = vrot.slane %v138, 1
  %v270 = vsel %vm255, %v267, %v269
  %v271 = vrot.slane %v139, 1
  %v272 = vsel %vm255, %v269, %v271
  %v273 = vrot.slane %v140, 1
  %v274 = vsel %vm255, %v271, %v273
  %v275 = vrot.slane %v141, 1
  %v276 = vsel %vm255, %v273, %v275
  %v277 = vrot.slane %v142, 1
  %v278 = vsel %vm255, %v275, %v277
  %v279 = vrot.slane %v143, 1
  %v280 = vsel %vm255, %v277, %v279
  %v281 = vrot.slane %v144, 1
  %v282 = vsel %vm255, %v279, %v281
  %v283 = vrot.slane %v145, 1
  %v284 = vsel %vm255, %v281, %v283
  %v285 = vrot.slane %v146, 1
  %v286 = vsel %vm255, %v283, %v285
  %v287 = vrot.slane %v147, 1
  %v288 = vsel %vm255, %v285, %v287
  %v289 = vrot.slane %v148, 1
  %v290 = vsel %vm255, %v287, %v289
  %v291 = vrot.slane %v149, 1
  %v292 = vsel %vm255, %v289, %v291
  %v293 = vrot.slane %v150, 1
  %v294 = vsel %vm255, %v291, %v293
  %v295 = vrot.slane %v151, 1
  %v296 = vsel %vm255, %v293, %v295
  %v297 = vrot.slane %v152, 1
  %v298 = vsel %vm255, %v295, %v297
  %v299 = vrot.slane %v153, 1
  %v300 = vsel %vm255, %v297, %v299
  %v301 = vrot.slane %v154, 1
  %v302 = vsel %vm255, %v299, %v301
  %v303 = vrot.slane %v155, 1
  %v304 = vsel %vm255, %v301, %v303
  %v305 = vrot.slane %v156, 1
  %v306 = vsel %vm255, %v303, %v305
  %v307 = vrot.slane %v157, 1
  %v308 = vsel %vm255, %v305, %v307
  %v309 = vrot.slane %v158, 1
  %v310 = vsel %vm255, %v307, %v309
  %v311 = vrot.slane %v159, 1
  %v312 = vsel %vm255, %v309, %v311
  %v313 = vrot.slane %v160, 1
  %v314 = vsel %vm255, %v311, %v313
  %v315 = vrot.slane %v161, 1
  %v316 = vsel %vm255, %v313, %v315
  %v317 = vrot.slane %v162, 1
  %v318 = vsel %vm255, %v315, %v317
  %v319 = vrot.slane %v163, 1
  %v320 = vsel %vm255, %v317, %v319
  %v321 = vrot.slane %v164, 1
  %v322 = vsel %vm255, %v319, %v321
  %v323 = vrot.slane %v165, 1
  %v324 = vsel %vm255, %v321, %v323
  %v325 = vrot.slane %v166, 1
  %v326 = vsel %vm255, %v323, %v325
  %v327 = vrot.slane %v167, 1
  %v328 = vsel %vm255, %v325, %v327
  %v329 = vrot.slane %v168, 1
  %v330 = vsel %vm255, %v327, %v329
  %v331 = vrot.slane %v169, 1
  %v332 = vsel %vm255, %v329, %v331
  %v333 = vrot.slane %v170, 1
  %v334 = vsel %vm255, %v331, %v333
  %v335 = vrot.slane %v171, 1
  %v336 = vsel %vm255, %v333, %v335
  %v337 = vrot.slane %v172, 1
  %v338 = vsel %vm255, %v335, %v337
  %v339 = vrot.slane %v173, 1
  %v340 = vsel %vm255, %v337, %v339
  %v341 = vrot.slane %v174, 1
  %v342 = vsel %vm255, %v339, %v341
  %v343 = vrot.slane %v175, 1
  %v344 = vsel %vm255, %v341, %v343
  %v345 = vrot.slane %v176, 1
  %v346 = vsel %vm255, %v343, %v345
  %v347 = vrot.slane %v177, 1
  %v348 = vsel %vm255, %v345, %v347
  %v349 = vrot.slane %v178, 1
  %v350 = vsel %vm255, %v347, %v349
  %v351 = vrot.slane %v179, 1
  %v352 = vsel %vm255, %v349, %v351
  %v353 = vrot.slane %v180, 1
  %v354 = vsel %vm255, %v351, %v353
  %v355 = vrot.slane %v181, 1
  %v356 = vsel %vm255, %v353, %v355
  %v357 = vrot.slane %v182, 1
  %v358 = vsel %vm255, %v355, %v357
  %v359 = vrot.slane %v183, 1
  %v360 = vsel %vm255, %v357, %v359
  %v361 = vrot.slane %v184, 1
  %v362 = vsel %vm255, %v359, %v361
  %v363 = vrot.slane %v185, 1
  %v364 = vsel %vm255, %v361, %v363
  %v365 = vrot.slane %v186, 1
  %v366 = vsel %vm255, %v363, %v365
  %v367 = vrot.slane %v187, 1
  %v368 = vsel %vm255, %v365, %v367
  %v369 = vrot.slane %v188, 1
  %v370 = vsel %vm255, %v367, %v369
  %v371 = vrot.slane %v189, 1
  %v372 = vsel %vm255, %v369, %v371
  %v373 = vrot.slane %v190, 1
  %v374 = vsel %vm255, %v371, %v373
  %375 = vrot.lane.b32.xlu0 %v258, 1
  %v376 = vpop.permute.xlu0 %375
  %377 = vrot.lane.b32.xlu0 %v260, 1
  %v378 = vpop.permute.xlu0 %377
  %379 = vrot.lane.b32.xlu0 %v262, 1
  %v380 = vpop.permute.xlu0 %379
  %381 = vrot.lane.b32.xlu0 %v264, 1
  %v382 = vpop.permute.xlu0 %381
  %383 = vrot.lane.b32.xlu0 %v266, 1
  %v384 = vpop.permute.xlu0 %383
  %385 = vrot.lane.b32.xlu0 %v268, 1
  %v386 = vpop.permute.xlu0 %385
  %387 = vrot.lane.b32.xlu0 %v270, 1
  %v388 = vpop.permute.xlu0 %387
  %389 = vrot.lane.b32.xlu0 %v272, 1
  %v390 = vpop.permute.xlu0 %389
  %391 = vrot.lane.b32.xlu0 %v274, 1
  %v392 = vpop.permute.xlu0 %391
  %393 = vrot.lane.b32.xlu0 %v276, 1
  %v394 = vpop.permute.xlu0 %393
  %395 = vrot.lane.b32.xlu0 %v278, 1
  %v396 = vpop.permute.xlu0 %395
  %397 = vrot.lane.b32.xlu0 %v280, 1
  %v398 = vpop.permute.xlu0 %397
  %399 = vrot.lane.b32.xlu0 %v282, 1
  %v400 = vpop.permute.xlu0 %399
  %401 = vrot.lane.b32.xlu0 %v284, 1
  %v402 = vpop.permute.xlu0 %401
  %403 = vrot.lane.b32.xlu0 %v286, 1
  %v404 = vpop.permute.xlu0 %403
  %405 = vrot.lane.b32.xlu0 %v288, 1
  %v406 = vpop.permute.xlu0 %405
  %407 = vrot.lane.b32.xlu0 %v290, 1
  %v408 = vpop.permute.xlu0 %407
  %409 = vrot.lane.b32.xlu0 %v292, 1
  %v410 = vpop.permute.xlu0 %409
  %411 = vrot.lane.b32.xlu0 %v294, 1
  %v412 = vpop.permute.xlu0 %411
  %413 = vrot.lane.b32.xlu0 %v296, 1
  %v414 = vpop.permute.xlu0 %413
  %415 = vrot.lane.b32.xlu0 %v298, 1
  %v416 = vpop.permute.xlu0 %415
  %417 = vrot.lane.b32.xlu0 %v300, 1
  %v418 = vpop.permute.xlu0 %417
  %419 = vrot.lane.b32.xlu0 %v302, 1
  %v420 = vpop.permute.xlu0 %419
  %421 = vrot.lane.b32.xlu0 %v304, 1
  %v422 = vpop.permute.xlu0 %421
  %423 = vrot.lane.b32.xlu0 %v306, 1
  %v424 = vpop.permute.xlu0 %423
  %425 = vrot.lane.b32.xlu0 %v308, 1
  %v426 = vpop.permute.xlu0 %425
  %427 = vrot.lane.b32.xlu0 %v310, 1
  %v428 = vpop.permute.xlu0 %427
  %429 = vrot.lane.b32.xlu0 %v312, 1
  %v430 = vpop.permute.xlu0 %429
  %431 = vrot.lane.b32.xlu0 %v314, 1
  %v432 = vpop.permute.xlu0 %431
  %433 = vrot.lane.b32.xlu0 %v316, 1
  %v434 = vpop.permute.xlu0 %433
  %435 = vrot.lane.b32.xlu0 %v318, 1
  %v436 = vpop.permute.xlu0 %435
  %437 = vrot.lane.b32.xlu0 %v320, 1
  %v438 = vpop.permute.xlu0 %437
  %439 = vrot.lane.b32.xlu0 %v322, 1
  %v440 = vpop.permute.xlu0 %439
  %441 = vrot.lane.b32.xlu0 %v324, 1
  %v442 = vpop.permute.xlu0 %441
  %443 = vrot.lane.b32.xlu0 %v326, 1
  %v444 = vpop.permute.xlu0 %443
  %445 = vrot.lane.b32.xlu0 %v328, 1
  %v446 = vpop.permute.xlu0 %445
  %447 = vrot.lane.b32.xlu0 %v330, 1
  %v448 = vpop.permute.xlu0 %447
  %449 = vrot.lane.b32.xlu0 %v332, 1
  %v450 = vpop.permute.xlu0 %449
  %451 = vrot.lane.b32.xlu0 %v334, 1
  %v452 = vpop.permute.xlu0 %451
  %453 = vrot.lane.b32.xlu0 %v336, 1
  %v454 = vpop.permute.xlu0 %453
  %455 = vrot.lane.b32.xlu0 %v338, 1
  %v456 = vpop.permute.xlu0 %455
  %457 = vrot.lane.b32.xlu0 %v340, 1
  %v458 = vpop.permute.xlu0 %457
  %459 = vrot.lane.b32.xlu0 %v342, 1
  %v460 = vpop.permute.xlu0 %459
  %461 = vrot.lane.b32.xlu0 %v344, 1
  %v462 = vpop.permute.xlu0 %461
  %463 = vrot.lane.b32.xlu0 %v346, 1
  %v464 = vpop.permute.xlu0 %463
  %465 = vrot.lane.b32.xlu0 %v348, 1
  %v466 = vpop.permute.xlu0 %465
  %467 = vrot.lane.b32.xlu0 %v350, 1
  %v468 = vpop.permute.xlu0 %467
  %469 = vrot.lane.b32.xlu0 %v352, 1
  %v470 = vpop.permute.xlu0 %469
  %471 = vrot.lane.b32.xlu0 %v354, 1
  %v472 = vpop.permute.xlu0 %471
  %473 = vrot.lane.b32.xlu0 %v356, 1
  %v474 = vpop.permute.xlu0 %473
  %475 = vrot.lane.b32.xlu0 %v358, 1
  %v476 = vpop.permute.xlu0 %475
  %477 = vrot.lane.b32.xlu0 %v360, 1
  %v478 = vpop.permute.xlu0 %477
  %479 = vrot.lane.b32.xlu0 %v362, 1
  %v480 = vpop.permute.xlu0 %479
  %481 = vrot.lane.b32.xlu0 %v364, 1
  %v482 = vpop.permute.xlu0 %481
  %483 = vrot.lane.b32.xlu0 %v366, 1
  %v484 = vpop.permute.xlu0 %483
  %485 = vrot.lane.b32.xlu0 %v368, 1
  %v486 = vpop.permute.xlu0 %485
  %487 = vrot.lane.b32.xlu0 %v370, 1
  %v488 = vpop.permute.xlu0 %487
  %489 = vrot.lane.b32.xlu0 %v372, 1
  %v490 = vpop.permute.xlu0 %489
  %491 = vrot.lane.b32.xlu0 %v374, 1
  %v492 = vpop.permute.xlu0 %491
  %493 = vrot.lane.b32.xlu0 %v373, 1
  %v494 = vpop.permute.xlu0 %493
  %vm555 = vcmask 1045504
  %v556 = vrot.slane %v131, 2
  %v557 = vrot.slane %v132, 2
  %v558 = vsel %vm555, %v556, %v557
  %v559 = vrot.slane %v133, 2
  %v560 = vsel %vm555, %v557, %v559
  %v561 = vrot.slane %v134, 2
  %v562 = vsel %vm555, %v559, %v561
  %v563 = vrot.slane %v135, 2
  %v564 = vsel %vm555, %v561, %v563
  %v565 = vrot.slane %v136, 2
  %v566 = vsel %vm555, %v563, %v565
  %v567 = vrot.slane %v137, 2
  %v568 = vsel %vm555, %v565, %v567
  %v569 = vrot.slane %v138, 2
  %v570 = vsel %vm555, %v567, %v569
  %v571 = vrot.slane %v139, 2
  %v572 = vsel %vm555, %v569, %v571
  %v573 = vrot.slane %v140, 2
  %v574 = vsel %vm555, %v571, %v573
  %v575 = vrot.slane %v141, 2
  %v576 = vsel %vm555, %v573, %v575
  %v577 = vrot.slane %v142, 2
  %v578 = vsel %vm555, %v575, %v577
  %v579 = vrot.slane %v143, 2
  %v580 = vsel %vm555, %v577, %v579
  %v581 = vrot.slane %v144, 2
  %v582 = vsel %vm555, %v579, %v581
  %v583 = vrot.slane %v145, 2
  %v584 = vsel %vm555, %v581, %v583
  %v585 = vrot.slane %v146, 2
  %v586 = vsel %vm555, %v583, %v585
  %v587 = vrot.slane %v147, 2
  %v588 = vsel %vm555, %v585, %v587
  %v589 = vrot.slane %v148, 2
  %v590 = vsel %vm555, %v587, %v589
  %v591 = vrot.slane %v149, 2
  %v592 = vsel %vm555, %v589, %v591
  %v593 = vrot.slane %v150, 2
  %v594 = vsel %vm555, %v591, %v593
  %v595 = vrot.slane %v151, 2
  %v596 = vsel %vm555, %v593, %v595
  %v597 = vrot.slane %v152, 2
  %v598 = vsel %vm555, %v595, %v597
  %v599 = vrot.slane %v153, 2
  %v600 = vsel %vm555, %v597, %v599
  %v601 = vrot.slane %v154, 2
  %v602 = vsel %vm555, %v599, %v601
  %v603 = vrot.slane %v155, 2
  %v604 = vsel %vm555, %v601, %v603
  %v605 = vrot.slane %v156, 2
  %v606 = vsel %vm555, %v603, %v605
  %v607 = vrot.slane %v157, 2
  %v608 = vsel %vm555, %v605, %v607
  %v609 = vrot.slane %v158, 2
  %v610 = vsel %vm555, %v607, %v609
  %v611 = vrot.slane %v159, 2
  %v612 = vsel %vm555, %v609, %v611
  %v613 = vrot.slane %v160, 2
  %v614 = vsel %vm555, %v611, %v613
  %v615 = vrot.slane %v161, 2
  %v616 = vsel %vm555, %v613, %v615
  %v617 = vrot.slane %v162, 2
  %v618 = vsel %vm555, %v615, %v617
  %v619 = vrot.slane %v163, 2
  %v620 = vsel %vm555, %v617, %v619
  %v621 = vrot.slane %v164, 2
  %v622 = vsel %vm555, %v619, %v621
  %v623 = vrot.slane %v165, 2
  %v624 = vsel %vm555, %v621, %v623
  %v625 = vrot.slane %v166, 2
  %v626 = vsel %vm555, %v623, %v625
  %v627 = vrot.slane %v167, 2
  %v628 = vsel %vm555, %v625, %v627
  %v629 = vrot.slane %v168, 2
  %v630 = vsel %vm555, %v627, %v629
  %v631 = vrot.slane %v169, 2
  %v632 = vsel %vm555, %v629, %v631
  %v633 = vrot.slane %v170, 2
  %v634 = vsel %vm555, %v631, %v633
  %v635 = vrot.slane %v171, 2
  %v636 = vsel %vm555, %v633, %v635
  %v637 = vrot.slane %v172, 2
  %v638 = vsel %vm555, %v635, %v637
  %v639 = vrot.slane %v173, 2
  %v640 = vsel %vm555, %v637, %v639
  %v641 = vrot.slane %v174, 2
  %v642 = vsel %vm555, %v639, %v641
  %v643 = vrot.slane %v175, 2
  %v644 = vsel %vm555, %v641, %v643
  %v645 = vrot.slane %v176, 2
  %v646 = vsel %vm555, %v643, %v645
  %v647 = vrot.slane %v177, 2
  %v648 = vsel %vm555, %v645, %v647
  %v649 = vrot.slane %v178, 2
  %v650 = vsel %vm555, %v647, %v649
  %v651 = vrot.slane %v179, 2
  %v652 = vsel %vm555, %v649, %v651
  %v653 = vrot.slane %v180, 2
  %v654 = vsel %vm555, %v651, %v653
  %v655 = vrot.slane %v181, 2
  %v656 = vsel %vm555, %v653, %v655
  %v657 = vrot.slane %v182, 2
  %v658 = vsel %vm555, %v655, %v657
  %v659 = vrot.slane %v183, 2
  %v660 = vsel %vm555, %v657, %v659
  %v661 = vrot.slane %v184, 2
  %v662 = vsel %vm555, %v659, %v661
  %v663 = vrot.slane %v185, 2
  %v664 = vsel %vm555, %v661, %v663
  %v665 = vrot.slane %v186, 2
  %v666 = vsel %vm555, %v663, %v665
  %v667 = vrot.slane %v187, 2
  %v668 = vsel %vm555, %v665, %v667
  %v669 = vrot.slane %v188, 2
  %v670 = vsel %vm555, %v667, %v669
  %v671 = vrot.slane %v189, 2
  %v672 = vsel %vm555, %v669, %v671
  %v673 = vrot.slane %v190, 2
  %v674 = vsel %vm555, %v671, %v673
  %675 = vrot.lane.b32.xlu0 %v558, 2
  %v676 = vpop.permute.xlu0 %675
  %677 = vrot.lane.b32.xlu0 %v560, 2
  %v678 = vpop.permute.xlu0 %677
  %679 = vrot.lane.b32.xlu0 %v562, 2
  %v680 = vpop.permute.xlu0 %679
  %681 = vrot.lane.b32.xlu0 %v564, 2
  %v682 = vpop.permute.xlu0 %681
  %683 = vrot.lane.b32.xlu0 %v566, 2
  %v684 = vpop.permute.xlu0 %683
  %685 = vrot.lane.b32.xlu0 %v568, 2
  %v686 = vpop.permute.xlu0 %685
  %687 = vrot.lane.b32.xlu0 %v570, 2
  %v688 = vpop.permute.xlu0 %687
  %689 = vrot.lane.b32.xlu0 %v572, 2
  %v690 = vpop.permute.xlu0 %689
  %691 = vrot.lane.b32.xlu0 %v574, 2
  %v692 = vpop.permute.xlu0 %691
  %693 = vrot.lane.b32.xlu0 %v576, 2
  %v694 = vpop.permute.xlu0 %693
  %695 = vrot.lane.b32.xlu0 %v578, 2
  %v696 = vpop.permute.xlu0 %695
  %697 = vrot.lane.b32.xlu0 %v580, 2
  %v698 = vpop.permute.xlu0 %697
  %699 = vrot.lane.b32.xlu0 %v582, 2
  %v700 = vpop.permute.xlu0 %699
  %701 = vrot.lane.b32.xlu0 %v584, 2
  %v702 = vpop.permute.xlu0 %701
  %703 = vrot.lane.b32.xlu0 %v586, 2
  %v704 = vpop.permute.xlu0 %703
  %705 = vrot.lane.b32.xlu0 %v588, 2
  %v706 = vpop.permute.xlu0 %705
  %707 = vrot.lane.b32.xlu0 %v590, 2
  %v708 = vpop.permute.xlu0 %707
  %709 = vrot.lane.b32.xlu0 %v592, 2
  %v710 = vpop.permute.xlu0 %709
  %711 = vrot.lane.b32.xlu0 %v594, 2
  %v712 = vpop.permute.xlu0 %711
  %713 = vrot.lane.b32.xlu0 %v596, 2
  %v714 = vpop.permute.xlu0 %713
  %715 = vrot.lane.b32.xlu0 %v598, 2
  %v716 = vpop.permute.xlu0 %715
  %717 = vrot.lane.b32.xlu0 %v600, 2
  %v718 = vpop.permute.xlu0 %717
  %719 = vrot.lane.b32.xlu0 %v602, 2
  %v720 = vpop.permute.xlu0 %719
  %721 = vrot.lane.b32.xlu0 %v604, 2
  %v722 = vpop.permute.xlu0 %721
  %723 = vrot.lane.b32.xlu0 %v606, 2
  %v724 = vpop.permute.xlu0 %723
  %725 = vrot.lane.b32.xlu0 %v608, 2
  %v726 = vpop.permute.xlu0 %725
  %727 = vrot.lane.b32.xlu0 %v610, 2
  %v728 = vpop.permute.xlu0 %727
  %729 = vrot.lane.b32.xlu0 %v612, 2
  %v730 = vpop.permute.xlu0 %729
  %731 = vrot.lane.b32.xlu0 %v614, 2
  %v732 = vpop.permute.xlu0 %731
  %733 = vrot.lane.b32.xlu0 %v616, 2
  %v734 = vpop.permute.xlu0 %733
  %735 = vrot.lane.b32.xlu0 %v618, 2
  %v736 = vpop.permute.xlu0 %735
  %737 = vrot.lane.b32.xlu0 %v620, 2
  %v738 = vpop.permute.xlu0 %737
  %739 = vrot.lane.b32.xlu0 %v622, 2
  %v740 = vpop.permute.xlu0 %739
  %741 = vrot.lane.b32.xlu0 %v624, 2
  %v742 = vpop.permute.xlu0 %741
  %743 = vrot.lane.b32.xlu0 %v626, 2
  %v744 = vpop.permute.xlu0 %743
  %745 = vrot.lane.b32.xlu0 %v628, 2
  %v746 = vpop.permute.xlu0 %745
  %747 = vrot.lane.b32.xlu0 %v630, 2
  %v748 = vpop.permute.xlu0 %747
  %749 = vrot.lane.b32.xlu0 %v632, 2
  %v750 = vpop.permute.xlu0 %749
  %751 = vrot.lane.b32.xlu0 %v634, 2
  %v752 = vpop.permute.xlu0 %751
  %753 = vrot.lane.b32.xlu0 %v636, 2
  %v754 = vpop.permute.xlu0 %753
  %755 = vrot.lane.b32.xlu0 %v638, 2
  %v756 = vpop.permute.xlu0 %755
  %757 = vrot.lane.b32.xlu0 %v640, 2
  %v758 = vpop.permute.xlu0 %757
  %759 = vrot.lane.b32.xlu0 %v642, 2
  %v760 = vpop.permute.xlu0 %759
  %761 = vrot.lane.b32.xlu0 %v644, 2
  %v762 = vpop.permute.xlu0 %761
  %763 = vrot.lane.b32.xlu0 %v646, 2
  %v764 = vpop.permute.xlu0 %763
  %765 = vrot.lane.b32.xlu0 %v648, 2
  %v766 = vpop.permute.xlu0 %765
  %767 = vrot.lane.b32.xlu0 %v650, 2
  %v768 = vpop.permute.xlu0 %767
  %769 = vrot.lane.b32.xlu0 %v652, 2
  %v770 = vpop.permute.xlu0 %769
  %771 = vrot.lane.b32.xlu0 %v654, 2
  %v772 = vpop.permute.xlu0 %771
  %773 = vrot.lane.b32.xlu0 %v656, 2
  %v774 = vpop.permute.xlu0 %773
  %775 = vrot.lane.b32.xlu0 %v658, 2
  %v776 = vpop.permute.xlu0 %775
  %777 = vrot.lane.b32.xlu0 %v660, 2
  %v778 = vpop.permute.xlu0 %777
  %779 = vrot.lane.b32.xlu0 %v662, 2
  %v780 = vpop.permute.xlu0 %779
  %781 = vrot.lane.b32.xlu0 %v664, 2
  %v782 = vpop.permute.xlu0 %781
  %783 = vrot.lane.b32.xlu0 %v666, 2
  %v784 = vpop.permute.xlu0 %783
  %785 = vrot.lane.b32.xlu0 %v668, 2
  %v786 = vpop.permute.xlu0 %785
  %787 = vrot.lane.b32.xlu0 %v670, 2
  %v788 = vpop.permute.xlu0 %787
  %789 = vrot.lane.b32.xlu0 %v672, 2
  %v790 = vpop.permute.xlu0 %789
  %791 = vrot.lane.b32.xlu0 %v674, 2
  %v792 = vpop.permute.xlu0 %791
  %793 = vrot.lane.b32.xlu0 %v673, 2
  %v794 = vpop.permute.xlu0 %793
  %857 = vrot.lane.b32.xlu0 %v133, 3
  %v858 = vpop.permute.xlu0 %857
  %859 = vrot.lane.b32.xlu0 %v134, 3
  %v860 = vpop.permute.xlu0 %859
  %861 = vrot.lane.b32.xlu0 %v135, 3
  %v862 = vpop.permute.xlu0 %861
  %863 = vrot.lane.b32.xlu0 %v136, 3
  %v864 = vpop.permute.xlu0 %863
  %865 = vrot.lane.b32.xlu0 %v137, 3
  %v866 = vpop.permute.xlu0 %865
  %867 = vrot.lane.b32.xlu0 %v138, 3
  %v868 = vpop.permute.xlu0 %867
  %869 = vrot.lane.b32.xlu0 %v139, 3
  %v870 = vpop.permute.xlu0 %869
  %871 = vrot.lane.b32.xlu0 %v140, 3
  %v872 = vpop.permute.xlu0 %871
  %873 = vrot.lane.b32.xlu0 %v141, 3
  %v874 = vpop.permute.xlu0 %873
  %875 = vrot.lane.b32.xlu0 %v142, 3
  %v876 = vpop.permute.xlu0 %875
  %877 = vrot.lane.b32.xlu0 %v143, 3
  %v878 = vpop.permute.xlu0 %877
  %879 = vrot.lane.b32.xlu0 %v144, 3
  %v880 = vpop.permute.xlu0 %879
  %881 = vrot.lane.b32.xlu0 %v145, 3
  %v882 = vpop.permute.xlu0 %881
  %883 = vrot.lane.b32.xlu0 %v146, 3
  %v884 = vpop.permute.xlu0 %883
  %885 = vrot.lane.b32.xlu0 %v147, 3
  %v886 = vpop.permute.xlu0 %885
  %887 = vrot.lane.b32.xlu0 %v148, 3
  %v888 = vpop.permute.xlu0 %887
  %889 = vrot.lane.b32.xlu0 %v149, 3
  %v890 = vpop.permute.xlu0 %889
  %891 = vrot.lane.b32.xlu0 %v150, 3
  %v892 = vpop.permute.xlu0 %891
  %893 = vrot.lane.b32.xlu0 %v151, 3
  %v894 = vpop.permute.xlu0 %893
  %895 = vrot.lane.b32.xlu0 %v152, 3
  %v896 = vpop.permute.xlu0 %895
  %897 = vrot.lane.b32.xlu0 %v153, 3
  %v898 = vpop.permute.xlu0 %897
  %899 = vrot.lane.b32.xlu0 %v154, 3
  %v900 = vpop.permute.xlu0 %899
  %901 = vrot.lane.b32.xlu0 %v155, 3
  %v902 = vpop.permute.xlu0 %901
  %903 = vrot.lane.b32.xlu0 %v156, 3
  %v904 = vpop.permute.xlu0 %903
  %905 = vrot.lane.b32.xlu0 %v157, 3
  %v906 = vpop.permute.xlu0 %905
  %907 = vrot.lane.b32.xlu0 %v158, 3
  %v908 = vpop.permute.xlu0 %907
  %909 = vrot.lane.b32.xlu0 %v159, 3
  %v910 = vpop.permute.xlu0 %909
  %911 = vrot.lane.b32.xlu0 %v160, 3
  %v912 = vpop.permute.xlu0 %911
  %913 = vrot.lane.b32.xlu0 %v161, 3
  %v914 = vpop.permute.xlu0 %913
  %915 = vrot.lane.b32.xlu0 %v162, 3
  %v916 = vpop.permute.xlu0 %915
  %917 = vrot.lane.b32.xlu0 %v163, 3
  %v918 = vpop.permute.xlu0 %917
  %919 = vrot.lane.b32.xlu0 %v164, 3
  %v920 = vpop.permute.xlu0 %919
  %921 = vrot.lane.b32.xlu0 %v165, 3
  %v922 = vpop.permute.xlu0 %921
  %923 = vrot.lane.b32.xlu0 %v166, 3
  %v924 = vpop.permute.xlu0 %923
  %925 = vrot.lane.b32.xlu0 %v167, 3
  %v926 = vpop.permute.xlu0 %925
  %927 = vrot.lane.b32.xlu0 %v168, 3
  %v928 = vpop.permute.xlu0 %927
  %929 = vrot.lane.b32.xlu0 %v169, 3
  %v930 = vpop.permute.xlu0 %929
  %931 = vrot.lane.b32.xlu0 %v170, 3
  %v932 = vpop.permute.xlu0 %931
  %933 = vrot.lane.b32.xlu0 %v171, 3
  %v934 = vpop.permute.xlu0 %933
  %935 = vrot.lane.b32.xlu0 %v172, 3
  %v936 = vpop.permute.xlu0 %935
  %937 = vrot.lane.b32.xlu0 %v173, 3
  %v938 = vpop.permute.xlu0 %937
  %939 = vrot.lane.b32.xlu0 %v174, 3
  %v940 = vpop.permute.xlu0 %939
  %941 = vrot.lane.b32.xlu0 %v175, 3
  %v942 = vpop.permute.xlu0 %941
  %943 = vrot.lane.b32.xlu0 %v176, 3
  %v944 = vpop.permute.xlu0 %943
  %945 = vrot.lane.b32.xlu0 %v177, 3
  %v946 = vpop.permute.xlu0 %945
  %947 = vrot.lane.b32.xlu0 %v178, 3
  %v948 = vpop.permute.xlu0 %947
  %949 = vrot.lane.b32.xlu0 %v179, 3
  %v950 = vpop.permute.xlu0 %949
  %951 = vrot.lane.b32.xlu0 %v180, 3
  %v952 = vpop.permute.xlu0 %951
  %953 = vrot.lane.b32.xlu0 %v181, 3
  %v954 = vpop.permute.xlu0 %953
  %955 = vrot.lane.b32.xlu0 %v182, 3
  %v956 = vpop.permute.xlu0 %955
  %957 = vrot.lane.b32.xlu0 %v183, 3
  %v958 = vpop.permute.xlu0 %957
  %959 = vrot.lane.b32.xlu0 %v184, 3
  %v960 = vpop.permute.xlu0 %959
  %961 = vrot.lane.b32.xlu0 %v185, 3
  %v962 = vpop.permute.xlu0 %961
  %963 = vrot.lane.b32.xlu0 %v186, 3
  %v964 = vpop.permute.xlu0 %963
  %965 = vrot.lane.b32.xlu0 %v187, 3
  %v966 = vpop.permute.xlu0 %965
  %967 = vrot.lane.b32.xlu0 %v188, 3
  %v968 = vpop.permute.xlu0 %967
  %969 = vrot.lane.b32.xlu0 %v189, 3
  %v970 = vpop.permute.xlu0 %969
  %971 = vrot.lane.b32.xlu0 %v190, 3
  %v972 = vpop.permute.xlu0 %971
  %973 = vrot.lane.b32.xlu0 %v191, 3
  %v974 = vpop.permute.xlu0 %973
  %975 = vrot.lane.b32.xlu0 %v192, 3
  %v976 = vpop.permute.xlu0 %975
  %v1037 = vrot.slane %v191, 1
  %v1038 = vsel %vm255, %v373, %v1037
  %v1039 = vrot.slane %v192, 1
  %v1040 = vsel %vm255, %v1037, %v1039
  %1041 = vrot.lane.b32.xlu0 %v262, 4
  %v1042 = vpop.permute.xlu0 %1041
  %1043 = vrot.lane.b32.xlu0 %v264, 4
  %v1044 = vpop.permute.xlu0 %1043
  %1045 = vrot.lane.b32.xlu0 %v266, 4
  %v1046 = vpop.permute.xlu0 %1045
  %1047 = vrot.lane.b32.xlu0 %v268, 4
  %v1048 = vpop.permute.xlu0 %1047
  %1049 = vrot.lane.b32.xlu0 %v270, 4
  %v1050 = vpop.permute.xlu0 %1049
  %1051 = vrot.lane.b32.xlu0 %v272, 4
  %v1052 = vpop.permute.xlu0 %1051
  %1053 = vrot.lane.b32.xlu0 %v274, 4
  %v1054 = vpop.permute.xlu0 %1053
  %1055 = vrot.lane.b32.xlu0 %v276, 4
  %v1056 = vpop.permute.xlu0 %1055
  %1057 = vrot.lane.b32.xlu0 %v278, 4
  %v1058 = vpop.permute.xlu0 %1057
  %1059 = vrot.lane.b32.xlu0 %v280, 4
  %v1060 = vpop.permute.xlu0 %1059
  %1061 = vrot.lane.b32.xlu0 %v282, 4
  %v1062 = vpop.permute.xlu0 %1061
  %1063 = vrot.lane.b32.xlu0 %v284, 4
  %v1064 = vpop.permute.xlu0 %1063
  %1065 = vrot.lane.b32.xlu0 %v286, 4
  %v1066 = vpop.permute.xlu0 %1065
  %1067 = vrot.lane.b32.xlu0 %v288, 4
  %v1068 = vpop.permute.xlu0 %1067
  %1069 = vrot.lane.b32.xlu0 %v290, 4
  %v1070 = vpop.permute.xlu0 %1069
  %1071 = vrot.lane.b32.xlu0 %v292, 4
  %v1072 = vpop.permute.xlu0 %1071
  %1073 = vrot.lane.b32.xlu0 %v294, 4
  %v1074 = vpop.permute.xlu0 %1073
  %1075 = vrot.lane.b32.xlu0 %v296, 4
  %v1076 = vpop.permute.xlu0 %1075
  %1077 = vrot.lane.b32.xlu0 %v298, 4
  %v1078 = vpop.permute.xlu0 %1077
  %1079 = vrot.lane.b32.xlu0 %v300, 4
  %v1080 = vpop.permute.xlu0 %1079
  %1081 = vrot.lane.b32.xlu0 %v302, 4
  %v1082 = vpop.permute.xlu0 %1081
  %1083 = vrot.lane.b32.xlu0 %v304, 4
  %v1084 = vpop.permute.xlu0 %1083
  %1085 = vrot.lane.b32.xlu0 %v306, 4
  %v1086 = vpop.permute.xlu0 %1085
  %1087 = vrot.lane.b32.xlu0 %v308, 4
  %v1088 = vpop.permute.xlu0 %1087
  %1089 = vrot.lane.b32.xlu0 %v310, 4
  %v1090 = vpop.permute.xlu0 %1089
  %1091 = vrot.lane.b32.xlu0 %v312, 4
  %v1092 = vpop.permute.xlu0 %1091
  %1093 = vrot.lane.b32.xlu0 %v314, 4
  %v1094 = vpop.permute.xlu0 %1093
  %1095 = vrot.lane.b32.xlu0 %v316, 4
  %v1096 = vpop.permute.xlu0 %1095
  %1097 = vrot.lane.b32.xlu0 %v318, 4
  %v1098 = vpop.permute.xlu0 %1097
  %1099 = vrot.lane.b32.xlu0 %v320, 4
  %v1100 = vpop.permute.xlu0 %1099
  %1101 = vrot.lane.b32.xlu0 %v322, 4
  %v1102 = vpop.permute.xlu0 %1101
  %1103 = vrot.lane.b32.xlu0 %v324, 4
  %v1104 = vpop.permute.xlu0 %1103
  %1105 = vrot.lane.b32.xlu0 %v326, 4
  %v1106 = vpop.permute.xlu0 %1105
  %1107 = vrot.lane.b32.xlu0 %v328, 4
  %v1108 = vpop.permute.xlu0 %1107
  %1109 = vrot.lane.b32.xlu0 %v330, 4
  %v1110 = vpop.permute.xlu0 %1109
  %1111 = vrot.lane.b32.xlu0 %v332, 4
  %v1112 = vpop.permute.xlu0 %1111
  %1113 = vrot.lane.b32.xlu0 %v334, 4
  %v1114 = vpop.permute.xlu0 %1113
  %1115 = vrot.lane.b32.xlu0 %v336, 4
  %v1116 = vpop.permute.xlu0 %1115
  %1117 = vrot.lane.b32.xlu0 %v338, 4
  %v1118 = vpop.permute.xlu0 %1117
  %1119 = vrot.lane.b32.xlu0 %v340, 4
  %v1120 = vpop.permute.xlu0 %1119
  %1121 = vrot.lane.b32.xlu0 %v342, 4
  %v1122 = vpop.permute.xlu0 %1121
  %1123 = vrot.lane.b32.xlu0 %v344, 4
  %v1124 = vpop.permute.xlu0 %1123
  %1125 = vrot.lane.b32.xlu0 %v346, 4
  %v1126 = vpop.permute.xlu0 %1125
  %1127 = vrot.lane.b32.xlu0 %v348, 4
  %v1128 = vpop.permute.xlu0 %1127
  %1129 = vrot.lane.b32.xlu0 %v350, 4
  %v1130 = vpop.permute.xlu0 %1129
  %1131 = vrot.lane.b32.xlu0 %v352, 4
  %v1132 = vpop.permute.xlu0 %1131
  %1133 = vrot.lane.b32.xlu0 %v354, 4
  %v1134 = vpop.permute.xlu0 %1133
  %1135 = vrot.lane.b32.xlu0 %v356, 4
  %v1136 = vpop.permute.xlu0 %1135
  %1137 = vrot.lane.b32.xlu0 %v358, 4
  %v1138 = vpop.permute.xlu0 %1137
  %1139 = vrot.lane.b32.xlu0 %v360, 4
  %v1140 = vpop.permute.xlu0 %1139
  %1141 = vrot.lane.b32.xlu0 %v362, 4
  %v1142 = vpop.permute.xlu0 %1141
  %1143 = vrot.lane.b32.xlu0 %v364, 4
  %v1144 = vpop.permute.xlu0 %1143
  %1145 = vrot.lane.b32.xlu0 %v366, 4
  %v1146 = vpop.permute.xlu0 %1145
  %1147 = vrot.lane.b32.xlu0 %v368, 4
  %v1148 = vpop.permute.xlu0 %1147
  %1149 = vrot.lane.b32.xlu0 %v370, 4
  %v1150 = vpop.permute.xlu0 %1149
  %1151 = vrot.lane.b32.xlu0 %v372, 4
  %v1152 = vpop.permute.xlu0 %1151
  %1153 = vrot.lane.b32.xlu0 %v374, 4
  %v1154 = vpop.permute.xlu0 %1153
  %1155 = vrot.lane.b32.xlu0 %v1038, 4
  %v1156 = vpop.permute.xlu0 %1155
  %1157 = vrot.lane.b32.xlu0 %v1040, 4
  %v1158 = vpop.permute.xlu0 %1157
  %1159 = vrot.lane.b32.xlu0 %v1039, 4
  %v1160 = vpop.permute.xlu0 %1159
  %v1221 = vrot.slane %v191, 2
  %v1222 = vsel %vm555, %v673, %v1221
  %v1223 = vrot.slane %v192, 2
  %v1224 = vsel %vm555, %v1221, %v1223
  %1225 = vrot.lane.b32.xlu0 %v562, 5
  %v1226 = vpop.permute.xlu0 %1225
  %1227 = vrot.lane.b32.xlu0 %v564, 5
  %v1228 = vpop.permute.xlu0 %1227
  %1229 = vrot.lane.b32.xlu0 %v566, 5
  %v1230 = vpop.permute.xlu0 %1229
  %1231 = vrot.lane.b32.xlu0 %v568, 5
  %v1232 = vpop.permute.xlu0 %1231
  %1233 = vrot.lane.b32.xlu0 %v570, 5
  %v1234 = vpop.permute.xlu0 %1233
  %1235 = vrot.lane.b32.xlu0 %v572, 5
  %v1236 = vpop.permute.xlu0 %1235
  %1237 = vrot.lane.b32.xlu0 %v574, 5
  %v1238 = vpop.permute.xlu0 %1237
  %1239 = vrot.lane.b32.xlu0 %v576, 5
  %v1240 = vpop.permute.xlu0 %1239
  %1241 = vrot.lane.b32.xlu0 %v578, 5
  %v1242 = vpop.permute.xlu0 %1241
  %1243 = vrot.lane.b32.xlu0 %v580, 5
  %v1244 = vpop.permute.xlu0 %1243
  %1245 = vrot.lane.b32.xlu0 %v582, 5
  %v1246 = vpop.permute.xlu0 %1245
  %1247 = vrot.lane.b32.xlu0 %v584, 5
  %v1248 = vpop.permute.xlu0 %1247
  %1249 = vrot.lane.b32.xlu0 %v586, 5
  %v1250 = vpop.permute.xlu0 %1249
  %1251 = vrot.lane.b32.xlu0 %v588, 5
  %v1252 = vpop.permute.xlu0 %1251
  %1253 = vrot.lane.b32.xlu0 %v590, 5
  %v1254 = vpop.permute.xlu0 %1253
  %1255 = vrot.lane.b32.xlu0 %v592, 5
  %v1256 = vpop.permute.xlu0 %1255
  %1257 = vrot.lane.b32.xlu0 %v594, 5
  %v1258 = vpop.permute.xlu0 %1257
  %1259 = vrot.lane.b32.xlu0 %v596, 5
  %v1260 = vpop.permute.xlu0 %1259
  %1261 = vrot.lane.b32.xlu0 %v598, 5
  %v1262 = vpop.permute.xlu0 %1261
  %1263 = vrot.lane.b32.xlu0 %v600, 5
  %v1264 = vpop.permute.xlu0 %1263
  %1265 = vrot.lane.b32.xlu0 %v602, 5
  %v1266 = vpop.permute.xlu0 %1265
  %1267 = vrot.lane.b32.xlu0 %v604, 5
  %v1268 = vpop.permute.xlu0 %1267
  %1269 = vrot.lane.b32.xlu0 %v606, 5
  %v1270 = vpop.permute.xlu0 %1269
  %1271 = vrot.lane.b32.xlu0 %v608, 5
  %v1272 = vpop.permute.xlu0 %1271
  %1273 = vrot.lane.b32.xlu0 %v610, 5
  %v1274 = vpop.permute.xlu0 %1273
  %1275 = vrot.lane.b32.xlu0 %v612, 5
  %v1276 = vpop.permute.xlu0 %1275
  %1277 = vrot.lane.b32.xlu0 %v614, 5
  %v1278 = vpop.permute.xlu0 %1277
  %1279 = vrot.lane.b32.xlu0 %v616, 5
  %v1280 = vpop.permute.xlu0 %1279
  %1281 = vrot.lane.b32.xlu0 %v618, 5
  %v1282 = vpop.permute.xlu0 %1281
  %1283 = vrot.lane.b32.xlu0 %v620, 5
  %v1284 = vpop.permute.xlu0 %1283
  %1285 = vrot.lane.b32.xlu0 %v622, 5
  %v1286 = vpop.permute.xlu0 %1285
  %1287 = vrot.lane.b32.xlu0 %v624, 5
  %v1288 = vpop.permute.xlu0 %1287
  %1289 = vrot.lane.b32.xlu0 %v626, 5
  %v1290 = vpop.permute.xlu0 %1289
  %1291 = vrot.lane.b32.xlu0 %v628, 5
  %v1292 = vpop.permute.xlu0 %1291
  %1293 = vrot.lane.b32.xlu0 %v630, 5
  %v1294 = vpop.permute.xlu0 %1293
  %1295 = vrot.lane.b32.xlu0 %v632, 5
  %v1296 = vpop.permute.xlu0 %1295
  %1297 = vrot.lane.b32.xlu0 %v634, 5
  %v1298 = vpop.permute.xlu0 %1297
  %1299 = vrot.lane.b32.xlu0 %v636, 5
  %v1300 = vpop.permute.xlu0 %1299
  %1301 = vrot.lane.b32.xlu0 %v638, 5
  %v1302 = vpop.permute.xlu0 %1301
  %1303 = vrot.lane.b32.xlu0 %v640, 5
  %v1304 = vpop.permute.xlu0 %1303
  %1305 = vrot.lane.b32.xlu0 %v642, 5
  %v1306 = vpop.permute.xlu0 %1305
  %1307 = vrot.lane.b32.xlu0 %v644, 5
  %v1308 = vpop.permute.xlu0 %1307
  %1309 = vrot.lane.b32.xlu0 %v646, 5
  %v1310 = vpop.permute.xlu0 %1309
  %1311 = vrot.lane.b32.xlu0 %v648, 5
  %v1312 = vpop.permute.xlu0 %1311
  %1313 = vrot.lane.b32.xlu0 %v650, 5
  %v1314 = vpop.permute.xlu0 %1313
  %1315 = vrot.lane.b32.xlu0 %v652, 5
  %v1316 = vpop.permute.xlu0 %1315
  %1317 = vrot.lane.b32.xlu0 %v654, 5
  %v1318 = vpop.permute.xlu0 %1317
  %1319 = vrot.lane.b32.xlu0 %v656, 5
  %v1320 = vpop.permute.xlu0 %1319
  %1321 = vrot.lane.b32.xlu0 %v658, 5
  %v1322 = vpop.permute.xlu0 %1321
  %1323 = vrot.lane.b32.xlu0 %v660, 5
  %v1324 = vpop.permute.xlu0 %1323
  %1325 = vrot.lane.b32.xlu0 %v662, 5
  %v1326 = vpop.permute.xlu0 %1325
  %1327 = vrot.lane.b32.xlu0 %v664, 5
  %v1328 = vpop.permute.xlu0 %1327
  %1329 = vrot.lane.b32.xlu0 %v666, 5
  %v1330 = vpop.permute.xlu0 %1329
  %1331 = vrot.lane.b32.xlu0 %v668, 5
  %v1332 = vpop.permute.xlu0 %1331
  %1333 = vrot.lane.b32.xlu0 %v670, 5
  %v1334 = vpop.permute.xlu0 %1333
  %1335 = vrot.lane.b32.xlu0 %v672, 5
  %v1336 = vpop.permute.xlu0 %1335
  %1337 = vrot.lane.b32.xlu0 %v674, 5
  %v1338 = vpop.permute.xlu0 %1337
  %1339 = vrot.lane.b32.xlu0 %v1222, 5
  %v1340 = vpop.permute.xlu0 %1339
  %1341 = vrot.lane.b32.xlu0 %v1224, 5
  %v1342 = vpop.permute.xlu0 %1341
  %1343 = vrot.lane.b32.xlu0 %v1223, 5
  %v1344 = vpop.permute.xlu0 %1343
  %1407 = vrot.lane.b32.xlu0 %v135, 6
  %v1408 = vpop.permute.xlu0 %1407
  %1409 = vrot.lane.b32.xlu0 %v136, 6
  %v1410 = vpop.permute.xlu0 %1409
  %1411 = vrot.lane.b32.xlu0 %v137, 6
  %v1412 = vpop.permute.xlu0 %1411
  %1413 = vrot.lane.b32.xlu0 %v138, 6
  %v1414 = vpop.permute.xlu0 %1413
  %1415 = vrot.lane.b32.xlu0 %v139, 6
  %v1416 = vpop.permute.xlu0 %1415
  %1417 = vrot.lane.b32.xlu0 %v140, 6
  %v1418 = vpop.permute.xlu0 %1417
  %1419 = vrot.lane.b32.xlu0 %v141, 6
  %v1420 = vpop.permute.xlu0 %1419
  %1421 = vrot.lane.b32.xlu0 %v142, 6
  %v1422 = vpop.permute.xlu0 %1421
  %1423 = vrot.lane.b32.xlu0 %v143, 6
  %v1424 = vpop.permute.xlu0 %1423
  %1425 = vrot.lane.b32.xlu0 %v144, 6
  %v1426 = vpop.permute.xlu0 %1425
  %1427 = vrot.lane.b32.xlu0 %v145, 6
  %v1428 = vpop.permute.xlu0 %1427
  %1429 = vrot.lane.b32.xlu0 %v146, 6
  %v1430 = vpop.permute.xlu0 %1429
  %1431 = vrot.lane.b32.xlu0 %v147, 6
  %v1432 = vpop.permute.xlu0 %1431
  %1433 = vrot.lane.b32.xlu0 %v148, 6
  %v1434 = vpop.permute.xlu0 %1433
  %1435 = vrot.lane.b32.xlu0 %v149, 6
  %v1436 = vpop.permute.xlu0 %1435
  %1437 = vrot.lane.b32.xlu0 %v150, 6
  %v1438 = vpop.permute.xlu0 %1437
  %1439 = vrot.lane.b32.xlu0 %v151, 6
  %v1440 = vpop.permute.xlu0 %1439
  %1441 = vrot.lane.b32.xlu0 %v152, 6
  %v1442 = vpop.permute.xlu0 %1441
  %1443 = vrot.lane.b32.xlu0 %v153, 6
  %v1444 = vpop.permute.xlu0 %1443
  %1445 = vrot.lane.b32.xlu0 %v154, 6
  %v1446 = vpop.permute.xlu0 %1445
  %1447 = vrot.lane.b32.xlu0 %v155, 6
  %v1448 = vpop.permute.xlu0 %1447
  %1449 = vrot.lane.b32.xlu0 %v156, 6
  %v1450 = vpop.permute.xlu0 %1449
  %1451 = vrot.lane.b32.xlu0 %v157, 6
  %v1452 = vpop.permute.xlu0 %1451
  %1453 = vrot.lane.b32.xlu0 %v158, 6
  %v1454 = vpop.permute.xlu0 %1453
  %1455 = vrot.lane.b32.xlu0 %v159, 6
  %v1456 = vpop.permute.xlu0 %1455
  %1457 = vrot.lane.b32.xlu0 %v160, 6
  %v1458 = vpop.permute.xlu0 %1457
  %1459 = vrot.lane.b32.xlu0 %v161, 6
  %v1460 = vpop.permute.xlu0 %1459
  %1461 = vrot.lane.b32.xlu0 %v162, 6
  %v1462 = vpop.permute.xlu0 %1461
  %1463 = vrot.lane.b32.xlu0 %v163, 6
  %v1464 = vpop.permute.xlu0 %1463
  %1465 = vrot.lane.b32.xlu0 %v164, 6
  %v1466 = vpop.permute.xlu0 %1465
  %1467 = vrot.lane.b32.xlu0 %v165, 6
  %v1468 = vpop.permute.xlu0 %1467
  %1469 = vrot.lane.b32.xlu0 %v166, 6
  %v1470 = vpop.permute.xlu0 %1469
  %1471 = vrot.lane.b32.xlu0 %v167, 6
  %v1472 = vpop.permute.xlu0 %1471
  %1473 = vrot.lane.b32.xlu0 %v168, 6
  %v1474 = vpop.permute.xlu0 %1473
  %1475 = vrot.lane.b32.xlu0 %v169, 6
  %v1476 = vpop.permute.xlu0 %1475
  %1477 = vrot.lane.b32.xlu0 %v170, 6
  %v1478 = vpop.permute.xlu0 %1477
  %1479 = vrot.lane.b32.xlu0 %v171, 6
  %v1480 = vpop.permute.xlu0 %1479
  %1481 = vrot.lane.b32.xlu0 %v172, 6
  %v1482 = vpop.permute.xlu0 %1481
  %1483 = vrot.lane.b32.xlu0 %v173, 6
  %v1484 = vpop.permute.xlu0 %1483
  %1485 = vrot.lane.b32.xlu0 %v174, 6
  %v1486 = vpop.permute.xlu0 %1485
  %1487 = vrot.lane.b32.xlu0 %v175, 6
  %v1488 = vpop.permute.xlu0 %1487
  %1489 = vrot.lane.b32.xlu0 %v176, 6
  %v1490 = vpop.permute.xlu0 %1489
  %1491 = vrot.lane.b32.xlu0 %v177, 6
  %v1492 = vpop.permute.xlu0 %1491
  %1493 = vrot.lane.b32.xlu0 %v178, 6
  %v1494 = vpop.permute.xlu0 %1493
  %1495 = vrot.lane.b32.xlu0 %v179, 6
  %v1496 = vpop.permute.xlu0 %1495
  %1497 = vrot.lane.b32.xlu0 %v180, 6
  %v1498 = vpop.permute.xlu0 %1497
  %1499 = vrot.lane.b32.xlu0 %v181, 6
  %v1500 = vpop.permute.xlu0 %1499
  %1501 = vrot.lane.b32.xlu0 %v182, 6
  %v1502 = vpop.permute.xlu0 %1501
  %1503 = vrot.lane.b32.xlu0 %v183, 6
  %v1504 = vpop.permute.xlu0 %1503
  %1505 = vrot.lane.b32.xlu0 %v184, 6
  %v1506 = vpop.permute.xlu0 %1505
  %1507 = vrot.lane.b32.xlu0 %v185, 6
  %v1508 = vpop.permute.xlu0 %1507
  %1509 = vrot.lane.b32.xlu0 %v186, 6
  %v1510 = vpop.permute.xlu0 %1509
  %1511 = vrot.lane.b32.xlu0 %v187, 6
  %v1512 = vpop.permute.xlu0 %1511
  %1513 = vrot.lane.b32.xlu0 %v188, 6
  %v1514 = vpop.permute.xlu0 %1513
  %1515 = vrot.lane.b32.xlu0 %v189, 6
  %v1516 = vpop.permute.xlu0 %1515
  %1517 = vrot.lane.b32.xlu0 %v190, 6
  %v1518 = vpop.permute.xlu0 %1517
  %1519 = vrot.lane.b32.xlu0 %v191, 6
  %v1520 = vpop.permute.xlu0 %1519
  %1521 = vrot.lane.b32.xlu0 %v192, 6
  %v1522 = vpop.permute.xlu0 %1521
  %1523 = vrot.lane.b32.xlu0 %v193, 6
  %v1524 = vpop.permute.xlu0 %1523
  %1525 = vrot.lane.b32.xlu0 %v194, 6
  %v1526 = vpop.permute.xlu0 %1525
  %v1587 = vrot.slane %v193, 1
  %v1588 = vsel %vm255, %v1039, %v1587
  %v1589 = vrot.slane %v194, 1
  %v1590 = vsel %vm255, %v1587, %v1589
  %1591 = vrot.lane.b32.xlu0 %v266, 7
  %v1592 = vpop.permute.xlu0 %1591
  %1593 = vrot.lane.b32.xlu0 %v268, 7
  %v1594 = vpop.permute.xlu0 %1593
  %1595 = vrot.lane.b32.xlu0 %v270, 7
  %v1596 = vpop.permute.xlu0 %1595
  %1597 = vrot.lane.b32.xlu0 %v272, 7
  %v1598 = vpop.permute.xlu0 %1597
  %1599 = vrot.lane.b32.xlu0 %v274, 7
  %v1600 = vpop.permute.xlu0 %1599
  %1601 = vrot.lane.b32.xlu0 %v276, 7
  %v1602 = vpop.permute.xlu0 %1601
  %1603 = vrot.lane.b32.xlu0 %v278, 7
  %v1604 = vpop.permute.xlu0 %1603
  %1605 = vrot.lane.b32.xlu0 %v280, 7
  %v1606 = vpop.permute.xlu0 %1605
  %1607 = vrot.lane.b32.xlu0 %v282, 7
  %v1608 = vpop.permute.xlu0 %1607
  %1609 = vrot.lane.b32.xlu0 %v284, 7
  %v1610 = vpop.permute.xlu0 %1609
  %1611 = vrot.lane.b32.xlu0 %v286, 7
  %v1612 = vpop.permute.xlu0 %1611
  %1613 = vrot.lane.b32.xlu0 %v288, 7
  %v1614 = vpop.permute.xlu0 %1613
  %1615 = vrot.lane.b32.xlu0 %v290, 7
  %v1616 = vpop.permute.xlu0 %1615
  %1617 = vrot.lane.b32.xlu0 %v292, 7
  %v1618 = vpop.permute.xlu0 %1617
  %1619 = vrot.lane.b32.xlu0 %v294, 7
  %v1620 = vpop.permute.xlu0 %1619
  %1621 = vrot.lane.b32.xlu0 %v296, 7
  %v1622 = vpop.permute.xlu0 %1621
  %1623 = vrot.lane.b32.xlu0 %v298, 7
  %v1624 = vpop.permute.xlu0 %1623
  %1625 = vrot.lane.b32.xlu0 %v300, 7
  %v1626 = vpop.permute.xlu0 %1625
  %1627 = vrot.lane.b32.xlu0 %v302, 7
  %v1628 = vpop.permute.xlu0 %1627
  %1629 = vrot.lane.b32.xlu0 %v304, 7
  %v1630 = vpop.permute.xlu0 %1629
  %1631 = vrot.lane.b32.xlu0 %v306, 7
  %v1632 = vpop.permute.xlu0 %1631
  %1633 = vrot.lane.b32.xlu0 %v308, 7
  %v1634 = vpop.permute.xlu0 %1633
  %1635 = vrot.lane.b32.xlu0 %v310, 7
  %v1636 = vpop.permute.xlu0 %1635
  %1637 = vrot.lane.b32.xlu0 %v312, 7
  %v1638 = vpop.permute.xlu0 %1637
  %1639 = vrot.lane.b32.xlu0 %v314, 7
  %v1640 = vpop.permute.xlu0 %1639
  %1641 = vrot.lane.b32.xlu0 %v316, 7
  %v1642 = vpop.permute.xlu0 %1641
  %1643 = vrot.lane.b32.xlu0 %v318, 7
  %v1644 = vpop.permute.xlu0 %1643
  %1645 = vrot.lane.b32.xlu0 %v320, 7
  %v1646 = vpop.permute.xlu0 %1645
  %1647 = vrot.lane.b32.xlu0 %v322, 7
  %v1648 = vpop.permute.xlu0 %1647
  %1649 = vrot.lane.b32.xlu0 %v324, 7
  %v1650 = vpop.permute.xlu0 %1649
  %1651 = vrot.lane.b32.xlu0 %v326, 7
  %v1652 = vpop.permute.xlu0 %1651
  %1653 = vrot.lane.b32.xlu0 %v328, 7
  %v1654 = vpop.permute.xlu0 %1653
  %1655 = vrot.lane.b32.xlu0 %v330, 7
  %v1656 = vpop.permute.xlu0 %1655
  %1657 = vrot.lane.b32.xlu0 %v332, 7
  %v1658 = vpop.permute.xlu0 %1657
  %1659 = vrot.lane.b32.xlu0 %v334, 7
  %v1660 = vpop.permute.xlu0 %1659
  %1661 = vrot.lane.b32.xlu0 %v336, 7
  %v1662 = vpop.permute.xlu0 %1661
  %1663 = vrot.lane.b32.xlu0 %v338, 7
  %v1664 = vpop.permute.xlu0 %1663
  %1665 = vrot.lane.b32.xlu0 %v340, 7
  %v1666 = vpop.permute.xlu0 %1665
  %1667 = vrot.lane.b32.xlu0 %v342, 7
  %v1668 = vpop.permute.xlu0 %1667
  %1669 = vrot.lane.b32.xlu0 %v344, 7
  %v1670 = vpop.permute.xlu0 %1669
  %1671 = vrot.lane.b32.xlu0 %v346, 7
  %v1672 = vpop.permute.xlu0 %1671
  %1673 = vrot.lane.b32.xlu0 %v348, 7
  %v1674 = vpop.permute.xlu0 %1673
  %1675 = vrot.lane.b32.xlu0 %v350, 7
  %v1676 = vpop.permute.xlu0 %1675
  %1677 = vrot.lane.b32.xlu0 %v352, 7
  %v1678 = vpop.permute.xlu0 %1677
  %1679 = vrot.lane.b32.xlu0 %v354, 7
  %v1680 = vpop.permute.xlu0 %1679
  %1681 = vrot.lane.b32.xlu0 %v356, 7
  %v1682 = vpop.permute.xlu0 %1681
  %1683 = vrot.lane.b32.xlu0 %v358, 7
  %v1684 = vpop.permute.xlu0 %1683
  %1685 = vrot.lane.b32.xlu0 %v360, 7
  %v1686 = vpop.permute.xlu0 %1685
  %1687 = vrot.lane.b32.xlu0 %v362, 7
  %v1688 = vpop.permute.xlu0 %1687
  %1689 = vrot.lane.b32.xlu0 %v364, 7
  %v1690 = vpop.permute.xlu0 %1689
  %1691 = vrot.lane.b32.xlu0 %v366, 7
  %v1692 = vpop.permute.xlu0 %1691
  %1693 = vrot.lane.b32.xlu0 %v368, 7
  %v1694 = vpop.permute.xlu0 %1693
  %1695 = vrot.lane.b32.xlu0 %v370, 7
  %v1696 = vpop.permute.xlu0 %1695
  %1697 = vrot.lane.b32.xlu0 %v372, 7
  %v1698 = vpop.permute.xlu0 %1697
  %1699 = vrot.lane.b32.xlu0 %v374, 7
  %v1700 = vpop.permute.xlu0 %1699
  %1701 = vrot.lane.b32.xlu0 %v1038, 7
  %v1702 = vpop.permute.xlu0 %1701
  %1703 = vrot.lane.b32.xlu0 %v1040, 7
  %v1704 = vpop.permute.xlu0 %1703
  %1705 = vrot.lane.b32.xlu0 %v1588, 7
  %v1706 = vpop.permute.xlu0 %1705
  %1707 = vrot.lane.b32.xlu0 %v1590, 7
  %v1708 = vpop.permute.xlu0 %1707
  %1709 = vrot.lane.b32.xlu0 %v1589, 7
  %v1710 = vpop.permute.xlu0 %1709
  %v1771 = vrot.slane %v193, 2
  %v1772 = vsel %vm555, %v1223, %v1771
  %v1773 = vrot.slane %v194, 2
  %v1774 = vsel %vm555, %v1771, %v1773
  %1775 = vrot.lane.b32.xlu0 %v566, 8
  %v1776 = vpop.permute.xlu0 %1775
  %1777 = vrot.lane.b32.xlu0 %v568, 8
  %v1778 = vpop.permute.xlu0 %1777
  %1779 = vrot.lane.b32.xlu0 %v570, 8
  %v1780 = vpop.permute.xlu0 %1779
  %1781 = vrot.lane.b32.xlu0 %v572, 8
  %v1782 = vpop.permute.xlu0 %1781
  %1783 = vrot.lane.b32.xlu0 %v574, 8
  %v1784 = vpop.permute.xlu0 %1783
  %1785 = vrot.lane.b32.xlu0 %v576, 8
  %v1786 = vpop.permute.xlu0 %1785
  %1787 = vrot.lane.b32.xlu0 %v578, 8
  %v1788 = vpop.permute.xlu0 %1787
  %1789 = vrot.lane.b32.xlu0 %v580, 8
  %v1790 = vpop.permute.xlu0 %1789
  %1791 = vrot.lane.b32.xlu0 %v582, 8
  %v1792 = vpop.permute.xlu0 %1791
  %1793 = vrot.lane.b32.xlu0 %v584, 8
  %v1794 = vpop.permute.xlu0 %1793
  %1795 = vrot.lane.b32.xlu0 %v586, 8
  %v1796 = vpop.permute.xlu0 %1795
  %1797 = vrot.lane.b32.xlu0 %v588, 8
  %v1798 = vpop.permute.xlu0 %1797
  %1799 = vrot.lane.b32.xlu0 %v590, 8
  %v1800 = vpop.permute.xlu0 %1799
  %1801 = vrot.lane.b32.xlu0 %v592, 8
  %v1802 = vpop.permute.xlu0 %1801
  %1803 = vrot.lane.b32.xlu0 %v594, 8
  %v1804 = vpop.permute.xlu0 %1803
  %1805 = vrot.lane.b32.xlu0 %v596, 8
  %v1806 = vpop.permute.xlu0 %1805
  %1807 = vrot.lane.b32.xlu0 %v598, 8
  %v1808 = vpop.permute.xlu0 %1807
  %1809 = vrot.lane.b32.xlu0 %v600, 8
  %v1810 = vpop.permute.xlu0 %1809
  %1811 = vrot.lane.b32.xlu0 %v602, 8
  %v1812 = vpop.permute.xlu0 %1811
  %1813 = vrot.lane.b32.xlu0 %v604, 8
  %v1814 = vpop.permute.xlu0 %1813
  %1815 = vrot.lane.b32.xlu0 %v606, 8
  %v1816 = vpop.permute.xlu0 %1815
  %1817 = vrot.lane.b32.xlu0 %v608, 8
  %v1818 = vpop.permute.xlu0 %1817
  %1819 = vrot.lane.b32.xlu0 %v610, 8
  %v1820 = vpop.permute.xlu0 %1819
  %1821 = vrot.lane.b32.xlu0 %v612, 8
  %v1822 = vpop.permute.xlu0 %1821
  %1823 = vrot.lane.b32.xlu0 %v614, 8
  %v1824 = vpop.permute.xlu0 %1823
  %1825 = vrot.lane.b32.xlu0 %v616, 8
  %v1826 = vpop.permute.xlu0 %1825
  %1827 = vrot.lane.b32.xlu0 %v618, 8
  %v1828 = vpop.permute.xlu0 %1827
  %1829 = vrot.lane.b32.xlu0 %v620, 8
  %v1830 = vpop.permute.xlu0 %1829
  %1831 = vrot.lane.b32.xlu0 %v622, 8
  %v1832 = vpop.permute.xlu0 %1831
  %1833 = vrot.lane.b32.xlu0 %v624, 8
  %v1834 = vpop.permute.xlu0 %1833
  %1835 = vrot.lane.b32.xlu0 %v626, 8
  %v1836 = vpop.permute.xlu0 %1835
  %1837 = vrot.lane.b32.xlu0 %v628, 8
  %v1838 = vpop.permute.xlu0 %1837
  %1839 = vrot.lane.b32.xlu0 %v630, 8
  %v1840 = vpop.permute.xlu0 %1839
  %1841 = vrot.lane.b32.xlu0 %v632, 8
  %v1842 = vpop.permute.xlu0 %1841
  %1843 = vrot.lane.b32.xlu0 %v634, 8
  %v1844 = vpop.permute.xlu0 %1843
  %1845 = vrot.lane.b32.xlu0 %v636, 8
  %v1846 = vpop.permute.xlu0 %1845
  %1847 = vrot.lane.b32.xlu0 %v638, 8
  %v1848 = vpop.permute.xlu0 %1847
  %1849 = vrot.lane.b32.xlu0 %v640, 8
  %v1850 = vpop.permute.xlu0 %1849
  %1851 = vrot.lane.b32.xlu0 %v642, 8
  %v1852 = vpop.permute.xlu0 %1851
  %1853 = vrot.lane.b32.xlu0 %v644, 8
  %v1854 = vpop.permute.xlu0 %1853
  %1855 = vrot.lane.b32.xlu0 %v646, 8
  %v1856 = vpop.permute.xlu0 %1855
  %1857 = vrot.lane.b32.xlu0 %v648, 8
  %v1858 = vpop.permute.xlu0 %1857
  %1859 = vrot.lane.b32.xlu0 %v650, 8
  %v1860 = vpop.permute.xlu0 %1859
  %1861 = vrot.lane.b32.xlu0 %v652, 8
  %v1862 = vpop.permute.xlu0 %1861
  %1863 = vrot.lane.b32.xlu0 %v654, 8
  %v1864 = vpop.permute.xlu0 %1863
  %1865 = vrot.lane.b32.xlu0 %v656, 8
  %v1866 = vpop.permute.xlu0 %1865
  %1867 = vrot.lane.b32.xlu0 %v658, 8
  %v1868 = vpop.permute.xlu0 %1867
  %1869 = vrot.lane.b32.xlu0 %v660, 8
  %v1870 = vpop.permute.xlu0 %1869
  %1871 = vrot.lane.b32.xlu0 %v662, 8
  %v1872 = vpop.permute.xlu0 %1871
  %1873 = vrot.lane.b32.xlu0 %v664, 8
  %v1874 = vpop.permute.xlu0 %1873
  %1875 = vrot.lane.b32.xlu0 %v666, 8
  %v1876 = vpop.permute.xlu0 %1875
  %1877 = vrot.lane.b32.xlu0 %v668, 8
  %v1878 = vpop.permute.xlu0 %1877
  %1879 = vrot.lane.b32.xlu0 %v670, 8
  %v1880 = vpop.permute.xlu0 %1879
  %1881 = vrot.lane.b32.xlu0 %v672, 8
  %v1882 = vpop.permute.xlu0 %1881
  %1883 = vrot.lane.b32.xlu0 %v674, 8
  %v1884 = vpop.permute.xlu0 %1883
  %1885 = vrot.lane.b32.xlu0 %v1222, 8
  %v1886 = vpop.permute.xlu0 %1885
  %1887 = vrot.lane.b32.xlu0 %v1224, 8
  %v1888 = vpop.permute.xlu0 %1887
  %1889 = vrot.lane.b32.xlu0 %v1772, 8
  %v1890 = vpop.permute.xlu0 %1889
  %1891 = vrot.lane.b32.xlu0 %v1774, 8
  %v1892 = vpop.permute.xlu0 %1891
  %1893 = vrot.lane.b32.xlu0 %v1773, 8
  %v1894 = vpop.permute.xlu0 %1893
  %vm1955 = vcmask 7168
  %v1956 = vsel %vm1955, %v131, %v376
  %v1957 = vsel %vm1955, %v132, %v378
  %v1958 = vsel %vm1955, %v133, %v380
  %v1959 = vsel %vm1955, %v134, %v382
  %v1960 = vsel %vm1955, %v135, %v384
  %v1961 = vsel %vm1955, %v136, %v386
  %v1962 = vsel %vm1955, %v137, %v388
  %v1963 = vsel %vm1955, %v138, %v390
  %v1964 = vsel %vm1955, %v139, %v392
  %v1965 = vsel %vm1955, %v140, %v394
  %v1966 = vsel %vm1955, %v141, %v396
  %v1967 = vsel %vm1955, %v142, %v398
  %v1968 = vsel %vm1955, %v143, %v400
  %v1969 = vsel %vm1955, %v144, %v402
  %v1970 = vsel %vm1955, %v145, %v404
  %v1971 = vsel %vm1955, %v146, %v406
  %v1972 = vsel %vm1955, %v147, %v408
  %v1973 = vsel %vm1955, %v148, %v410
  %v1974 = vsel %vm1955, %v149, %v412
  %v1975 = vsel %vm1955, %v150, %v414
  %v1976 = vsel %vm1955, %v151, %v416
  %v1977 = vsel %vm1955, %v152, %v418
  %v1978 = vsel %vm1955, %v153, %v420
  %v1979 = vsel %vm1955, %v154, %v422
  %v1980 = vsel %vm1955, %v155, %v424
  %v1981 = vsel %vm1955, %v156, %v426
  %v1982 = vsel %vm1955, %v157, %v428
  %v1983 = vsel %vm1955, %v158, %v430
  %v1984 = vsel %vm1955, %v159, %v432
  %v1985 = vsel %vm1955, %v160, %v434
  %v1986 = vsel %vm1955, %v161, %v436
  %v1987 = vsel %vm1955, %v162, %v438
  %v1988 = vsel %vm1955, %v163, %v440
  %v1989 = vsel %vm1955, %v164, %v442
  %v1990 = vsel %vm1955, %v165, %v444
  %v1991 = vsel %vm1955, %v166, %v446
  %v1992 = vsel %vm1955, %v167, %v448
  %v1993 = vsel %vm1955, %v168, %v450
  %v1994 = vsel %vm1955, %v169, %v452
  %v1995 = vsel %vm1955, %v170, %v454
  %v1996 = vsel %vm1955, %v171, %v456
  %v1997 = vsel %vm1955, %v172, %v458
  %v1998 = vsel %vm1955, %v173, %v460
  %v1999 = vsel %vm1955, %v174, %v462
  %v2000 = vsel %vm1955, %v175, %v464
  %v2001 = vsel %vm1955, %v176, %v466
  %v2002 = vsel %vm1955, %v177, %v468
  %v2003 = vsel %vm1955, %v178, %v470
  %v2004 = vsel %vm1955, %v179, %v472
  %v2005 = vsel %vm1955, %v180, %v474
  %v2006 = vsel %vm1955, %v181, %v476
  %v2007 = vsel %vm1955, %v182, %v478
  %v2008 = vsel %vm1955, %v183, %v480
  %v2009 = vsel %vm1955, %v184, %v482
  %v2010 = vsel %vm1955, %v185, %v484
  %v2011 = vsel %vm1955, %v186, %v486
  %v2012 = vsel %vm1955, %v187, %v488
  %v2013 = vsel %vm1955, %v188, %v490
  %v2014 = vsel %vm1955, %v189, %v492
  %v2015 = vsel %vm1955, %v190, %v494
  %vm2016 = vcmask 15360
  %v2017 = vsel %vm2016, %v1956, %v676
  %v2018 = vsel %vm2016, %v1957, %v678
  %v2019 = vsel %vm2016, %v1958, %v680
  %v2020 = vsel %vm2016, %v1959, %v682
  %v2021 = vsel %vm2016, %v1960, %v684
  %v2022 = vsel %vm2016, %v1961, %v686
  %v2023 = vsel %vm2016, %v1962, %v688
  %v2024 = vsel %vm2016, %v1963, %v690
  %v2025 = vsel %vm2016, %v1964, %v692
  %v2026 = vsel %vm2016, %v1965, %v694
  %v2027 = vsel %vm2016, %v1966, %v696
  %v2028 = vsel %vm2016, %v1967, %v698
  %v2029 = vsel %vm2016, %v1968, %v700
  %v2030 = vsel %vm2016, %v1969, %v702
  %v2031 = vsel %vm2016, %v1970, %v704
  %v2032 = vsel %vm2016, %v1971, %v706
  %v2033 = vsel %vm2016, %v1972, %v708
  %v2034 = vsel %vm2016, %v1973, %v710
  %v2035 = vsel %vm2016, %v1974, %v712
  %v2036 = vsel %vm2016, %v1975, %v714
  %v2037 = vsel %vm2016, %v1976, %v716
  %v2038 = vsel %vm2016, %v1977, %v718
  %v2039 = vsel %vm2016, %v1978, %v720
  %v2040 = vsel %vm2016, %v1979, %v722
  %v2041 = vsel %vm2016, %v1980, %v724
  %v2042 = vsel %vm2016, %v1981, %v726
  %v2043 = vsel %vm2016, %v1982, %v728
  %v2044 = vsel %vm2016, %v1983, %v730
  %v2045 = vsel %vm2016, %v1984, %v732
  %v2046 = vsel %vm2016, %v1985, %v734
  %v2047 = vsel %vm2016, %v1986, %v736
  %v2048 = vsel %vm2016, %v1987, %v738
  %v2049 = vsel %vm2016, %v1988, %v740
  %v2050 = vsel %vm2016, %v1989, %v742
  %v2051 = vsel %vm2016, %v1990, %v744
  %v2052 = vsel %vm2016, %v1991, %v746
  %v2053 = vsel %vm2016, %v1992, %v748
  %v2054 = vsel %vm2016, %v1993, %v750
  %v2055 = vsel %vm2016, %v1994, %v752
  %v2056 = vsel %vm2016, %v1995, %v754
  %v2057 = vsel %vm2016, %v1996, %v756
  %v2058 = vsel %vm2016, %v1997, %v758
  %v2059 = vsel %vm2016, %v1998, %v760
  %v2060 = vsel %vm2016, %v1999, %v762
  %v2061 = vsel %vm2016, %v2000, %v764
  %v2062 = vsel %vm2016, %v2001, %v766
  %v2063 = vsel %vm2016, %v2002, %v768
  %v2064 = vsel %vm2016, %v2003, %v770
  %v2065 = vsel %vm2016, %v2004, %v772
  %v2066 = vsel %vm2016, %v2005, %v774
  %v2067 = vsel %vm2016, %v2006, %v776
  %v2068 = vsel %vm2016, %v2007, %v778
  %v2069 = vsel %vm2016, %v2008, %v780
  %v2070 = vsel %vm2016, %v2009, %v782
  %v2071 = vsel %vm2016, %v2010, %v784
  %v2072 = vsel %vm2016, %v2011, %v786
  %v2073 = vsel %vm2016, %v2012, %v788
  %v2074 = vsel %vm2016, %v2013, %v790
  %v2075 = vsel %vm2016, %v2014, %v792
  %v2076 = vsel %vm2016, %v2015, %v794
  %vm2077 = vcmask 23552
  %v2078 = vsel %vm2077, %v2017, %v858
  %v2079 = vsel %vm2077, %v2018, %v860
  %v2080 = vsel %vm2077, %v2019, %v862
  %v2081 = vsel %vm2077, %v2020, %v864
  %v2082 = vsel %vm2077, %v2021, %v866
  %v2083 = vsel %vm2077, %v2022, %v868
  %v2084 = vsel %vm2077, %v2023, %v870
  %v2085 = vsel %vm2077, %v2024, %v872
  %v2086 = vsel %vm2077, %v2025, %v874
  %v2087 = vsel %vm2077, %v2026, %v876
  %v2088 = vsel %vm2077, %v2027, %v878
  %v2089 = vsel %vm2077, %v2028, %v880
  %v2090 = vsel %vm2077, %v2029, %v882
  %v2091 = vsel %vm2077, %v2030, %v884
  %v2092 = vsel %vm2077, %v2031, %v886
  %v2093 = vsel %vm2077, %v2032, %v888
  %v2094 = vsel %vm2077, %v2033, %v890
  %v2095 = vsel %vm2077, %v2034, %v892
  %v2096 = vsel %vm2077, %v2035, %v894
  %v2097 = vsel %vm2077, %v2036, %v896
  %v2098 = vsel %vm2077, %v2037, %v898
  %v2099 = vsel %vm2077, %v2038, %v900
  %v2100 = vsel %vm2077, %v2039, %v902
  %v2101 = vsel %vm2077, %v2040, %v904
  %v2102 = vsel %vm2077, %v2041, %v906
  %v2103 = vsel %vm2077, %v2042, %v908
  %v2104 = vsel %vm2077, %v2043, %v910
  %v2105 = vsel %vm2077, %v2044, %v912
  %v2106 = vsel %vm2077, %v2045, %v914
  %v2107 = vsel %vm2077, %v2046, %v916
  %v2108 = vsel %vm2077, %v2047, %v918
  %v2109 = vsel %vm2077, %v2048, %v920
  %v2110 = vsel %vm2077, %v2049, %v922
  %v2111 = vsel %vm2077, %v2050, %v924
  %v2112 = vsel %vm2077, %v2051, %v926
  %v2113 = vsel %vm2077, %v2052, %v928
  %v2114 = vsel %vm2077, %v2053, %v930
  %v2115 = vsel %vm2077, %v2054, %v932
  %v2116 = vsel %vm2077, %v2055, %v934
  %v2117 = vsel %vm2077, %v2056, %v936
  %v2118 = vsel %vm2077, %v2057, %v938
  %v2119 = vsel %vm2077, %v2058, %v940
  %v2120 = vsel %vm2077, %v2059, %v942
  %v2121 = vsel %vm2077, %v2060, %v944
  %v2122 = vsel %vm2077, %v2061, %v946
  %v2123 = vsel %vm2077, %v2062, %v948
  %v2124 = vsel %vm2077, %v2063, %v950
  %v2125 = vsel %vm2077, %v2064, %v952
  %v2126 = vsel %vm2077, %v2065, %v954
  %v2127 = vsel %vm2077, %v2066, %v956
  %v2128 = vsel %vm2077, %v2067, %v958
  %v2129 = vsel %vm2077, %v2068, %v960
  %v2130 = vsel %vm2077, %v2069, %v962
  %v2131 = vsel %vm2077, %v2070, %v964
  %v2132 = vsel %vm2077, %v2071, %v966
  %v2133 = vsel %vm2077, %v2072, %v968
  %v2134 = vsel %vm2077, %v2073, %v970
  %v2135 = vsel %vm2077, %v2074, %v972
  %v2136 = vsel %vm2077, %v2075, %v974
  %v2137 = vsel %vm2077, %v2076, %v976
  %vm2138 = vcmask 31744
  %v2139 = vsel %vm2138, %v2078, %v1042
  %v2140 = vsel %vm2138, %v2079, %v1044
  %v2141 = vsel %vm2138, %v2080, %v1046
  %v2142 = vsel %vm2138, %v2081, %v1048
  %v2143 = vsel %vm2138, %v2082, %v1050
  %v2144 = vsel %vm2138, %v2083, %v1052
  %v2145 = vsel %vm2138, %v2084, %v1054
  %v2146 = vsel %vm2138, %v2085, %v1056
  %v2147 = vsel %vm2138, %v2086, %v1058
  %v2148 = vsel %vm2138, %v2087, %v1060
  %v2149 = vsel %vm2138, %v2088, %v1062
  %v2150 = vsel %vm2138, %v2089, %v1064
  %v2151 = vsel %vm2138, %v2090, %v1066
  %v2152 = vsel %vm2138, %v2091, %v1068
  %v2153 = vsel %vm2138, %v2092, %v1070
  %v2154 = vsel %vm2138, %v2093, %v1072
  %v2155 = vsel %vm2138, %v2094, %v1074
  %v2156 = vsel %vm2138, %v2095, %v1076
  %v2157 = vsel %vm2138, %v2096, %v1078
  %v2158 = vsel %vm2138, %v2097, %v1080
  %v2159 = vsel %vm2138, %v2098, %v1082
  %v2160 = vsel %vm2138, %v2099, %v1084
  %v2161 = vsel %vm2138, %v2100, %v1086
  %v2162 = vsel %vm2138, %v2101, %v1088
  %v2163 = vsel %vm2138, %v2102, %v1090
  %v2164 = vsel %vm2138, %v2103, %v1092
  %v2165 = vsel %vm2138, %v2104, %v1094
  %v2166 = vsel %vm2138, %v2105, %v1096
  %v2167 = vsel %vm2138, %v2106, %v1098
  %v2168 = vsel %vm2138, %v2107, %v1100
  %v2169 = vsel %vm2138, %v2108, %v1102
  %v2170 = vsel %vm2138, %v2109, %v1104
  %v2171 = vsel %vm2138, %v2110, %v1106
  %v2172 = vsel %vm2138, %v2111, %v1108
  %v2173 = vsel %vm2138, %v2112, %v1110
  %v2174 = vsel %vm2138, %v2113, %v1112
  %v2175 = vsel %vm2138, %v2114, %v1114
  %v2176 = vsel %vm2138, %v2115, %v1116
  %v2177 = vsel %vm2138, %v2116, %v1118
  %v2178 = vsel %vm2138, %v2117, %v1120
  %v2179 = vsel %vm2138, %v2118, %v1122
  %v2180 = vsel %vm2138, %v2119, %v1124
  %v2181 = vsel %vm2138, %v2120, %v1126
  %v2182 = vsel %vm2138, %v2121, %v1128
  %v2183 = vsel %vm2138, %v2122, %v1130
  %v2184 = vsel %vm2138, %v2123, %v1132
  %v2185 = vsel %vm2138, %v2124, %v1134
  %v2186 = vsel %vm2138, %v2125, %v1136
  %v2187 = vsel %vm2138, %v2126, %v1138
  %v2188 = vsel %vm2138, %v2127, %v1140
  %v2189 = vsel %vm2138, %v2128, %v1142
  %v2190 = vsel %vm2138, %v2129, %v1144
  %v2191 = vsel %vm2138, %v2130, %v1146
  %v2192 = vsel %vm2138, %v2131, %v1148
  %v2193 = vsel %vm2138, %v2132, %v1150
  %v2194 = vsel %vm2138, %v2133, %v1152
  %v2195 = vsel %vm2138, %v2134, %v1154
  %v2196 = vsel %vm2138, %v2135, %v1156
  %v2197 = vsel %vm2138, %v2136, %v1158
  %v2198 = vsel %vm2138, %v2137, %v1160
  %vm2199 = vcmask 39936
  %v2200 = vsel %vm2199, %v2139, %v1226
  %v2201 = vsel %vm2199, %v2140, %v1228
  %v2202 = vsel %vm2199, %v2141, %v1230
  %v2203 = vsel %vm2199, %v2142, %v1232
  %v2204 = vsel %vm2199, %v2143, %v1234
  %v2205 = vsel %vm2199, %v2144, %v1236
  %v2206 = vsel %vm2199, %v2145, %v1238
  %v2207 = vsel %vm2199, %v2146, %v1240
  %v2208 = vsel %vm2199, %v2147, %v1242
  %v2209 = vsel %vm2199, %v2148, %v1244
  %v2210 = vsel %vm2199, %v2149, %v1246
  %v2211 = vsel %vm2199, %v2150, %v1248
  %v2212 = vsel %vm2199, %v2151, %v1250
  %v2213 = vsel %vm2199, %v2152, %v1252
  %v2214 = vsel %vm2199, %v2153, %v1254
  %v2215 = vsel %vm2199, %v2154, %v1256
  %v2216 = vsel %vm2199, %v2155, %v1258
  %v2217 = vsel %vm2199, %v2156, %v1260
  %v2218 = vsel %vm2199, %v2157, %v1262
  %v2219 = vsel %vm2199, %v2158, %v1264
  %v2220 = vsel %vm2199, %v2159, %v1266
  %v2221 = vsel %vm2199, %v2160, %v1268
  %v2222 = vsel %vm2199, %v2161, %v1270
  %v2223 = vsel %vm2199, %v2162, %v1272
  %v2224 = vsel %vm2199, %v2163, %v1274
  %v2225 = vsel %vm2199, %v2164, %v1276
  %v2226 = vsel %vm2199, %v2165, %v1278
  %v2227 = vsel %vm2199, %v2166, %v1280
  %v2228 = vsel %vm2199, %v2167, %v1282
  %v2229 = vsel %vm2199, %v2168, %v1284
  %v2230 = vsel %vm2199, %v2169, %v1286
  %v2231 = vsel %vm2199, %v2170, %v1288
  %v2232 = vsel %vm2199, %v2171, %v1290
  %v2233 = vsel %vm2199, %v2172, %v1292
  %v2234 = vsel %vm2199, %v2173, %v1294
  %v2235 = vsel %vm2199, %v2174, %v1296
  %v2236 = vsel %vm2199, %v2175, %v1298
  %v2237 = vsel %vm2199, %v2176, %v1300
  %v2238 = vsel %vm2199, %v2177, %v1302
  %v2239 = vsel %vm2199, %v2178, %v1304
  %v2240 = vsel %vm2199, %v2179, %v1306
  %v2241 = vsel %vm2199, %v2180, %v1308
  %v2242 = vsel %vm2199, %v2181, %v1310
  %v2243 = vsel %vm2199, %v2182, %v1312
  %v2244 = vsel %vm2199, %v2183, %v1314
  %v2245 = vsel %vm2199, %v2184, %v1316
  %v2246 = vsel %vm2199, %v2185, %v1318
  %v2247 = vsel %vm2199, %v2186, %v1320
  %v2248 = vsel %vm2199, %v2187, %v1322
  %v2249 = vsel %vm2199, %v2188, %v1324
  %v2250 = vsel %vm2199, %v2189, %v1326
  %v2251 = vsel %vm2199, %v2190, %v1328
  %v2252 = vsel %vm2199, %v2191, %v1330
  %v2253 = vsel %vm2199, %v2192, %v1332
  %v2254 = vsel %vm2199, %v2193, %v1334
  %v2255 = vsel %vm2199, %v2194, %v1336
  %v2256 = vsel %vm2199, %v2195, %v1338
  %v2257 = vsel %vm2199, %v2196, %v1340
  %v2258 = vsel %vm2199, %v2197, %v1342
  %v2259 = vsel %vm2199, %v2198, %v1344
  %vm2260 = vcmask 48128
  %v2261 = vsel %vm2260, %v2200, %v1408
  %v2262 = vsel %vm2260, %v2201, %v1410
  %v2263 = vsel %vm2260, %v2202, %v1412
  %v2264 = vsel %vm2260, %v2203, %v1414
  %v2265 = vsel %vm2260, %v2204, %v1416
  %v2266 = vsel %vm2260, %v2205, %v1418
  %v2267 = vsel %vm2260, %v2206, %v1420
  %v2268 = vsel %vm2260, %v2207, %v1422
  %v2269 = vsel %vm2260, %v2208, %v1424
  %v2270 = vsel %vm2260, %v2209, %v1426
  %v2271 = vsel %vm2260, %v2210, %v1428
  %v2272 = vsel %vm2260, %v2211, %v1430
  %v2273 = vsel %vm2260, %v2212, %v1432
  %v2274 = vsel %vm2260, %v2213, %v1434
  %v2275 = vsel %vm2260, %v2214, %v1436
  %v2276 = vsel %vm2260, %v2215, %v1438
  %v2277 = vsel %vm2260, %v2216, %v1440
  %v2278 = vsel %vm2260, %v2217, %v1442
  %v2279 = vsel %vm2260, %v2218, %v1444
  %v2280 = vsel %vm2260, %v2219, %v1446
  %v2281 = vsel %vm2260, %v2220, %v1448
  %v2282 = vsel %vm2260, %v2221, %v1450
  %v2283 = vsel %vm2260, %v2222, %v1452
  %v2284 = vsel %vm2260, %v2223, %v1454
  %v2285 = vsel %vm2260, %v2224, %v1456
  %v2286 = vsel %vm2260, %v2225, %v1458
  %v2287 = vsel %vm2260, %v2226, %v1460
  %v2288 = vsel %vm2260, %v2227, %v1462
  %v2289 = vsel %vm2260, %v2228, %v1464
  %v2290 = vsel %vm2260, %v2229, %v1466
  %v2291 = vsel %vm2260, %v2230, %v1468
  %v2292 = vsel %vm2260, %v2231, %v1470
  %v2293 = vsel %vm2260, %v2232, %v1472
  %v2294 = vsel %vm2260, %v2233, %v1474
  %v2295 = vsel %vm2260, %v2234, %v1476
  %v2296 = vsel %vm2260, %v2235, %v1478
  %v2297 = vsel %vm2260, %v2236, %v1480
  %v2298 = vsel %vm2260, %v2237, %v1482
  %v2299 = vsel %vm2260, %v2238, %v1484
  %v2300 = vsel %vm2260, %v2239, %v1486
  %v2301 = vsel %vm2260, %v2240, %v1488
  %v2302 = vsel %vm2260, %v2241, %v1490
  %v2303 = vsel %vm2260, %v2242, %v1492
  %v2304 = vsel %vm2260, %v2243, %v1494
  %v2305 = vsel %vm2260, %v2244, %v1496
  %v2306 = vsel %vm2260, %v2245, %v1498
  %v2307 = vsel %vm2260, %v2246, %v1500
  %v2308 = vsel %vm2260, %v2247, %v1502
  %v2309 = vsel %vm2260, %v2248, %v1504
  %v2310 = vsel %vm2260, %v2249, %v1506
  %v2311 = vsel %vm2260, %v2250, %v1508
  %v2312 = vsel %vm2260, %v2251, %v1510
  %v2313 = vsel %vm2260, %v2252, %v1512
  %v2314 = vsel %vm2260, %v2253, %v1514
  %v2315 = vsel %vm2260, %v2254, %v1516
  %v2316 = vsel %vm2260, %v2255, %v1518
  %v2317 = vsel %vm2260, %v2256, %v1520
  %v2318 = vsel %vm2260, %v2257, %v1522
  %v2319 = vsel %vm2260, %v2258, %v1524
  %v2320 = vsel %vm2260, %v2259, %v1526
  %vm2321 = vcmask 56320
  %v2322 = vsel %vm2321, %v2261, %v1592
  %v2323 = vsel %vm2321, %v2262, %v1594
  %v2324 = vsel %vm2321, %v2263, %v1596
  %v2325 = vsel %vm2321, %v2264, %v1598
  %v2326 = vsel %vm2321, %v2265, %v1600
  %v2327 = vsel %vm2321, %v2266, %v1602
  %v2328 = vsel %vm2321, %v2267, %v1604
  %v2329 = vsel %vm2321, %v2268, %v1606
  %v2330 = vsel %vm2321, %v2269, %v1608
  %v2331 = vsel %vm2321, %v2270, %v1610
  %v2332 = vsel %vm2321, %v2271, %v1612
  %v2333 = vsel %vm2321, %v2272, %v1614
  %v2334 = vsel %vm2321, %v2273, %v1616
  %v2335 = vsel %vm2321, %v2274, %v1618
  %v2336 = vsel %vm2321, %v2275, %v1620
  %v2337 = vsel %vm2321, %v2276, %v1622
  %v2338 = vsel %vm2321, %v2277, %v1624
  %v2339 = vsel %vm2321, %v2278, %v1626
  %v2340 = vsel %vm2321, %v2279, %v1628
  %v2341 = vsel %vm2321, %v2280, %v1630
  %v2342 = vsel %vm2321, %v2281, %v1632
  %v2343 = vsel %vm2321, %v2282, %v1634
  %v2344 = vsel %vm2321, %v2283, %v1636
  %v2345 = vsel %vm2321, %v2284, %v1638
  %v2346 = vsel %vm2321, %v2285, %v1640
  %v2347 = vsel %vm2321, %v2286, %v1642
  %v2348 = vsel %vm2321, %v2287, %v1644
  %v2349 = vsel %vm2321, %v2288, %v1646
  %v2350 = vsel %vm2321, %v2289, %v1648
  %v2351 = vsel %vm2321, %v2290, %v1650
  %v2352 = vsel %vm2321, %v2291, %v1652
  %v2353 = vsel %vm2321, %v2292, %v1654
  %v2354 = vsel %vm2321, %v2293, %v1656
  %v2355 = vsel %vm2321, %v2294, %v1658
  %v2356 = vsel %vm2321, %v2295, %v1660
  %v2357 = vsel %vm2321, %v2296, %v1662
  %v2358 = vsel %vm2321, %v2297, %v1664
  %v2359 = vsel %vm2321, %v2298, %v1666
  %v2360 = vsel %vm2321, %v2299, %v1668
  %v2361 = vsel %vm2321, %v2300, %v1670
  %v2362 = vsel %vm2321, %v2301, %v1672
  %v2363 = vsel %vm2321, %v2302, %v1674
  %v2364 = vsel %vm2321, %v2303, %v1676
  %v2365 = vsel %vm2321, %v2304, %v1678
  %v2366 = vsel %vm2321, %v2305, %v1680
  %v2367 = vsel %vm2321, %v2306, %v1682
  %v2368 = vsel %vm2321, %v2307, %v1684
  %v2369 = vsel %vm2321, %v2308, %v1686
  %v2370 = vsel %vm2321, %v2309, %v1688
  %v2371 = vsel %vm2321, %v2310, %v1690
  %v2372 = vsel %vm2321, %v2311, %v1692
  %v2373 = vsel %vm2321, %v2312, %v1694
  %v2374 = vsel %vm2321, %v2313, %v1696
  %v2375 = vsel %vm2321, %v2314, %v1698
  %v2376 = vsel %vm2321, %v2315, %v1700
  %v2377 = vsel %vm2321, %v2316, %v1702
  %v2378 = vsel %vm2321, %v2317, %v1704
  %v2379 = vsel %vm2321, %v2318, %v1706
  %v2380 = vsel %vm2321, %v2319, %v1708
  %v2381 = vsel %vm2321, %v2320, %v1710
  %vm2382 = vcmask 64512
  %v2383 = vsel %vm2382, %v2322, %v1776
  %v2384 = vsel %vm2382, %v2323, %v1778
  %v2385 = vsel %vm2382, %v2324, %v1780
  %v2386 = vsel %vm2382, %v2325, %v1782
  %v2387 = vsel %vm2382, %v2326, %v1784
  %v2388 = vsel %vm2382, %v2327, %v1786
  %v2389 = vsel %vm2382, %v2328, %v1788
  %v2390 = vsel %vm2382, %v2329, %v1790
  %v2391 = vsel %vm2382, %v2330, %v1792
  %v2392 = vsel %vm2382, %v2331, %v1794
  %v2393 = vsel %vm2382, %v2332, %v1796
  %v2394 = vsel %vm2382, %v2333, %v1798
  %v2395 = vsel %vm2382, %v2334, %v1800
  %v2396 = vsel %vm2382, %v2335, %v1802
  %v2397 = vsel %vm2382, %v2336, %v1804
  %v2398 = vsel %vm2382, %v2337, %v1806
  %v2399 = vsel %vm2382, %v2338, %v1808
  %v2400 = vsel %vm2382, %v2339, %v1810
  %v2401 = vsel %vm2382, %v2340, %v1812
  %v2402 = vsel %vm2382, %v2341, %v1814
  %v2403 = vsel %vm2382, %v2342, %v1816
  %v2404 = vsel %vm2382, %v2343, %v1818
  %v2405 = vsel %vm2382, %v2344, %v1820
  %v2406 = vsel %vm2382, %v2345, %v1822
  %v2407 = vsel %vm2382, %v2346, %v1824
  %v2408 = vsel %vm2382, %v2347, %v1826
  %v2409 = vsel %vm2382, %v2348, %v1828
  %v2410 = vsel %vm2382, %v2349, %v1830
  %v2411 = vsel %vm2382, %v2350, %v1832
  %v2412 = vsel %vm2382, %v2351, %v1834
  %v2413 = vsel %vm2382, %v2352, %v1836
  %v2414 = vsel %vm2382, %v2353, %v1838
  %v2415 = vsel %vm2382, %v2354, %v1840
  %v2416 = vsel %vm2382, %v2355, %v1842
  %v2417 = vsel %vm2382, %v2356, %v1844
  %v2418 = vsel %vm2382, %v2357, %v1846
  %v2419 = vsel %vm2382, %v2358, %v1848
  %v2420 = vsel %vm2382, %v2359, %v1850
  %v2421 = vsel %vm2382, %v2360, %v1852
  %v2422 = vsel %vm2382, %v2361, %v1854
  %v2423 = vsel %vm2382, %v2362, %v1856
  %v2424 = vsel %vm2382, %v2363, %v1858
  %v2425 = vsel %vm2382, %v2364, %v1860
  %v2426 = vsel %vm2382, %v2365, %v1862
  %v2427 = vsel %vm2382, %v2366, %v1864
  %v2428 = vsel %vm2382, %v2367, %v1866
  %v2429 = vsel %vm2382, %v2368, %v1868
  %v2430 = vsel %vm2382, %v2369, %v1870
  %v2431 = vsel %vm2382, %v2370, %v1872
  %v2432 = vsel %vm2382, %v2371, %v1874
  %v2433 = vsel %vm2382, %v2372, %v1876
  %v2434 = vsel %vm2382, %v2373, %v1878
  %v2435 = vsel %vm2382, %v2374, %v1880
  %v2436 = vsel %vm2382, %v2375, %v1882
  %v2437 = vsel %vm2382, %v2376, %v1884
  %v2438 = vsel %vm2382, %v2377, %v1886
  %v2439 = vsel %vm2382, %v2378, %v1888
  %v2440 = vsel %vm2382, %v2379, %v1890
  %v2441 = vsel %vm2382, %v2380, %v1892
  %v2442 = vsel %vm2382, %v2381, %v1894
  %v2443 = vpack.c.bf16 %v2384, %v2383
  %v2444 = vpack.c.bf16 %v2386, %v2385
  %v2445 = vpack.c.bf16 %v2388, %v2387
  %v2446 = vpack.c.bf16 %v2390, %v2389
  %v2447 = vpack.c.bf16 %v2392, %v2391
  %v2448 = vpack.c.bf16 %v2394, %v2393
  %v2449 = vpack.c.bf16 %v2396, %v2395
  %v2450 = vpack.c.bf16 %v2398, %v2397
  %v2451 = vpack.c.bf16 %v2400, %v2399
  %v2452 = vpack.c.bf16 %v2402, %v2401
  %v2453 = vpack.c.bf16 %v2404, %v2403
  %v2454 = vpack.c.bf16 %v2406, %v2405
  %v2455 = vpack.c.bf16 %v2408, %v2407
  %v2456 = vpack.c.bf16 %v2410, %v2409
  %v2457 = vpack.c.bf16 %v2412, %v2411
  %v2458 = vpack.c.bf16 %v2414, %v2413
  %v2459 = vpack.c.bf16 %v2416, %v2415
  %v2460 = vpack.c.bf16 %v2418, %v2417
  %v2461 = vpack.c.bf16 %v2420, %v2419
  %v2462 = vpack.c.bf16 %v2422, %v2421
  %v2463 = vpack.c.bf16 %v2424, %v2423
  %v2464 = vpack.c.bf16 %v2426, %v2425
  %v2465 = vpack.c.bf16 %v2428, %v2427
  %v2466 = vpack.c.bf16 %v2430, %v2429
  %v2467 = vpack.c.bf16 %v2432, %v2431
  %v2468 = vpack.c.bf16 %v2434, %v2433
  %v2469 = vpack.c.bf16 %v2436, %v2435
  %v2470 = vpack.c.bf16 %v2438, %v2437
  %v2471 = vpack.c.bf16 %v2440, %v2439
  %v2472 = vpack.c.bf16 %v2442, %v2441
  %v2473 = vld [vmem:[%s3] sm:$0xf]
  %v2474 = vld [vmem:[%s3 + $0x4] sm:$0x1]
  %v2475 = vld [vmem:[%s5] sm:$0x1]
  %v2477 = vlaneseq
  %v2478 = vshrl.u32 %v2477, 7
  %v2479 = vsub.s32 0, %v2478
  %v2480 = vrot.slane %v2475, %v2479
  %v2484 = vunpack.c.l.b16 %v2473
  %v2485 = vunpack.c.l.b16 %v2474
  %v2486 = vpack.c.b16 %v2485, %v2484
  %vm2487 = vcmask 72704
  %v2489 = vsel %vm2487, %v2443, 0
  %v2492 = vsel %vm2487, %v2444, 0
  %v2495 = vsel %vm2487, %v2445, 0
  %v2498 = vsel %vm2487, %v2446, 0
  %v2501 = vsel %vm2487, %v2447, 0
  %v2504 = vsel %vm2487, %v2448, 0
  %v2507 = vsel %vm2487, %v2449, 0
  %v2510 = vsel %vm2487, %v2450, 0
  %v2513 = vsel %vm2487, %v2451, 0
  %v2516 = vsel %vm2487, %v2452, 0
  %v2519 = vsel %vm2487, %v2453, 0
  %v2522 = vsel %vm2487, %v2454, 0
  %v2525 = vsel %vm2487, %v2455, 0
  %v2528 = vsel %vm2487, %v2456, 0
  %v2531 = vsel %vm2487, %v2457, 0
  %v2534 = vsel %vm2487, %v2458, 0
  %v2537 = vsel %vm2487, %v2459, 0
  %v2540 = vsel %vm2487, %v2460, 0
  %v2543 = vsel %vm2487, %v2461, 0
  %v2546 = vsel %vm2487, %v2462, 0
  %v2549 = vsel %vm2487, %v2463, 0
  %v2552 = vsel %vm2487, %v2464, 0
  %v2555 = vsel %vm2487, %v2465, 0
  %v2558 = vsel %vm2487, %v2466, 0
  %v2561 = vsel %vm2487, %v2467, 0
  %v2564 = vsel %vm2487, %v2468, 0
  %v2567 = vsel %vm2487, %v2469, 0
  %v2570 = vsel %vm2487, %v2470, 0
  %v2573 = vsel %vm2487, %v2471, 0
  %v2576 = vsel %vm2487, %v2472, 0
  %vm2578 = vcmask 1043456
  %vm2579 = vcmask 1044480
  %v2580 = vsel %vm2578, 4294967295, 65535
  %v2581 = vsel %vm2579, %v2580, 0
  %v2583 = vand.u32 %v2486, %v2581
  %2585 = vmatprep.subr.bf16.mxu0 0
  %2586 = vmatpush1.bf16.msra.mxu0 0
  %2587 = vmatprep.subr.bf16.mxu0 0
  %2588 = vmatpush1.bf16.msra.mxu0 0
  %2589 = vmatprep.subr.bf16.mxu0 0
  %2590 = vmatpush1.bf16.msra.mxu0 0
  %2591 = vmatprep.subr.bf16.mxu0 0
  %2592 = vmatpush1.bf16.msra.mxu0 0
  %2593 = vmatprep.subr.bf16.mxu0 0
  %2594 = vmatpush1.bf16.msra.mxu0 0
  %2595 = vmatprep.subr.bf16.mxu0 0
  %2596 = vmatpush1.bf16.msra.mxu0 0
  %2597 = vmatprep.subr.bf16.mxu0 0
  %2598 = vmatpush1.bf16.msra.mxu0 0
  %2599 = vmatprep.subr.bf16.mxu0 0
  %2600 = vmatpush1.bf16.msra.mxu0 %v2583
  %2601 = vmatprep.subr.bf16.mxu0 0
  %2602 = vmatpush2.bf16.msra.mxu0 0
  %2603 = vmatprep.subr.bf16.mxu0 0
  %2604 = vmatpush2.bf16.msra.mxu0 0
  %2605 = vmatprep.subr.bf16.mxu0 0
  %2606 = vmatpush2.bf16.msra.mxu0 0
  %2607 = vmatprep.subr.bf16.mxu0 0
  %2608 = vmatpush2.bf16.msra.mxu0 0
  %2609 = vmatprep.subr.bf16.mxu0 0
  %2610 = vmatpush2.bf16.msra.mxu0 0
  %2611 = vmatprep.subr.bf16.mxu0 0
  %2612 = vmatpush2.bf16.msra.mxu0 0
  %2613 = vmatprep.subr.bf16.mxu0 0
  %2614 = vmatpush2.bf16.msra.mxu0 0
  %2615 = vmatprep.subr.bf16.mxu0 0
  %2616 = vmatpush2.bf16.msra.mxu0 0
  %2617 = vmatprep.mubr.bf16.mxu0 0
  %2618 = vmatmul.mubr.bf16.gmra.mxu0 %v2489
  %v2619 = vpop.f32.mrf.mxu0
  %v2620 = vadd.f32 %v2480, %v2619
  %v2621 = vpop.f32.mrf.mxu0
  %v2622 = vpop.f32.mrf.mxu0
  %v2623 = vadd.f32 %v2480, %v2622
  %v2624 = vpop.f32.mrf.mxu0
  %2625 = vmatprep.mubr.bf16.mxu0 0
  %2626 = vmatmul.mubr.bf16.gmra.mxu0 %v2492
  %v2627 = vpop.f32.mrf.mxu0
  %v2628 = vadd.f32 %v2480, %v2627
  %v2629 = vpop.f32.mrf.mxu0
  %v2630 = vpop.f32.mrf.mxu0
  %v2631 = vadd.f32 %v2480, %v2630
  %v2632 = vpop.f32.mrf.mxu0
  %2633 = vmatprep.mubr.bf16.mxu0 0
  %2634 = vmatmul.mubr.bf16.gmra.mxu0 %v2495
  %v2635 = vpop.f32.mrf.mxu0
  %v2636 = vadd.f32 %v2480, %v2635
  %v2637 = vpop.f32.mrf.mxu0
  %v2638 = vpop.f32.mrf.mxu0
  %v2639 = vadd.f32 %v2480, %v2638
  %v2640 = vpop.f32.mrf.mxu0
  %2641 = vmatprep.mubr.bf16.mxu0 0
  %2642 = vmatmul.mubr.bf16.gmra.mxu0 %v2498
  %v2643 = vpop.f32.mrf.mxu0
  %v2644 = vadd.f32 %v2480, %v2643
  %v2645 = vpop.f32.mrf.mxu0
  %v2646 = vpop.f32.mrf.mxu0
  %v2647 = vadd.f32 %v2480, %v2646
  %v2648 = vpop.f32.mrf.mxu0
  %2649 = vmatprep.mubr.bf16.mxu0 0
  %2650 = vmatmul.mubr.bf16.gmra.mxu0 %v2501
  %v2651 = vpop.f32.mrf.mxu0
  %v2652 = vadd.f32 %v2480, %v2651
  %v2653 = vpop.f32.mrf.mxu0
  %v2654 = vpop.f32.mrf.mxu0
  %v2655 = vadd.f32 %v2480, %v2654
  %v2656 = vpop.f32.mrf.mxu0
  %2657 = vmatprep.mubr.bf16.mxu0 0
  %2658 = vmatmul.mubr.bf16.gmra.mxu0 %v2504
  %v2659 = vpop.f32.mrf.mxu0
  %v2660 = vadd.f32 %v2480, %v2659
  %v2661 = vpop.f32.mrf.mxu0
  %v2662 = vpop.f32.mrf.mxu0
  %v2663 = vadd.f32 %v2480, %v2662
  %v2664 = vpop.f32.mrf.mxu0
  %2665 = vmatprep.mubr.bf16.mxu0 0
  %2666 = vmatmul.mubr.bf16.gmra.mxu0 %v2507
  %v2667 = vpop.f32.mrf.mxu0
  %v2668 = vadd.f32 %v2480, %v2667
  %v2669 = vpop.f32.mrf.mxu0
  %v2670 = vpop.f32.mrf.mxu0
  %v2671 = vadd.f32 %v2480, %v2670
  %v2672 = vpop.f32.mrf.mxu0
  %2673 = vmatprep.mubr.bf16.mxu0 0
  %2674 = vmatmul.mubr.bf16.gmra.mxu0 %v2510
  %v2675 = vpop.f32.mrf.mxu0
  %v2676 = vadd.f32 %v2480, %v2675
  %v2677 = vpop.f32.mrf.mxu0
  %v2678 = vpop.f32.mrf.mxu0
  %v2679 = vadd.f32 %v2480, %v2678
  %v2680 = vpop.f32.mrf.mxu0
  %2681 = vmatprep.mubr.bf16.mxu0 0
  %2682 = vmatmul.mubr.bf16.gmra.mxu0 %v2513
  %v2683 = vpop.f32.mrf.mxu0
  %v2684 = vadd.f32 %v2480, %v2683
  %v2685 = vpop.f32.mrf.mxu0
  %v2686 = vpop.f32.mrf.mxu0
  %v2687 = vadd.f32 %v2480, %v2686
  %v2688 = vpop.f32.mrf.mxu0
  %2689 = vmatprep.mubr.bf16.mxu0 0
  %2690 = vmatmul.mubr.bf16.gmra.mxu0 %v2516
  %v2691 = vpop.f32.mrf.mxu0
  %v2692 = vadd.f32 %v2480, %v2691
  %v2693 = vpop.f32.mrf.mxu0
  %v2694 = vpop.f32.mrf.mxu0
  %v2695 = vadd.f32 %v2480, %v2694
  %v2696 = vpop.f32.mrf.mxu0
  %2697 = vmatprep.mubr.bf16.mxu0 0
  %2698 = vmatmul.mubr.bf16.gmra.mxu0 %v2519
  %v2699 = vpop.f32.mrf.mxu0
  %v2700 = vadd.f32 %v2480, %v2699
  %v2701 = vpop.f32.mrf.mxu0
  %v2702 = vpop.f32.mrf.mxu0
  %v2703 = vadd.f32 %v2480, %v2702
  %v2704 = vpop.f32.mrf.mxu0
  %2705 = vmatprep.mubr.bf16.mxu0 0
  %2706 = vmatmul.mubr.bf16.gmra.mxu0 %v2522
  %v2707 = vpop.f32.mrf.mxu0
  %v2708 = vadd.f32 %v2480, %v2707
  %v2709 = vpop.f32.mrf.mxu0
  %v2710 = vpop.f32.mrf.mxu0
  %v2711 = vadd.f32 %v2480, %v2710
  %v2712 = vpop.f32.mrf.mxu0
  %2713 = vmatprep.mubr.bf16.mxu0 0
  %2714 = vmatmul.mubr.bf16.gmra.mxu0 %v2525
  %v2715 = vpop.f32.mrf.mxu0
  %v2716 = vadd.f32 %v2480, %v2715
  %v2717 = vpop.f32.mrf.mxu0
  %v2718 = vpop.f32.mrf.mxu0
  %v2719 = vadd.f32 %v2480, %v2718
  %v2720 = vpop.f32.mrf.mxu0
  %2721 = vmatprep.mubr.bf16.mxu0 0
  %2722 = vmatmul.mubr.bf16.gmra.mxu0 %v2528
  %v2723 = vpop.f32.mrf.mxu0
  %v2724 = vadd.f32 %v2480, %v2723
  %v2725 = vpop.f32.mrf.mxu0
  %v2726 = vpop.f32.mrf.mxu0
  %v2727 = vadd.f32 %v2480, %v2726
  %v2728 = vpop.f32.mrf.mxu0
  %2729 = vmatprep.mubr.bf16.mxu0 0
  %2730 = vmatmul.mubr.bf16.gmra.mxu0 %v2531
  %v2731 = vpop.f32.mrf.mxu0
  %v2732 = vadd.f32 %v2480, %v2731
  %v2733 = vpop.f32.mrf.mxu0
  %v2734 = vpop.f32.mrf.mxu0
  %v2735 = vadd.f32 %v2480, %v2734
  %v2736 = vpop.f32.mrf.mxu0
  %2737 = vmatprep.mubr.bf16.mxu0 0
  %2738 = vmatmul.mubr.bf16.gmra.mxu0 %v2534
  %v2739 = vpop.f32.mrf.mxu0
  %v2740 = vadd.f32 %v2480, %v2739
  %v2741 = vpop.f32.mrf.mxu0
  %v2742 = vpop.f32.mrf.mxu0
  %v2743 = vadd.f32 %v2480, %v2742
  %v2744 = vpop.f32.mrf.mxu0
  %2745 = vmatprep.mubr.bf16.mxu0 0
  %2746 = vmatmul.mubr.bf16.gmra.mxu0 %v2537
  %v2747 = vpop.f32.mrf.mxu0
  %v2748 = vadd.f32 %v2480, %v2747
  %v2749 = vpop.f32.mrf.mxu0
  %v2750 = vpop.f32.mrf.mxu0
  %v2751 = vadd.f32 %v2480, %v2750
  %v2752 = vpop.f32.mrf.mxu0
  %2753 = vmatprep.mubr.bf16.mxu0 0
  %2754 = vmatmul.mubr.bf16.gmra.mxu0 %v2540
  %v2755 = vpop.f32.mrf.mxu0
  %v2756 = vadd.f32 %v2480, %v2755
  %v2757 = vpop.f32.mrf.mxu0
  %v2758 = vpop.f32.mrf.mxu0
  %v2759 = vadd.f32 %v2480, %v2758
  %v2760 = vpop.f32.mrf.mxu0
  %2761 = vmatprep.mubr.bf16.mxu0 0
  %2762 = vmatmul.mubr.bf16.gmra.mxu0 %v2543
  %v2763 = vpop.f32.mrf.mxu0
  %v2764 = vadd.f32 %v2480, %v2763
  %v2765 = vpop.f32.mrf.mxu0
  %v2766 = vpop.f32.mrf.mxu0
  %v2767 = vadd.f32 %v2480, %v2766
  %v2768 = vpop.f32.mrf.mxu0
  %2769 = vmatprep.mubr.bf16.mxu0 0
  %2770 = vmatmul.mubr.bf16.gmra.mxu0 %v2546
  %v2771 = vpop.f32.mrf.mxu0
  %v2772 = vadd.f32 %v2480, %v2771
  %v2773 = vpop.f32.mrf.mxu0
  %v2774 = vpop.f32.mrf.mxu0
  %v2775 = vadd.f32 %v2480, %v2774
  %v2776 = vpop.f32.mrf.mxu0
  %2777 = vmatprep.mubr.bf16.mxu0 0
  %2778 = vmatmul.mubr.bf16.gmra.mxu0 %v2549
  %v2779 = vpop.f32.mrf.mxu0
  %v2780 = vadd.f32 %v2480, %v2779
  %v2781 = vpop.f32.mrf.mxu0
  %v2782 = vpop.f32.mrf.mxu0
  %v2783 = vadd.f32 %v2480, %v2782
  %v2784 = vpop.f32.mrf.mxu0
  %2785 = vmatprep.mubr.bf16.mxu0 0
  %2786 = vmatmul.mubr.bf16.gmra.mxu0 %v2552
  %v2787 = vpop.f32.mrf.mxu0
  %v2788 = vadd.f32 %v2480, %v2787
  %v2789 = vpop.f32.mrf.mxu0
  %v2790 = vpop.f32.mrf.mxu0
  %v2791 = vadd.f32 %v2480, %v2790
  %v2792 = vpop.f32.mrf.mxu0
  %2793 = vmatprep.mubr.bf16.mxu0 0
  %2794 = vmatmul.mubr.bf16.gmra.mxu0 %v2555
  %v2795 = vpop.f32.mrf.mxu0
  %v2796 = vadd.f32 %v2480, %v2795
  %v2797 = vpop.f32.mrf.mxu0
  %v2798 = vpop.f32.mrf.mxu0
  %v2799 = vadd.f32 %v2480, %v2798
  %v2800 = vpop.f32.mrf.mxu0
  %2801 = vmatprep.mubr.bf16.mxu0 0
  %2802 = vmatmul.mubr.bf16.gmra.mxu0 %v2558
  %v2803 = vpop.f32.mrf.mxu0
  %v2804 = vadd.f32 %v2480, %v2803
  %v2805 = vpop.f32.mrf.mxu0
  %v2806 = vpop.f32.mrf.mxu0
  %v2807 = vadd.f32 %v2480, %v2806
  %v2808 = vpop.f32.mrf.mxu0
  %2809 = vmatprep.mubr.bf16.mxu0 0
  %2810 = vmatmul.mubr.bf16.gmra.mxu0 %v2561
  %v2811 = vpop.f32.mrf.mxu0
  %v2812 = vadd.f32 %v2480, %v2811
  %v2813 = vpop.f32.mrf.mxu0
  %v2814 = vpop.f32.mrf.mxu0
  %v2815 = vadd.f32 %v2480, %v2814
  %v2816 = vpop.f32.mrf.mxu0
  %2817 = vmatprep.mubr.bf16.mxu0 0
  %2818 = vmatmul.mubr.bf16.gmra.mxu0 %v2564
  %v2819 = vpop.f32.mrf.mxu0
  %v2820 = vadd.f32 %v2480, %v2819
  %v2821 = vpop.f32.mrf.mxu0
  %v2822 = vpop.f32.mrf.mxu0
  %v2823 = vadd.f32 %v2480, %v2822
  %v2824 = vpop.f32.mrf.mxu0
  %2825 = vmatprep.mubr.bf16.mxu0 0
  %2826 = vmatmul.mubr.bf16.gmra.mxu0 %v2567
  %v2827 = vpop.f32.mrf.mxu0
  %v2828 = vadd.f32 %v2480, %v2827
  %v2829 = vpop.f32.mrf.mxu0
  %v2830 = vpop.f32.mrf.mxu0
  %v2831 = vadd.f32 %v2480, %v2830
  %v2832 = vpop.f32.mrf.mxu0
  %2833 = vmatprep.mubr.bf16.mxu0 0
  %2834 = vmatmul.mubr.bf16.gmra.mxu0 %v2570
  %v2835 = vpop.f32.mrf.mxu0
  %v2836 = vadd.f32 %v2480, %v2835
  %v2837 = vpop.f32.mrf.mxu0
  %v2838 = vpop.f32.mrf.mxu0
  %v2839 = vadd.f32 %v2480, %v2838
  %v2840 = vpop.f32.mrf.mxu0
  %2841 = vmatprep.mubr.bf16.mxu0 0
  %2842 = vmatmul.mubr.bf16.gmra.mxu0 %v2573
  %v2843 = vpop.f32.mrf.mxu0
  %v2844 = vadd.f32 %v2480, %v2843
  %v2845 = vpop.f32.mrf.mxu0
  %v2846 = vpop.f32.mrf.mxu0
  %v2847 = vadd.f32 %v2480, %v2846
  %v2848 = vpop.f32.mrf.mxu0
  %2849 = vmatprep.mubr.bf16.mxu0 0
  %2850 = vmatmul.mubr.bf16.gmra.mxu0 %v2576
  %v2851 = vpop.f32.mrf.mxu0
  %v2852 = vadd.f32 %v2480, %v2851
  %v2853 = vpop.f32.mrf.mxu0
  %v2854 = vpop.f32.mrf.mxu0
  %v2855 = vadd.f32 %v2480, %v2854
  %v2856 = vpop.f32.mrf.mxu0
  %2857 = vdwg.mxu0
  %vm2858 = vcmp.gt.f32.partialorder %v2620, 0.0
  %vm2859 = vcmp.gt.f32.partialorder %v2623, 0.0
  %vm2860 = vcmp.gt.f32.partialorder %v2628, 0.0
  %vm2861 = vcmp.gt.f32.partialorder %v2631, 0.0
  %vm2862 = vcmp.gt.f32.partialorder %v2636, 0.0
  %vm2863 = vcmp.gt.f32.partialorder %v2639, 0.0
  %vm2864 = vcmp.gt.f32.partialorder %v2644, 0.0
  %vm2865 = vcmp.gt.f32.partialorder %v2647, 0.0
  %vm2866 = vcmp.gt.f32.partialorder %v2652, 0.0
  %vm2867 = vcmp.gt.f32.partialorder %v2655, 0.0
  %vm2868 = vcmp.gt.f32.partialorder %v2660, 0.0
  %vm2869 = vcmp.gt.f32.partialorder %v2663, 0.0
  %vm2870 = vcmp.gt.f32.partialorder %v2668, 0.0
  %vm2871 = vcmp.gt.f32.partialorder %v2671, 0.0
  %vm2872 = vcmp.gt.f32.partialorder %v2676, 0.0
  %vm2873 = vcmp.gt.f32.partialorder %v2679, 0.0
  %vm2874 = vcmp.gt.f32.partialorder %v2684, 0.0
  %vm2875 = vcmp.gt.f32.partialorder %v2687, 0.0
  %vm2876 = vcmp.gt.f32.partialorder %v2692, 0.0
  %vm2877 = vcmp.gt.f32.partialorder %v2695, 0.0
  %vm2878 = vcmp.gt.f32.partialorder %v2700, 0.0
  %vm2879 = vcmp.gt.f32.partialorder %v2703, 0.0
  %vm2880 = vcmp.gt.f32.partialorder %v2708, 0.0
  %vm2881 = vcmp.gt.f32.partialorder %v2711, 0.0
  %vm2882 = vcmp.gt.f32.partialorder %v2716, 0.0
  %vm2883 = vcmp.gt.f32.partialorder %v2719, 0.0
  %vm2884 = vcmp.gt.f32.partialorder %v2724, 0.0
  %vm2885 = vcmp.gt.f32.partialorder %v2727, 0.0
  %vm2886 = vcmp.gt.f32.partialorder %v2732, 0.0
  %vm2887 = vcmp.gt.f32.partialorder %v2735, 0.0
  %vm2888 = vcmp.gt.f32.partialorder %v2740, 0.0
  %vm2889 = vcmp.gt.f32.partialorder %v2743, 0.0
  %vm2890 = vcmp.gt.f32.partialorder %v2748, 0.0
  %vm2891 = vcmp.gt.f32.partialorder %v2751, 0.0
  %vm2892 = vcmp.gt.f32.partialorder %v2756, 0.0
  %vm2893 = vcmp.gt.f32.partialorder %v2759, 0.0
  %vm2894 = vcmp.gt.f32.partialorder %v2764, 0.0
  %vm2895 = vcmp.gt.f32.partialorder %v2767, 0.0
  %vm2896 = vcmp.gt.f32.partialorder %v2772, 0.0
  %vm2897 = vcmp.gt.f32.partialorder %v2775, 0.0
  %vm2898 = vcmp.gt.f32.partialorder %v2780, 0.0
  %vm2899 = vcmp.gt.f32.partialorder %v2783, 0.0
  %vm2900 = vcmp.gt.f32.partialorder %v2788, 0.0
  %vm2901 = vcmp.gt.f32.partialorder %v2791, 0.0
  %vm2902 = vcmp.gt.f32.partialorder %v2796, 0.0
  %vm2903 = vcmp.gt.f32.partialorder %v2799, 0.0
  %vm2904 = vcmp.gt.f32.partialorder %v2804, 0.0
  %vm2905 = vcmp.gt.f32.partialorder %v2807, 0.0
  %vm2906 = vcmp.gt.f32.partialorder %v2812, 0.0
  %vm2907 = vcmp.gt.f32.partialorder %v2815, 0.0
  %vm2908 = vcmp.gt.f32.partialorder %v2820, 0.0
  %vm2909 = vcmp.gt.f32.partialorder %v2823, 0.0
  %vm2910 = vcmp.gt.f32.partialorder %v2828, 0.0
  %vm2911 = vcmp.gt.f32.partialorder %v2831, 0.0
  %vm2912 = vcmp.gt.f32.partialorder %v2836, 0.0
  %vm2913 = vcmp.gt.f32.partialorder %v2839, 0.0
  %vm2914 = vcmp.gt.f32.partialorder %v2844, 0.0
  %vm2915 = vcmp.gt.f32.partialorder %v2847, 0.0
  %vm2916 = vcmp.gt.f32.partialorder %v2852, 0.0
  %vm2917 = vcmp.gt.f32.partialorder %v2855, 0.0
  %v2918 = vmul.f32 %v2620, 0.01
  %v2919 = vmul.f32 %v2623, 0.01
  %v2920 = vmul.f32 %v2628, 0.01
  %v2921 = vmul.f32 %v2631, 0.01
  %v2922 = vmul.f32 %v2636, 0.01
  %v2923 = vmul.f32 %v2639, 0.01
  %v2924 = vmul.f32 %v2644, 0.01
  %v2925 = vmul.f32 %v2647, 0.01
  %v2926 = vmul.f32 %v2652, 0.01
  %v2927 = vmul.f32 %v2655, 0.01
  %v2928 = vmul.f32 %v2660, 0.01
  %v2929 = vmul.f32 %v2663, 0.01
  %v2930 = vmul.f32 %v2668, 0.01
  %v2931 = vmul.f32 %v2671, 0.01
  %v2932 = vmul.f32 %v2676, 0.01
  %v2933 = vmul.f32 %v2679, 0.01
  %v2934 = vmul.f32 %v2684, 0.01
  %v2935 = vmul.f32 %v2687, 0.01
  %v2936 = vmul.f32 %v2692, 0.01
  %v2937 = vmul.f32 %v2695, 0.01
  %v2938 = vmul.f32 %v2700, 0.01
  %v2939 = vmul.f32 %v2703, 0.01
  %v2940 = vmul.f32 %v2708, 0.01
  %v2941 = vmul.f32 %v2711, 0.01
  %v2942 = vmul.f32 %v2716, 0.01
  %v2943 = vmul.f32 %v2719, 0.01
  %v2944 = vmul.f32 %v2724, 0.01
  %v2945 = vmul.f32 %v2727, 0.01
  %v2946 = vmul.f32 %v2732, 0.01
  %v2947 = vmul.f32 %v2735, 0.01
  %v2948 = vmul.f32 %v2740, 0.01
  %v2949 = vmul.f32 %v2743, 0.01
  %v2950 = vmul.f32 %v2748, 0.01
  %v2951 = vmul.f32 %v2751, 0.01
  %v2952 = vmul.f32 %v2756, 0.01
  %v2953 = vmul.f32 %v2759, 0.01
  %v2954 = vmul.f32 %v2764, 0.01
  %v2955 = vmul.f32 %v2767, 0.01
  %v2956 = vmul.f32 %v2772, 0.01
  %v2957 = vmul.f32 %v2775, 0.01
  %v2958 = vmul.f32 %v2780, 0.01
  %v2959 = vmul.f32 %v2783, 0.01
  %v2960 = vmul.f32 %v2788, 0.01
  %v2961 = vmul.f32 %v2791, 0.01
  %v2962 = vmul.f32 %v2796, 0.01
  %v2963 = vmul.f32 %v2799, 0.01
  %v2964 = vmul.f32 %v2804, 0.01
  %v2965 = vmul.f32 %v2807, 0.01
  %v2966 = vmul.f32 %v2812, 0.01
  %v2967 = vmul.f32 %v2815, 0.01
  %v2968 = vmul.f32 %v2820, 0.01
  %v2969 = vmul.f32 %v2823, 0.01
  %v2970 = vmul.f32 %v2828, 0.01
  %v2971 = vmul.f32 %v2831, 0.01
  %v2972 = vmul.f32 %v2836, 0.01
  %v2973 = vmul.f32 %v2839, 0.01
  %v2974 = vmul.f32 %v2844, 0.01
  %v2975 = vmul.f32 %v2847, 0.01
  %v2976 = vmul.f32 %v2852, 0.01
  %v2977 = vmul.f32 %v2855, 0.01
  %v2978 = vsel %vm2858, %v2620, %v2918
  %v2979 = vsel %vm2859, %v2623, %v2919
  %v2980 = vsel %vm2860, %v2628, %v2920
  %v2981 = vsel %vm2861, %v2631, %v2921
  %v2982 = vsel %vm2862, %v2636, %v2922
  %v2983 = vsel %vm2863, %v2639, %v2923
  %v2984 = vsel %vm2864, %v2644, %v2924
  %v2985 = vsel %vm2865, %v2647, %v2925
  %v2986 = vsel %vm2866, %v2652, %v2926
  %v2987 = vsel %vm2867, %v2655, %v2927
  %v2988 = vsel %vm2868, %v2660, %v2928
  %v2989 = vsel %vm2869, %v2663, %v2929
  %v2990 = vsel %vm2870, %v2668, %v2930
  %v2991 = vsel %vm2871, %v2671, %v2931
  %v2992 = vsel %vm2872, %v2676, %v2932
  %v2993 = vsel %vm2873, %v2679, %v2933
  %v2994 = vsel %vm2874, %v2684, %v2934
  %v2995 = vsel %vm2875, %v2687, %v2935
  %v2996 = vsel %vm2876, %v2692, %v2936
  %v2997 = vsel %vm2877, %v2695, %v2937
  %v2998 = vsel %vm2878, %v2700, %v2938
  %v2999 = vsel %vm2879, %v2703, %v2939
  %v3000 = vsel %vm2880, %v2708, %v2940
  %v3001 = vsel %vm2881, %v2711, %v2941
  %v3002 = vsel %vm2882, %v2716, %v2942
  %v3003 = vsel %vm2883, %v2719, %v2943
  %v3004 = vsel %vm2884, %v2724, %v2944
  %v3005 = vsel %vm2885, %v2727, %v2945
  %v3006 = vsel %vm2886, %v2732, %v2946
  %v3007 = vsel %vm2887, %v2735, %v2947
  %v3008 = vsel %vm2888, %v2740, %v2948
  %v3009 = vsel %vm2889, %v2743, %v2949
  %v3010 = vsel %vm2890, %v2748, %v2950
  %v3011 = vsel %vm2891, %v2751, %v2951
  %v3012 = vsel %vm2892, %v2756, %v2952
  %v3013 = vsel %vm2893, %v2759, %v2953
  %v3014 = vsel %vm2894, %v2764, %v2954
  %v3015 = vsel %vm2895, %v2767, %v2955
  %v3016 = vsel %vm2896, %v2772, %v2956
  %v3017 = vsel %vm2897, %v2775, %v2957
  %v3018 = vsel %vm2898, %v2780, %v2958
  %v3019 = vsel %vm2899, %v2783, %v2959
  %v3020 = vsel %vm2900, %v2788, %v2960
  %v3021 = vsel %vm2901, %v2791, %v2961
  %v3022 = vsel %vm2902, %v2796, %v2962
  %v3023 = vsel %vm2903, %v2799, %v2963
  %v3024 = vsel %vm2904, %v2804, %v2964
  %v3025 = vsel %vm2905, %v2807, %v2965
  %v3026 = vsel %vm2906, %v2812, %v2966
  %v3027 = vsel %vm2907, %v2815, %v2967
  %v3028 = vsel %vm2908, %v2820, %v2968
  %v3029 = vsel %vm2909, %v2823, %v2969
  %v3030 = vsel %vm2910, %v2828, %v2970
  %v3031 = vsel %vm2911, %v2831, %v2971
  %v3032 = vsel %vm2912, %v2836, %v2972
  %v3033 = vsel %vm2913, %v2839, %v2973
  %v3034 = vsel %vm2914, %v2844, %v2974
  %v3035 = vsel %vm2915, %v2847, %v2975
  %v3036 = vsel %vm2916, %v2852, %v2976
  %v3037 = vsel %vm2917, %v2855, %v2977
  %v3038 = vpack.c.bf16 %v2979, %v2978
  %v3039 = vpack.c.bf16 %v2981, %v2980
  %v3040 = vpack.c.bf16 %v2983, %v2982
  %v3041 = vpack.c.bf16 %v2985, %v2984
  %v3042 = vpack.c.bf16 %v2987, %v2986
  %v3043 = vpack.c.bf16 %v2989, %v2988
  %v3044 = vpack.c.bf16 %v2991, %v2990
  %v3045 = vpack.c.bf16 %v2993, %v2992
  %v3046 = vpack.c.bf16 %v2995, %v2994
  %v3047 = vpack.c.bf16 %v2997, %v2996
  %v3048 = vpack.c.bf16 %v2999, %v2998
  %v3049 = vpack.c.bf16 %v3001, %v3000
  %v3050 = vpack.c.bf16 %v3003, %v3002
  %v3051 = vpack.c.bf16 %v3005, %v3004
  %v3052 = vpack.c.bf16 %v3007, %v3006
  %v3053 = vpack.c.bf16 %v3009, %v3008
  %v3054 = vpack.c.bf16 %v3011, %v3010
  %v3055 = vpack.c.bf16 %v3013, %v3012
  %v3056 = vpack.c.bf16 %v3015, %v3014
  %v3057 = vpack.c.bf16 %v3017, %v3016
  %v3058 = vpack.c.bf16 %v3019, %v3018
  %v3059 = vpack.c.bf16 %v3021, %v3020
  %v3060 = vpack.c.bf16 %v3023, %v3022
  %v3061 = vpack.c.bf16 %v3025, %v3024
  %v3062 = vpack.c.bf16 %v3027, %v3026
  %v3063 = vpack.c.bf16 %v3029, %v3028
  %v3064 = vpack.c.bf16 %v3031, %v3030
  %v3065 = vpack.c.bf16 %v3033, %v3032
  %v3066 = vpack.c.bf16 %v3035, %v3034
  %v3067 = vpack.c.bf16 %v3037, %v3036
  %vm3068 = vsmask.f32 7424
  %v3070 = vshrl.u32 %v3038, 16
  %v3072 = vshll.u32 %v3038, 16
  %v3074 = vrot.slane %v3072, 1
  %v3075 = vor.u32 %v3070, %v3074
  %v3077 = vshll.u32 %v3039, 16
  %v3079 = vrot.slane %v3077, 1
  %v3080 = vsel %vm3068, %v3075, %v3079
  %v3081 = vshrl.u32 %v3039, 16
  %v3083 = vor.u32 %v3081, %v3079
  %v3085 = vshll.u32 %v3040, 16
  %v3087 = vrot.slane %v3085, 1
  %v3088 = vsel %vm3068, %v3083, %v3087
  %v3089 = vshrl.u32 %v3040, 16
  %v3091 = vor.u32 %v3089, %v3087
  %v3093 = vshll.u32 %v3041, 16
  %v3095 = vrot.slane %v3093, 1
  %v3096 = vsel %vm3068, %v3091, %v3095
  %v3097 = vshrl.u32 %v3041, 16
  %v3099 = vor.u32 %v3097, %v3095
  %v3101 = vshll.u32 %v3042, 16
  %v3103 = vrot.slane %v3101, 1
  %v3104 = vsel %vm3068, %v3099, %v3103
  %v3105 = vshrl.u32 %v3042, 16
  %v3107 = vor.u32 %v3105, %v3103
  %v3109 = vshll.u32 %v3043, 16
  %v3111 = vrot.slane %v3109, 1
  %v3112 = vsel %vm3068, %v3107, %v3111
  %v3113 = vshrl.u32 %v3043, 16
  %v3115 = vor.u32 %v3113, %v3111
  %v3117 = vshll.u32 %v3044, 16
  %v3119 = vrot.slane %v3117, 1
  %v3120 = vsel %vm3068, %v3115, %v3119
  %v3121 = vshrl.u32 %v3044, 16
  %v3123 = vor.u32 %v3121, %v3119
  %v3125 = vshll.u32 %v3045, 16
  %v3127 = vrot.slane %v3125, 1
  %v3128 = vsel %vm3068, %v3123, %v3127
  %v3129 = vshrl.u32 %v3045, 16
  %v3131 = vor.u32 %v3129, %v3127
  %v3133 = vshll.u32 %v3046, 16
  %v3135 = vrot.slane %v3133, 1
  %v3136 = vsel %vm3068, %v3131, %v3135
  %v3137 = vshrl.u32 %v3046, 16
  %v3139 = vor.u32 %v3137, %v3135
  %v3141 = vshll.u32 %v3047, 16
  %v3143 = vrot.slane %v3141, 1
  %v3144 = vsel %vm3068, %v3139, %v3143
  %v3145 = vshrl.u32 %v3047, 16
  %v3147 = vor.u32 %v3145, %v3143
  %v3149 = vshll.u32 %v3048, 16
  %v3151 = vrot.slane %v3149, 1
  %v3152 = vsel %vm3068, %v3147, %v3151
  %v3153 = vshrl.u32 %v3048, 16
  %v3155 = vor.u32 %v3153, %v3151
  %v3157 = vshll.u32 %v3049, 16
  %v3159 = vrot.slane %v3157, 1
  %v3160 = vsel %vm3068, %v3155, %v3159
  %v3161 = vshrl.u32 %v3049, 16
  %v3163 = vor.u32 %v3161, %v3159
  %v3165 = vshll.u32 %v3050, 16
  %v3167 = vrot.slane %v3165, 1
  %v3168 = vsel %vm3068, %v3163, %v3167
  %v3169 = vshrl.u32 %v3050, 16
  %v3171 = vor.u32 %v3169, %v3167
  %v3173 = vshll.u32 %v3051, 16
  %v3175 = vrot.slane %v3173, 1
  %v3176 = vsel %vm3068, %v3171, %v3175
  %v3177 = vshrl.u32 %v3051, 16
  %v3179 = vor.u32 %v3177, %v3175
  %v3181 = vshll.u32 %v3052, 16
  %v3183 = vrot.slane %v3181, 1
  %v3184 = vsel %vm3068, %v3179, %v3183
  %v3185 = vshrl.u32 %v3052, 16
  %v3187 = vor.u32 %v3185, %v3183
  %v3189 = vshll.u32 %v3053, 16
  %v3191 = vrot.slane %v3189, 1
  %v3192 = vsel %vm3068, %v3187, %v3191
  %v3193 = vshrl.u32 %v3053, 16
  %v3195 = vor.u32 %v3193, %v3191
  %v3197 = vshll.u32 %v3054, 16
  %v3199 = vrot.slane %v3197, 1
  %v3200 = vsel %vm3068, %v3195, %v3199
  %v3201 = vshrl.u32 %v3054, 16
  %v3203 = vor.u32 %v3201, %v3199
  %v3205 = vshll.u32 %v3055, 16
  %v3207 = vrot.slane %v3205, 1
  %v3208 = vsel %vm3068, %v3203, %v3207
  %v3209 = vshrl.u32 %v3055, 16
  %v3211 = vor.u32 %v3209, %v3207
  %v3213 = vshll.u32 %v3056, 16
  %v3215 = vrot.slane %v3213, 1
  %v3216 = vsel %vm3068, %v3211, %v3215
  %v3217 = vshrl.u32 %v3056, 16
  %v3219 = vor.u32 %v3217, %v3215
  %v3221 = vshll.u32 %v3057, 16
  %v3223 = vrot.slane %v3221, 1
  %v3224 = vsel %vm3068, %v3219, %v3223
  %v3225 = vshrl.u32 %v3057, 16
  %v3227 = vor.u32 %v3225, %v3223
  %v3229 = vshll.u32 %v3058, 16
  %v3231 = vrot.slane %v3229, 1
  %v3232 = vsel %vm3068, %v3227, %v3231
  %v3233 = vshrl.u32 %v3058, 16
  %v3235 = vor.u32 %v3233, %v3231
  %v3237 = vshll.u32 %v3059, 16
  %v3239 = vrot.slane %v3237, 1
  %v3240 = vsel %vm3068, %v3235, %v3239
  %v3241 = vshrl.u32 %v3059, 16
  %v3243 = vor.u32 %v3241, %v3239
  %v3245 = vshll.u32 %v3060, 16
  %v3247 = vrot.slane %v3245, 1
  %v3248 = vsel %vm3068, %v3243, %v3247
  %v3249 = vshrl.u32 %v3060, 16
  %v3251 = vor.u32 %v3249, %v3247
  %v3253 = vshll.u32 %v3061, 16
  %v3255 = vrot.slane %v3253, 1
  %v3256 = vsel %vm3068, %v3251, %v3255
  %v3257 = vshrl.u32 %v3061, 16
  %v3259 = vor.u32 %v3257, %v3255
  %v3261 = vshll.u32 %v3062, 16
  %v3263 = vrot.slane %v3261, 1
  %v3264 = vsel %vm3068, %v3259, %v3263
  %v3265 = vshrl.u32 %v3062, 16
  %v3267 = vor.u32 %v3265, %v3263
  %v3269 = vshll.u32 %v3063, 16
  %v3271 = vrot.slane %v3269, 1
  %v3272 = vsel %vm3068, %v3267, %v3271
  %v3273 = vshrl.u32 %v3063, 16
  %v3275 = vor.u32 %v3273, %v3271
  %v3277 = vshll.u32 %v3064, 16
  %v3279 = vrot.slane %v3277, 1
  %v3280 = vsel %vm3068, %v3275, %v3279
  %v3281 = vshrl.u32 %v3064, 16
  %v3283 = vor.u32 %v3281, %v3279
  %v3285 = vshll.u32 %v3065, 16
  %v3287 = vrot.slane %v3285, 1
  %v3288 = vsel %vm3068, %v3283, %v3287
  %v3289 = vshrl.u32 %v3065, 16
  %v3291 = vor.u32 %v3289, %v3287
  %3292 = vrot.lane.b32.xlu0 %v3080, 16
  %v3293 = vpop.permute.xlu0 %3292
  %3294 = vrot.lane.b32.xlu0 %v3088, 16
  %v3295 = vpop.permute.xlu0 %3294
  %3296 = vrot.lane.b32.xlu0 %v3096, 16
  %v3297 = vpop.permute.xlu0 %3296
  %3298 = vrot.lane.b32.xlu0 %v3104, 16
  %v3299 = vpop.permute.xlu0 %3298
  %3300 = vrot.lane.b32.xlu0 %v3112, 16
  %v3301 = vpop.permute.xlu0 %3300
  %3302 = vrot.lane.b32.xlu0 %v3120, 16
  %v3303 = vpop.permute.xlu0 %3302
  %3304 = vrot.lane.b32.xlu0 %v3128, 16
  %v3305 = vpop.permute.xlu0 %3304
  %3306 = vrot.lane.b32.xlu0 %v3136, 16
  %v3307 = vpop.permute.xlu0 %3306
  %3308 = vrot.lane.b32.xlu0 %v3144, 16
  %v3309 = vpop.permute.xlu0 %3308
  %3310 = vrot.lane.b32.xlu0 %v3152, 16
  %v3311 = vpop.permute.xlu0 %3310
  %3312 = vrot.lane.b32.xlu0 %v3160, 16
  %v3313 = vpop.permute.xlu0 %3312
  %3314 = vrot.lane.b32.xlu0 %v3168, 16
  %v3315 = vpop.permute.xlu0 %3314
  %3316 = vrot.lane.b32.xlu0 %v3176, 16
  %v3317 = vpop.permute.xlu0 %3316
  %3318 = vrot.lane.b32.xlu0 %v3184, 16
  %v3319 = vpop.permute.xlu0 %3318
  %3320 = vrot.lane.b32.xlu0 %v3192, 16
  %v3321 = vpop.permute.xlu0 %3320
  %3322 = vrot.lane.b32.xlu0 %v3200, 16
  %v3323 = vpop.permute.xlu0 %3322
  %3324 = vrot.lane.b32.xlu0 %v3208, 16
  %v3325 = vpop.permute.xlu0 %3324
  %3326 = vrot.lane.b32.xlu0 %v3216, 16
  %v3327 = vpop.permute.xlu0 %3326
  %3328 = vrot.lane.b32.xlu0 %v3224, 16
  %v3329 = vpop.permute.xlu0 %3328
  %3330 = vrot.lane.b32.xlu0 %v3232, 16
  %v3331 = vpop.permute.xlu0 %3330
  %3332 = vrot.lane.b32.xlu0 %v3240, 16
  %v3333 = vpop.permute.xlu0 %3332
  %3334 = vrot.lane.b32.xlu0 %v3248, 16
  %v3335 = vpop.permute.xlu0 %3334
  %3336 = vrot.lane.b32.xlu0 %v3256, 16
  %v3337 = vpop.permute.xlu0 %3336
  %3338 = vrot.lane.b32.xlu0 %v3264, 16
  %v3339 = vpop.permute.xlu0 %3338
  %3340 = vrot.lane.b32.xlu0 %v3272, 16
  %v3341 = vpop.permute.xlu0 %3340
  %3342 = vrot.lane.b32.xlu0 %v3280, 16
  %v3343 = vpop.permute.xlu0 %3342
  %3344 = vrot.lane.b32.xlu0 %v3288, 16
  %v3345 = vpop.permute.xlu0 %3344
  %3346 = vrot.lane.b32.xlu0 %v3291, 16
  %v3347 = vpop.permute.xlu0 %3346
  %vm3376 = vcmask 1046528
  %v3377 = vrot.slane %v3038, 1
  %v3378 = vrot.slane %v3039, 1
  %v3379 = vsel %vm3376, %v3377, %v3378
  %v3380 = vrot.slane %v3040, 1
  %v3381 = vsel %vm3376, %v3378, %v3380
  %v3382 = vrot.slane %v3041, 1
  %v3383 = vsel %vm3376, %v3380, %v3382
  %v3384 = vrot.slane %v3042, 1
  %v3385 = vsel %vm3376, %v3382, %v3384
  %v3386 = vrot.slane %v3043, 1
  %v3387 = vsel %vm3376, %v3384, %v3386
  %v3388 = vrot.slane %v3044, 1
  %v3389 = vsel %vm3376, %v3386, %v3388
  %v3390 = vrot.slane %v3045, 1
  %v3391 = vsel %vm3376, %v3388, %v3390
  %v3392 = vrot.slane %v3046, 1
  %v3393 = vsel %vm3376, %v3390, %v3392
  %v3394 = vrot.slane %v3047, 1
  %v3395 = vsel %vm3376, %v3392, %v3394
  %v3396 = vrot.slane %v3048, 1
  %v3397 = vsel %vm3376, %v3394, %v3396
  %v3398 = vrot.slane %v3049, 1
  %v3399 = vsel %vm3376, %v3396, %v3398
  %v3400 = vrot.slane %v3050, 1
  %v3401 = vsel %vm3376, %v3398, %v3400
  %v3402 = vrot.slane %v3051, 1
  %v3403 = vsel %vm3376, %v3400, %v3402
  %v3404 = vrot.slane %v3052, 1
  %v3405 = vsel %vm3376, %v3402, %v3404
  %v3406 = vrot.slane %v3053, 1
  %v3407 = vsel %vm3376, %v3404, %v3406
  %v3408 = vrot.slane %v3054, 1
  %v3409 = vsel %vm3376, %v3406, %v3408
  %v3410 = vrot.slane %v3055, 1
  %v3411 = vsel %vm3376, %v3408, %v3410
  %v3412 = vrot.slane %v3056, 1
  %v3413 = vsel %vm3376, %v3410, %v3412
  %v3414 = vrot.slane %v3057, 1
  %v3415 = vsel %vm3376, %v3412, %v3414
  %v3416 = vrot.slane %v3058, 1
  %v3417 = vsel %vm3376, %v3414, %v3416
  %v3418 = vrot.slane %v3059, 1
  %v3419 = vsel %vm3376, %v3416, %v3418
  %v3420 = vrot.slane %v3060, 1
  %v3421 = vsel %vm3376, %v3418, %v3420
  %v3422 = vrot.slane %v3061, 1
  %v3423 = vsel %vm3376, %v3420, %v3422
  %v3424 = vrot.slane %v3062, 1
  %v3425 = vsel %vm3376, %v3422, %v3424
  %v3426 = vrot.slane %v3063, 1
  %v3427 = vsel %vm3376, %v3424, %v3426
  %v3428 = vrot.slane %v3064, 1
  %v3429 = vsel %vm3376, %v3426, %v3428
  %v3430 = vrot.slane %v3065, 1
  %v3431 = vsel %vm3376, %v3428, %v3430
  %3432 = vrot.lane.b32.xlu0 %v3379, 32
  %v3433 = vpop.permute.xlu0 %3432
  %3434 = vrot.lane.b32.xlu0 %v3381, 32
  %v3435 = vpop.permute.xlu0 %3434
  %3436 = vrot.lane.b32.xlu0 %v3383, 32
  %v3437 = vpop.permute.xlu0 %3436
  %3438 = vrot.lane.b32.xlu0 %v3385, 32
  %v3439 = vpop.permute.xlu0 %3438
  %3440 = vrot.lane.b32.xlu0 %v3387, 32
  %v3441 = vpop.permute.xlu0 %3440
  %3442 = vrot.lane.b32.xlu0 %v3389, 32
  %v3443 = vpop.permute.xlu0 %3442
  %3444 = vrot.lane.b32.xlu0 %v3391, 32
  %v3445 = vpop.permute.xlu0 %3444
  %3446 = vrot.lane.b32.xlu0 %v3393, 32
  %v3447 = vpop.permute.xlu0 %3446
  %3448 = vrot.lane.b32.xlu0 %v3395, 32
  %v3449 = vpop.permute.xlu0 %3448
  %3450 = vrot.lane.b32.xlu0 %v3397, 32
  %v3451 = vpop.permute.xlu0 %3450
  %3452 = vrot.lane.b32.xlu0 %v3399, 32
  %v3453 = vpop.permute.xlu0 %3452
  %3454 = vrot.lane.b32.xlu0 %v3401, 32
  %v3455 = vpop.permute.xlu0 %3454
  %3456 = vrot.lane.b32.xlu0 %v3403, 32
  %v3457 = vpop.permute.xlu0 %3456
  %3458 = vrot.lane.b32.xlu0 %v3405, 32
  %v3459 = vpop.permute.xlu0 %3458
  %3460 = vrot.lane.b32.xlu0 %v3407, 32
  %v3461 = vpop.permute.xlu0 %3460
  %3462 = vrot.lane.b32.xlu0 %v3409, 32
  %v3463 = vpop.permute.xlu0 %3462
  %3464 = vrot.lane.b32.xlu0 %v3411, 32
  %v3465 = vpop.permute.xlu0 %3464
  %3466 = vrot.lane.b32.xlu0 %v3413, 32
  %v3467 = vpop.permute.xlu0 %3466
  %3468 = vrot.lane.b32.xlu0 %v3415, 32
  %v3469 = vpop.permute.xlu0 %3468
  %3470 = vrot.lane.b32.xlu0 %v3417, 32
  %v3471 = vpop.permute.xlu0 %3470
  %3472 = vrot.lane.b32.xlu0 %v3419, 32
  %v3473 = vpop.permute.xlu0 %3472
  %3474 = vrot.lane.b32.xlu0 %v3421, 32
  %v3475 = vpop.permute.xlu0 %3474
  %3476 = vrot.lane.b32.xlu0 %v3423, 32
  %v3477 = vpop.permute.xlu0 %3476
  %3478 = vrot.lane.b32.xlu0 %v3425, 32
  %v3479 = vpop.permute.xlu0 %3478
  %3480 = vrot.lane.b32.xlu0 %v3427, 32
  %v3481 = vpop.permute.xlu0 %3480
  %3482 = vrot.lane.b32.xlu0 %v3429, 32
  %v3483 = vpop.permute.xlu0 %3482
  %3484 = vrot.lane.b32.xlu0 %v3431, 32
  %v3485 = vpop.permute.xlu0 %3484
  %3486 = vrot.lane.b32.xlu0 %v3430, 32
  %v3487 = vpop.permute.xlu0 %3486
  %3489 = vrot.lane.b32.xlu0 %v3039, 48
  %v3490 = vpop.permute.xlu0 %3489
  %3491 = vrot.lane.b32.xlu0 %v3040, 48
  %v3492 = vpop.permute.xlu0 %3491
  %3493 = vrot.lane.b32.xlu0 %v3041, 48
  %v3494 = vpop.permute.xlu0 %3493
  %3495 = vrot.lane.b32.xlu0 %v3042, 48
  %v3496 = vpop.permute.xlu0 %3495
  %3497 = vrot.lane.b32.xlu0 %v3043, 48
  %v3498 = vpop.permute.xlu0 %3497
  %3499 = vrot.lane.b32.xlu0 %v3044, 48
  %v3500 = vpop.permute.xlu0 %3499
  %3501 = vrot.lane.b32.xlu0 %v3045, 48
  %v3502 = vpop.permute.xlu0 %3501
  %3503 = vrot.lane.b32.xlu0 %v3046, 48
  %v3504 = vpop.permute.xlu0 %3503
  %3505 = vrot.lane.b32.xlu0 %v3047, 48
  %v3506 = vpop.permute.xlu0 %3505
  %3507 = vrot.lane.b32.xlu0 %v3048, 48
  %v3508 = vpop.permute.xlu0 %3507
  %3509 = vrot.lane.b32.xlu0 %v3049, 48
  %v3510 = vpop.permute.xlu0 %3509
  %3511 = vrot.lane.b32.xlu0 %v3050, 48
  %v3512 = vpop.permute.xlu0 %3511
  %3513 = vrot.lane.b32.xlu0 %v3051, 48
  %v3514 = vpop.permute.xlu0 %3513
  %3515 = vrot.lane.b32.xlu0 %v3052, 48
  %v3516 = vpop.permute.xlu0 %3515
  %3517 = vrot.lane.b32.xlu0 %v3053, 48
  %v3518 = vpop.permute.xlu0 %3517
  %3519 = vrot.lane.b32.xlu0 %v3054, 48
  %v3520 = vpop.permute.xlu0 %3519
  %3521 = vrot.lane.b32.xlu0 %v3055, 48
  %v3522 = vpop.permute.xlu0 %3521
  %3523 = vrot.lane.b32.xlu0 %v3056, 48
  %v3524 = vpop.permute.xlu0 %3523
  %3525 = vrot.lane.b32.xlu0 %v3057, 48
  %v3526 = vpop.permute.xlu0 %3525
  %3527 = vrot.lane.b32.xlu0 %v3058, 48
  %v3528 = vpop.permute.xlu0 %3527
  %3529 = vrot.lane.b32.xlu0 %v3059, 48
  %v3530 = vpop.permute.xlu0 %3529
  %3531 = vrot.lane.b32.xlu0 %v3060, 48
  %v3532 = vpop.permute.xlu0 %3531
  %3533 = vrot.lane.b32.xlu0 %v3061, 48
  %v3534 = vpop.permute.xlu0 %3533
  %3535 = vrot.lane.b32.xlu0 %v3062, 48
  %v3536 = vpop.permute.xlu0 %3535
  %3537 = vrot.lane.b32.xlu0 %v3063, 48
  %v3538 = vpop.permute.xlu0 %3537
  %3539 = vrot.lane.b32.xlu0 %v3064, 48
  %v3540 = vpop.permute.xlu0 %3539
  %3541 = vrot.lane.b32.xlu0 %v3065, 48
  %v3542 = vpop.permute.xlu0 %3541
  %3543 = vrot.lane.b32.xlu0 %v3066, 48
  %v3544 = vpop.permute.xlu0 %3543
  %v3546 = vshll.u32 %v3066, 16
  %v3548 = vrot.slane %v3546, 1
  %v3549 = vsel %vm3068, %v3291, %v3548
  %v3550 = vshrl.u32 %v3066, 16
  %v3552 = vor.u32 %v3550, %v3548
  %3553 = vrot.lane.b32.xlu0 %v3088, 64
  %v3554 = vpop.permute.xlu0 %3553
  %3555 = vrot.lane.b32.xlu0 %v3096, 64
  %v3556 = vpop.permute.xlu0 %3555
  %3557 = vrot.lane.b32.xlu0 %v3104, 64
  %v3558 = vpop.permute.xlu0 %3557
  %3559 = vrot.lane.b32.xlu0 %v3112, 64
  %v3560 = vpop.permute.xlu0 %3559
  %3561 = vrot.lane.b32.xlu0 %v3120, 64
  %v3562 = vpop.permute.xlu0 %3561
  %3563 = vrot.lane.b32.xlu0 %v3128, 64
  %v3564 = vpop.permute.xlu0 %3563
  %3565 = vrot.lane.b32.xlu0 %v3136, 64
  %v3566 = vpop.permute.xlu0 %3565
  %3567 = vrot.lane.b32.xlu0 %v3144, 64
  %v3568 = vpop.permute.xlu0 %3567
  %3569 = vrot.lane.b32.xlu0 %v3152, 64
  %v3570 = vpop.permute.xlu0 %3569
  %3571 = vrot.lane.b32.xlu0 %v3160, 64
  %v3572 = vpop.permute.xlu0 %3571
  %3573 = vrot.lane.b32.xlu0 %v3168, 64
  %v3574 = vpop.permute.xlu0 %3573
  %3575 = vrot.lane.b32.xlu0 %v3176, 64
  %v3576 = vpop.permute.xlu0 %3575
  %3577 = vrot.lane.b32.xlu0 %v3184, 64
  %v3578 = vpop.permute.xlu0 %3577
  %3579 = vrot.lane.b32.xlu0 %v3192, 64
  %v3580 = vpop.permute.xlu0 %3579
  %3581 = vrot.lane.b32.xlu0 %v3200, 64
  %v3582 = vpop.permute.xlu0 %3581
  %3583 = vrot.lane.b32.xlu0 %v3208, 64
  %v3584 = vpop.permute.xlu0 %3583
  %3585 = vrot.lane.b32.xlu0 %v3216, 64
  %v3586 = vpop.permute.xlu0 %3585
  %3587 = vrot.lane.b32.xlu0 %v3224, 64
  %v3588 = vpop.permute.xlu0 %3587
  %3589 = vrot.lane.b32.xlu0 %v3232, 64
  %v3590 = vpop.permute.xlu0 %3589
  %3591 = vrot.lane.b32.xlu0 %v3240, 64
  %v3592 = vpop.permute.xlu0 %3591
  %3593 = vrot.lane.b32.xlu0 %v3248, 64
  %v3594 = vpop.permute.xlu0 %3593
  %3595 = vrot.lane.b32.xlu0 %v3256, 64
  %v3596 = vpop.permute.xlu0 %3595
  %3597 = vrot.lane.b32.xlu0 %v3264, 64
  %v3598 = vpop.permute.xlu0 %3597
  %3599 = vrot.lane.b32.xlu0 %v3272, 64
  %v3600 = vpop.permute.xlu0 %3599
  %3601 = vrot.lane.b32.xlu0 %v3280, 64
  %v3602 = vpop.permute.xlu0 %3601
  %3603 = vrot.lane.b32.xlu0 %v3288, 64
  %v3604 = vpop.permute.xlu0 %3603
  %3605 = vrot.lane.b32.xlu0 %v3549, 64
  %v3606 = vpop.permute.xlu0 %3605
  %3607 = vrot.lane.b32.xlu0 %v3552, 64
  %v3608 = vpop.permute.xlu0 %3607
  %v3609 = vrot.slane %v3066, 1
  %v3610 = vsel %vm3376, %v3430, %v3609
  %3611 = vrot.lane.b32.xlu0 %v3381, 80
  %v3612 = vpop.permute.xlu0 %3611
  %3613 = vrot.lane.b32.xlu0 %v3383, 80
  %v3614 = vpop.permute.xlu0 %3613
  %3615 = vrot.lane.b32.xlu0 %v3385, 80
  %v3616 = vpop.permute.xlu0 %3615
  %3617 = vrot.lane.b32.xlu0 %v3387, 80
  %v3618 = vpop.permute.xlu0 %3617
  %3619 = vrot.lane.b32.xlu0 %v3389, 80
  %v3620 = vpop.permute.xlu0 %3619
  %3621 = vrot.lane.b32.xlu0 %v3391, 80
  %v3622 = vpop.permute.xlu0 %3621
  %3623 = vrot.lane.b32.xlu0 %v3393, 80
  %v3624 = vpop.permute.xlu0 %3623
  %3625 = vrot.lane.b32.xlu0 %v3395, 80
  %v3626 = vpop.permute.xlu0 %3625
  %3627 = vrot.lane.b32.xlu0 %v3397, 80
  %v3628 = vpop.permute.xlu0 %3627
  %3629 = vrot.lane.b32.xlu0 %v3399, 80
  %v3630 = vpop.permute.xlu0 %3629
  %3631 = vrot.lane.b32.xlu0 %v3401, 80
  %v3632 = vpop.permute.xlu0 %3631
  %3633 = vrot.lane.b32.xlu0 %v3403, 80
  %v3634 = vpop.permute.xlu0 %3633
  %3635 = vrot.lane.b32.xlu0 %v3405, 80
  %v3636 = vpop.permute.xlu0 %3635
  %3637 = vrot.lane.b32.xlu0 %v3407, 80
  %v3638 = vpop.permute.xlu0 %3637
  %3639 = vrot.lane.b32.xlu0 %v3409, 80
  %v3640 = vpop.permute.xlu0 %3639
  %3641 = vrot.lane.b32.xlu0 %v3411, 80
  %v3642 = vpop.permute.xlu0 %3641
  %3643 = vrot.lane.b32.xlu0 %v3413, 80
  %v3644 = vpop.permute.xlu0 %3643
  %3645 = vrot.lane.b32.xlu0 %v3415, 80
  %v3646 = vpop.permute.xlu0 %3645
  %3647 = vrot.lane.b32.xlu0 %v3417, 80
  %v3648 = vpop.permute.xlu0 %3647
  %3649 = vrot.lane.b32.xlu0 %v3419, 80
  %v3650 = vpop.permute.xlu0 %3649
  %3651 = vrot.lane.b32.xlu0 %v3421, 80
  %v3652 = vpop.permute.xlu0 %3651
  %3653 = vrot.lane.b32.xlu0 %v3423, 80
  %v3654 = vpop.permute.xlu0 %3653
  %3655 = vrot.lane.b32.xlu0 %v3425, 80
  %v3656 = vpop.permute.xlu0 %3655
  %3657 = vrot.lane.b32.xlu0 %v3427, 80
  %v3658 = vpop.permute.xlu0 %3657
  %3659 = vrot.lane.b32.xlu0 %v3429, 80
  %v3660 = vpop.permute.xlu0 %3659
  %3661 = vrot.lane.b32.xlu0 %v3431, 80
  %v3662 = vpop.permute.xlu0 %3661
  %3663 = vrot.lane.b32.xlu0 %v3610, 80
  %v3664 = vpop.permute.xlu0 %3663
  %3665 = vrot.lane.b32.xlu0 %v3609, 80
  %v3666 = vpop.permute.xlu0 %3665
  %3668 = vrot.lane.b32.xlu0 %v3040, 96
  %v3669 = vpop.permute.xlu0 %3668
  %3670 = vrot.lane.b32.xlu0 %v3041, 96
  %v3671 = vpop.permute.xlu0 %3670
  %3672 = vrot.lane.b32.xlu0 %v3042, 96
  %v3673 = vpop.permute.xlu0 %3672
  %3674 = vrot.lane.b32.xlu0 %v3043, 96
  %v3675 = vpop.permute.xlu0 %3674
  %3676 = vrot.lane.b32.xlu0 %v3044, 96
  %v3677 = vpop.permute.xlu0 %3676
  %3678 = vrot.lane.b32.xlu0 %v3045, 96
  %v3679 = vpop.permute.xlu0 %3678
  %3680 = vrot.lane.b32.xlu0 %v3046, 96
  %v3681 = vpop.permute.xlu0 %3680
  %3682 = vrot.lane.b32.xlu0 %v3047, 96
  %v3683 = vpop.permute.xlu0 %3682
  %3684 = vrot.lane.b32.xlu0 %v3048, 96
  %v3685 = vpop.permute.xlu0 %3684
  %3686 = vrot.lane.b32.xlu0 %v3049, 96
  %v3687 = vpop.permute.xlu0 %3686
  %3688 = vrot.lane.b32.xlu0 %v3050, 96
  %v3689 = vpop.permute.xlu0 %3688
  %3690 = vrot.lane.b32.xlu0 %v3051, 96
  %v3691 = vpop.permute.xlu0 %3690
  %3692 = vrot.lane.b32.xlu0 %v3052, 96
  %v3693 = vpop.permute.xlu0 %3692
  %3694 = vrot.lane.b32.xlu0 %v3053, 96
  %v3695 = vpop.permute.xlu0 %3694
  %3696 = vrot.lane.b32.xlu0 %v3054, 96
  %v3697 = vpop.permute.xlu0 %3696
  %3698 = vrot.lane.b32.xlu0 %v3055, 96
  %v3699 = vpop.permute.xlu0 %3698
  %3700 = vrot.lane.b32.xlu0 %v3056, 96
  %v3701 = vpop.permute.xlu0 %3700
  %3702 = vrot.lane.b32.xlu0 %v3057, 96
  %v3703 = vpop.permute.xlu0 %3702
  %3704 = vrot.lane.b32.xlu0 %v3058, 96
  %v3705 = vpop.permute.xlu0 %3704
  %3706 = vrot.lane.b32.xlu0 %v3059, 96
  %v3707 = vpop.permute.xlu0 %3706
  %3708 = vrot.lane.b32.xlu0 %v3060, 96
  %v3709 = vpop.permute.xlu0 %3708
  %3710 = vrot.lane.b32.xlu0 %v3061, 96
  %v3711 = vpop.permute.xlu0 %3710
  %3712 = vrot.lane.b32.xlu0 %v3062, 96
  %v3713 = vpop.permute.xlu0 %3712
  %3714 = vrot.lane.b32.xlu0 %v3063, 96
  %v3715 = vpop.permute.xlu0 %3714
  %3716 = vrot.lane.b32.xlu0 %v3064, 96
  %v3717 = vpop.permute.xlu0 %3716
  %3718 = vrot.lane.b32.xlu0 %v3065, 96
  %v3719 = vpop.permute.xlu0 %3718
  %3720 = vrot.lane.b32.xlu0 %v3066, 96
  %v3721 = vpop.permute.xlu0 %3720
  %3722 = vrot.lane.b32.xlu0 %v3067, 96
  %v3723 = vpop.permute.xlu0 %3722
  %v3725 = vshll.u32 %v3067, 16
  %v3727 = vrot.slane %v3725, 1
  %v3728 = vsel %vm3068, %v3552, %v3727
  %v3729 = vshrl.u32 %v3067, 16
  %v3731 = vor.u32 %v3729, %v3727
  %3732 = vrot.lane.b32.xlu0 %v3096, 112
  %v3733 = vpop.permute.xlu0 %3732
  %3734 = vrot.lane.b32.xlu0 %v3104, 112
  %v3735 = vpop.permute.xlu0 %3734
  %3736 = vrot.lane.b32.xlu0 %v3112, 112
  %v3737 = vpop.permute.xlu0 %3736
  %3738 = vrot.lane.b32.xlu0 %v3120, 112
  %v3739 = vpop.permute.xlu0 %3738
  %3740 = vrot.lane.b32.xlu0 %v3128, 112
  %v3741 = vpop.permute.xlu0 %3740
  %3742 = vrot.lane.b32.xlu0 %v3136, 112
  %v3743 = vpop.permute.xlu0 %3742
  %3744 = vrot.lane.b32.xlu0 %v3144, 112
  %v3745 = vpop.permute.xlu0 %3744
  %3746 = vrot.lane.b32.xlu0 %v3152, 112
  %v3747 = vpop.permute.xlu0 %3746
  %3748 = vrot.lane.b32.xlu0 %v3160, 112
  %v3749 = vpop.permute.xlu0 %3748
  %3750 = vrot.lane.b32.xlu0 %v3168, 112
  %v3751 = vpop.permute.xlu0 %3750
  %3752 = vrot.lane.b32.xlu0 %v3176, 112
  %v3753 = vpop.permute.xlu0 %3752
  %3754 = vrot.lane.b32.xlu0 %v3184, 112
  %v3755 = vpop.permute.xlu0 %3754
  %3756 = vrot.lane.b32.xlu0 %v3192, 112
  %v3757 = vpop.permute.xlu0 %3756
  %3758 = vrot.lane.b32.xlu0 %v3200, 112
  %v3759 = vpop.permute.xlu0 %3758
  %3760 = vrot.lane.b32.xlu0 %v3208, 112
  %v3761 = vpop.permute.xlu0 %3760
  %3762 = vrot.lane.b32.xlu0 %v3216, 112
  %v3763 = vpop.permute.xlu0 %3762
  %3764 = vrot.lane.b32.xlu0 %v3224, 112
  %v3765 = vpop.permute.xlu0 %3764
  %3766 = vrot.lane.b32.xlu0 %v3232, 112
  %v3767 = vpop.permute.xlu0 %3766
  %3768 = vrot.lane.b32.xlu0 %v3240, 112
  %v3769 = vpop.permute.xlu0 %3768
  %3770 = vrot.lane.b32.xlu0 %v3248, 112
  %v3771 = vpop.permute.xlu0 %3770
  %3772 = vrot.lane.b32.xlu0 %v3256, 112
  %v3773 = vpop.permute.xlu0 %3772
  %3774 = vrot.lane.b32.xlu0 %v3264, 112
  %v3775 = vpop.permute.xlu0 %3774
  %3776 = vrot.lane.b32.xlu0 %v3272, 112
  %v3777 = vpop.permute.xlu0 %3776
  %3778 = vrot.lane.b32.xlu0 %v3280, 112
  %v3779 = vpop.permute.xlu0 %3778
  %3780 = vrot.lane.b32.xlu0 %v3288, 112
  %v3781 = vpop.permute.xlu0 %3780
  %3782 = vrot.lane.b32.xlu0 %v3549, 112
  %v3783 = vpop.permute.xlu0 %3782
  %3784 = vrot.lane.b32.xlu0 %v3728, 112
  %v3785 = vpop.permute.xlu0 %3784
  %3786 = vrot.lane.b32.xlu0 %v3731, 112
  %v3787 = vpop.permute.xlu0 %3786
  %v3788 = vrot.slane %v3067, 1
  %v3789 = vsel %vm3376, %v3609, %v3788
  %vm3790 = vcmask 130048
  %v3792 = vsel %vm3790, %v3038, %v3293
  %v3794 = vsel %vm3790, %v3039, %v3295
  %v3796 = vsel %vm3790, %v3040, %v3297
  %v3798 = vsel %vm3790, %v3041, %v3299
  %v3800 = vsel %vm3790, %v3042, %v3301
  %v3802 = vsel %vm3790, %v3043, %v3303
  %v3804 = vsel %vm3790, %v3044, %v3305
  %v3806 = vsel %vm3790, %v3045, %v3307
  %v3808 = vsel %vm3790, %v3046, %v3309
  %v3810 = vsel %vm3790, %v3047, %v3311
  %v3812 = vsel %vm3790, %v3048, %v3313
  %v3814 = vsel %vm3790, %v3049, %v3315
  %v3816 = vsel %vm3790, %v3050, %v3317
  %v3818 = vsel %vm3790, %v3051, %v3319
  %v3820 = vsel %vm3790, %v3052, %v3321
  %v3822 = vsel %vm3790, %v3053, %v3323
  %v3824 = vsel %vm3790, %v3054, %v3325
  %v3826 = vsel %vm3790, %v3055, %v3327
  %v3828 = vsel %vm3790, %v3056, %v3329
  %v3830 = vsel %vm3790, %v3057, %v3331
  %v3832 = vsel %vm3790, %v3058, %v3333
  %v3834 = vsel %vm3790, %v3059, %v3335
  %v3836 = vsel %vm3790, %v3060, %v3337
  %v3838 = vsel %vm3790, %v3061, %v3339
  %v3840 = vsel %vm3790, %v3062, %v3341
  %v3842 = vsel %vm3790, %v3063, %v3343
  %v3844 = vsel %vm3790, %v3064, %v3345
  %v3846 = vsel %vm3790, %v3065, %v3347
  %vm3847 = vcmask 261120
  %v3849 = vsel %vm3847, %v3792, %v3433
  %v3851 = vsel %vm3847, %v3794, %v3435
  %v3853 = vsel %vm3847, %v3796, %v3437
  %v3855 = vsel %vm3847, %v3798, %v3439
  %v3857 = vsel %vm3847, %v3800, %v3441
  %v3859 = vsel %vm3847, %v3802, %v3443
  %v3861 = vsel %vm3847, %v3804, %v3445
  %v3863 = vsel %vm3847, %v3806, %v3447
  %v3865 = vsel %vm3847, %v3808, %v3449
  %v3867 = vsel %vm3847, %v3810, %v3451
  %v3869 = vsel %vm3847, %v3812, %v3453
  %v3871 = vsel %vm3847, %v3814, %v3455
  %v3873 = vsel %vm3847, %v3816, %v3457
  %v3875 = vsel %vm3847, %v3818, %v3459
  %v3877 = vsel %vm3847, %v3820, %v3461
  %v3879 = vsel %vm3847, %v3822, %v3463
  %v3881 = vsel %vm3847, %v3824, %v3465
  %v3883 = vsel %vm3847, %v3826, %v3467
  %v3885 = vsel %vm3847, %v3828, %v3469
  %v3887 = vsel %vm3847, %v3830, %v3471
  %v3889 = vsel %vm3847, %v3832, %v3473
  %v3891 = vsel %vm3847, %v3834, %v3475
  %v3893 = vsel %vm3847, %v3836, %v3477
  %v3895 = vsel %vm3847, %v3838, %v3479
  %v3897 = vsel %vm3847, %v3840, %v3481
  %v3899 = vsel %vm3847, %v3842, %v3483
  %v3901 = vsel %vm3847, %v3844, %v3485
  %v3903 = vsel %vm3847, %v3846, %v3487
  %vm3904 = vcmask 392192
  %v3906 = vsel %vm3904, %v3849, %v3490
  %v3908 = vsel %vm3904, %v3851, %v3492
  %v3910 = vsel %vm3904, %v3853, %v3494
  %v3912 = vsel %vm3904, %v3855, %v3496
  %v3914 = vsel %vm3904, %v3857, %v3498
  %v3916 = vsel %vm3904, %v3859, %v3500
  %v3918 = vsel %vm3904, %v3861, %v3502
  %v3920 = vsel %vm3904, %v3863, %v3504
  %v3922 = vsel %vm3904, %v3865, %v3506
  %v3924 = vsel %vm3904, %v3867, %v3508
  %v3926 = vsel %vm3904, %v3869, %v3510
  %v3928 = vsel %vm3904, %v3871, %v3512
  %v3930 = vsel %vm3904, %v3873, %v3514
  %v3932 = vsel %vm3904, %v3875, %v3516
  %v3934 = vsel %vm3904, %v3877, %v3518
  %v3936 = vsel %vm3904, %v3879, %v3520
  %v3938 = vsel %vm3904, %v3881, %v3522
  %v3940 = vsel %vm3904, %v3883, %v3524
  %v3942 = vsel %vm3904, %v3885, %v3526
  %v3944 = vsel %vm3904, %v3887, %v3528
  %v3946 = vsel %vm3904, %v3889, %v3530
  %v3948 = vsel %vm3904, %v3891, %v3532
  %v3950 = vsel %vm3904, %v3893, %v3534
  %v3952 = vsel %vm3904, %v3895, %v3536
  %v3954 = vsel %vm3904, %v3897, %v3538
  %v3956 = vsel %vm3904, %v3899, %v3540
  %v3958 = vsel %vm3904, %v3901, %v3542
  %v3960 = vsel %vm3904, %v3903, %v3544
  %vm3961 = vcmask 523264
  %v3963 = vsel %vm3961, %v3906, %v3554
  %v3965 = vsel %vm3961, %v3908, %v3556
  %v3967 = vsel %vm3961, %v3910, %v3558
  %v3969 = vsel %vm3961, %v3912, %v3560
  %v3971 = vsel %vm3961, %v3914, %v3562
  %v3973 = vsel %vm3961, %v3916, %v3564
  %v3975 = vsel %vm3961, %v3918, %v3566
  %v3977 = vsel %vm3961, %v3920, %v3568
  %v3979 = vsel %vm3961, %v3922, %v3570
  %v3981 = vsel %vm3961, %v3924, %v3572
  %v3983 = vsel %vm3961, %v3926, %v3574
  %v3985 = vsel %vm3961, %v3928, %v3576
  %v3987 = vsel %vm3961, %v3930, %v3578
  %v3989 = vsel %vm3961, %v3932, %v3580
  %v3991 = vsel %vm3961, %v3934, %v3582
  %v3993 = vsel %vm3961, %v3936, %v3584
  %v3995 = vsel %vm3961, %v3938, %v3586
  %v3997 = vsel %vm3961, %v3940, %v3588
  %v3999 = vsel %vm3961, %v3942, %v3590
  %v4001 = vsel %vm3961, %v3944, %v3592
  %v4003 = vsel %vm3961, %v3946, %v3594
  %v4005 = vsel %vm3961, %v3948, %v3596
  %v4007 = vsel %vm3961, %v3950, %v3598
  %v4009 = vsel %vm3961, %v3952, %v3600
  %v4011 = vsel %vm3961, %v3954, %v3602
  %v4013 = vsel %vm3961, %v3956, %v3604
  %v4015 = vsel %vm3961, %v3958, %v3606
  %v4017 = vsel %vm3961, %v3960, %v3608
  %vm4018 = vcmask 654336
  %v4020 = vsel %vm4018, %v3963, %v3612
  %v4022 = vsel %vm4018, %v3965, %v3614
  %v4024 = vsel %vm4018, %v3967, %v3616
  %v4026 = vsel %vm4018, %v3969, %v3618
  %v4028 = vsel %vm4018, %v3971, %v3620
  %v4030 = vsel %vm4018, %v3973, %v3622
  %v4032 = vsel %vm4018, %v3975, %v3624
  %v4034 = vsel %vm4018, %v3977, %v3626
  %v4036 = vsel %vm4018, %v3979, %v3628
  %v4038 = vsel %vm4018, %v3981, %v3630
  %v4040 = vsel %vm4018, %v3983, %v3632
  %v4042 = vsel %vm4018, %v3985, %v3634
  %v4044 = vsel %vm4018, %v3987, %v3636
  %v4046 = vsel %vm4018, %v3989, %v3638
  %v4048 = vsel %vm4018, %v3991, %v3640
  %v4050 = vsel %vm4018, %v3993, %v3642
  %v4052 = vsel %vm4018, %v3995, %v3644
  %v4054 = vsel %vm4018, %v3997, %v3646
  %v4056 = vsel %vm4018, %v3999, %v3648
  %v4058 = vsel %vm4018, %v4001, %v3650
  %v4060 = vsel %vm4018, %v4003, %v3652
  %v4062 = vsel %vm4018, %v4005, %v3654
  %v4064 = vsel %vm4018, %v4007, %v3656
  %v4066 = vsel %vm4018, %v4009, %v3658
  %v4068 = vsel %vm4018, %v4011, %v3660
  %v4070 = vsel %vm4018, %v4013, %v3662
  %v4072 = vsel %vm4018, %v4015, %v3664
  %v4074 = vsel %vm4018, %v4017, %v3666
  %vm4075 = vcmask 785408
  %v4077 = vsel %vm4075, %v4020, %v3669
  %v4079 = vsel %vm4075, %v4022, %v3671
  %v4081 = vsel %vm4075, %v4024, %v3673
  %v4083 = vsel %vm4075, %v4026, %v3675
  %v4085 = vsel %vm4075, %v4028, %v3677
  %v4087 = vsel %vm4075, %v4030, %v3679
  %v4089 = vsel %vm4075, %v4032, %v3681
  %v4091 = vsel %vm4075, %v4034, %v3683
  %v4093 = vsel %vm4075, %v4036, %v3685
  %v4095 = vsel %vm4075, %v4038, %v3687
  %v4097 = vsel %vm4075, %v4040, %v3689
  %v4099 = vsel %vm4075, %v4042, %v3691
  %v4101 = vsel %vm4075, %v4044, %v3693
  %v4103 = vsel %vm4075, %v4046, %v3695
  %v4105 = vsel %vm4075, %v4048, %v3697
  %v4107 = vsel %vm4075, %v4050, %v3699
  %v4109 = vsel %vm4075, %v4052, %v3701
  %v4111 = vsel %vm4075, %v4054, %v3703
  %v4113 = vsel %vm4075, %v4056, %v3705
  %v4115 = vsel %vm4075, %v4058, %v3707
  %v4117 = vsel %vm4075, %v4060, %v3709
  %v4119 = vsel %vm4075, %v4062, %v3711
  %v4121 = vsel %vm4075, %v4064, %v3713
  %v4123 = vsel %vm4075, %v4066, %v3715
  %v4125 = vsel %vm4075, %v4068, %v3717
  %v4127 = vsel %vm4075, %v4070, %v3719
  %v4129 = vsel %vm4075, %v4072, %v3721
  %v4131 = vsel %vm4075, %v4074, %v3723
  %vm4132 = vcmask 916480
  %v4134 = vsel %vm4132, %v4077, %v3733
  %v4137 = vsel %vm4132, %v4079, %v3735
  %v4140 = vsel %vm4132, %v4081, %v3737
  %v4143 = vsel %vm4132, %v4083, %v3739
  %v4146 = vsel %vm4132, %v4085, %v3741
  %v4149 = vsel %vm4132, %v4087, %v3743
  %v4152 = vsel %vm4132, %v4089, %v3745
  %v4155 = vsel %vm4132, %v4091, %v3747
  %v4158 = vsel %vm4132, %v4093, %v3749
  %v4161 = vsel %vm4132, %v4095, %v3751
  %v4164 = vsel %vm4132, %v4097, %v3753
  %v4167 = vsel %vm4132, %v4099, %v3755
  %v4170 = vsel %vm4132, %v4101, %v3757
  %v4173 = vsel %vm4132, %v4103, %v3759
  %v4176 = vsel %vm4132, %v4105, %v3761
  %v4179 = vsel %vm4132, %v4107, %v3763
  %v4182 = vsel %vm4132, %v4109, %v3765
  %v4185 = vsel %vm4132, %v4111, %v3767
  %v4188 = vsel %vm4132, %v4113, %v3769
  %v4191 = vsel %vm4132, %v4115, %v3771
  %v4194 = vsel %vm4132, %v4117, %v3773
  %v4197 = vsel %vm4132, %v4119, %v3775
  %v4200 = vsel %vm4132, %v4121, %v3777
  %v4203 = vsel %vm4132, %v4123, %v3779
  %v4206 = vsel %vm4132, %v4125, %v3781
  %v4209 = vsel %vm4132, %v4127, %v3783
  %v4212 = vsel %vm4132, %v4129, %v3785
  %v4215 = vsel %vm4132, %v4131, %v3787
  %v4217 = vld [vmem:[%s7] sm:$0xf]
  %v4218 = vld [vmem:[%s7 + $0x4] sm:$0xf]
  %v4219 = vld [vmem:[%s7 + $0x8] sm:$0xf]
  %v4220 = vld [vmem:[%s7 + $0xc] sm:$0xf]
  %v4221 = vld [vmem:[%s7 + $0x10] sm:$0xf]
  %v4222 = vld [vmem:[%s7 + $0x14] sm:$0xf]
  %v4223 = vld [vmem:[%s7 + $0x18] sm:$0xf]
  %v4224 = vld [vmem:[%s7 + $0x1c] sm:$0xf]
  %v4225 = vld [vmem:[%s7 + $0x20] sm:$0xf]
  %v4226 = vld [vmem:[%s7 + $0x24] sm:$0xf]
  %v4227 = vld [vmem:[%s7 + $0x28] sm:$0xf]
  %v4228 = vld [vmem:[%s7 + $0x2c] sm:$0xf]
  %v4229 = vld [vmem:[%s7 + $0x30] sm:$0xf]
  %v4230 = vld [vmem:[%s7 + $0x34] sm:$0xf]
  %v4231 = vld [vmem:[%s7 + $0x38] sm:$0xf]
  %v4232 = vld [vmem:[%s7 + $0x3c] sm:$0xf]
  %v4233 = vld [vmem:[%s7 + $0x40] sm:$0xf]
  %v4234 = vld [vmem:[%s7 + $0x44] sm:$0xf]
  %v4235 = vld [vmem:[%s9] sm:$0x1]
  %v4237 = vlaneseq
  %v4238 = vshrl.u32 %v4237, 7
  %v4239 = vsub.s32 0, %v4238
  %v4240 = vrot.slane %v4235, %v4239
  %v4260 = vunpack.c.l.b16 %v4217
  %v4261 = vunpack.c.l.b16 %v4218
  %v4262 = vunpack.c.l.b16 %v4219
  %v4263 = vunpack.c.l.b16 %v4220
  %v4264 = vunpack.c.l.b16 %v4221
  %v4265 = vunpack.c.l.b16 %v4222
  %v4266 = vunpack.c.l.b16 %v4223
  %v4267 = vunpack.c.l.b16 %v4224
  %v4268 = vunpack.c.l.b16 %v4225
  %v4269 = vunpack.c.l.b16 %v4226
  %v4270 = vunpack.c.l.b16 %v4227
  %v4271 = vunpack.c.l.b16 %v4228
  %v4272 = vunpack.c.l.b16 %v4229
  %v4273 = vunpack.c.l.b16 %v4230
  %v4274 = vunpack.c.l.b16 %v4231
  %v4275 = vunpack.c.l.b16 %v4232
  %v4276 = vunpack.c.l.b16 %v4233
  %v4277 = vunpack.c.l.b16 %v4234
  %v4278 = vpack.c.b16 %v4261, %v4260
  %v4279 = vpack.c.b16 %v4263, %v4262
  %v4280 = vpack.c.b16 %v4265, %v4264
  %v4281 = vpack.c.b16 %v4267, %v4266
  %v4282 = vpack.c.b16 %v4269, %v4268
  %v4283 = vpack.c.b16 %v4271, %v4270
  %v4284 = vpack.c.b16 %v4273, %v4272
  %v4285 = vpack.c.b16 %v4275, %v4274
  %v4286 = vpack.c.b16 %v4277, %v4276
  %v4297 = vsel %vm3790, %v3383, 0
  %v4300 = vsel %vm3790, %v3385, 0
  %v4303 = vsel %vm3790, %v3387, 0
  %v4306 = vsel %vm3790, %v3389, 0
  %v4309 = vsel %vm3790, %v3391, 0
  %v4312 = vsel %vm3790, %v3393, 0
  %v4315 = vsel %vm3790, %v3395, 0
  %v4318 = vsel %vm3790, %v3397, 0
  %v4321 = vsel %vm3790, %v3399, 0
  %v4324 = vsel %vm3790, %v3401, 0
  %v4327 = vsel %vm3790, %v3403, 0
  %v4330 = vsel %vm3790, %v3405, 0
  %v4333 = vsel %vm3790, %v3407, 0
  %v4336 = vsel %vm3790, %v3409, 0
  %v4339 = vsel %vm3790, %v3411, 0
  %v4342 = vsel %vm3790, %v3413, 0
  %v4345 = vsel %vm3790, %v3415, 0
  %v4348 = vsel %vm3790, %v3417, 0
  %v4351 = vsel %vm3790, %v3419, 0
  %v4354 = vsel %vm3790, %v3421, 0
  %v4357 = vsel %vm3790, %v3423, 0
  %v4360 = vsel %vm3790, %v3425, 0
  %v4363 = vsel %vm3790, %v3427, 0
  %v4366 = vsel %vm3790, %v3429, 0
  %v4369 = vsel %vm3790, %v3431, 0
  %v4372 = vsel %vm3790, %v3610, 0
  %v4375 = vsel %vm3790, %v3789, 0
  %v4378 = vsel %vm3790, %v3788, 0
  %4380 = vmatprep.subr.bf16.mxu0 0
  %4381 = vmatpush1.bf16.msra.mxu0 %v4285
  %4382 = vmatprep.subr.bf16.mxu0 0
  %4383 = vmatpush1.bf16.msra.mxu0 %v4284
  %4384 = vmatprep.subr.bf16.mxu0 0
  %4385 = vmatpush1.bf16.msra.mxu0 %v4283
  %4386 = vmatprep.subr.bf16.mxu0 0
  %4387 = vmatpush1.bf16.msra.mxu0 %v4282
  %4388 = vmatprep.subr.bf16.mxu0 0
  %4389 = vmatpush1.bf16.msra.mxu0 %v4281
  %4390 = vmatprep.subr.bf16.mxu0 0
  %4391 = vmatpush1.bf16.msra.mxu0 %v4280
  %4392 = vmatprep.subr.bf16.mxu0 0
  %4393 = vmatpush1.bf16.msra.mxu0 %v4279
  %4394 = vmatprep.subr.bf16.mxu0 0
  %4395 = vmatpush1.bf16.msra.mxu0 %v4278
  %4396 = vmatprep.subr.bf16.mxu0 0
  %4397 = vmatpush2.bf16.msra.mxu0 0
  %4398 = vmatprep.subr.bf16.mxu0 0
  %4399 = vmatpush2.bf16.msra.mxu0 0
  %4400 = vmatprep.subr.bf16.mxu0 0
  %4401 = vmatpush2.bf16.msra.mxu0 0
  %4402 = vmatprep.subr.bf16.mxu0 0
  %4403 = vmatpush2.bf16.msra.mxu0 0
  %4404 = vmatprep.subr.bf16.mxu0 0
  %4405 = vmatpush2.bf16.msra.mxu0 0
  %4406 = vmatprep.subr.bf16.mxu0 0
  %4407 = vmatpush2.bf16.msra.mxu0 0
  %4408 = vmatprep.subr.bf16.mxu0 0
  %4409 = vmatpush2.bf16.msra.mxu0 0
  %4410 = vmatprep.subr.bf16.mxu0 0
  %4411 = vmatpush2.bf16.msra.mxu0 %v4286
  %4412 = vmatprep.mubr.bf16.mxu0 %v4297
  %4413 = vmatmul.mubr.bf16.gmra.mxu0 %v4134
  %v4414 = vpop.f32.mrf.mxu0
  %v4415 = vadd.f32 %v4240, %v4414
  %v4416 = vpop.f32.mrf.mxu0
  %v4417 = vpop.f32.mrf.mxu0
  %v4418 = vadd.f32 %v4240, %v4417
  %v4419 = vpop.f32.mrf.mxu0
  %4420 = vmatprep.mubr.bf16.mxu0 %v4300
  %4421 = vmatmul.mubr.bf16.gmra.mxu0 %v4137
  %v4422 = vpop.f32.mrf.mxu0
  %v4423 = vadd.f32 %v4240, %v4422
  %v4424 = vpop.f32.mrf.mxu0
  %v4425 = vpop.f32.mrf.mxu0
  %v4426 = vadd.f32 %v4240, %v4425
  %v4427 = vpop.f32.mrf.mxu0
  %4428 = vmatprep.mubr.bf16.mxu0 %v4303
  %4429 = vmatmul.mubr.bf16.gmra.mxu0 %v4140
  %v4430 = vpop.f32.mrf.mxu0
  %v4431 = vadd.f32 %v4240, %v4430
  %v4432 = vpop.f32.mrf.mxu0
  %v4433 = vpop.f32.mrf.mxu0
  %v4434 = vadd.f32 %v4240, %v4433
  %v4435 = vpop.f32.mrf.mxu0
  %4436 = vmatprep.mubr.bf16.mxu0 %v4306
  %4437 = vmatmul.mubr.bf16.gmra.mxu0 %v4143
  %v4438 = vpop.f32.mrf.mxu0
  %v4439 = vadd.f32 %v4240, %v4438
  %v4440 = vpop.f32.mrf.mxu0
  %v4441 = vpop.f32.mrf.mxu0
  %v4442 = vadd.f32 %v4240, %v4441
  %v4443 = vpop.f32.mrf.mxu0
  %4444 = vmatprep.mubr.bf16.mxu0 %v4309
  %4445 = vmatmul.mubr.bf16.gmra.mxu0 %v4146
  %v4446 = vpop.f32.mrf.mxu0
  %v4447 = vadd.f32 %v4240, %v4446
  %v4448 = vpop.f32.mrf.mxu0
  %v4449 = vpop.f32.mrf.mxu0
  %v4450 = vadd.f32 %v4240, %v4449
  %v4451 = vpop.f32.mrf.mxu0
  %4452 = vmatprep.mubr.bf16.mxu0 %v4312
  %4453 = vmatmul.mubr.bf16.gmra.mxu0 %v4149
  %v4454 = vpop.f32.mrf.mxu0
  %v4455 = vadd.f32 %v4240, %v4454
  %v4456 = vpop.f32.mrf.mxu0
  %v4457 = vpop.f32.mrf.mxu0
  %v4458 = vadd.f32 %v4240, %v4457
  %v4459 = vpop.f32.mrf.mxu0
  %4460 = vmatprep.mubr.bf16.mxu0 %v4315
  %4461 = vmatmul.mubr.bf16.gmra.mxu0 %v4152
  %v4462 = vpop.f32.mrf.mxu0
  %v4463 = vadd.f32 %v4240, %v4462
  %v4464 = vpop.f32.mrf.mxu0
  %v4465 = vpop.f32.mrf.mxu0
  %v4466 = vadd.f32 %v4240, %v4465
  %v4467 = vpop.f32.mrf.mxu0
  %4468 = vmatprep.mubr.bf16.mxu0 %v4318
  %4469 = vmatmul.mubr.bf16.gmra.mxu0 %v4155
  %v4470 = vpop.f32.mrf.mxu0
  %v4471 = vadd.f32 %v4240, %v4470
  %v4472 = vpop.f32.mrf.mxu0
  %v4473 = vpop.f32.mrf.mxu0
  %v4474 = vadd.f32 %v4240, %v4473
  %v4475 = vpop.f32.mrf.mxu0
  %4476 = vmatprep.mubr.bf16.mxu0 %v4321
  %4477 = vmatmul.mubr.bf16.gmra.mxu0 %v4158
  %v4478 = vpop.f32.mrf.mxu0
  %v4479 = vadd.f32 %v4240, %v4478
  %v4480 = vpop.f32.mrf.mxu0
  %v4481 = vpop.f32.mrf.mxu0
  %v4482 = vadd.f32 %v4240, %v4481
  %v4483 = vpop.f32.mrf.mxu0
  %4484 = vmatprep.mubr.bf16.mxu0 %v4324
  %4485 = vmatmul.mubr.bf16.gmra.mxu0 %v4161
  %v4486 = vpop.f32.mrf.mxu0
  %v4487 = vadd.f32 %v4240, %v4486
  %v4488 = vpop.f32.mrf.mxu0
  %v4489 = vpop.f32.mrf.mxu0
  %v4490 = vadd.f32 %v4240, %v4489
  %v4491 = vpop.f32.mrf.mxu0
  %4492 = vmatprep.mubr.bf16.mxu0 %v4327
  %4493 = vmatmul.mubr.bf16.gmra.mxu0 %v4164
  %v4494 = vpop.f32.mrf.mxu0
  %v4495 = vadd.f32 %v4240, %v4494
  %v4496 = vpop.f32.mrf.mxu0
  %v4497 = vpop.f32.mrf.mxu0
  %v4498 = vadd.f32 %v4240, %v4497
  %v4499 = vpop.f32.mrf.mxu0
  %4500 = vmatprep.mubr.bf16.mxu0 %v4330
  %4501 = vmatmul.mubr.bf16.gmra.mxu0 %v4167
  %v4502 = vpop.f32.mrf.mxu0
  %v4503 = vadd.f32 %v4240, %v4502
  %v4504 = vpop.f32.mrf.mxu0
  %v4505 = vpop.f32.mrf.mxu0
  %v4506 = vadd.f32 %v4240, %v4505
  %v4507 = vpop.f32.mrf.mxu0
  %4508 = vmatprep.mubr.bf16.mxu0 %v4333
  %4509 = vmatmul.mubr.bf16.gmra.mxu0 %v4170
  %v4510 = vpop.f32.mrf.mxu0
  %v4511 = vadd.f32 %v4240, %v4510
  %v4512 = vpop.f32.mrf.mxu0
  %v4513 = vpop.f32.mrf.mxu0
  %v4514 = vadd.f32 %v4240, %v4513
  %v4515 = vpop.f32.mrf.mxu0
  %4516 = vmatprep.mubr.bf16.mxu0 %v4336
  %4517 = vmatmul.mubr.bf16.gmra.mxu0 %v4173
  %v4518 = vpop.f32.mrf.mxu0
  %v4519 = vadd.f32 %v4240, %v4518
  %v4520 = vpop.f32.mrf.mxu0
  %v4521 = vpop.f32.mrf.mxu0
  %v4522 = vadd.f32 %v4240, %v4521
  %v4523 = vpop.f32.mrf.mxu0
  %4524 = vmatprep.mubr.bf16.mxu0 %v4339
  %4525 = vmatmul.mubr.bf16.gmra.mxu0 %v4176
  %v4526 = vpop.f32.mrf.mxu0
  %v4527 = vadd.f32 %v4240, %v4526
  %v4528 = vpop.f32.mrf.mxu0
  %v4529 = vpop.f32.mrf.mxu0
  %v4530 = vadd.f32 %v4240, %v4529
  %v4531 = vpop.f32.mrf.mxu0
  %4532 = vmatprep.mubr.bf16.mxu0 %v4342
  %4533 = vmatmul.mubr.bf16.gmra.mxu0 %v4179
  %v4534 = vpop.f32.mrf.mxu0
  %v4535 = vadd.f32 %v4240, %v4534
  %v4536 = vpop.f32.mrf.mxu0
  %v4537 = vpop.f32.mrf.mxu0
  %v4538 = vadd.f32 %v4240, %v4537
  %v4539 = vpop.f32.mrf.mxu0
  %4540 = vmatprep.mubr.bf16.mxu0 %v4345
  %4541 = vmatmul.mubr.bf16.gmra.mxu0 %v4182
  %v4542 = vpop.f32.mrf.mxu0
  %v4543 = vadd.f32 %v4240, %v4542
  %v4544 = vpop.f32.mrf.mxu0
  %v4545 = vpop.f32.mrf.mxu0
  %v4546 = vadd.f32 %v4240, %v4545
  %v4547 = vpop.f32.mrf.mxu0
  %4548 = vmatprep.mubr.bf16.mxu0 %v4348
  %4549 = vmatmul.mubr.bf16.gmra.mxu0 %v4185
  %v4550 = vpop.f32.mrf.mxu0
  %v4551 = vadd.f32 %v4240, %v4550
  %v4552 = vpop.f32.mrf.mxu0
  %v4553 = vpop.f32.mrf.mxu0
  %v4554 = vadd.f32 %v4240, %v4553
  %v4555 = vpop.f32.mrf.mxu0
  %4556 = vmatprep.mubr.bf16.mxu0 %v4351
  %4557 = vmatmul.mubr.bf16.gmra.mxu0 %v4188
  %v4558 = vpop.f32.mrf.mxu0
  %v4559 = vadd.f32 %v4240, %v4558
  %v4560 = vpop.f32.mrf.mxu0
  %v4561 = vpop.f32.mrf.mxu0
  %v4562 = vadd.f32 %v4240, %v4561
  %v4563 = vpop.f32.mrf.mxu0
  %4564 = vmatprep.mubr.bf16.mxu0 %v4354
  %4565 = vmatmul.mubr.bf16.gmra.mxu0 %v4191
  %v4566 = vpop.f32.mrf.mxu0
  %v4567 = vadd.f32 %v4240, %v4566
  %v4568 = vpop.f32.mrf.mxu0
  %v4569 = vpop.f32.mrf.mxu0
  %v4570 = vadd.f32 %v4240, %v4569
  %v4571 = vpop.f32.mrf.mxu0
  %4572 = vmatprep.mubr.bf16.mxu0 %v4357
  %4573 = vmatmul.mubr.bf16.gmra.mxu0 %v4194
  %v4574 = vpop.f32.mrf.mxu0
  %v4575 = vadd.f32 %v4240, %v4574
  %v4576 = vpop.f32.mrf.mxu0
  %v4577 = vpop.f32.mrf.mxu0
  %v4578 = vadd.f32 %v4240, %v4577
  %v4579 = vpop.f32.mrf.mxu0
  %4580 = vmatprep.mubr.bf16.mxu0 %v4360
  %4581 = vmatmul.mubr.bf16.gmra.mxu0 %v4197
  %v4582 = vpop.f32.mrf.mxu0
  %v4583 = vadd.f32 %v4240, %v4582
  %v4584 = vpop.f32.mrf.mxu0
  %v4585 = vpop.f32.mrf.mxu0
  %v4586 = vadd.f32 %v4240, %v4585
  %v4587 = vpop.f32.mrf.mxu0
  %4588 = vmatprep.mubr.bf16.mxu0 %v4363
  %4589 = vmatmul.mubr.bf16.gmra.mxu0 %v4200
  %v4590 = vpop.f32.mrf.mxu0
  %v4591 = vadd.f32 %v4240, %v4590
  %v4592 = vpop.f32.mrf.mxu0
  %v4593 = vpop.f32.mrf.mxu0
  %v4594 = vadd.f32 %v4240, %v4593
  %v4595 = vpop.f32.mrf.mxu0
  %4596 = vmatprep.mubr.bf16.mxu0 %v4366
  %4597 = vmatmul.mubr.bf16.gmra.mxu0 %v4203
  %v4598 = vpop.f32.mrf.mxu0
  %v4599 = vadd.f32 %v4240, %v4598
  %v4600 = vpop.f32.mrf.mxu0
  %v4601 = vpop.f32.mrf.mxu0
  %v4602 = vadd.f32 %v4240, %v4601
  %v4603 = vpop.f32.mrf.mxu0
  %4604 = vmatprep.mubr.bf16.mxu0 %v4369
  %4605 = vmatmul.mubr.bf16.gmra.mxu0 %v4206
  %v4606 = vpop.f32.mrf.mxu0
  %v4607 = vadd.f32 %v4240, %v4606
  %v4608 = vpop.f32.mrf.mxu0
  %v4609 = vpop.f32.mrf.mxu0
  %v4610 = vadd.f32 %v4240, %v4609
  %v4611 = vpop.f32.mrf.mxu0
  %4612 = vmatprep.mubr.bf16.mxu0 %v4372
  %4613 = vmatmul.mubr.bf16.gmra.mxu0 %v4209
  %v4614 = vpop.f32.mrf.mxu0
  %v4615 = vadd.f32 %v4240, %v4614
  %v4616 = vpop.f32.mrf.mxu0
  %v4617 = vpop.f32.mrf.mxu0
  %v4618 = vadd.f32 %v4240, %v4617
  %v4619 = vpop.f32.mrf.mxu0
  %4620 = vmatprep.mubr.bf16.mxu0 %v4375
  %4621 = vmatmul.mubr.bf16.gmra.mxu0 %v4212
  %v4622 = vpop.f32.mrf.mxu0
  %v4623 = vadd.f32 %v4240, %v4622
  %v4624 = vpop.f32.mrf.mxu0
  %v4625 = vpop.f32.mrf.mxu0
  %v4626 = vadd.f32 %v4240, %v4625
  %v4627 = vpop.f32.mrf.mxu0
  %4628 = vmatprep.mubr.bf16.mxu0 %v4378
  %4629 = vmatmul.mubr.bf16.gmra.mxu0 %v4215
  %v4630 = vpop.f32.mrf.mxu0
  %v4631 = vadd.f32 %v4240, %v4630
  %v4632 = vpop.f32.mrf.mxu0
  %v4633 = vpop.f32.mrf.mxu0
  %v4634 = vadd.f32 %v4240, %v4633
  %v4635 = vpop.f32.mrf.mxu0
  %4636 = vdwg.mxu0
  %vm4637 = vcmp.gt.f32.partialorder %v4415, 0.0
  %vm4638 = vcmp.gt.f32.partialorder %v4418, 0.0
  %vm4639 = vcmp.gt.f32.partialorder %v4423, 0.0
  %vm4640 = vcmp.gt.f32.partialorder %v4426, 0.0
  %vm4641 = vcmp.gt.f32.partialorder %v4431, 0.0
  %vm4642 = vcmp.gt.f32.partialorder %v4434, 0.0
  %vm4643 = vcmp.gt.f32.partialorder %v4439, 0.0
  %vm4644 = vcmp.gt.f32.partialorder %v4442, 0.0
  %vm4645 = vcmp.gt.f32.partialorder %v4447, 0.0
  %vm4646 = vcmp.gt.f32.partialorder %v4450, 0.0
  %vm4647 = vcmp.gt.f32.partialorder %v4455, 0.0
  %vm4648 = vcmp.gt.f32.partialorder %v4458, 0.0
  %vm4649 = vcmp.gt.f32.partialorder %v4463, 0.0
  %vm4650 = vcmp.gt.f32.partialorder %v4466, 0.0
  %vm4651 = vcmp.gt.f32.partialorder %v4471, 0.0
  %vm4652 = vcmp.gt.f32.partialorder %v4474, 0.0
  %vm4653 = vcmp.gt.f32.partialorder %v4479, 0.0
  %vm4654 = vcmp.gt.f32.partialorder %v4482, 0.0
  %vm4655 = vcmp.gt.f32.partialorder %v4487, 0.0
  %vm4656 = vcmp.gt.f32.partialorder %v4490, 0.0
  %vm4657 = vcmp.gt.f32.partialorder %v4495, 0.0
  %vm4658 = vcmp.gt.f32.partialorder %v4498, 0.0
  %vm4659 = vcmp.gt.f32.partialorder %v4503, 0.0
  %vm4660 = vcmp.gt.f32.partialorder %v4506, 0.0
  %vm4661 = vcmp.gt.f32.partialorder %v4511, 0.0
  %vm4662 = vcmp.gt.f32.partialorder %v4514, 0.0
  %vm4663 = vcmp.gt.f32.partialorder %v4519, 0.0
  %vm4664 = vcmp.gt.f32.partialorder %v4522, 0.0
  %vm4665 = vcmp.gt.f32.partialorder %v4527, 0.0
  %vm4666 = vcmp.gt.f32.partialorder %v4530, 0.0
  %vm4667 = vcmp.gt.f32.partialorder %v4535, 0.0
  %vm4668 = vcmp.gt.f32.partialorder %v4538, 0.0
  %vm4669 = vcmp.gt.f32.partialorder %v4543, 0.0
  %vm4670 = vcmp.gt.f32.partialorder %v4546, 0.0
  %vm4671 = vcmp.gt.f32.partialorder %v4551, 0.0
  %vm4672 = vcmp.gt.f32.partialorder %v4554, 0.0
  %vm4673 = vcmp.gt.f32.partialorder %v4559, 0.0
  %vm4674 = vcmp.gt.f32.partialorder %v4562, 0.0
  %vm4675 = vcmp.gt.f32.partialorder %v4567, 0.0
  %vm4676 = vcmp.gt.f32.partialorder %v4570, 0.0
  %vm4677 = vcmp.gt.f32.partialorder %v4575, 0.0
  %vm4678 = vcmp.gt.f32.partialorder %v4578, 0.0
  %vm4679 = vcmp.gt.f32.partialorder %v4583, 0.0
  %vm4680 = vcmp.gt.f32.partialorder %v4586, 0.0
  %vm4681 = vcmp.gt.f32.partialorder %v4591, 0.0
  %vm4682 = vcmp.gt.f32.partialorder %v4594, 0.0
  %vm4683 = vcmp.gt.f32.partialorder %v4599, 0.0
  %vm4684 = vcmp.gt.f32.partialorder %v4602, 0.0
  %vm4685 = vcmp.gt.f32.partialorder %v4607, 0.0
  %vm4686 = vcmp.gt.f32.partialorder %v4610, 0.0
  %vm4687 = vcmp.gt.f32.partialorder %v4615, 0.0
  %vm4688 = vcmp.gt.f32.partialorder %v4618, 0.0
  %vm4689 = vcmp.gt.f32.partialorder %v4623, 0.0
  %vm4690 = vcmp.gt.f32.partialorder %v4626, 0.0
  %vm4691 = vcmp.gt.f32.partialorder %v4631, 0.0
  %vm4692 = vcmp.gt.f32.partialorder %v4634, 0.0
  %v4693 = vmul.f32 %v4415, 0.01
  %v4694 = vmul.f32 %v4418, 0.01
  %v4695 = vmul.f32 %v4423, 0.01
  %v4696 = vmul.f32 %v4426, 0.01
  %v4697 = vmul.f32 %v4431, 0.01
  %v4698 = vmul.f32 %v4434, 0.01
  %v4699 = vmul.f32 %v4439, 0.01
  %v4700 = vmul.f32 %v4442, 0.01
  %v4701 = vmul.f32 %v4447, 0.01
  %v4702 = vmul.f32 %v4450, 0.01
  %v4703 = vmul.f32 %v4455, 0.01
  %v4704 = vmul.f32 %v4458, 0.01
  %v4705 = vmul.f32 %v4463, 0.01
  %v4706 = vmul.f32 %v4466, 0.01
  %v4707 = vmul.f32 %v4471, 0.01
  %v4708 = vmul.f32 %v4474, 0.01
  %v4709 = vmul.f32 %v4479, 0.01
  %v4710 = vmul.f32 %v4482, 0.01
  %v4711 = vmul.f32 %v4487, 0.01
  %v4712 = vmul.f32 %v4490, 0.01
  %v4713 = vmul.f32 %v4495, 0.01
  %v4714 = vmul.f32 %v4498, 0.01
  %v4715 = vmul.f32 %v4503, 0.01
  %v4716 = vmul.f32 %v4506, 0.01
  %v4717 = vmul.f32 %v4511, 0.01
  %v4718 = vmul.f32 %v4514, 0.01
  %v4719 = vmul.f32 %v4519, 0.01
  %v4720 = vmul.f32 %v4522, 0.01
  %v4721 = vmul.f32 %v4527, 0.01
  %v4722 = vmul.f32 %v4530, 0.01
  %v4723 = vmul.f32 %v4535, 0.01
  %v4724 = vmul.f32 %v4538, 0.01
  %v4725 = vmul.f32 %v4543, 0.01
  %v4726 = vmul.f32 %v4546, 0.01
  %v4727 = vmul.f32 %v4551, 0.01
  %v4728 = vmul.f32 %v4554, 0.01
  %v4729 = vmul.f32 %v4559, 0.01
  %v4730 = vmul.f32 %v4562, 0.01
  %v4731 = vmul.f32 %v4567, 0.01
  %v4732 = vmul.f32 %v4570, 0.01
  %v4733 = vmul.f32 %v4575, 0.01
  %v4734 = vmul.f32 %v4578, 0.01
  %v4735 = vmul.f32 %v4583, 0.01
  %v4736 = vmul.f32 %v4586, 0.01
  %v4737 = vmul.f32 %v4591, 0.01
  %v4738 = vmul.f32 %v4594, 0.01
  %v4739 = vmul.f32 %v4599, 0.01
  %v4740 = vmul.f32 %v4602, 0.01
  %v4741 = vmul.f32 %v4607, 0.01
  %v4742 = vmul.f32 %v4610, 0.01
  %v4743 = vmul.f32 %v4615, 0.01
  %v4744 = vmul.f32 %v4618, 0.01
  %v4745 = vmul.f32 %v4623, 0.01
  %v4746 = vmul.f32 %v4626, 0.01
  %v4747 = vmul.f32 %v4631, 0.01
  %v4748 = vmul.f32 %v4634, 0.01
  %v4749 = vsel %vm4637, %v4415, %v4693
  %v4750 = vsel %vm4638, %v4418, %v4694
  %v4751 = vsel %vm4639, %v4423, %v4695
  %v4752 = vsel %vm4640, %v4426, %v4696
  %v4753 = vsel %vm4641, %v4431, %v4697
  %v4754 = vsel %vm4642, %v4434, %v4698
  %v4755 = vsel %vm4643, %v4439, %v4699
  %v4756 = vsel %vm4644, %v4442, %v4700
  %v4757 = vsel %vm4645, %v4447, %v4701
  %v4758 = vsel %vm4646, %v4450, %v4702
  %v4759 = vsel %vm4647, %v4455, %v4703
  %v4760 = vsel %vm4648, %v4458, %v4704
  %v4761 = vsel %vm4649, %v4463, %v4705
  %v4762 = vsel %vm4650, %v4466, %v4706
  %v4763 = vsel %vm4651, %v4471, %v4707
  %v4764 = vsel %vm4652, %v4474, %v4708
  %v4765 = vsel %vm4653, %v4479, %v4709
  %v4766 = vsel %vm4654, %v4482, %v4710
  %v4767 = vsel %vm4655, %v4487, %v4711
  %v4768 = vsel %vm4656, %v4490, %v4712
  %v4769 = vsel %vm4657, %v4495, %v4713
  %v4770 = vsel %vm4658, %v4498, %v4714
  %v4771 = vsel %vm4659, %v4503, %v4715
  %v4772 = vsel %vm4660, %v4506, %v4716
  %v4773 = vsel %vm4661, %v4511, %v4717
  %v4774 = vsel %vm4662, %v4514, %v4718
  %v4775 = vsel %vm4663, %v4519, %v4719
  %v4776 = vsel %vm4664, %v4522, %v4720
  %v4777 = vsel %vm4665, %v4527, %v4721
  %v4778 = vsel %vm4666, %v4530, %v4722
  %v4779 = vsel %vm4667, %v4535, %v4723
  %v4780 = vsel %vm4668, %v4538, %v4724
  %v4781 = vsel %vm4669, %v4543, %v4725
  %v4782 = vsel %vm4670, %v4546, %v4726
  %v4783 = vsel %vm4671, %v4551, %v4727
  %v4784 = vsel %vm4672, %v4554, %v4728
  %v4785 = vsel %vm4673, %v4559, %v4729
  %v4786 = vsel %vm4674, %v4562, %v4730
  %v4787 = vsel %vm4675, %v4567, %v4731
  %v4788 = vsel %vm4676, %v4570, %v4732
  %v4789 = vsel %vm4677, %v4575, %v4733
  %v4790 = vsel %vm4678, %v4578, %v4734
  %v4791 = vsel %vm4679, %v4583, %v4735
  %v4792 = vsel %vm4680, %v4586, %v4736
  %v4793 = vsel %vm4681, %v4591, %v4737
  %v4794 = vsel %vm4682, %v4594, %v4738
  %v4795 = vsel %vm4683, %v4599, %v4739
  %v4796 = vsel %vm4684, %v4602, %v4740
  %v4797 = vsel %vm4685, %v4607, %v4741
  %v4798 = vsel %vm4686, %v4610, %v4742
  %v4799 = vsel %vm4687, %v4615, %v4743
  %v4800 = vsel %vm4688, %v4618, %v4744
  %v4801 = vsel %vm4689, %v4623, %v4745
  %v4802 = vsel %vm4690, %v4626, %v4746
  %v4803 = vsel %vm4691, %v4631, %v4747
  %v4804 = vsel %vm4692, %v4634, %v4748
  %v4805 = vpack.c.bf16 %v4750, %v4749
  %v4806 = vpack.c.bf16 %v4752, %v4751
  %v4807 = vpack.c.bf16 %v4754, %v4753
  %v4808 = vpack.c.bf16 %v4756, %v4755
  %v4809 = vpack.c.bf16 %v4758, %v4757
  %v4810 = vpack.c.bf16 %v4760, %v4759
  %v4811 = vpack.c.bf16 %v4762, %v4761
  %v4812 = vpack.c.bf16 %v4764, %v4763
  %v4813 = vpack.c.bf16 %v4766, %v4765
  %v4814 = vpack.c.bf16 %v4768, %v4767
  %v4815 = vpack.c.bf16 %v4770, %v4769
  %v4816 = vpack.c.bf16 %v4772, %v4771
  %v4817 = vpack.c.bf16 %v4774, %v4773
  %v4818 = vpack.c.bf16 %v4776, %v4775
  %v4819 = vpack.c.bf16 %v4778, %v4777
  %v4820 = vpack.c.bf16 %v4780, %v4779
  %v4821 = vpack.c.bf16 %v4782, %v4781
  %v4822 = vpack.c.bf16 %v4784, %v4783
  %v4823 = vpack.c.bf16 %v4786, %v4785
  %v4824 = vpack.c.bf16 %v4788, %v4787
  %v4825 = vpack.c.bf16 %v4790, %v4789
  %v4826 = vpack.c.bf16 %v4792, %v4791
  %v4827 = vpack.c.bf16 %v4794, %v4793
  %v4828 = vpack.c.bf16 %v4796, %v4795
  %v4829 = vpack.c.bf16 %v4798, %v4797
  %v4830 = vpack.c.bf16 %v4800, %v4799
  %v4831 = vpack.c.bf16 %v4802, %v4801
  %v4832 = vpack.c.bf16 %v4804, %v4803
  %v4834 = vshrl.u32 %v4805, 16
  %v4836 = vshll.u32 %v4805, 16
  %v4838 = vrot.slane %v4836, 1
  %v4839 = vor.u32 %v4834, %v4838
  %v4841 = vshll.u32 %v4806, 16
  %v4843 = vrot.slane %v4841, 1
  %v4844 = vsel %vm3068, %v4839, %v4843
  %v4845 = vshrl.u32 %v4806, 16
  %v4847 = vor.u32 %v4845, %v4843
  %v4849 = vshll.u32 %v4807, 16
  %v4851 = vrot.slane %v4849, 1
  %v4852 = vsel %vm3068, %v4847, %v4851
  %v4853 = vshrl.u32 %v4807, 16
  %v4855 = vor.u32 %v4853, %v4851
  %v4857 = vshll.u32 %v4808, 16
  %v4859 = vrot.slane %v4857, 1
  %v4860 = vsel %vm3068, %v4855, %v4859
  %v4861 = vshrl.u32 %v4808, 16
  %v4863 = vor.u32 %v4861, %v4859
  %v4865 = vshll.u32 %v4809, 16
  %v4867 = vrot.slane %v4865, 1
  %v4868 = vsel %vm3068, %v4863, %v4867
  %v4869 = vshrl.u32 %v4809, 16
  %v4871 = vor.u32 %v4869, %v4867
  %v4873 = vshll.u32 %v4810, 16
  %v4875 = vrot.slane %v4873, 1
  %v4876 = vsel %vm3068, %v4871, %v4875
  %v4877 = vshrl.u32 %v4810, 16
  %v4879 = vor.u32 %v4877, %v4875
  %v4881 = vshll.u32 %v4811, 16
  %v4883 = vrot.slane %v4881, 1
  %v4884 = vsel %vm3068, %v4879, %v4883
  %v4885 = vshrl.u32 %v4811, 16
  %v4887 = vor.u32 %v4885, %v4883
  %v4889 = vshll.u32 %v4812, 16
  %v4891 = vrot.slane %v4889, 1
  %v4892 = vsel %vm3068, %v4887, %v4891
  %v4893 = vshrl.u32 %v4812, 16
  %v4895 = vor.u32 %v4893, %v4891
  %v4897 = vshll.u32 %v4813, 16
  %v4899 = vrot.slane %v4897, 1
  %v4900 = vsel %vm3068, %v4895, %v4899
  %v4901 = vshrl.u32 %v4813, 16
  %v4903 = vor.u32 %v4901, %v4899
  %v4905 = vshll.u32 %v4814, 16
  %v4907 = vrot.slane %v4905, 1
  %v4908 = vsel %vm3068, %v4903, %v4907
  %v4909 = vshrl.u32 %v4814, 16
  %v4911 = vor.u32 %v4909, %v4907
  %v4913 = vshll.u32 %v4815, 16
  %v4915 = vrot.slane %v4913, 1
  %v4916 = vsel %vm3068, %v4911, %v4915
  %v4917 = vshrl.u32 %v4815, 16
  %v4919 = vor.u32 %v4917, %v4915
  %v4921 = vshll.u32 %v4816, 16
  %v4923 = vrot.slane %v4921, 1
  %v4924 = vsel %vm3068, %v4919, %v4923
  %v4925 = vshrl.u32 %v4816, 16
  %v4927 = vor.u32 %v4925, %v4923
  %v4929 = vshll.u32 %v4817, 16
  %v4931 = vrot.slane %v4929, 1
  %v4932 = vsel %vm3068, %v4927, %v4931
  %v4933 = vshrl.u32 %v4817, 16
  %v4935 = vor.u32 %v4933, %v4931
  %v4937 = vshll.u32 %v4818, 16
  %v4939 = vrot.slane %v4937, 1
  %v4940 = vsel %vm3068, %v4935, %v4939
  %v4941 = vshrl.u32 %v4818, 16
  %v4943 = vor.u32 %v4941, %v4939
  %v4945 = vshll.u32 %v4819, 16
  %v4947 = vrot.slane %v4945, 1
  %v4948 = vsel %vm3068, %v4943, %v4947
  %v4949 = vshrl.u32 %v4819, 16
  %v4951 = vor.u32 %v4949, %v4947
  %v4953 = vshll.u32 %v4820, 16
  %v4955 = vrot.slane %v4953, 1
  %v4956 = vsel %vm3068, %v4951, %v4955
  %v4957 = vshrl.u32 %v4820, 16
  %v4959 = vor.u32 %v4957, %v4955
  %v4961 = vshll.u32 %v4821, 16
  %v4963 = vrot.slane %v4961, 1
  %v4964 = vsel %vm3068, %v4959, %v4963
  %v4965 = vshrl.u32 %v4821, 16
  %v4967 = vor.u32 %v4965, %v4963
  %v4969 = vshll.u32 %v4822, 16
  %v4971 = vrot.slane %v4969, 1
  %v4972 = vsel %vm3068, %v4967, %v4971
  %v4973 = vshrl.u32 %v4822, 16
  %v4975 = vor.u32 %v4973, %v4971
  %v4977 = vshll.u32 %v4823, 16
  %v4979 = vrot.slane %v4977, 1
  %v4980 = vsel %vm3068, %v4975, %v4979
  %v4981 = vshrl.u32 %v4823, 16
  %v4983 = vor.u32 %v4981, %v4979
  %v4985 = vshll.u32 %v4824, 16
  %v4987 = vrot.slane %v4985, 1
  %v4988 = vsel %vm3068, %v4983, %v4987
  %v4989 = vshrl.u32 %v4824, 16
  %v4991 = vor.u32 %v4989, %v4987
  %v4993 = vshll.u32 %v4825, 16
  %v4995 = vrot.slane %v4993, 1
  %v4996 = vsel %vm3068, %v4991, %v4995
  %v4997 = vshrl.u32 %v4825, 16
  %v4999 = vor.u32 %v4997, %v4995
  %v5001 = vshll.u32 %v4826, 16
  %v5003 = vrot.slane %v5001, 1
  %v5004 = vsel %vm3068, %v4999, %v5003
  %v5005 = vshrl.u32 %v4826, 16
  %v5007 = vor.u32 %v5005, %v5003
  %v5009 = vshll.u32 %v4827, 16
  %v5011 = vrot.slane %v5009, 1
  %v5012 = vsel %vm3068, %v5007, %v5011
  %v5013 = vshrl.u32 %v4827, 16
  %v5015 = vor.u32 %v5013, %v5011
  %v5017 = vshll.u32 %v4828, 16
  %v5019 = vrot.slane %v5017, 1
  %v5020 = vsel %vm3068, %v5015, %v5019
  %v5021 = vshrl.u32 %v4828, 16
  %v5023 = vor.u32 %v5021, %v5019
  %v5025 = vshll.u32 %v4829, 16
  %v5027 = vrot.slane %v5025, 1
  %v5028 = vsel %vm3068, %v5023, %v5027
  %v5029 = vshrl.u32 %v4829, 16
  %v5031 = vor.u32 %v5029, %v5027
  %v5033 = vshll.u32 %v4830, 16
  %v5035 = vrot.slane %v5033, 1
  %v5036 = vsel %vm3068, %v5031, %v5035
  %v5037 = vshrl.u32 %v4830, 16
  %v5039 = vor.u32 %v5037, %v5035
  %5040 = vrot.lane.b32.xlu0 %v4844, 32
  %v5041 = vpop.permute.xlu0 %5040
  %5042 = vrot.lane.b32.xlu0 %v4852, 32
  %v5043 = vpop.permute.xlu0 %5042
  %5044 = vrot.lane.b32.xlu0 %v4860, 32
  %v5045 = vpop.permute.xlu0 %5044
  %5046 = vrot.lane.b32.xlu0 %v4868, 32
  %v5047 = vpop.permute.xlu0 %5046
  %5048 = vrot.lane.b32.xlu0 %v4876, 32
  %v5049 = vpop.permute.xlu0 %5048
  %5050 = vrot.lane.b32.xlu0 %v4884, 32
  %v5051 = vpop.permute.xlu0 %5050
  %5052 = vrot.lane.b32.xlu0 %v4892, 32
  %v5053 = vpop.permute.xlu0 %5052
  %5054 = vrot.lane.b32.xlu0 %v4900, 32
  %v5055 = vpop.permute.xlu0 %5054
  %5056 = vrot.lane.b32.xlu0 %v4908, 32
  %v5057 = vpop.permute.xlu0 %5056
  %5058 = vrot.lane.b32.xlu0 %v4916, 32
  %v5059 = vpop.permute.xlu0 %5058
  %5060 = vrot.lane.b32.xlu0 %v4924, 32
  %v5061 = vpop.permute.xlu0 %5060
  %5062 = vrot.lane.b32.xlu0 %v4932, 32
  %v5063 = vpop.permute.xlu0 %5062
  %5064 = vrot.lane.b32.xlu0 %v4940, 32
  %v5065 = vpop.permute.xlu0 %5064
  %5066 = vrot.lane.b32.xlu0 %v4948, 32
  %v5067 = vpop.permute.xlu0 %5066
  %5068 = vrot.lane.b32.xlu0 %v4956, 32
  %v5069 = vpop.permute.xlu0 %5068
  %5070 = vrot.lane.b32.xlu0 %v4964, 32
  %v5071 = vpop.permute.xlu0 %5070
  %5072 = vrot.lane.b32.xlu0 %v4972, 32
  %v5073 = vpop.permute.xlu0 %5072
  %5074 = vrot.lane.b32.xlu0 %v4980, 32
  %v5075 = vpop.permute.xlu0 %5074
  %5076 = vrot.lane.b32.xlu0 %v4988, 32
  %v5077 = vpop.permute.xlu0 %5076
  %5078 = vrot.lane.b32.xlu0 %v4996, 32
  %v5079 = vpop.permute.xlu0 %5078
  %5080 = vrot.lane.b32.xlu0 %v5004, 32
  %v5081 = vpop.permute.xlu0 %5080
  %5082 = vrot.lane.b32.xlu0 %v5012, 32
  %v5083 = vpop.permute.xlu0 %5082
  %5084 = vrot.lane.b32.xlu0 %v5020, 32
  %v5085 = vpop.permute.xlu0 %5084
  %5086 = vrot.lane.b32.xlu0 %v5028, 32
  %v5087 = vpop.permute.xlu0 %5086
  %5088 = vrot.lane.b32.xlu0 %v5036, 32
  %v5089 = vpop.permute.xlu0 %5088
  %5090 = vrot.lane.b32.xlu0 %v5039, 32
  %v5091 = vpop.permute.xlu0 %5090
  %v5118 = vrot.slane %v4805, 1
  %v5119 = vrot.slane %v4806, 1
  %v5120 = vsel %vm3376, %v5118, %v5119
  %v5121 = vrot.slane %v4807, 1
  %v5122 = vsel %vm3376, %v5119, %v5121
  %v5123 = vrot.slane %v4808, 1
  %v5124 = vsel %vm3376, %v5121, %v5123
  %v5125 = vrot.slane %v4809, 1
  %v5126 = vsel %vm3376, %v5123, %v5125
  %v5127 = vrot.slane %v4810, 1
  %v5128 = vsel %vm3376, %v5125, %v5127
  %v5129 = vrot.slane %v4811, 1
  %v5130 = vsel %vm3376, %v5127, %v5129
  %v5131 = vrot.slane %v4812, 1
  %v5132 = vsel %vm3376, %v5129, %v5131
  %v5133 = vrot.slane %v4813, 1
  %v5134 = vsel %vm3376, %v5131, %v5133
  %v5135 = vrot.slane %v4814, 1
  %v5136 = vsel %vm3376, %v5133, %v5135
  %v5137 = vrot.slane %v4815, 1
  %v5138 = vsel %vm3376, %v5135, %v5137
  %v5139 = vrot.slane %v4816, 1
  %v5140 = vsel %vm3376, %v5137, %v5139
  %v5141 = vrot.slane %v4817, 1
  %v5142 = vsel %vm3376, %v5139, %v5141
  %v5143 = vrot.slane %v4818, 1
  %v5144 = vsel %vm3376, %v5141, %v5143
  %v5145 = vrot.slane %v4819, 1
  %v5146 = vsel %vm3376, %v5143, %v5145
  %v5147 = vrot.slane %v4820, 1
  %v5148 = vsel %vm3376, %v5145, %v5147
  %v5149 = vrot.slane %v4821, 1
  %v5150 = vsel %vm3376, %v5147, %v5149
  %v5151 = vrot.slane %v4822, 1
  %v5152 = vsel %vm3376, %v5149, %v5151
  %v5153 = vrot.slane %v4823, 1
  %v5154 = vsel %vm3376, %v5151, %v5153
  %v5155 = vrot.slane %v4824, 1
  %v5156 = vsel %vm3376, %v5153, %v5155
  %v5157 = vrot.slane %v4825, 1
  %v5158 = vsel %vm3376, %v5155, %v5157
  %v5159 = vrot.slane %v4826, 1
  %v5160 = vsel %vm3376, %v5157, %v5159
  %v5161 = vrot.slane %v4827, 1
  %v5162 = vsel %vm3376, %v5159, %v5161
  %v5163 = vrot.slane %v4828, 1
  %v5164 = vsel %vm3376, %v5161, %v5163
  %v5165 = vrot.slane %v4829, 1
  %v5166 = vsel %vm3376, %v5163, %v5165
  %v5167 = vrot.slane %v4830, 1
  %v5168 = vsel %vm3376, %v5165, %v5167
  %5169 = vrot.lane.b32.xlu0 %v5120, 64
  %v5170 = vpop.permute.xlu0 %5169
  %5171 = vrot.lane.b32.xlu0 %v5122, 64
  %v5172 = vpop.permute.xlu0 %5171
  %5173 = vrot.lane.b32.xlu0 %v5124, 64
  %v5174 = vpop.permute.xlu0 %5173
  %5175 = vrot.lane.b32.xlu0 %v5126, 64
  %v5176 = vpop.permute.xlu0 %5175
  %5177 = vrot.lane.b32.xlu0 %v5128, 64
  %v5178 = vpop.permute.xlu0 %5177
  %5179 = vrot.lane.b32.xlu0 %v5130, 64
  %v5180 = vpop.permute.xlu0 %5179
  %5181 = vrot.lane.b32.xlu0 %v5132, 64
  %v5182 = vpop.permute.xlu0 %5181
  %5183 = vrot.lane.b32.xlu0 %v5134, 64
  %v5184 = vpop.permute.xlu0 %5183
  %5185 = vrot.lane.b32.xlu0 %v5136, 64
  %v5186 = vpop.permute.xlu0 %5185
  %5187 = vrot.lane.b32.xlu0 %v5138, 64
  %v5188 = vpop.permute.xlu0 %5187
  %5189 = vrot.lane.b32.xlu0 %v5140, 64
  %v5190 = vpop.permute.xlu0 %5189
  %5191 = vrot.lane.b32.xlu0 %v5142, 64
  %v5192 = vpop.permute.xlu0 %5191
  %5193 = vrot.lane.b32.xlu0 %v5144, 64
  %v5194 = vpop.permute.xlu0 %5193
  %5195 = vrot.lane.b32.xlu0 %v5146, 64
  %v5196 = vpop.permute.xlu0 %5195
  %5197 = vrot.lane.b32.xlu0 %v5148, 64
  %v5198 = vpop.permute.xlu0 %5197
  %5199 = vrot.lane.b32.xlu0 %v5150, 64
  %v5200 = vpop.permute.xlu0 %5199
  %5201 = vrot.lane.b32.xlu0 %v5152, 64
  %v5202 = vpop.permute.xlu0 %5201
  %5203 = vrot.lane.b32.xlu0 %v5154, 64
  %v5204 = vpop.permute.xlu0 %5203
  %5205 = vrot.lane.b32.xlu0 %v5156, 64
  %v5206 = vpop.permute.xlu0 %5205
  %5207 = vrot.lane.b32.xlu0 %v5158, 64
  %v5208 = vpop.permute.xlu0 %5207
  %5209 = vrot.lane.b32.xlu0 %v5160, 64
  %v5210 = vpop.permute.xlu0 %5209
  %5211 = vrot.lane.b32.xlu0 %v5162, 64
  %v5212 = vpop.permute.xlu0 %5211
  %5213 = vrot.lane.b32.xlu0 %v5164, 64
  %v5214 = vpop.permute.xlu0 %5213
  %5215 = vrot.lane.b32.xlu0 %v5166, 64
  %v5216 = vpop.permute.xlu0 %5215
  %5217 = vrot.lane.b32.xlu0 %v5168, 64
  %v5218 = vpop.permute.xlu0 %5217
  %5219 = vrot.lane.b32.xlu0 %v5167, 64
  %v5220 = vpop.permute.xlu0 %5219
  %5222 = vrot.lane.b32.xlu0 %v4806, 96
  %v5223 = vpop.permute.xlu0 %5222
  %5224 = vrot.lane.b32.xlu0 %v4807, 96
  %v5225 = vpop.permute.xlu0 %5224
  %5226 = vrot.lane.b32.xlu0 %v4808, 96
  %v5227 = vpop.permute.xlu0 %5226
  %5228 = vrot.lane.b32.xlu0 %v4809, 96
  %v5229 = vpop.permute.xlu0 %5228
  %5230 = vrot.lane.b32.xlu0 %v4810, 96
  %v5231 = vpop.permute.xlu0 %5230
  %5232 = vrot.lane.b32.xlu0 %v4811, 96
  %v5233 = vpop.permute.xlu0 %5232
  %5234 = vrot.lane.b32.xlu0 %v4812, 96
  %v5235 = vpop.permute.xlu0 %5234
  %5236 = vrot.lane.b32.xlu0 %v4813, 96
  %v5237 = vpop.permute.xlu0 %5236
  %5238 = vrot.lane.b32.xlu0 %v4814, 96
  %v5239 = vpop.permute.xlu0 %5238
  %5240 = vrot.lane.b32.xlu0 %v4815, 96
  %v5241 = vpop.permute.xlu0 %5240
  %5242 = vrot.lane.b32.xlu0 %v4816, 96
  %v5243 = vpop.permute.xlu0 %5242
  %5244 = vrot.lane.b32.xlu0 %v4817, 96
  %v5245 = vpop.permute.xlu0 %5244
  %5246 = vrot.lane.b32.xlu0 %v4818, 96
  %v5247 = vpop.permute.xlu0 %5246
  %5248 = vrot.lane.b32.xlu0 %v4819, 96
  %v5249 = vpop.permute.xlu0 %5248
  %5250 = vrot.lane.b32.xlu0 %v4820, 96
  %v5251 = vpop.permute.xlu0 %5250
  %5252 = vrot.lane.b32.xlu0 %v4821, 96
  %v5253 = vpop.permute.xlu0 %5252
  %5254 = vrot.lane.b32.xlu0 %v4822, 96
  %v5255 = vpop.permute.xlu0 %5254
  %5256 = vrot.lane.b32.xlu0 %v4823, 96
  %v5257 = vpop.permute.xlu0 %5256
  %5258 = vrot.lane.b32.xlu0 %v4824, 96
  %v5259 = vpop.permute.xlu0 %5258
  %5260 = vrot.lane.b32.xlu0 %v4825, 96
  %v5261 = vpop.permute.xlu0 %5260
  %5262 = vrot.lane.b32.xlu0 %v4826, 96
  %v5263 = vpop.permute.xlu0 %5262
  %5264 = vrot.lane.b32.xlu0 %v4827, 96
  %v5265 = vpop.permute.xlu0 %5264
  %5266 = vrot.lane.b32.xlu0 %v4828, 96
  %v5267 = vpop.permute.xlu0 %5266
  %5268 = vrot.lane.b32.xlu0 %v4829, 96
  %v5269 = vpop.permute.xlu0 %5268
  %5270 = vrot.lane.b32.xlu0 %v4830, 96
  %v5271 = vpop.permute.xlu0 %5270
  %5272 = vrot.lane.b32.xlu0 %v4831, 96
  %v5273 = vpop.permute.xlu0 %5272
  %v5275 = vshll.u32 %v4831, 16
  %v5277 = vrot.slane %v5275, 1
  %v5278 = vsel %vm3068, %v5039, %v5277
  %v5279 = vshrl.u32 %v4831, 16
  %v5281 = vor.u32 %v5279, %v5277
  %v5282 = vrot.slane %v4831, 1
  %v5283 = vsel %vm3376, %v5167, %v5282
  %5284 = vrot.lane.b32.xlu0 %v5122, 32
  %v5285 = vpop.permute.xlu0 %5284
  %5286 = vrot.lane.b32.xlu0 %v5124, 32
  %v5287 = vpop.permute.xlu0 %5286
  %5288 = vrot.lane.b32.xlu0 %v5126, 32
  %v5289 = vpop.permute.xlu0 %5288
  %5290 = vrot.lane.b32.xlu0 %v5128, 32
  %v5291 = vpop.permute.xlu0 %5290
  %5292 = vrot.lane.b32.xlu0 %v5130, 32
  %v5293 = vpop.permute.xlu0 %5292
  %5294 = vrot.lane.b32.xlu0 %v5132, 32
  %v5295 = vpop.permute.xlu0 %5294
  %5296 = vrot.lane.b32.xlu0 %v5134, 32
  %v5297 = vpop.permute.xlu0 %5296
  %5298 = vrot.lane.b32.xlu0 %v5136, 32
  %v5299 = vpop.permute.xlu0 %5298
  %5300 = vrot.lane.b32.xlu0 %v5138, 32
  %v5301 = vpop.permute.xlu0 %5300
  %5302 = vrot.lane.b32.xlu0 %v5140, 32
  %v5303 = vpop.permute.xlu0 %5302
  %5304 = vrot.lane.b32.xlu0 %v5142, 32
  %v5305 = vpop.permute.xlu0 %5304
  %5306 = vrot.lane.b32.xlu0 %v5144, 32
  %v5307 = vpop.permute.xlu0 %5306
  %5308 = vrot.lane.b32.xlu0 %v5146, 32
  %v5309 = vpop.permute.xlu0 %5308
  %5310 = vrot.lane.b32.xlu0 %v5148, 32
  %v5311 = vpop.permute.xlu0 %5310
  %5312 = vrot.lane.b32.xlu0 %v5150, 32
  %v5313 = vpop.permute.xlu0 %5312
  %5314 = vrot.lane.b32.xlu0 %v5152, 32
  %v5315 = vpop.permute.xlu0 %5314
  %5316 = vrot.lane.b32.xlu0 %v5154, 32
  %v5317 = vpop.permute.xlu0 %5316
  %5318 = vrot.lane.b32.xlu0 %v5156, 32
  %v5319 = vpop.permute.xlu0 %5318
  %5320 = vrot.lane.b32.xlu0 %v5158, 32
  %v5321 = vpop.permute.xlu0 %5320
  %5322 = vrot.lane.b32.xlu0 %v5160, 32
  %v5323 = vpop.permute.xlu0 %5322
  %5324 = vrot.lane.b32.xlu0 %v5162, 32
  %v5325 = vpop.permute.xlu0 %5324
  %5326 = vrot.lane.b32.xlu0 %v5164, 32
  %v5327 = vpop.permute.xlu0 %5326
  %5328 = vrot.lane.b32.xlu0 %v5166, 32
  %v5329 = vpop.permute.xlu0 %5328
  %5330 = vrot.lane.b32.xlu0 %v5168, 32
  %v5331 = vpop.permute.xlu0 %5330
  %5332 = vrot.lane.b32.xlu0 %v5283, 32
  %v5333 = vpop.permute.xlu0 %5332
  %5334 = vrot.lane.b32.xlu0 %v5282, 32
  %v5335 = vpop.permute.xlu0 %5334
  %5337 = vrot.lane.b32.xlu0 %v4807, 64
  %v5338 = vpop.permute.xlu0 %5337
  %5339 = vrot.lane.b32.xlu0 %v4808, 64
  %v5340 = vpop.permute.xlu0 %5339
  %5341 = vrot.lane.b32.xlu0 %v4809, 64
  %v5342 = vpop.permute.xlu0 %5341
  %5343 = vrot.lane.b32.xlu0 %v4810, 64
  %v5344 = vpop.permute.xlu0 %5343
  %5345 = vrot.lane.b32.xlu0 %v4811, 64
  %v5346 = vpop.permute.xlu0 %5345
  %5347 = vrot.lane.b32.xlu0 %v4812, 64
  %v5348 = vpop.permute.xlu0 %5347
  %5349 = vrot.lane.b32.xlu0 %v4813, 64
  %v5350 = vpop.permute.xlu0 %5349
  %5351 = vrot.lane.b32.xlu0 %v4814, 64
  %v5352 = vpop.permute.xlu0 %5351
  %5353 = vrot.lane.b32.xlu0 %v4815, 64
  %v5354 = vpop.permute.xlu0 %5353
  %5355 = vrot.lane.b32.xlu0 %v4816, 64
  %v5356 = vpop.permute.xlu0 %5355
  %5357 = vrot.lane.b32.xlu0 %v4817, 64
  %v5358 = vpop.permute.xlu0 %5357
  %5359 = vrot.lane.b32.xlu0 %v4818, 64
  %v5360 = vpop.permute.xlu0 %5359
  %5361 = vrot.lane.b32.xlu0 %v4819, 64
  %v5362 = vpop.permute.xlu0 %5361
  %5363 = vrot.lane.b32.xlu0 %v4820, 64
  %v5364 = vpop.permute.xlu0 %5363
  %5365 = vrot.lane.b32.xlu0 %v4821, 64
  %v5366 = vpop.permute.xlu0 %5365
  %5367 = vrot.lane.b32.xlu0 %v4822, 64
  %v5368 = vpop.permute.xlu0 %5367
  %5369 = vrot.lane.b32.xlu0 %v4823, 64
  %v5370 = vpop.permute.xlu0 %5369
  %5371 = vrot.lane.b32.xlu0 %v4824, 64
  %v5372 = vpop.permute.xlu0 %5371
  %5373 = vrot.lane.b32.xlu0 %v4825, 64
  %v5374 = vpop.permute.xlu0 %5373
  %5375 = vrot.lane.b32.xlu0 %v4826, 64
  %v5376 = vpop.permute.xlu0 %5375
  %5377 = vrot.lane.b32.xlu0 %v4827, 64
  %v5378 = vpop.permute.xlu0 %5377
  %5379 = vrot.lane.b32.xlu0 %v4828, 64
  %v5380 = vpop.permute.xlu0 %5379
  %5381 = vrot.lane.b32.xlu0 %v4829, 64
  %v5382 = vpop.permute.xlu0 %5381
  %5383 = vrot.lane.b32.xlu0 %v4830, 64
  %v5384 = vpop.permute.xlu0 %5383
  %5385 = vrot.lane.b32.xlu0 %v4831, 64
  %v5386 = vpop.permute.xlu0 %5385
  %5387 = vrot.lane.b32.xlu0 %v4832, 64
  %v5388 = vpop.permute.xlu0 %5387
  %v5390 = vshll.u32 %v4832, 16
  %v5392 = vrot.slane %v5390, 1
  %v5393 = vsel %vm3068, %v5281, %v5392
  %v5394 = vshrl.u32 %v4832, 16
  %v5396 = vor.u32 %v5394, %v5392
  %5397 = vrot.lane.b32.xlu0 %v4860, 96
  %v5398 = vpop.permute.xlu0 %5397
  %5399 = vrot.lane.b32.xlu0 %v4868, 96
  %v5400 = vpop.permute.xlu0 %5399
  %5401 = vrot.lane.b32.xlu0 %v4876, 96
  %v5402 = vpop.permute.xlu0 %5401
  %5403 = vrot.lane.b32.xlu0 %v4884, 96
  %v5404 = vpop.permute.xlu0 %5403
  %5405 = vrot.lane.b32.xlu0 %v4892, 96
  %v5406 = vpop.permute.xlu0 %5405
  %5407 = vrot.lane.b32.xlu0 %v4900, 96
  %v5408 = vpop.permute.xlu0 %5407
  %5409 = vrot.lane.b32.xlu0 %v4908, 96
  %v5410 = vpop.permute.xlu0 %5409
  %5411 = vrot.lane.b32.xlu0 %v4916, 96
  %v5412 = vpop.permute.xlu0 %5411
  %5413 = vrot.lane.b32.xlu0 %v4924, 96
  %v5414 = vpop.permute.xlu0 %5413
  %5415 = vrot.lane.b32.xlu0 %v4932, 96
  %v5416 = vpop.permute.xlu0 %5415
  %5417 = vrot.lane.b32.xlu0 %v4940, 96
  %v5418 = vpop.permute.xlu0 %5417
  %5419 = vrot.lane.b32.xlu0 %v4948, 96
  %v5420 = vpop.permute.xlu0 %5419
  %5421 = vrot.lane.b32.xlu0 %v4956, 96
  %v5422 = vpop.permute.xlu0 %5421
  %5423 = vrot.lane.b32.xlu0 %v4964, 96
  %v5424 = vpop.permute.xlu0 %5423
  %5425 = vrot.lane.b32.xlu0 %v4972, 96
  %v5426 = vpop.permute.xlu0 %5425
  %5427 = vrot.lane.b32.xlu0 %v4980, 96
  %v5428 = vpop.permute.xlu0 %5427
  %5429 = vrot.lane.b32.xlu0 %v4988, 96
  %v5430 = vpop.permute.xlu0 %5429
  %5431 = vrot.lane.b32.xlu0 %v4996, 96
  %v5432 = vpop.permute.xlu0 %5431
  %5433 = vrot.lane.b32.xlu0 %v5004, 96
  %v5434 = vpop.permute.xlu0 %5433
  %5435 = vrot.lane.b32.xlu0 %v5012, 96
  %v5436 = vpop.permute.xlu0 %5435
  %5437 = vrot.lane.b32.xlu0 %v5020, 96
  %v5438 = vpop.permute.xlu0 %5437
  %5439 = vrot.lane.b32.xlu0 %v5028, 96
  %v5440 = vpop.permute.xlu0 %5439
  %5441 = vrot.lane.b32.xlu0 %v5036, 96
  %v5442 = vpop.permute.xlu0 %5441
  %5443 = vrot.lane.b32.xlu0 %v5278, 96
  %v5444 = vpop.permute.xlu0 %5443
  %5445 = vrot.lane.b32.xlu0 %v5393, 96
  %v5446 = vpop.permute.xlu0 %5445
  %5447 = vrot.lane.b32.xlu0 %v5396, 96
  %v5448 = vpop.permute.xlu0 %5447
  %v5449 = vrot.slane %v4832, 1
  %v5450 = vsel %vm3376, %v5282, %v5449
  %v5452 = vsel %vm3847, %v4805, %v5041
  %v5454 = vsel %vm3847, %v4806, %v5043
  %v5456 = vsel %vm3847, %v4807, %v5045
  %v5458 = vsel %vm3847, %v4808, %v5047
  %v5460 = vsel %vm3847, %v4809, %v5049
  %v5462 = vsel %vm3847, %v4810, %v5051
  %v5464 = vsel %vm3847, %v4811, %v5053
  %v5466 = vsel %vm3847, %v4812, %v5055
  %v5468 = vsel %vm3847, %v4813, %v5057
  %v5470 = vsel %vm3847, %v4814, %v5059
  %v5472 = vsel %vm3847, %v4815, %v5061
  %v5474 = vsel %vm3847, %v4816, %v5063
  %v5476 = vsel %vm3847, %v4817, %v5065
  %v5478 = vsel %vm3847, %v4818, %v5067
  %v5480 = vsel %vm3847, %v4819, %v5069
  %v5482 = vsel %vm3847, %v4820, %v5071
  %v5484 = vsel %vm3847, %v4821, %v5073
  %v5486 = vsel %vm3847, %v4822, %v5075
  %v5488 = vsel %vm3847, %v4823, %v5077
  %v5490 = vsel %vm3847, %v4824, %v5079
  %v5492 = vsel %vm3847, %v4825, %v5081
  %v5494 = vsel %vm3847, %v4826, %v5083
  %v5496 = vsel %vm3847, %v4827, %v5085
  %v5498 = vsel %vm3847, %v4828, %v5087
  %v5500 = vsel %vm3847, %v4829, %v5089
  %v5502 = vsel %vm3847, %v4830, %v5091
  %v5504 = vsel %vm3961, %v5452, %v5170
  %v5506 = vsel %vm3961, %v5454, %v5172
  %v5508 = vsel %vm3961, %v5456, %v5174
  %v5510 = vsel %vm3961, %v5458, %v5176
  %v5512 = vsel %vm3961, %v5460, %v5178
  %v5514 = vsel %vm3961, %v5462, %v5180
  %v5516 = vsel %vm3961, %v5464, %v5182
  %v5518 = vsel %vm3961, %v5466, %v5184
  %v5520 = vsel %vm3961, %v5468, %v5186
  %v5522 = vsel %vm3961, %v5470, %v5188
  %v5524 = vsel %vm3961, %v5472, %v5190
  %v5526 = vsel %vm3961, %v5474, %v5192
  %v5528 = vsel %vm3961, %v5476, %v5194
  %v5530 = vsel %vm3961, %v5478, %v5196
  %v5532 = vsel %vm3961, %v5480, %v5198
  %v5534 = vsel %vm3961, %v5482, %v5200
  %v5536 = vsel %vm3961, %v5484, %v5202
  %v5538 = vsel %vm3961, %v5486, %v5204
  %v5540 = vsel %vm3961, %v5488, %v5206
  %v5542 = vsel %vm3961, %v5490, %v5208
  %v5544 = vsel %vm3961, %v5492, %v5210
  %v5546 = vsel %vm3961, %v5494, %v5212
  %v5548 = vsel %vm3961, %v5496, %v5214
  %v5550 = vsel %vm3961, %v5498, %v5216
  %v5552 = vsel %vm3961, %v5500, %v5218
  %v5554 = vsel %vm3961, %v5502, %v5220
  %v5556 = vsel %vm4075, %v5504, %v5223
  %v5559 = vsel %vm4075, %v5506, %v5225
  %v5562 = vsel %vm4075, %v5508, %v5227
  %v5565 = vsel %vm4075, %v5510, %v5229
  %v5568 = vsel %vm4075, %v5512, %v5231
  %v5571 = vsel %vm4075, %v5514, %v5233
  %v5574 = vsel %vm4075, %v5516, %v5235
  %v5577 = vsel %vm4075, %v5518, %v5237
  %v5580 = vsel %vm4075, %v5520, %v5239
  %v5583 = vsel %vm4075, %v5522, %v5241
  %v5586 = vsel %vm4075, %v5524, %v5243
  %v5589 = vsel %vm4075, %v5526, %v5245
  %v5592 = vsel %vm4075, %v5528, %v5247
  %v5595 = vsel %vm4075, %v5530, %v5249
  %v5598 = vsel %vm4075, %v5532, %v5251
  %v5601 = vsel %vm4075, %v5534, %v5253
  %v5604 = vsel %vm4075, %v5536, %v5255
  %v5607 = vsel %vm4075, %v5538, %v5257
  %v5610 = vsel %vm4075, %v5540, %v5259
  %v5613 = vsel %vm4075, %v5542, %v5261
  %v5616 = vsel %vm4075, %v5544, %v5263
  %v5619 = vsel %vm4075, %v5546, %v5265
  %v5622 = vsel %vm4075, %v5548, %v5267
  %v5625 = vsel %vm4075, %v5550, %v5269
  %v5628 = vsel %vm4075, %v5552, %v5271
  %v5631 = vsel %vm4075, %v5554, %v5273
  %v5635 = vsel %vm3847, %v4852, %v5285
  %v5638 = vsel %vm3847, %v4860, %v5287
  %v5641 = vsel %vm3847, %v4868, %v5289
  %v5644 = vsel %vm3847, %v4876, %v5291
  %v5647 = vsel %vm3847, %v4884, %v5293
  %v5650 = vsel %vm3847, %v4892, %v5295
  %v5653 = vsel %vm3847, %v4900, %v5297
  %v5656 = vsel %vm3847, %v4908, %v5299
  %v5659 = vsel %vm3847, %v4916, %v5301
  %v5662 = vsel %vm3847, %v4924, %v5303
  %v5665 = vsel %vm3847, %v4932, %v5305
  %v5668 = vsel %vm3847, %v4940, %v5307
  %v5671 = vsel %vm3847, %v4948, %v5309
  %v5674 = vsel %vm3847, %v4956, %v5311
  %v5677 = vsel %vm3847, %v4964, %v5313
  %v5680 = vsel %vm3847, %v4972, %v5315
  %v5683 = vsel %vm3847, %v4980, %v5317
  %v5686 = vsel %vm3847, %v4988, %v5319
  %v5689 = vsel %vm3847, %v4996, %v5321
  %v5692 = vsel %vm3847, %v5004, %v5323
  %v5695 = vsel %vm3847, %v5012, %v5325
  %v5698 = vsel %vm3847, %v5020, %v5327
  %v5701 = vsel %vm3847, %v5028, %v5329
  %v5704 = vsel %vm3847, %v5036, %v5331
  %v5707 = vsel %vm3847, %v5278, %v5333
  %v5710 = vsel %vm3847, %v5281, %v5335
  %v5712 = vsel %vm3961, %v5635, %v5338
  %v5714 = vsel %vm3961, %v5638, %v5340
  %v5716 = vsel %vm3961, %v5641, %v5342
  %v5718 = vsel %vm3961, %v5644, %v5344
  %v5720 = vsel %vm3961, %v5647, %v5346
  %v5722 = vsel %vm3961, %v5650, %v5348
  %v5724 = vsel %vm3961, %v5653, %v5350
  %v5726 = vsel %vm3961, %v5656, %v5352
  %v5728 = vsel %vm3961, %v5659, %v5354
  %v5730 = vsel %vm3961, %v5662, %v5356
  %v5732 = vsel %vm3961, %v5665, %v5358
  %v5734 = vsel %vm3961, %v5668, %v5360
  %v5736 = vsel %vm3961, %v5671, %v5362
  %v5738 = vsel %vm3961, %v5674, %v5364
  %v5740 = vsel %vm3961, %v5677, %v5366
  %v5742 = vsel %vm3961, %v5680, %v5368
  %v5744 = vsel %vm3961, %v5683, %v5370
  %v5746 = vsel %vm3961, %v5686, %v5372
  %v5748 = vsel %vm3961, %v5689, %v5374
  %v5750 = vsel %vm3961, %v5692, %v5376
  %v5752 = vsel %vm3961, %v5695, %v5378
  %v5754 = vsel %vm3961, %v5698, %v5380
  %v5756 = vsel %vm3961, %v5701, %v5382
  %v5758 = vsel %vm3961, %v5704, %v5384
  %v5760 = vsel %vm3961, %v5707, %v5386
  %v5762 = vsel %vm3961, %v5710, %v5388
  %v5764 = vsel %vm4075, %v5712, %v5398
  %v5767 = vsel %vm4075, %v5714, %v5400
  %v5770 = vsel %vm4075, %v5716, %v5402
  %v5773 = vsel %vm4075, %v5718, %v5404
  %v5776 = vsel %vm4075, %v5720, %v5406
  %v5779 = vsel %vm4075, %v5722, %v5408
  %v5782 = vsel %vm4075, %v5724, %v5410
  %v5785 = vsel %vm4075, %v5726, %v5412
  %v5788 = vsel %vm4075, %v5728, %v5414
  %v5791 = vsel %vm4075, %v5730, %v5416
  %v5794 = vsel %vm4075, %v5732, %v5418
  %v5797 = vsel %vm4075, %v5734, %v5420
  %v5800 = vsel %vm4075, %v5736, %v5422
  %v5803 = vsel %vm4075, %v5738, %v5424
  %v5806 = vsel %vm4075, %v5740, %v5426
  %v5809 = vsel %vm4075, %v5742, %v5428
  %v5812 = vsel %vm4075, %v5744, %v5430
  %v5815 = vsel %vm4075, %v5746, %v5432
  %v5818 = vsel %vm4075, %v5748, %v5434
  %v5821 = vsel %vm4075, %v5750, %v5436
  %v5824 = vsel %vm4075, %v5752, %v5438
  %v5827 = vsel %vm4075, %v5754, %v5440
  %v5830 = vsel %vm4075, %v5756, %v5442
  %v5833 = vsel %vm4075, %v5758, %v5444
  %v5836 = vsel %vm4075, %v5760, %v5446
  %v5839 = vsel %vm4075, %v5762, %v5448
  %v5841 = vld [vmem:[%s11] sm:$0xf]
  %v5842 = vld [vmem:[%s11 + $0x4] sm:$0xf]
  %v5843 = vld [vmem:[%s11 + $0x8] sm:$0xf]
  %v5844 = vld [vmem:[%s11 + $0xc] sm:$0xf]
  %v5845 = vld [vmem:[%s11 + $0x10] sm:$0xf]
  %v5846 = vld [vmem:[%s11 + $0x14] sm:$0xf]
  %v5847 = vld [vmem:[%s11 + $0x18] sm:$0xf]
  %v5848 = vld [vmem:[%s11 + $0x1c] sm:$0xf]
  %v5849 = vld [vmem:[%s11 + $0x20] sm:$0xf]
  %v5850 = vld [vmem:[%s11 + $0x24] sm:$0xf]
  %v5851 = vld [vmem:[%s11 + $0x28] sm:$0xf]
  %v5852 = vld [vmem:[%s11 + $0x2c] sm:$0xf]
  %v5853 = vld [vmem:[%s11 + $0x30] sm:$0xf]
  %v5854 = vld [vmem:[%s11 + $0x34] sm:$0xf]
  %v5855 = vld [vmem:[%s11 + $0x38] sm:$0xf]
  %v5856 = vld [vmem:[%s11 + $0x3c] sm:$0xf]
  %v5857 = vld [vmem:[%s11 + $0x40] sm:$0xf]
  %v5858 = vld [vmem:[%s11 + $0x44] sm:$0xf]
  %v5859 = vld [vmem:[%s11 + $0x48] sm:$0xf]
  %v5860 = vld [vmem:[%s11 + $0x4c] sm:$0xf]
  %v5861 = vld [vmem:[%s11 + $0x50] sm:$0xf]
  %v5862 = vld [vmem:[%s11 + $0x54] sm:$0xf]
  %v5863 = vld [vmem:[%s11 + $0x58] sm:$0xf]
  %v5864 = vld [vmem:[%s11 + $0x5c] sm:$0xf]
  %v5865 = vld [vmem:[%s11 + $0x60] sm:$0xf]
  %v5866 = vld [vmem:[%s11 + $0x64] sm:$0xf]
  %v5867 = vld [vmem:[%s11 + $0x68] sm:$0xf]
  %v5868 = vld [vmem:[%s11 + $0x6c] sm:$0xf]
  %v5869 = vld [vmem:[%s11 + $0x70] sm:$0xf]
  %v5870 = vld [vmem:[%s11 + $0x74] sm:$0xf]
  %v5871 = vld [vmem:[%s11 + $0x78] sm:$0xf]
  %v5872 = vld [vmem:[%s11 + $0x7c] sm:$0xf]
  %v5873 = vld [vmem:[%s11 + $0x80] sm:$0xf]
  %v5874 = vld [vmem:[%s11 + $0x84] sm:$0xf]
  %v5875 = vld [vmem:[%s11 + $0x88] sm:$0xf]
  %v5876 = vld [vmem:[%s11 + $0x8c] sm:$0xf]
  %v5877 = vld [vmem:[%s13] sm:$0x1]
  %v5879 = vlaneseq
  %v5880 = vshrl.u32 %v5879, 7
  %v5881 = vsub.s32 0, %v5880
  %v5882 = vrot.slane %v5877, %v5881
  %v5920 = vunpack.c.l.b16 %v5841
  %v5921 = vunpack.c.l.b16 %v5842
  %v5922 = vunpack.c.l.b16 %v5843
  %v5923 = vunpack.c.l.b16 %v5844
  %v5924 = vunpack.c.l.b16 %v5845
  %v5925 = vunpack.c.l.b16 %v5846
  %v5926 = vunpack.c.l.b16 %v5847
  %v5927 = vunpack.c.l.b16 %v5848
  %v5928 = vunpack.c.l.b16 %v5849
  %v5929 = vunpack.c.l.b16 %v5850
  %v5930 = vunpack.c.l.b16 %v5851
  %v5931 = vunpack.c.l.b16 %v5852
  %v5932 = vunpack.c.l.b16 %v5853
  %v5933 = vunpack.c.l.b16 %v5854
  %v5934 = vunpack.c.l.b16 %v5855
  %v5935 = vunpack.c.l.b16 %v5856
  %v5936 = vunpack.c.l.b16 %v5857
  %v5937 = vunpack.c.l.b16 %v5858
  %v5938 = vunpack.c.l.b16 %v5859
  %v5939 = vunpack.c.l.b16 %v5860
  %v5940 = vunpack.c.l.b16 %v5861
  %v5941 = vunpack.c.l.b16 %v5862
  %v5942 = vunpack.c.l.b16 %v5863
  %v5943 = vunpack.c.l.b16 %v5864
  %v5944 = vunpack.c.l.b16 %v5865
  %v5945 = vunpack.c.l.b16 %v5866
  %v5946 = vunpack.c.l.b16 %v5867
  %v5947 = vunpack.c.l.b16 %v5868
  %v5948 = vunpack.c.l.b16 %v5869
  %v5949 = vunpack.c.l.b16 %v5870
  %v5950 = vunpack.c.l.b16 %v5871
  %v5951 = vunpack.c.l.b16 %v5872
  %v5952 = vunpack.c.l.b16 %v5873
  %v5953 = vunpack.c.l.b16 %v5874
  %v5954 = vunpack.c.l.b16 %v5875
  %v5955 = vunpack.c.l.b16 %v5876
  %v5956 = vpack.c.b16 %v5921, %v5920
  %v5957 = vpack.c.b16 %v5923, %v5922
  %v5958 = vpack.c.b16 %v5925, %v5924
  %v5959 = vpack.c.b16 %v5927, %v5926
  %v5960 = vpack.c.b16 %v5929, %v5928
  %v5961 = vpack.c.b16 %v5931, %v5930
  %v5962 = vpack.c.b16 %v5933, %v5932
  %v5963 = vpack.c.b16 %v5935, %v5934
  %v5964 = vpack.c.b16 %v5937, %v5936
  %v5965 = vpack.c.b16 %v5939, %v5938
  %v5966 = vpack.c.b16 %v5941, %v5940
  %v5967 = vpack.c.b16 %v5943, %v5942
  %v5968 = vpack.c.b16 %v5945, %v5944
  %v5969 = vpack.c.b16 %v5947, %v5946
  %v5970 = vpack.c.b16 %v5949, %v5948
  %v5971 = vpack.c.b16 %v5951, %v5950
  %v5972 = vpack.c.b16 %v5953, %v5952
  %v5973 = vpack.c.b16 %v5955, %v5954
  %v5993 = vsel %vm3847, %v5124, 0
  %v5996 = vsel %vm3847, %v5126, 0
  %v5999 = vsel %vm3847, %v5128, 0
  %v6002 = vsel %vm3847, %v5130, 0
  %v6005 = vsel %vm3847, %v5132, 0
  %v6008 = vsel %vm3847, %v5134, 0
  %v6011 = vsel %vm3847, %v5136, 0
  %v6014 = vsel %vm3847, %v5138, 0
  %v6017 = vsel %vm3847, %v5140, 0
  %v6020 = vsel %vm3847, %v5142, 0
  %v6023 = vsel %vm3847, %v5144, 0
  %v6026 = vsel %vm3847, %v5146, 0
  %v6029 = vsel %vm3847, %v5148, 0
  %v6032 = vsel %vm3847, %v5150, 0
  %v6035 = vsel %vm3847, %v5152, 0
  %v6038 = vsel %vm3847, %v5154, 0
  %v6041 = vsel %vm3847, %v5156, 0
  %v6044 = vsel %vm3847, %v5158, 0
  %v6047 = vsel %vm3847, %v5160, 0
  %v6050 = vsel %vm3847, %v5162, 0
  %v6053 = vsel %vm3847, %v5164, 0
  %v6056 = vsel %vm3847, %v5166, 0
  %v6059 = vsel %vm3847, %v5168, 0
  %v6062 = vsel %vm3847, %v5283, 0
  %v6065 = vsel %vm3847, %v5450, 0
  %v6068 = vsel %vm3847, %v5449, 0
  %6070 = vmatprep.subr.bf16.mxu0 0
  %6071 = vmatpush1.bf16.msra.mxu0 %v5963
  %6072 = vmatprep.subr.bf16.mxu0 0
  %6073 = vmatpush1.bf16.msra.mxu0 %v5962
  %6074 = vmatprep.subr.bf16.mxu0 0
  %6075 = vmatpush1.bf16.msra.mxu0 %v5961
  %6076 = vmatprep.subr.bf16.mxu0 0
  %6077 = vmatpush1.bf16.msra.mxu0 %v5960
  %6078 = vmatprep.subr.bf16.mxu0 0
  %6079 = vmatpush1.bf16.msra.mxu0 %v5959
  %6080 = vmatprep.subr.bf16.mxu0 0
  %6081 = vmatpush1.bf16.msra.mxu0 %v5958
  %6082 = vmatprep.subr.bf16.mxu0 0
  %6083 = vmatpush1.bf16.msra.mxu0 %v5957
  %6084 = vmatprep.subr.bf16.mxu0 0
  %6085 = vmatpush1.bf16.msra.mxu0 %v5956
  %6086 = vmatprep.subr.bf16.mxu0 0
  %6087 = vmatpush2.bf16.msra.mxu0 %v5971
  %6088 = vmatprep.subr.bf16.mxu0 0
  %6089 = vmatpush2.bf16.msra.mxu0 %v5970
  %6090 = vmatprep.subr.bf16.mxu0 0
  %6091 = vmatpush2.bf16.msra.mxu0 %v5969
  %6092 = vmatprep.subr.bf16.mxu0 0
  %6093 = vmatpush2.bf16.msra.mxu0 %v5968
  %6094 = vmatprep.subr.bf16.mxu0 0
  %6095 = vmatpush2.bf16.msra.mxu0 %v5967
  %6096 = vmatprep.subr.bf16.mxu0 0
  %6097 = vmatpush2.bf16.msra.mxu0 %v5966
  %6098 = vmatprep.subr.bf16.mxu0 0
  %6099 = vmatpush2.bf16.msra.mxu0 %v5965
  %6100 = vmatprep.subr.bf16.mxu0 0
  %6101 = vmatpush2.bf16.msra.mxu0 %v5964
  %6102 = vmatprep.mubr.bf16.mxu0 %v5764
  %6103 = vmatmul.mubr.bf16.gmra.mxu0 %v5556
  %v6104 = vpop.f32.mrf.mxu0
  %v6105 = vadd.f32 %v5882, %v6104
  %v6106 = vpop.f32.mrf.mxu0
  %v6107 = vpop.f32.mrf.mxu0
  %v6108 = vadd.f32 %v5882, %v6107
  %v6109 = vpop.f32.mrf.mxu0
  %6110 = vmatprep.mubr.bf16.mxu0 %v5767
  %6111 = vmatmul.mubr.bf16.gmra.mxu0 %v5559
  %v6112 = vpop.f32.mrf.mxu0
  %v6113 = vadd.f32 %v5882, %v6112
  %v6114 = vpop.f32.mrf.mxu0
  %v6115 = vpop.f32.mrf.mxu0
  %v6116 = vadd.f32 %v5882, %v6115
  %v6117 = vpop.f32.mrf.mxu0
  %6118 = vmatprep.mubr.bf16.mxu0 %v5770
  %6119 = vmatmul.mubr.bf16.gmra.mxu0 %v5562
  %v6120 = vpop.f32.mrf.mxu0
  %v6121 = vadd.f32 %v5882, %v6120
  %v6122 = vpop.f32.mrf.mxu0
  %v6123 = vpop.f32.mrf.mxu0
  %v6124 = vadd.f32 %v5882, %v6123
  %v6125 = vpop.f32.mrf.mxu0
  %6126 = vmatprep.mubr.bf16.mxu0 %v5773
  %6127 = vmatmul.mubr.bf16.gmra.mxu0 %v5565
  %v6128 = vpop.f32.mrf.mxu0
  %v6129 = vadd.f32 %v5882, %v6128
  %v6130 = vpop.f32.mrf.mxu0
  %v6131 = vpop.f32.mrf.mxu0
  %v6132 = vadd.f32 %v5882, %v6131
  %v6133 = vpop.f32.mrf.mxu0
  %6134 = vmatprep.mubr.bf16.mxu0 %v5776
  %6135 = vmatmul.mubr.bf16.gmra.mxu0 %v5568
  %v6136 = vpop.f32.mrf.mxu0
  %v6137 = vadd.f32 %v5882, %v6136
  %v6138 = vpop.f32.mrf.mxu0
  %v6139 = vpop.f32.mrf.mxu0
  %v6140 = vadd.f32 %v5882, %v6139
  %v6141 = vpop.f32.mrf.mxu0
  %6142 = vmatprep.mubr.bf16.mxu0 %v5779
  %6143 = vmatmul.mubr.bf16.gmra.mxu0 %v5571
  %v6144 = vpop.f32.mrf.mxu0
  %v6145 = vadd.f32 %v5882, %v6144
  %v6146 = vpop.f32.mrf.mxu0
  %v6147 = vpop.f32.mrf.mxu0
  %v6148 = vadd.f32 %v5882, %v6147
  %v6149 = vpop.f32.mrf.mxu0
  %6150 = vmatprep.mubr.bf16.mxu0 %v5782
  %6151 = vmatmul.mubr.bf16.gmra.mxu0 %v5574
  %v6152 = vpop.f32.mrf.mxu0
  %v6153 = vadd.f32 %v5882, %v6152
  %v6154 = vpop.f32.mrf.mxu0
  %v6155 = vpop.f32.mrf.mxu0
  %v6156 = vadd.f32 %v5882, %v6155
  %v6157 = vpop.f32.mrf.mxu0
  %6158 = vmatprep.mubr.bf16.mxu0 %v5785
  %6159 = vmatmul.mubr.bf16.gmra.mxu0 %v5577
  %v6160 = vpop.f32.mrf.mxu0
  %v6161 = vadd.f32 %v5882, %v6160
  %v6162 = vpop.f32.mrf.mxu0
  %v6163 = vpop.f32.mrf.mxu0
  %v6164 = vadd.f32 %v5882, %v6163
  %v6165 = vpop.f32.mrf.mxu0
  %6166 = vmatprep.mubr.bf16.mxu0 %v5788
  %6167 = vmatmul.mubr.bf16.gmra.mxu0 %v5580
  %v6168 = vpop.f32.mrf.mxu0
  %v6169 = vadd.f32 %v5882, %v6168
  %v6170 = vpop.f32.mrf.mxu0
  %v6171 = vpop.f32.mrf.mxu0
  %v6172 = vadd.f32 %v5882, %v6171
  %v6173 = vpop.f32.mrf.mxu0
  %6174 = vmatprep.mubr.bf16.mxu0 %v5791
  %6175 = vmatmul.mubr.bf16.gmra.mxu0 %v5583
  %v6176 = vpop.f32.mrf.mxu0
  %v6177 = vadd.f32 %v5882, %v6176
  %v6178 = vpop.f32.mrf.mxu0
  %v6179 = vpop.f32.mrf.mxu0
  %v6180 = vadd.f32 %v5882, %v6179
  %v6181 = vpop.f32.mrf.mxu0
  %6182 = vmatprep.mubr.bf16.mxu0 %v5794
  %6183 = vmatmul.mubr.bf16.gmra.mxu0 %v5586
  %v6184 = vpop.f32.mrf.mxu0
  %v6185 = vadd.f32 %v5882, %v6184
  %v6186 = vpop.f32.mrf.mxu0
  %v6187 = vpop.f32.mrf.mxu0
  %v6188 = vadd.f32 %v5882, %v6187
  %v6189 = vpop.f32.mrf.mxu0
  %6190 = vmatprep.mubr.bf16.mxu0 %v5797
  %6191 = vmatmul.mubr.bf16.gmra.mxu0 %v5589
  %v6192 = vpop.f32.mrf.mxu0
  %v6193 = vadd.f32 %v5882, %v6192
  %v6194 = vpop.f32.mrf.mxu0
  %v6195 = vpop.f32.mrf.mxu0
  %v6196 = vadd.f32 %v5882, %v6195
  %v6197 = vpop.f32.mrf.mxu0
  %6198 = vmatprep.mubr.bf16.mxu0 %v5800
  %6199 = vmatmul.mubr.bf16.gmra.mxu0 %v5592
  %v6200 = vpop.f32.mrf.mxu0
  %v6201 = vadd.f32 %v5882, %v6200
  %v6202 = vpop.f32.mrf.mxu0
  %v6203 = vpop.f32.mrf.mxu0
  %v6204 = vadd.f32 %v5882, %v6203
  %v6205 = vpop.f32.mrf.mxu0
  %6206 = vmatprep.mubr.bf16.mxu0 %v5803
  %6207 = vmatmul.mubr.bf16.gmra.mxu0 %v5595
  %v6208 = vpop.f32.mrf.mxu0
  %v6209 = vadd.f32 %v5882, %v6208
  %v6210 = vpop.f32.mrf.mxu0
  %v6211 = vpop.f32.mrf.mxu0
  %v6212 = vadd.f32 %v5882, %v6211
  %v6213 = vpop.f32.mrf.mxu0
  %6214 = vmatprep.mubr.bf16.mxu0 %v5806
  %6215 = vmatmul.mubr.bf16.gmra.mxu0 %v5598
  %v6216 = vpop.f32.mrf.mxu0
  %v6217 = vadd.f32 %v5882, %v6216
  %v6218 = vpop.f32.mrf.mxu0
  %v6219 = vpop.f32.mrf.mxu0
  %v6220 = vadd.f32 %v5882, %v6219
  %v6221 = vpop.f32.mrf.mxu0
  %6222 = vmatprep.mubr.bf16.mxu0 %v5809
  %6223 = vmatmul.mubr.bf16.gmra.mxu0 %v5601
  %v6224 = vpop.f32.mrf.mxu0
  %v6225 = vadd.f32 %v5882, %v6224
  %v6226 = vpop.f32.mrf.mxu0
  %v6227 = vpop.f32.mrf.mxu0
  %v6228 = vadd.f32 %v5882, %v6227
  %v6229 = vpop.f32.mrf.mxu0
  %6230 = vmatprep.mubr.bf16.mxu0 %v5812
  %6231 = vmatmul.mubr.bf16.gmra.mxu0 %v5604
  %v6232 = vpop.f32.mrf.mxu0
  %v6233 = vadd.f32 %v5882, %v6232
  %v6234 = vpop.f32.mrf.mxu0
  %v6235 = vpop.f32.mrf.mxu0
  %v6236 = vadd.f32 %v5882, %v6235
  %v6237 = vpop.f32.mrf.mxu0
  %6238 = vmatprep.mubr.bf16.mxu0 %v5815
  %6239 = vmatmul.mubr.bf16.gmra.mxu0 %v5607
  %v6240 = vpop.f32.mrf.mxu0
  %v6241 = vadd.f32 %v5882, %v6240
  %v6242 = vpop.f32.mrf.mxu0
  %v6243 = vpop.f32.mrf.mxu0
  %v6244 = vadd.f32 %v5882, %v6243
  %v6245 = vpop.f32.mrf.mxu0
  %6246 = vmatprep.mubr.bf16.mxu0 %v5818
  %6247 = vmatmul.mubr.bf16.gmra.mxu0 %v5610
  %v6248 = vpop.f32.mrf.mxu0
  %v6249 = vadd.f32 %v5882, %v6248
  %v6250 = vpop.f32.mrf.mxu0
  %v6251 = vpop.f32.mrf.mxu0
  %v6252 = vadd.f32 %v5882, %v6251
  %v6253 = vpop.f32.mrf.mxu0
  %6254 = vmatprep.mubr.bf16.mxu0 %v5821
  %6255 = vmatmul.mubr.bf16.gmra.mxu0 %v5613
  %v6256 = vpop.f32.mrf.mxu0
  %v6257 = vadd.f32 %v5882, %v6256
  %v6258 = vpop.f32.mrf.mxu0
  %v6259 = vpop.f32.mrf.mxu0
  %v6260 = vadd.f32 %v5882, %v6259
  %v6261 = vpop.f32.mrf.mxu0
  %6262 = vmatprep.mubr.bf16.mxu0 %v5824
  %6263 = vmatmul.mubr.bf16.gmra.mxu0 %v5616
  %v6264 = vpop.f32.mrf.mxu0
  %v6265 = vadd.f32 %v5882, %v6264
  %v6266 = vpop.f32.mrf.mxu0
  %v6267 = vpop.f32.mrf.mxu0
  %v6268 = vadd.f32 %v5882, %v6267
  %v6269 = vpop.f32.mrf.mxu0
  %6270 = vmatprep.mubr.bf16.mxu0 %v5827
  %6271 = vmatmul.mubr.bf16.gmra.mxu0 %v5619
  %v6272 = vpop.f32.mrf.mxu0
  %v6273 = vadd.f32 %v5882, %v6272
  %v6274 = vpop.f32.mrf.mxu0
  %v6275 = vpop.f32.mrf.mxu0
  %v6276 = vadd.f32 %v5882, %v6275
  %v6277 = vpop.f32.mrf.mxu0
  %6278 = vmatprep.mubr.bf16.mxu0 %v5830
  %6279 = vmatmul.mubr.bf16.gmra.mxu0 %v5622
  %v6280 = vpop.f32.mrf.mxu0
  %v6281 = vadd.f32 %v5882, %v6280
  %v6282 = vpop.f32.mrf.mxu0
  %v6283 = vpop.f32.mrf.mxu0
  %v6284 = vadd.f32 %v5882, %v6283
  %v6285 = vpop.f32.mrf.mxu0
  %6286 = vmatprep.mubr.bf16.mxu0 %v5833
  %6287 = vmatmul.mubr.bf16.gmra.mxu0 %v5625
  %v6288 = vpop.f32.mrf.mxu0
  %v6289 = vadd.f32 %v5882, %v6288
  %v6290 = vpop.f32.mrf.mxu0
  %v6291 = vpop.f32.mrf.mxu0
  %v6292 = vadd.f32 %v5882, %v6291
  %v6293 = vpop.f32.mrf.mxu0
  %6294 = vmatprep.mubr.bf16.mxu0 %v5836
  %6295 = vmatmul.mubr.bf16.gmra.mxu0 %v5628
  %v6296 = vpop.f32.mrf.mxu0
  %v6297 = vadd.f32 %v5882, %v6296
  %v6298 = vpop.f32.mrf.mxu0
  %v6299 = vpop.f32.mrf.mxu0
  %v6300 = vadd.f32 %v5882, %v6299
  %v6301 = vpop.f32.mrf.mxu0
  %6302 = vmatprep.mubr.bf16.mxu0 %v5839
  %6303 = vmatmul.mubr.bf16.gmra.mxu0 %v5631
  %v6304 = vpop.f32.mrf.mxu0
  %v6305 = vadd.f32 %v5882, %v6304
  %v6306 = vpop.f32.mrf.mxu0
  %v6307 = vpop.f32.mrf.mxu0
  %v6308 = vadd.f32 %v5882, %v6307
  %v6309 = vpop.f32.mrf.mxu0
  %6310 = vdwg.mxu0
  %6311 = vmatprep.subr.bf16.mxu0 0
  %6312 = vmatpush1.bf16.msra.mxu0 0
  %6313 = vmatprep.subr.bf16.mxu0 0
  %6314 = vmatpush1.bf16.msra.mxu0 0
  %6315 = vmatprep.subr.bf16.mxu0 0
  %6316 = vmatpush1.bf16.msra.mxu0 0
  %6317 = vmatprep.subr.bf16.mxu0 0
  %6318 = vmatpush1.bf16.msra.mxu0 0
  %6319 = vmatprep.subr.bf16.mxu0 0
  %6320 = vmatpush1.bf16.msra.mxu0 0
  %6321 = vmatprep.subr.bf16.mxu0 0
  %6322 = vmatpush1.bf16.msra.mxu0 0
  %6323 = vmatprep.subr.bf16.mxu0 0
  %6324 = vmatpush1.bf16.msra.mxu0 %v5973
  %6325 = vmatprep.subr.bf16.mxu0 0
  %6326 = vmatpush1.bf16.msra.mxu0 %v5972
  %6327 = vmatprep.subr.bf16.mxu0 0
  %6328 = vmatpush2.bf16.msra.mxu0 0
  %6329 = vmatprep.subr.bf16.mxu0 0
  %6330 = vmatpush2.bf16.msra.mxu0 0
  %6331 = vmatprep.subr.bf16.mxu0 0
  %6332 = vmatpush2.bf16.msra.mxu0 0
  %6333 = vmatprep.subr.bf16.mxu0 0
  %6334 = vmatpush2.bf16.msra.mxu0 0
  %6335 = vmatprep.subr.bf16.mxu0 0
  %6336 = vmatpush2.bf16.msra.mxu0 0
  %6337 = vmatprep.subr.bf16.mxu0 0
  %6338 = vmatpush2.bf16.msra.mxu0 0
  %6339 = vmatprep.subr.bf16.mxu0 0
  %6340 = vmatpush2.bf16.msra.mxu0 0
  %6341 = vmatprep.subr.bf16.mxu0 0
  %6342 = vmatpush2.bf16.msra.mxu0 0
  %6343 = vmatprep.mubr.bf16.mxu0 0
  %6344 = vmatmul.mubr.bf16.gmra.mxu0 %v5993
  %v6345 = vpop.f32.mrf.mxu0
  %v6346 = vadd.f32 %v6105, %v6345
  %v6347 = vpop.f32.mrf.mxu0
  %v6348 = vpop.f32.mrf.mxu0
  %v6349 = vadd.f32 %v6108, %v6348
  %v6350 = vpop.f32.mrf.mxu0
  %6351 = vmatprep.mubr.bf16.mxu0 0
  %6352 = vmatmul.mubr.bf16.gmra.mxu0 %v5996
  %v6353 = vpop.f32.mrf.mxu0
  %v6354 = vadd.f32 %v6113, %v6353
  %v6355 = vpop.f32.mrf.mxu0
  %v6356 = vpop.f32.mrf.mxu0
  %v6357 = vadd.f32 %v6116, %v6356
  %v6358 = vpop.f32.mrf.mxu0
  %6359 = vmatprep.mubr.bf16.mxu0 0
  %6360 = vmatmul.mubr.bf16.gmra.mxu0 %v5999
  %v6361 = vpop.f32.mrf.mxu0
  %v6362 = vadd.f32 %v6121, %v6361
  %v6363 = vpop.f32.mrf.mxu0
  %v6364 = vpop.f32.mrf.mxu0
  %v6365 = vadd.f32 %v6124, %v6364
  %v6366 = vpop.f32.mrf.mxu0
  %6367 = vmatprep.mubr.bf16.mxu0 0
  %6368 = vmatmul.mubr.bf16.gmra.mxu0 %v6002
  %v6369 = vpop.f32.mrf.mxu0
  %v6370 = vadd.f32 %v6129, %v6369
  %v6371 = vpop.f32.mrf.mxu0
  %v6372 = vpop.f32.mrf.mxu0
  %v6373 = vadd.f32 %v6132, %v6372
  %v6374 = vpop.f32.mrf.mxu0
  %6375 = vmatprep.mubr.bf16.mxu0 0
  %6376 = vmatmul.mubr.bf16.gmra.mxu0 %v6005
  %v6377 = vpop.f32.mrf.mxu0
  %v6378 = vadd.f32 %v6137, %v6377
  %v6379 = vpop.f32.mrf.mxu0
  %v6380 = vpop.f32.mrf.mxu0
  %v6381 = vadd.f32 %v6140, %v6380
  %v6382 = vpop.f32.mrf.mxu0
  %6383 = vmatprep.mubr.bf16.mxu0 0
  %6384 = vmatmul.mubr.bf16.gmra.mxu0 %v6008
  %v6385 = vpop.f32.mrf.mxu0
  %v6386 = vadd.f32 %v6145, %v6385
  %v6387 = vpop.f32.mrf.mxu0
  %v6388 = vpop.f32.mrf.mxu0
  %v6389 = vadd.f32 %v6148, %v6388
  %v6390 = vpop.f32.mrf.mxu0
  %6391 = vmatprep.mubr.bf16.mxu0 0
  %6392 = vmatmul.mubr.bf16.gmra.mxu0 %v6011
  %v6393 = vpop.f32.mrf.mxu0
  %v6394 = vadd.f32 %v6153, %v6393
  %v6395 = vpop.f32.mrf.mxu0
  %v6396 = vpop.f32.mrf.mxu0
  %v6397 = vadd.f32 %v6156, %v6396
  %v6398 = vpop.f32.mrf.mxu0
  %6399 = vmatprep.mubr.bf16.mxu0 0
  %6400 = vmatmul.mubr.bf16.gmra.mxu0 %v6014
  %v6401 = vpop.f32.mrf.mxu0
  %v6402 = vadd.f32 %v6161, %v6401
  %v6403 = vpop.f32.mrf.mxu0
  %v6404 = vpop.f32.mrf.mxu0
  %v6405 = vadd.f32 %v6164, %v6404
  %v6406 = vpop.f32.mrf.mxu0
  %6407 = vmatprep.mubr.bf16.mxu0 0
  %6408 = vmatmul.mubr.bf16.gmra.mxu0 %v6017
  %v6409 = vpop.f32.mrf.mxu0
  %v6410 = vadd.f32 %v6169, %v6409
  %v6411 = vpop.f32.mrf.mxu0
  %v6412 = vpop.f32.mrf.mxu0
  %v6413 = vadd.f32 %v6172, %v6412
  %v6414 = vpop.f32.mrf.mxu0
  %6415 = vmatprep.mubr.bf16.mxu0 0
  %6416 = vmatmul.mubr.bf16.gmra.mxu0 %v6020
  %v6417 = vpop.f32.mrf.mxu0
  %v6418 = vadd.f32 %v6177, %v6417
  %v6419 = vpop.f32.mrf.mxu0
  %v6420 = vpop.f32.mrf.mxu0
  %v6421 = vadd.f32 %v6180, %v6420
  %v6422 = vpop.f32.mrf.mxu0
  %6423 = vmatprep.mubr.bf16.mxu0 0
  %6424 = vmatmul.mubr.bf16.gmra.mxu0 %v6023
  %v6425 = vpop.f32.mrf.mxu0
  %v6426 = vadd.f32 %v6185, %v6425
  %v6427 = vpop.f32.mrf.mxu0
  %v6428 = vpop.f32.mrf.mxu0
  %v6429 = vadd.f32 %v6188, %v6428
  %v6430 = vpop.f32.mrf.mxu0
  %6431 = vmatprep.mubr.bf16.mxu0 0
  %6432 = vmatmul.mubr.bf16.gmra.mxu0 %v6026
  %v6433 = vpop.f32.mrf.mxu0
  %v6434 = vadd.f32 %v6193, %v6433
  %v6435 = vpop.f32.mrf.mxu0
  %v6436 = vpop.f32.mrf.mxu0
  %v6437 = vadd.f32 %v6196, %v6436
  %v6438 = vpop.f32.mrf.mxu0
  %6439 = vmatprep.mubr.bf16.mxu0 0
  %6440 = vmatmul.mubr.bf16.gmra.mxu0 %v6029
  %v6441 = vpop.f32.mrf.mxu0
  %v6442 = vadd.f32 %v6201, %v6441
  %v6443 = vpop.f32.mrf.mxu0
  %v6444 = vpop.f32.mrf.mxu0
  %v6445 = vadd.f32 %v6204, %v6444
  %v6446 = vpop.f32.mrf.mxu0
  %6447 = vmatprep.mubr.bf16.mxu0 0
  %6448 = vmatmul.mubr.bf16.gmra.mxu0 %v6032
  %v6449 = vpop.f32.mrf.mxu0
  %v6450 = vadd.f32 %v6209, %v6449
  %v6451 = vpop.f32.mrf.mxu0
  %v6452 = vpop.f32.mrf.mxu0
  %v6453 = vadd.f32 %v6212, %v6452
  %v6454 = vpop.f32.mrf.mxu0
  %6455 = vmatprep.mubr.bf16.mxu0 0
  %6456 = vmatmul.mubr.bf16.gmra.mxu0 %v6035
  %v6457 = vpop.f32.mrf.mxu0
  %v6458 = vadd.f32 %v6217, %v6457
  %v6459 = vpop.f32.mrf.mxu0
  %v6460 = vpop.f32.mrf.mxu0
  %v6461 = vadd.f32 %v6220, %v6460
  %v6462 = vpop.f32.mrf.mxu0
  %6463 = vmatprep.mubr.bf16.mxu0 0
  %6464 = vmatmul.mubr.bf16.gmra.mxu0 %v6038
  %v6465 = vpop.f32.mrf.mxu0
  %v6466 = vadd.f32 %v6225, %v6465
  %v6467 = vpop.f32.mrf.mxu0
  %v6468 = vpop.f32.mrf.mxu0
  %v6469 = vadd.f32 %v6228, %v6468
  %v6470 = vpop.f32.mrf.mxu0
  %6471 = vmatprep.mubr.bf16.mxu0 0
  %6472 = vmatmul.mubr.bf16.gmra.mxu0 %v6041
  %v6473 = vpop.f32.mrf.mxu0
  %v6474 = vadd.f32 %v6233, %v6473
  %v6475 = vpop.f32.mrf.mxu0
  %v6476 = vpop.f32.mrf.mxu0
  %v6477 = vadd.f32 %v6236, %v6476
  %v6478 = vpop.f32.mrf.mxu0
  %6479 = vmatprep.mubr.bf16.mxu0 0
  %6480 = vmatmul.mubr.bf16.gmra.mxu0 %v6044
  %v6481 = vpop.f32.mrf.mxu0
  %v6482 = vadd.f32 %v6241, %v6481
  %v6483 = vpop.f32.mrf.mxu0
  %v6484 = vpop.f32.mrf.mxu0
  %v6485 = vadd.f32 %v6244, %v6484
  %v6486 = vpop.f32.mrf.mxu0
  %6487 = vmatprep.mubr.bf16.mxu0 0
  %6488 = vmatmul.mubr.bf16.gmra.mxu0 %v6047
  %v6489 = vpop.f32.mrf.mxu0
  %v6490 = vadd.f32 %v6249, %v6489
  %v6491 = vpop.f32.mrf.mxu0
  %v6492 = vpop.f32.mrf.mxu0
  %v6493 = vadd.f32 %v6252, %v6492
  %v6494 = vpop.f32.mrf.mxu0
  %6495 = vmatprep.mubr.bf16.mxu0 0
  %6496 = vmatmul.mubr.bf16.gmra.mxu0 %v6050
  %v6497 = vpop.f32.mrf.mxu0
  %v6498 = vadd.f32 %v6257, %v6497
  %v6499 = vpop.f32.mrf.mxu0
  %v6500 = vpop.f32.mrf.mxu0
  %v6501 = vadd.f32 %v6260, %v6500
  %v6502 = vpop.f32.mrf.mxu0
  %6503 = vmatprep.mubr.bf16.mxu0 0
  %6504 = vmatmul.mubr.bf16.gmra.mxu0 %v6053
  %v6505 = vpop.f32.mrf.mxu0
  %v6506 = vadd.f32 %v6265, %v6505
  %v6507 = vpop.f32.mrf.mxu0
  %v6508 = vpop.f32.mrf.mxu0
  %v6509 = vadd.f32 %v6268, %v6508
  %v6510 = vpop.f32.mrf.mxu0
  %6511 = vmatprep.mubr.bf16.mxu0 0
  %6512 = vmatmul.mubr.bf16.gmra.mxu0 %v6056
  %v6513 = vpop.f32.mrf.mxu0
  %v6514 = vadd.f32 %v6273, %v6513
  %v6515 = vpop.f32.mrf.mxu0
  %v6516 = vpop.f32.mrf.mxu0
  %v6517 = vadd.f32 %v6276, %v6516
  %v6518 = vpop.f32.mrf.mxu0
  %6519 = vmatprep.mubr.bf16.mxu0 0
  %6520 = vmatmul.mubr.bf16.gmra.mxu0 %v6059
  %v6521 = vpop.f32.mrf.mxu0
  %v6522 = vadd.f32 %v6281, %v6521
  %v6523 = vpop.f32.mrf.mxu0
  %v6524 = vpop.f32.mrf.mxu0
  %v6525 = vadd.f32 %v6284, %v6524
  %v6526 = vpop.f32.mrf.mxu0
  %6527 = vmatprep.mubr.bf16.mxu0 0
  %6528 = vmatmul.mubr.bf16.gmra.mxu0 %v6062
  %v6529 = vpop.f32.mrf.mxu0
  %v6530 = vadd.f32 %v6289, %v6529
  %v6531 = vpop.f32.mrf.mxu0
  %v6532 = vpop.f32.mrf.mxu0
  %v6533 = vadd.f32 %v6292, %v6532
  %v6534 = vpop.f32.mrf.mxu0
  %6535 = vmatprep.mubr.bf16.mxu0 0
  %6536 = vmatmul.mubr.bf16.gmra.mxu0 %v6065
  %v6537 = vpop.f32.mrf.mxu0
  %v6538 = vadd.f32 %v6297, %v6537
  %v6539 = vpop.f32.mrf.mxu0
  %v6540 = vpop.f32.mrf.mxu0
  %v6541 = vadd.f32 %v6300, %v6540
  %v6542 = vpop.f32.mrf.mxu0
  %6543 = vmatprep.mubr.bf16.mxu0 0
  %6544 = vmatmul.mubr.bf16.gmra.mxu0 %v6068
  %v6545 = vpop.f32.mrf.mxu0
  %v6546 = vadd.f32 %v6305, %v6545
  %v6547 = vpop.f32.mrf.mxu0
  %v6548 = vpop.f32.mrf.mxu0
  %v6549 = vadd.f32 %v6308, %v6548
  %v6550 = vpop.f32.mrf.mxu0
  %6551 = vdwg.mxu0
  %vm6552 = vcmp.gt.f32.partialorder %v6346, 0.0
  %vm6553 = vcmp.gt.f32.partialorder %v6349, 0.0
  %vm6554 = vcmp.gt.f32.partialorder %v6354, 0.0
  %vm6555 = vcmp.gt.f32.partialorder %v6357, 0.0
  %vm6556 = vcmp.gt.f32.partialorder %v6362, 0.0
  %vm6557 = vcmp.gt.f32.partialorder %v6365, 0.0
  %vm6558 = vcmp.gt.f32.partialorder %v6370, 0.0
  %vm6559 = vcmp.gt.f32.partialorder %v6373, 0.0
  %vm6560 = vcmp.gt.f32.partialorder %v6378, 0.0
  %vm6561 = vcmp.gt.f32.partialorder %v6381, 0.0
  %vm6562 = vcmp.gt.f32.partialorder %v6386, 0.0
  %vm6563 = vcmp.gt.f32.partialorder %v6389, 0.0
  %vm6564 = vcmp.gt.f32.partialorder %v6394, 0.0
  %vm6565 = vcmp.gt.f32.partialorder %v6397, 0.0
  %vm6566 = vcmp.gt.f32.partialorder %v6402, 0.0
  %vm6567 = vcmp.gt.f32.partialorder %v6405, 0.0
  %vm6568 = vcmp.gt.f32.partialorder %v6410, 0.0
  %vm6569 = vcmp.gt.f32.partialorder %v6413, 0.0
  %vm6570 = vcmp.gt.f32.partialorder %v6418, 0.0
  %vm6571 = vcmp.gt.f32.partialorder %v6421, 0.0
  %vm6572 = vcmp.gt.f32.partialorder %v6426, 0.0
  %vm6573 = vcmp.gt.f32.partialorder %v6429, 0.0
  %vm6574 = vcmp.gt.f32.partialorder %v6434, 0.0
  %vm6575 = vcmp.gt.f32.partialorder %v6437, 0.0
  %vm6576 = vcmp.gt.f32.partialorder %v6442, 0.0
  %vm6577 = vcmp.gt.f32.partialorder %v6445, 0.0
  %vm6578 = vcmp.gt.f32.partialorder %v6450, 0.0
  %vm6579 = vcmp.gt.f32.partialorder %v6453, 0.0
  %vm6580 = vcmp.gt.f32.partialorder %v6458, 0.0
  %vm6581 = vcmp.gt.f32.partialorder %v6461, 0.0
  %vm6582 = vcmp.gt.f32.partialorder %v6466, 0.0
  %vm6583 = vcmp.gt.f32.partialorder %v6469, 0.0
  %vm6584 = vcmp.gt.f32.partialorder %v6474, 0.0
  %vm6585 = vcmp.gt.f32.partialorder %v6477, 0.0
  %vm6586 = vcmp.gt.f32.partialorder %v6482, 0.0
  %vm6587 = vcmp.gt.f32.partialorder %v6485, 0.0
  %vm6588 = vcmp.gt.f32.partialorder %v6490, 0.0
  %vm6589 = vcmp.gt.f32.partialorder %v6493, 0.0
  %vm6590 = vcmp.gt.f32.partialorder %v6498, 0.0
  %vm6591 = vcmp.gt.f32.partialorder %v6501, 0.0
  %vm6592 = vcmp.gt.f32.partialorder %v6506, 0.0
  %vm6593 = vcmp.gt.f32.partialorder %v6509, 0.0
  %vm6594 = vcmp.gt.f32.partialorder %v6514, 0.0
  %vm6595 = vcmp.gt.f32.partialorder %v6517, 0.0
  %vm6596 = vcmp.gt.f32.partialorder %v6522, 0.0
  %vm6597 = vcmp.gt.f32.partialorder %v6525, 0.0
  %vm6598 = vcmp.gt.f32.partialorder %v6530, 0.0
  %vm6599 = vcmp.gt.f32.partialorder %v6533, 0.0
  %vm6600 = vcmp.gt.f32.partialorder %v6538, 0.0
  %vm6601 = vcmp.gt.f32.partialorder %v6541, 0.0
  %vm6602 = vcmp.gt.f32.partialorder %v6546, 0.0
  %vm6603 = vcmp.gt.f32.partialorder %v6549, 0.0
  %v6604 = vmul.f32 %v6346, 0.01
  %v6605 = vmul.f32 %v6349, 0.01
  %v6606 = vmul.f32 %v6354, 0.01
  %v6607 = vmul.f32 %v6357, 0.01
  %v6608 = vmul.f32 %v6362, 0.01
  %v6609 = vmul.f32 %v6365, 0.01
  %v6610 = vmul.f32 %v6370, 0.01
  %v6611 = vmul.f32 %v6373, 0.01
  %v6612 = vmul.f32 %v6378, 0.01
  %v6613 = vmul.f32 %v6381, 0.01
  %v6614 = vmul.f32 %v6386, 0.01
  %v6615 = vmul.f32 %v6389, 0.01
  %v6616 = vmul.f32 %v6394, 0.01
  %v6617 = vmul.f32 %v6397, 0.01
  %v6618 = vmul.f32 %v6402, 0.01
  %v6619 = vmul.f32 %v6405, 0.01
  %v6620 = vmul.f32 %v6410, 0.01
  %v6621 = vmul.f32 %v6413, 0.01
  %v6622 = vmul.f32 %v6418, 0.01
  %v6623 = vmul.f32 %v6421, 0.01
  %v6624 = vmul.f32 %v6426, 0.01
  %v6625 = vmul.f32 %v6429, 0.01
  %v6626 = vmul.f32 %v6434, 0.01
  %v6627 = vmul.f32 %v6437, 0.01
  %v6628 = vmul.f32 %v6442, 0.01
  %v6629 = vmul.f32 %v6445, 0.01
  %v6630 = vmul.f32 %v6450, 0.01
  %v6631 = vmul.f32 %v6453, 0.01
  %v6632 = vmul.f32 %v6458, 0.01
  %v6633 = vmul.f32 %v6461, 0.01
  %v6634 = vmul.f32 %v6466, 0.01
  %v6635 = vmul.f32 %v6469, 0.01
  %v6636 = vmul.f32 %v6474, 0.01
  %v6637 = vmul.f32 %v6477, 0.01
  %v6638 = vmul.f32 %v6482, 0.01
  %v6639 = vmul.f32 %v6485, 0.01
  %v6640 = vmul.f32 %v6490, 0.01
  %v6641 = vmul.f32 %v6493, 0.01
  %v6642 = vmul.f32 %v6498, 0.01
  %v6643 = vmul.f32 %v6501, 0.01
  %v6644 = vmul.f32 %v6506, 0.01
  %v6645 = vmul.f32 %v6509, 0.01
  %v6646 = vmul.f32 %v6514, 0.01
  %v6647 = vmul.f32 %v6517, 0.01
  %v6648 = vmul.f32 %v6522, 0.01
  %v6649 = vmul.f32 %v6525, 0.01
  %v6650 = vmul.f32 %v6530, 0.01
  %v6651 = vmul.f32 %v6533, 0.01
  %v6652 = vmul.f32 %v6538, 0.01
  %v6653 = vmul.f32 %v6541, 0.01
  %v6654 = vmul.f32 %v6546, 0.01
  %v6655 = vmul.f32 %v6549, 0.01
  %v6656 = vsel %vm6552, %v6346, %v6604
  %v6657 = vsel %vm6553, %v6349, %v6605
  %v6658 = vsel %vm6554, %v6354, %v6606
  %v6659 = vsel %vm6555, %v6357, %v6607
  %v6660 = vsel %vm6556, %v6362, %v6608
  %v6661 = vsel %vm6557, %v6365, %v6609
  %v6662 = vsel %vm6558, %v6370, %v6610
  %v6663 = vsel %vm6559, %v6373, %v6611
  %v6664 = vsel %vm6560, %v6378, %v6612
  %v6665 = vsel %vm6561, %v6381, %v6613
  %v6666 = vsel %vm6562, %v6386, %v6614
  %v6667 = vsel %vm6563, %v6389, %v6615
  %v6668 = vsel %vm6564, %v6394, %v6616
  %v6669 = vsel %vm6565, %v6397, %v6617
  %v6670 = vsel %vm6566, %v6402, %v6618
  %v6671 = vsel %vm6567, %v6405, %v6619
  %v6672 = vsel %vm6568, %v6410, %v6620
  %v6673 = vsel %vm6569, %v6413, %v6621
  %v6674 = vsel %vm6570, %v6418, %v6622
  %v6675 = vsel %vm6571, %v6421, %v6623
  %v6676 = vsel %vm6572, %v6426, %v6624
  %v6677 = vsel %vm6573, %v6429, %v6625
  %v6678 = vsel %vm6574, %v6434, %v6626
  %v6679 = vsel %vm6575, %v6437, %v6627
  %v6680 = vsel %vm6576, %v6442, %v6628
  %v6681 = vsel %vm6577, %v6445, %v6629
  %v6682 = vsel %vm6578, %v6450, %v6630
  %v6683 = vsel %vm6579, %v6453, %v6631
  %v6684 = vsel %vm6580, %v6458, %v6632
  %v6685 = vsel %vm6581, %v6461, %v6633
  %v6686 = vsel %vm6582, %v6466, %v6634
  %v6687 = vsel %vm6583, %v6469, %v6635
  %v6688 = vsel %vm6584, %v6474, %v6636
  %v6689 = vsel %vm6585, %v6477, %v6637
  %v6690 = vsel %vm6586, %v6482, %v6638
  %v6691 = vsel %vm6587, %v6485, %v6639
  %v6692 = vsel %vm6588, %v6490, %v6640
  %v6693 = vsel %vm6589, %v6493, %v6641
  %v6694 = vsel %vm6590, %v6498, %v6642
  %v6695 = vsel %vm6591, %v6501, %v6643
  %v6696 = vsel %vm6592, %v6506, %v6644
  %v6697 = vsel %vm6593, %v6509, %v6645
  %v6698 = vsel %vm6594, %v6514, %v6646
  %v6699 = vsel %vm6595, %v6517, %v6647
  %v6700 = vsel %vm6596, %v6522, %v6648
  %v6701 = vsel %vm6597, %v6525, %v6649
  %v6702 = vsel %vm6598, %v6530, %v6650
  %v6703 = vsel %vm6599, %v6533, %v6651
  %v6704 = vsel %vm6600, %v6538, %v6652
  %v6705 = vsel %vm6601, %v6541, %v6653
  %v6706 = vsel %vm6602, %v6546, %v6654
  %v6707 = vsel %vm6603, %v6549, %v6655
  %v6708 = vpack.c.bf16 %v6657, %v6656
  %v6709 = vpack.c.bf16 %v6659, %v6658
  %v6710 = vpack.c.bf16 %v6661, %v6660
  %v6711 = vpack.c.bf16 %v6663, %v6662
  %v6712 = vpack.c.bf16 %v6665, %v6664
  %v6713 = vpack.c.bf16 %v6667, %v6666
  %v6714 = vpack.c.bf16 %v6669, %v6668
  %v6715 = vpack.c.bf16 %v6671, %v6670
  %v6716 = vpack.c.bf16 %v6673, %v6672
  %v6717 = vpack.c.bf16 %v6675, %v6674
  %v6718 = vpack.c.bf16 %v6677, %v6676
  %v6719 = vpack.c.bf16 %v6679, %v6678
  %v6720 = vpack.c.bf16 %v6681, %v6680
  %v6721 = vpack.c.bf16 %v6683, %v6682
  %v6722 = vpack.c.bf16 %v6685, %v6684
  %v6723 = vpack.c.bf16 %v6687, %v6686
  %v6724 = vpack.c.bf16 %v6689, %v6688
  %v6725 = vpack.c.bf16 %v6691, %v6690
  %v6726 = vpack.c.bf16 %v6693, %v6692
  %v6727 = vpack.c.bf16 %v6695, %v6694
  %v6728 = vpack.c.bf16 %v6697, %v6696
  %v6729 = vpack.c.bf16 %v6699, %v6698
  %v6730 = vpack.c.bf16 %v6701, %v6700
  %v6731 = vpack.c.bf16 %v6703, %v6702
  %v6732 = vpack.c.bf16 %v6705, %v6704
  %v6733 = vpack.c.bf16 %v6707, %v6706
  %v6735 = vshrl.u32 %v6708, 16
  %v6737 = vshll.u32 %v6708, 16
  %v6739 = vrot.slane %v6737, 1
  %v6740 = vor.u32 %v6735, %v6739
  %v6742 = vshll.u32 %v6709, 16
  %v6744 = vrot.slane %v6742, 1
  %v6745 = vsel %vm3068, %v6740, %v6744
  %v6746 = vshrl.u32 %v6709, 16
  %v6748 = vor.u32 %v6746, %v6744
  %v6750 = vshll.u32 %v6710, 16
  %v6752 = vrot.slane %v6750, 1
  %v6753 = vsel %vm3068, %v6748, %v6752
  %v6754 = vshrl.u32 %v6710, 16
  %v6756 = vor.u32 %v6754, %v6752
  %v6758 = vshll.u32 %v6711, 16
  %v6760 = vrot.slane %v6758, 1
  %v6761 = vsel %vm3068, %v6756, %v6760
  %v6762 = vshrl.u32 %v6711, 16
  %v6764 = vor.u32 %v6762, %v6760
  %v6766 = vshll.u32 %v6712, 16
  %v6768 = vrot.slane %v6766, 1
  %v6769 = vsel %vm3068, %v6764, %v6768
  %v6770 = vshrl.u32 %v6712, 16
  %v6772 = vor.u32 %v6770, %v6768
  %v6774 = vshll.u32 %v6713, 16
  %v6776 = vrot.slane %v6774, 1
  %v6777 = vsel %vm3068, %v6772, %v6776
  %v6778 = vshrl.u32 %v6713, 16
  %v6780 = vor.u32 %v6778, %v6776
  %v6782 = vshll.u32 %v6714, 16
  %v6784 = vrot.slane %v6782, 1
  %v6785 = vsel %vm3068, %v6780, %v6784
  %v6786 = vshrl.u32 %v6714, 16
  %v6788 = vor.u32 %v6786, %v6784
  %v6790 = vshll.u32 %v6715, 16
  %v6792 = vrot.slane %v6790, 1
  %v6793 = vsel %vm3068, %v6788, %v6792
  %v6794 = vshrl.u32 %v6715, 16
  %v6796 = vor.u32 %v6794, %v6792
  %v6798 = vshll.u32 %v6716, 16
  %v6800 = vrot.slane %v6798, 1
  %v6801 = vsel %vm3068, %v6796, %v6800
  %v6802 = vshrl.u32 %v6716, 16
  %v6804 = vor.u32 %v6802, %v6800
  %v6806 = vshll.u32 %v6717, 16
  %v6808 = vrot.slane %v6806, 1
  %v6809 = vsel %vm3068, %v6804, %v6808
  %v6810 = vshrl.u32 %v6717, 16
  %v6812 = vor.u32 %v6810, %v6808
  %v6814 = vshll.u32 %v6718, 16
  %v6816 = vrot.slane %v6814, 1
  %v6817 = vsel %vm3068, %v6812, %v6816
  %v6818 = vshrl.u32 %v6718, 16
  %v6820 = vor.u32 %v6818, %v6816
  %v6822 = vshll.u32 %v6719, 16
  %v6824 = vrot.slane %v6822, 1
  %v6825 = vsel %vm3068, %v6820, %v6824
  %v6826 = vshrl.u32 %v6719, 16
  %v6828 = vor.u32 %v6826, %v6824
  %v6830 = vshll.u32 %v6720, 16
  %v6832 = vrot.slane %v6830, 1
  %v6833 = vsel %vm3068, %v6828, %v6832
  %v6834 = vshrl.u32 %v6720, 16
  %v6836 = vor.u32 %v6834, %v6832
  %v6838 = vshll.u32 %v6721, 16
  %v6840 = vrot.slane %v6838, 1
  %v6841 = vsel %vm3068, %v6836, %v6840
  %v6842 = vshrl.u32 %v6721, 16
  %v6844 = vor.u32 %v6842, %v6840
  %v6846 = vshll.u32 %v6722, 16
  %v6848 = vrot.slane %v6846, 1
  %v6849 = vsel %vm3068, %v6844, %v6848
  %v6850 = vshrl.u32 %v6722, 16
  %v6852 = vor.u32 %v6850, %v6848
  %v6854 = vshll.u32 %v6723, 16
  %v6856 = vrot.slane %v6854, 1
  %v6857 = vsel %vm3068, %v6852, %v6856
  %v6858 = vshrl.u32 %v6723, 16
  %v6860 = vor.u32 %v6858, %v6856
  %v6862 = vshll.u32 %v6724, 16
  %v6864 = vrot.slane %v6862, 1
  %v6865 = vsel %vm3068, %v6860, %v6864
  %v6866 = vshrl.u32 %v6724, 16
  %v6868 = vor.u32 %v6866, %v6864
  %v6870 = vshll.u32 %v6725, 16
  %v6872 = vrot.slane %v6870, 1
  %v6873 = vsel %vm3068, %v6868, %v6872
  %v6874 = vshrl.u32 %v6725, 16
  %v6876 = vor.u32 %v6874, %v6872
  %v6878 = vshll.u32 %v6726, 16
  %v6880 = vrot.slane %v6878, 1
  %v6881 = vsel %vm3068, %v6876, %v6880
  %v6882 = vshrl.u32 %v6726, 16
  %v6884 = vor.u32 %v6882, %v6880
  %v6886 = vshll.u32 %v6727, 16
  %v6888 = vrot.slane %v6886, 1
  %v6889 = vsel %vm3068, %v6884, %v6888
  %v6890 = vshrl.u32 %v6727, 16
  %v6892 = vor.u32 %v6890, %v6888
  %v6894 = vshll.u32 %v6728, 16
  %v6896 = vrot.slane %v6894, 1
  %v6897 = vsel %vm3068, %v6892, %v6896
  %v6898 = vshrl.u32 %v6728, 16
  %v6900 = vor.u32 %v6898, %v6896
  %v6902 = vshll.u32 %v6729, 16
  %v6904 = vrot.slane %v6902, 1
  %v6905 = vsel %vm3068, %v6900, %v6904
  %v6906 = vshrl.u32 %v6729, 16
  %v6908 = vor.u32 %v6906, %v6904
  %v6910 = vshll.u32 %v6730, 16
  %v6912 = vrot.slane %v6910, 1
  %v6913 = vsel %vm3068, %v6908, %v6912
  %v6914 = vshrl.u32 %v6730, 16
  %v6916 = vor.u32 %v6914, %v6912
  %v6918 = vshll.u32 %v6731, 16
  %v6920 = vrot.slane %v6918, 1
  %v6921 = vsel %vm3068, %v6916, %v6920
  %v6922 = vshrl.u32 %v6731, 16
  %v6924 = vor.u32 %v6922, %v6920
  %6925 = vrot.lane.b32.xlu0 %v6745, 64
  %v6926 = vpop.permute.xlu0 %6925
  %6927 = vrot.lane.b32.xlu0 %v6753, 64
  %v6928 = vpop.permute.xlu0 %6927
  %6929 = vrot.lane.b32.xlu0 %v6761, 64
  %v6930 = vpop.permute.xlu0 %6929
  %6931 = vrot.lane.b32.xlu0 %v6769, 64
  %v6932 = vpop.permute.xlu0 %6931
  %6933 = vrot.lane.b32.xlu0 %v6777, 64
  %v6934 = vpop.permute.xlu0 %6933
  %6935 = vrot.lane.b32.xlu0 %v6785, 64
  %v6936 = vpop.permute.xlu0 %6935
  %6937 = vrot.lane.b32.xlu0 %v6793, 64
  %v6938 = vpop.permute.xlu0 %6937
  %6939 = vrot.lane.b32.xlu0 %v6801, 64
  %v6940 = vpop.permute.xlu0 %6939
  %6941 = vrot.lane.b32.xlu0 %v6809, 64
  %v6942 = vpop.permute.xlu0 %6941
  %6943 = vrot.lane.b32.xlu0 %v6817, 64
  %v6944 = vpop.permute.xlu0 %6943
  %6945 = vrot.lane.b32.xlu0 %v6825, 64
  %v6946 = vpop.permute.xlu0 %6945
  %6947 = vrot.lane.b32.xlu0 %v6833, 64
  %v6948 = vpop.permute.xlu0 %6947
  %6949 = vrot.lane.b32.xlu0 %v6841, 64
  %v6950 = vpop.permute.xlu0 %6949
  %6951 = vrot.lane.b32.xlu0 %v6849, 64
  %v6952 = vpop.permute.xlu0 %6951
  %6953 = vrot.lane.b32.xlu0 %v6857, 64
  %v6954 = vpop.permute.xlu0 %6953
  %6955 = vrot.lane.b32.xlu0 %v6865, 64
  %v6956 = vpop.permute.xlu0 %6955
  %6957 = vrot.lane.b32.xlu0 %v6873, 64
  %v6958 = vpop.permute.xlu0 %6957
  %6959 = vrot.lane.b32.xlu0 %v6881, 64
  %v6960 = vpop.permute.xlu0 %6959
  %6961 = vrot.lane.b32.xlu0 %v6889, 64
  %v6962 = vpop.permute.xlu0 %6961
  %6963 = vrot.lane.b32.xlu0 %v6897, 64
  %v6964 = vpop.permute.xlu0 %6963
  %6965 = vrot.lane.b32.xlu0 %v6905, 64
  %v6966 = vpop.permute.xlu0 %6965
  %6967 = vrot.lane.b32.xlu0 %v6913, 64
  %v6968 = vpop.permute.xlu0 %6967
  %6969 = vrot.lane.b32.xlu0 %v6921, 64
  %v6970 = vpop.permute.xlu0 %6969
  %6971 = vrot.lane.b32.xlu0 %v6924, 64
  %v6972 = vpop.permute.xlu0 %6971
  %v6997 = vrot.slane %v6708, 1
  %v6998 = vrot.slane %v6709, 1
  %v6999 = vsel %vm3376, %v6997, %v6998
  %v7000 = vrot.slane %v6710, 1
  %v7001 = vsel %vm3376, %v6998, %v7000
  %v7002 = vrot.slane %v6711, 1
  %v7003 = vsel %vm3376, %v7000, %v7002
  %v7004 = vrot.slane %v6712, 1
  %v7005 = vsel %vm3376, %v7002, %v7004
  %v7006 = vrot.slane %v6713, 1
  %v7007 = vsel %vm3376, %v7004, %v7006
  %v7008 = vrot.slane %v6714, 1
  %v7009 = vsel %vm3376, %v7006, %v7008
  %v7010 = vrot.slane %v6715, 1
  %v7011 = vsel %vm3376, %v7008, %v7010
  %v7012 = vrot.slane %v6716, 1
  %v7013 = vsel %vm3376, %v7010, %v7012
  %v7014 = vrot.slane %v6717, 1
  %v7015 = vsel %vm3376, %v7012, %v7014
  %v7016 = vrot.slane %v6718, 1
  %v7017 = vsel %vm3376, %v7014, %v7016
  %v7018 = vrot.slane %v6719, 1
  %v7019 = vsel %vm3376, %v7016, %v7018
  %v7020 = vrot.slane %v6720, 1
  %v7021 = vsel %vm3376, %v7018, %v7020
  %v7022 = vrot.slane %v6721, 1
  %v7023 = vsel %vm3376, %v7020, %v7022
  %v7024 = vrot.slane %v6722, 1
  %v7025 = vsel %vm3376, %v7022, %v7024
  %v7026 = vrot.slane %v6723, 1
  %v7027 = vsel %vm3376, %v7024, %v7026
  %v7028 = vrot.slane %v6724, 1
  %v7029 = vsel %vm3376, %v7026, %v7028
  %v7030 = vrot.slane %v6725, 1
  %v7031 = vsel %vm3376, %v7028, %v7030
  %v7032 = vrot.slane %v6726, 1
  %v7033 = vsel %vm3376, %v7030, %v7032
  %v7034 = vrot.slane %v6727, 1
  %v7035 = vsel %vm3376, %v7032, %v7034
  %v7036 = vrot.slane %v6728, 1
  %v7037 = vsel %vm3376, %v7034, %v7036
  %v7038 = vrot.slane %v6729, 1
  %v7039 = vsel %vm3376, %v7036, %v7038
  %v7040 = vrot.slane %v6730, 1
  %v7041 = vsel %vm3376, %v7038, %v7040
  %v7042 = vrot.slane %v6731, 1
  %v7043 = vsel %vm3376, %v7040, %v7042
  %7045 = vrot.lane.b32.xlu0 %v6709, 64
  %v7046 = vpop.permute.xlu0 %7045
  %7047 = vrot.lane.b32.xlu0 %v6710, 64
  %v7048 = vpop.permute.xlu0 %7047
  %7049 = vrot.lane.b32.xlu0 %v6711, 64
  %v7050 = vpop.permute.xlu0 %7049
  %7051 = vrot.lane.b32.xlu0 %v6712, 64
  %v7052 = vpop.permute.xlu0 %7051
  %7053 = vrot.lane.b32.xlu0 %v6713, 64
  %v7054 = vpop.permute.xlu0 %7053
  %7055 = vrot.lane.b32.xlu0 %v6714, 64
  %v7056 = vpop.permute.xlu0 %7055
  %7057 = vrot.lane.b32.xlu0 %v6715, 64
  %v7058 = vpop.permute.xlu0 %7057
  %7059 = vrot.lane.b32.xlu0 %v6716, 64
  %v7060 = vpop.permute.xlu0 %7059
  %7061 = vrot.lane.b32.xlu0 %v6717, 64
  %v7062 = vpop.permute.xlu0 %7061
  %7063 = vrot.lane.b32.xlu0 %v6718, 64
  %v7064 = vpop.permute.xlu0 %7063
  %7065 = vrot.lane.b32.xlu0 %v6719, 64
  %v7066 = vpop.permute.xlu0 %7065
  %7067 = vrot.lane.b32.xlu0 %v6720, 64
  %v7068 = vpop.permute.xlu0 %7067
  %7069 = vrot.lane.b32.xlu0 %v6721, 64
  %v7070 = vpop.permute.xlu0 %7069
  %7071 = vrot.lane.b32.xlu0 %v6722, 64
  %v7072 = vpop.permute.xlu0 %7071
  %7073 = vrot.lane.b32.xlu0 %v6723, 64
  %v7074 = vpop.permute.xlu0 %7073
  %7075 = vrot.lane.b32.xlu0 %v6724, 64
  %v7076 = vpop.permute.xlu0 %7075
  %7077 = vrot.lane.b32.xlu0 %v6725, 64
  %v7078 = vpop.permute.xlu0 %7077
  %7079 = vrot.lane.b32.xlu0 %v6726, 64
  %v7080 = vpop.permute.xlu0 %7079
  %7081 = vrot.lane.b32.xlu0 %v6727, 64
  %v7082 = vpop.permute.xlu0 %7081
  %7083 = vrot.lane.b32.xlu0 %v6728, 64
  %v7084 = vpop.permute.xlu0 %7083
  %7085 = vrot.lane.b32.xlu0 %v6729, 64
  %v7086 = vpop.permute.xlu0 %7085
  %7087 = vrot.lane.b32.xlu0 %v6730, 64
  %v7088 = vpop.permute.xlu0 %7087
  %7089 = vrot.lane.b32.xlu0 %v6731, 64
  %v7090 = vpop.permute.xlu0 %7089
  %7091 = vrot.lane.b32.xlu0 %v6732, 64
  %v7092 = vpop.permute.xlu0 %7091
  %v7094 = vshll.u32 %v6732, 16
  %v7096 = vrot.slane %v7094, 1
  %v7097 = vsel %vm3068, %v6924, %v7096
  %v7098 = vshrl.u32 %v6732, 16
  %v7100 = vor.u32 %v7098, %v7096
  %v7101 = vrot.slane %v6732, 1
  %v7102 = vsel %vm3376, %v7042, %v7101
  %7103 = vrot.lane.b32.xlu0 %v7001, 64
  %v7104 = vpop.permute.xlu0 %7103
  %7105 = vrot.lane.b32.xlu0 %v7003, 64
  %v7106 = vpop.permute.xlu0 %7105
  %7107 = vrot.lane.b32.xlu0 %v7005, 64
  %v7108 = vpop.permute.xlu0 %7107
  %7109 = vrot.lane.b32.xlu0 %v7007, 64
  %v7110 = vpop.permute.xlu0 %7109
  %7111 = vrot.lane.b32.xlu0 %v7009, 64
  %v7112 = vpop.permute.xlu0 %7111
  %7113 = vrot.lane.b32.xlu0 %v7011, 64
  %v7114 = vpop.permute.xlu0 %7113
  %7115 = vrot.lane.b32.xlu0 %v7013, 64
  %v7116 = vpop.permute.xlu0 %7115
  %7117 = vrot.lane.b32.xlu0 %v7015, 64
  %v7118 = vpop.permute.xlu0 %7117
  %7119 = vrot.lane.b32.xlu0 %v7017, 64
  %v7120 = vpop.permute.xlu0 %7119
  %7121 = vrot.lane.b32.xlu0 %v7019, 64
  %v7122 = vpop.permute.xlu0 %7121
  %7123 = vrot.lane.b32.xlu0 %v7021, 64
  %v7124 = vpop.permute.xlu0 %7123
  %7125 = vrot.lane.b32.xlu0 %v7023, 64
  %v7126 = vpop.permute.xlu0 %7125
  %7127 = vrot.lane.b32.xlu0 %v7025, 64
  %v7128 = vpop.permute.xlu0 %7127
  %7129 = vrot.lane.b32.xlu0 %v7027, 64
  %v7130 = vpop.permute.xlu0 %7129
  %7131 = vrot.lane.b32.xlu0 %v7029, 64
  %v7132 = vpop.permute.xlu0 %7131
  %7133 = vrot.lane.b32.xlu0 %v7031, 64
  %v7134 = vpop.permute.xlu0 %7133
  %7135 = vrot.lane.b32.xlu0 %v7033, 64
  %v7136 = vpop.permute.xlu0 %7135
  %7137 = vrot.lane.b32.xlu0 %v7035, 64
  %v7138 = vpop.permute.xlu0 %7137
  %7139 = vrot.lane.b32.xlu0 %v7037, 64
  %v7140 = vpop.permute.xlu0 %7139
  %7141 = vrot.lane.b32.xlu0 %v7039, 64
  %v7142 = vpop.permute.xlu0 %7141
  %7143 = vrot.lane.b32.xlu0 %v7041, 64
  %v7144 = vpop.permute.xlu0 %7143
  %7145 = vrot.lane.b32.xlu0 %v7043, 64
  %v7146 = vpop.permute.xlu0 %7145
  %7147 = vrot.lane.b32.xlu0 %v7102, 64
  %v7148 = vpop.permute.xlu0 %7147
  %7149 = vrot.lane.b32.xlu0 %v7101, 64
  %v7150 = vpop.permute.xlu0 %7149
  %v7152 = vshll.u32 %v6733, 16
  %v7154 = vrot.slane %v7152, 1
  %v7155 = vsel %vm3068, %v7100, %v7154
  %v7156 = vshrl.u32 %v6733, 16
  %v7158 = vor.u32 %v7156, %v7154
  %7159 = vrot.lane.b32.xlu0 %v7097, 64
  %v7160 = vpop.permute.xlu0 %7159
  %7161 = vrot.lane.b32.xlu0 %v7155, 64
  %v7162 = vpop.permute.xlu0 %7161
  %7163 = vrot.lane.b32.xlu0 %v7158, 64
  %v7164 = vpop.permute.xlu0 %7163
  %v7166 = vrot.slane %v6733, 1
  %v7167 = vsel %vm3376, %v7101, %v7166
  %v7169 = vsel %vm3961, %v6708, %v6926
  %v7172 = vsel %vm3961, %v6709, %v6928
  %v7175 = vsel %vm3961, %v6710, %v6930
  %v7178 = vsel %vm3961, %v6711, %v6932
  %v7181 = vsel %vm3961, %v6712, %v6934
  %v7184 = vsel %vm3961, %v6713, %v6936
  %v7187 = vsel %vm3961, %v6714, %v6938
  %v7190 = vsel %vm3961, %v6715, %v6940
  %v7193 = vsel %vm3961, %v6716, %v6942
  %v7196 = vsel %vm3961, %v6717, %v6944
  %v7199 = vsel %vm3961, %v6718, %v6946
  %v7202 = vsel %vm3961, %v6719, %v6948
  %v7205 = vsel %vm3961, %v6720, %v6950
  %v7208 = vsel %vm3961, %v6721, %v6952
  %v7211 = vsel %vm3961, %v6722, %v6954
  %v7214 = vsel %vm3961, %v6723, %v6956
  %v7217 = vsel %vm3961, %v6724, %v6958
  %v7220 = vsel %vm3961, %v6725, %v6960
  %v7223 = vsel %vm3961, %v6726, %v6962
  %v7226 = vsel %vm3961, %v6727, %v6964
  %v7229 = vsel %vm3961, %v6728, %v6966
  %v7232 = vsel %vm3961, %v6729, %v6968
  %v7235 = vsel %vm3961, %v6730, %v6970
  %v7238 = vsel %vm3961, %v6731, %v6972
  %v7242 = vsel %vm3961, %v6999, %v7046
  %v7246 = vsel %vm3961, %v7001, %v7048
  %v7250 = vsel %vm3961, %v7003, %v7050
  %v7254 = vsel %vm3961, %v7005, %v7052
  %v7258 = vsel %vm3961, %v7007, %v7054
  %v7262 = vsel %vm3961, %v7009, %v7056
  %v7266 = vsel %vm3961, %v7011, %v7058
  %v7270 = vsel %vm3961, %v7013, %v7060
  %v7274 = vsel %vm3961, %v7015, %v7062
  %v7278 = vsel %vm3961, %v7017, %v7064
  %v7282 = vsel %vm3961, %v7019, %v7066
  %v7286 = vsel %vm3961, %v7021, %v7068
  %v7290 = vsel %vm3961, %v7023, %v7070
  %v7294 = vsel %vm3961, %v7025, %v7072
  %v7298 = vsel %vm3961, %v7027, %v7074
  %v7302 = vsel %vm3961, %v7029, %v7076
  %v7306 = vsel %vm3961, %v7031, %v7078
  %v7310 = vsel %vm3961, %v7033, %v7080
  %v7314 = vsel %vm3961, %v7035, %v7082
  %v7318 = vsel %vm3961, %v7037, %v7084
  %v7322 = vsel %vm3961, %v7039, %v7086
  %v7326 = vsel %vm3961, %v7041, %v7088
  %v7330 = vsel %vm3961, %v7043, %v7090
  %v7334 = vsel %vm3961, %v7042, %v7092
  %v7338 = vsel %vm3961, %v6753, %v7104
  %v7342 = vsel %vm3961, %v6761, %v7106
  %v7346 = vsel %vm3961, %v6769, %v7108
  %v7350 = vsel %vm3961, %v6777, %v7110
  %v7354 = vsel %vm3961, %v6785, %v7112
  %v7358 = vsel %vm3961, %v6793, %v7114
  %v7362 = vsel %vm3961, %v6801, %v7116
  %v7366 = vsel %vm3961, %v6809, %v7118
  %v7370 = vsel %vm3961, %v6817, %v7120
  %v7374 = vsel %vm3961, %v6825, %v7122
  %v7378 = vsel %vm3961, %v6833, %v7124
  %v7382 = vsel %vm3961, %v6841, %v7126
  %v7386 = vsel %vm3961, %v6849, %v7128
  %v7390 = vsel %vm3961, %v6857, %v7130
  %v7394 = vsel %vm3961, %v6865, %v7132
  %v7398 = vsel %vm3961, %v6873, %v7134
  %v7402 = vsel %vm3961, %v6881, %v7136
  %v7406 = vsel %vm3961, %v6889, %v7138
  %v7410 = vsel %vm3961, %v6897, %v7140
  %v7414 = vsel %vm3961, %v6905, %v7142
  %v7418 = vsel %vm3961, %v6913, %v7144
  %v7422 = vsel %vm3961, %v6921, %v7146
  %v7426 = vsel %vm3961, %v7097, %v7148
  %v7430 = vsel %vm3961, %v7100, %v7150
  %v7433 = vsel %vm3961, %v6731, %v7160
  %v7436 = vsel %vm3961, %v6732, %v7162
  %v7439 = vsel %vm3961, %v6733, %v7164
  %v7441 = vld [vmem:[%s15] sm:$0xf]
  %v7442 = vld [vmem:[%s15 + $0x4] sm:$0xf]
  %v7443 = vld [vmem:[%s15 + $0x8] sm:$0xf]
  %v7444 = vld [vmem:[%s15 + $0xc] sm:$0xf]
  %v7445 = vld [vmem:[%s15 + $0x10] sm:$0xf]
  %v7446 = vld [vmem:[%s15 + $0x14] sm:$0xf]
  %v7447 = vld [vmem:[%s15 + $0x18] sm:$0xf]
  %v7448 = vld [vmem:[%s15 + $0x1c] sm:$0xf]
  %v7449 = vld [vmem:[%s15 + $0x20] sm:$0xf]
  %v7450 = vld [vmem:[%s15 + $0x24] sm:$0xf]
  %v7451 = vld [vmem:[%s15 + $0x28] sm:$0xf]
  %v7452 = vld [vmem:[%s15 + $0x2c] sm:$0xf]
  %v7453 = vld [vmem:[%s15 + $0x30] sm:$0xf]
  %v7454 = vld [vmem:[%s15 + $0x34] sm:$0xf]
  %v7455 = vld [vmem:[%s15 + $0x38] sm:$0xf]
  %v7456 = vld [vmem:[%s15 + $0x3c] sm:$0xf]
  %v7457 = vld [vmem:[%s15 + $0x40] sm:$0xf]
  %v7458 = vld [vmem:[%s15 + $0x44] sm:$0xf]
  %v7459 = vld [vmem:[%s15 + $0x48] sm:$0xf]
  %v7460 = vld [vmem:[%s15 + $0x4c] sm:$0xf]
  %v7461 = vld [vmem:[%s15 + $0x50] sm:$0xf]
  %v7462 = vld [vmem:[%s15 + $0x54] sm:$0xf]
  %v7463 = vld [vmem:[%s15 + $0x58] sm:$0xf]
  %v7464 = vld [vmem:[%s15 + $0x5c] sm:$0xf]
  %v7465 = vld [vmem:[%s15 + $0x60] sm:$0xf]
  %v7466 = vld [vmem:[%s15 + $0x64] sm:$0xf]
  %v7467 = vld [vmem:[%s15 + $0x68] sm:$0xf]
  %v7468 = vld [vmem:[%s15 + $0x6c] sm:$0xf]
  %v7469 = vld [vmem:[%s15 + $0x70] sm:$0xf]
  %v7470 = vld [vmem:[%s15 + $0x74] sm:$0xf]
  %v7471 = vld [vmem:[%s15 + $0x78] sm:$0xf]
  %v7472 = vld [vmem:[%s15 + $0x7c] sm:$0xf]
  %v7473 = vld [vmem:[%s15 + $0x80] sm:$0xf]
  %v7474 = vld [vmem:[%s15 + $0x84] sm:$0xf]
  %v7475 = vld [vmem:[%s15 + $0x88] sm:$0xf]
  %v7476 = vld [vmem:[%s15 + $0x8c] sm:$0xf]
  %v7477 = vld [vmem:[%s15 + $0x90] sm:$0xf]
  %v7478 = vld [vmem:[%s15 + $0x94] sm:$0xf]
  %v7479 = vld [vmem:[%s15 + $0x98] sm:$0xf]
  %v7480 = vld [vmem:[%s15 + $0x9c] sm:$0xf]
  %v7481 = vld [vmem:[%s15 + $0xa0] sm:$0xf]
  %v7482 = vld [vmem:[%s15 + $0xa4] sm:$0xf]
  %v7483 = vld [vmem:[%s15 + $0xa8] sm:$0xf]
  %v7484 = vld [vmem:[%s15 + $0xac] sm:$0xf]
  %v7485 = vld [vmem:[%s15 + $0xb0] sm:$0xf]
  %v7486 = vld [vmem:[%s15 + $0xb4] sm:$0xf]
  %v7487 = vld [vmem:[%s15 + $0xb8] sm:$0xf]
  %v7488 = vld [vmem:[%s15 + $0xbc] sm:$0xf]
  %v7489 = vld [vmem:[%s15 + $0xc0] sm:$0xf]
  %v7490 = vld [vmem:[%s15 + $0xc4] sm:$0xf]
  %v7491 = vld [vmem:[%s15 + $0xc8] sm:$0xf]
  %v7492 = vld [vmem:[%s15 + $0xcc] sm:$0xf]
  %v7493 = vld [vmem:[%s15 + $0xd0] sm:$0xf]
  %v7494 = vld [vmem:[%s15 + $0xd4] sm:$0xf]
  %v7495 = vld [vmem:[%s15 + $0xd8] sm:$0xf]
  %v7496 = vld [vmem:[%s15 + $0xdc] sm:$0xf]
  %v7497 = vld [vmem:[%s15 + $0xe0] sm:$0xf]
  %v7498 = vld [vmem:[%s15 + $0xe4] sm:$0xf]
  %v7499 = vld [vmem:[%s15 + $0xe8] sm:$0xf]
  %v7500 = vld [vmem:[%s15 + $0xec] sm:$0xf]
  %v7501 = vld [vmem:[%s15 + $0xf0] sm:$0xf]
  %v7502 = vld [vmem:[%s15 + $0xf4] sm:$0xf]
  %v7503 = vld [vmem:[%s15 + $0xf8] sm:$0xf]
  %v7504 = vld [vmem:[%s15 + $0xfc] sm:$0xf]
  %v7505 = vld [vmem:[%s15 + $0x100] sm:$0xf]
  %v7506 = vld [vmem:[%s15 + $0x104] sm:$0xf]
  %v7507 = vld [vmem:[%s15 + $0x108] sm:$0xf]
  %v7508 = vld [vmem:[%s15 + $0x10c] sm:$0xf]
  %v7509 = vld [vmem:[%s15 + $0x110] sm:$0xf]
  %v7510 = vld [vmem:[%s15 + $0x114] sm:$0xf]
  %v7511 = vld [vmem:[%s15 + $0x118] sm:$0xf]
  %v7512 = vld [vmem:[%s15 + $0x11c] sm:$0xf]
  %v7513 = vld [vmem:[%s17] sm:$0x1]
  %v7515 = vlaneseq
  %v7516 = vshrl.u32 %v7515, 7
  %v7517 = vsub.s32 0, %v7516
  %v7518 = vrot.slane %v7513, %v7517
  %v7592 = vunpack.c.l.b16 %v7441
  %v7593 = vunpack.c.l.b16 %v7442
  %v7594 = vunpack.c.l.b16 %v7443
  %v7595 = vunpack.c.l.b16 %v7444
  %v7596 = vunpack.c.l.b16 %v7445
  %v7597 = vunpack.c.l.b16 %v7446
  %v7598 = vunpack.c.l.b16 %v7447
  %v7599 = vunpack.c.l.b16 %v7448
  %v7600 = vunpack.c.l.b16 %v7449
  %v7601 = vunpack.c.l.b16 %v7450
  %v7602 = vunpack.c.l.b16 %v7451
  %v7603 = vunpack.c.l.b16 %v7452
  %v7604 = vunpack.c.l.b16 %v7453
  %v7605 = vunpack.c.l.b16 %v7454
  %v7606 = vunpack.c.l.b16 %v7455
  %v7607 = vunpack.c.l.b16 %v7456
  %v7608 = vunpack.c.l.b16 %v7457
  %v7609 = vunpack.c.l.b16 %v7458
  %v7610 = vunpack.c.l.b16 %v7459
  %v7611 = vunpack.c.l.b16 %v7460
  %v7612 = vunpack.c.l.b16 %v7461
  %v7613 = vunpack.c.l.b16 %v7462
  %v7614 = vunpack.c.l.b16 %v7463
  %v7615 = vunpack.c.l.b16 %v7464
  %v7616 = vunpack.c.l.b16 %v7465
  %v7617 = vunpack.c.l.b16 %v7466
  %v7618 = vunpack.c.l.b16 %v7467
  %v7619 = vunpack.c.l.b16 %v7468
  %v7620 = vunpack.c.l.b16 %v7469
  %v7621 = vunpack.c.l.b16 %v7470
  %v7622 = vunpack.c.l.b16 %v7471
  %v7623 = vunpack.c.l.b16 %v7472
  %v7624 = vunpack.c.l.b16 %v7473
  %v7625 = vunpack.c.l.b16 %v7474
  %v7626 = vunpack.c.l.b16 %v7475
  %v7627 = vunpack.c.l.b16 %v7476
  %v7628 = vunpack.c.l.b16 %v7477
  %v7629 = vunpack.c.l.b16 %v7478
  %v7630 = vunpack.c.l.b16 %v7479
  %v7631 = vunpack.c.l.b16 %v7480
  %v7632 = vunpack.c.l.b16 %v7481
  %v7633 = vunpack.c.l.b16 %v7482
  %v7634 = vunpack.c.l.b16 %v7483
  %v7635 = vunpack.c.l.b16 %v7484
  %v7636 = vunpack.c.l.b16 %v7485
  %v7637 = vunpack.c.l.b16 %v7486
  %v7638 = vunpack.c.l.b16 %v7487
  %v7639 = vunpack.c.l.b16 %v7488
  %v7640 = vunpack.c.l.b16 %v7489
  %v7641 = vunpack.c.l.b16 %v7490
  %v7642 = vunpack.c.l.b16 %v7491
  %v7643 = vunpack.c.l.b16 %v7492
  %v7644 = vunpack.c.l.b16 %v7493
  %v7645 = vunpack.c.l.b16 %v7494
  %v7646 = vunpack.c.l.b16 %v7495
  %v7647 = vunpack.c.l.b16 %v7496
  %v7648 = vunpack.c.l.b16 %v7497
  %v7649 = vunpack.c.l.b16 %v7498
  %v7650 = vunpack.c.l.b16 %v7499
  %v7651 = vunpack.c.l.b16 %v7500
  %v7652 = vunpack.c.l.b16 %v7501
  %v7653 = vunpack.c.l.b16 %v7502
  %v7654 = vunpack.c.l.b16 %v7503
  %v7655 = vunpack.c.l.b16 %v7504
  %v7656 = vunpack.c.l.b16 %v7505
  %v7657 = vunpack.c.l.b16 %v7506
  %v7658 = vunpack.c.l.b16 %v7507
  %v7659 = vunpack.c.l.b16 %v7508
  %v7660 = vunpack.c.l.b16 %v7509
  %v7661 = vunpack.c.l.b16 %v7510
  %v7662 = vunpack.c.l.b16 %v7511
  %v7663 = vunpack.c.l.b16 %v7512
  %v7664 = vpack.c.b16 %v7593, %v7592
  %v7665 = vpack.c.b16 %v7595, %v7594
  %v7666 = vpack.c.b16 %v7597, %v7596
  %v7667 = vpack.c.b16 %v7599, %v7598
  %v7668 = vpack.c.b16 %v7601, %v7600
  %v7669 = vpack.c.b16 %v7603, %v7602
  %v7670 = vpack.c.b16 %v7605, %v7604
  %v7671 = vpack.c.b16 %v7607, %v7606
  %v7672 = vpack.c.b16 %v7609, %v7608
  %v7673 = vpack.c.b16 %v7611, %v7610
  %v7674 = vpack.c.b16 %v7613, %v7612
  %v7675 = vpack.c.b16 %v7615, %v7614
  %v7676 = vpack.c.b16 %v7617, %v7616
  %v7677 = vpack.c.b16 %v7619, %v7618
  %v7678 = vpack.c.b16 %v7621, %v7620
  %v7679 = vpack.c.b16 %v7623, %v7622
  %v7680 = vpack.c.b16 %v7625, %v7624
  %v7681 = vpack.c.b16 %v7627, %v7626
  %v7682 = vpack.c.b16 %v7629, %v7628
  %v7683 = vpack.c.b16 %v7631, %v7630
  %v7684 = vpack.c.b16 %v7633, %v7632
  %v7685 = vpack.c.b16 %v7635, %v7634
  %v7686 = vpack.c.b16 %v7637, %v7636
  %v7687 = vpack.c.b16 %v7639, %v7638
  %v7688 = vpack.c.b16 %v7641, %v7640
  %v7689 = vpack.c.b16 %v7643, %v7642
  %v7690 = vpack.c.b16 %v7645, %v7644
  %v7691 = vpack.c.b16 %v7647, %v7646
  %v7692 = vpack.c.b16 %v7649, %v7648
  %v7693 = vpack.c.b16 %v7651, %v7650
  %v7694 = vpack.c.b16 %v7653, %v7652
  %v7695 = vpack.c.b16 %v7655, %v7654
  %v7696 = vpack.c.b16 %v7657, %v7656
  %v7697 = vpack.c.b16 %v7659, %v7658
  %v7698 = vpack.c.b16 %v7661, %v7660
  %v7699 = vpack.c.b16 %v7663, %v7662
  %v7736 = vsel %vm3961, %v7003, 0
  %v7738 = vsel %vm3961, %v7005, 0
  %v7740 = vsel %vm3961, %v7007, 0
  %v7742 = vsel %vm3961, %v7009, 0
  %v7744 = vsel %vm3961, %v7011, 0
  %v7746 = vsel %vm3961, %v7013, 0
  %v7748 = vsel %vm3961, %v7015, 0
  %v7750 = vsel %vm3961, %v7017, 0
  %v7752 = vsel %vm3961, %v7019, 0
  %v7754 = vsel %vm3961, %v7021, 0
  %v7756 = vsel %vm3961, %v7023, 0
  %v7758 = vsel %vm3961, %v7025, 0
  %v7760 = vsel %vm3961, %v7027, 0
  %v7762 = vsel %vm3961, %v7029, 0
  %v7764 = vsel %vm3961, %v7031, 0
  %v7766 = vsel %vm3961, %v7033, 0
  %v7768 = vsel %vm3961, %v7035, 0
  %v7770 = vsel %vm3961, %v7037, 0
  %v7772 = vsel %vm3961, %v7039, 0
  %v7774 = vsel %vm3961, %v7041, 0
  %v7776 = vsel %vm3961, %v7043, 0
  %v7779 = vsel %vm3961, %v7102, 0
  %v7782 = vsel %vm3961, %v7167, 0
  %v7785 = vsel %vm3961, %v7166, 0
  %7787 = vmatprep.subr.bf16.mxu0 0
  %7788 = vmatpush1.bf16.msra.mxu0 %v7671
  %7789 = vmatprep.subr.bf16.mxu0 0
  %7790 = vmatpush1.bf16.msra.mxu0 %v7670
  %7791 = vmatprep.subr.bf16.mxu0 0
  %7792 = vmatpush1.bf16.msra.mxu0 %v7669
  %7793 = vmatprep.subr.bf16.mxu0 0
  %7794 = vmatpush1.bf16.msra.mxu0 %v7668
  %7795 = vmatprep.subr.bf16.mxu0 0
  %7796 = vmatpush1.bf16.msra.mxu0 %v7667
  %7797 = vmatprep.subr.bf16.mxu0 0
  %7798 = vmatpush1.bf16.msra.mxu0 %v7666
  %7799 = vmatprep.subr.bf16.mxu0 0
  %7800 = vmatpush1.bf16.msra.mxu0 %v7665
  %7801 = vmatprep.subr.bf16.mxu0 0
  %7802 = vmatpush1.bf16.msra.mxu0 %v7664
  %7803 = vmatprep.subr.bf16.mxu0 0
  %7804 = vmatpush2.bf16.msra.mxu0 %v7679
  %7805 = vmatprep.subr.bf16.mxu0 0
  %7806 = vmatpush2.bf16.msra.mxu0 %v7678
  %7807 = vmatprep.subr.bf16.mxu0 0
  %7808 = vmatpush2.bf16.msra.mxu0 %v7677
  %7809 = vmatprep.subr.bf16.mxu0 0
  %7810 = vmatpush2.bf16.msra.mxu0 %v7676
  %7811 = vmatprep.subr.bf16.mxu0 0
  %7812 = vmatpush2.bf16.msra.mxu0 %v7675
  %7813 = vmatprep.subr.bf16.mxu0 0
  %7814 = vmatpush2.bf16.msra.mxu0 %v7674
  %7815 = vmatprep.subr.bf16.mxu0 0
  %7816 = vmatpush2.bf16.msra.mxu0 %v7673
  %7817 = vmatprep.subr.bf16.mxu0 0
  %7818 = vmatpush2.bf16.msra.mxu0 %v7672
  %7819 = vmatprep.mubr.bf16.mxu0 %v7242
  %7820 = vmatmul.mubr.bf16.gmra.mxu0 %v7169
  %v7821 = vpop.f32.mrf.mxu0
  %v7822 = vadd.f32 %v7518, %v7821
  %v7823 = vpop.f32.mrf.mxu0
  %v7824 = vpop.f32.mrf.mxu0
  %v7825 = vadd.f32 %v7518, %v7824
  %v7826 = vpop.f32.mrf.mxu0
  %7827 = vmatprep.mubr.bf16.mxu0 %v7246
  %7828 = vmatmul.mubr.bf16.gmra.mxu0 %v7172
  %v7829 = vpop.f32.mrf.mxu0
  %v7830 = vadd.f32 %v7518, %v7829
  %v7831 = vpop.f32.mrf.mxu0
  %v7832 = vpop.f32.mrf.mxu0
  %v7833 = vadd.f32 %v7518, %v7832
  %v7834 = vpop.f32.mrf.mxu0
  %7835 = vmatprep.mubr.bf16.mxu0 %v7250
  %7836 = vmatmul.mubr.bf16.gmra.mxu0 %v7175
  %v7837 = vpop.f32.mrf.mxu0
  %v7838 = vadd.f32 %v7518, %v7837
  %v7839 = vpop.f32.mrf.mxu0
  %v7840 = vpop.f32.mrf.mxu0
  %v7841 = vadd.f32 %v7518, %v7840
  %v7842 = vpop.f32.mrf.mxu0
  %7843 = vmatprep.mubr.bf16.mxu0 %v7254
  %7844 = vmatmul.mubr.bf16.gmra.mxu0 %v7178
  %v7845 = vpop.f32.mrf.mxu0
  %v7846 = vadd.f32 %v7518, %v7845
  %v7847 = vpop.f32.mrf.mxu0
  %v7848 = vpop.f32.mrf.mxu0
  %v7849 = vadd.f32 %v7518, %v7848
  %v7850 = vpop.f32.mrf.mxu0
  %7851 = vmatprep.mubr.bf16.mxu0 %v7258
  %7852 = vmatmul.mubr.bf16.gmra.mxu0 %v7181
  %v7853 = vpop.f32.mrf.mxu0
  %v7854 = vadd.f32 %v7518, %v7853
  %v7855 = vpop.f32.mrf.mxu0
  %v7856 = vpop.f32.mrf.mxu0
  %v7857 = vadd.f32 %v7518, %v7856
  %v7858 = vpop.f32.mrf.mxu0
  %7859 = vmatprep.mubr.bf16.mxu0 %v7262
  %7860 = vmatmul.mubr.bf16.gmra.mxu0 %v7184
  %v7861 = vpop.f32.mrf.mxu0
  %v7862 = vadd.f32 %v7518, %v7861
  %v7863 = vpop.f32.mrf.mxu0
  %v7864 = vpop.f32.mrf.mxu0
  %v7865 = vadd.f32 %v7518, %v7864
  %v7866 = vpop.f32.mrf.mxu0
  %7867 = vmatprep.mubr.bf16.mxu0 %v7266
  %7868 = vmatmul.mubr.bf16.gmra.mxu0 %v7187
  %v7869 = vpop.f32.mrf.mxu0
  %v7870 = vadd.f32 %v7518, %v7869
  %v7871 = vpop.f32.mrf.mxu0
  %v7872 = vpop.f32.mrf.mxu0
  %v7873 = vadd.f32 %v7518, %v7872
  %v7874 = vpop.f32.mrf.mxu0
  %7875 = vmatprep.mubr.bf16.mxu0 %v7270
  %7876 = vmatmul.mubr.bf16.gmra.mxu0 %v7190
  %v7877 = vpop.f32.mrf.mxu0
  %v7878 = vadd.f32 %v7518, %v7877
  %v7879 = vpop.f32.mrf.mxu0
  %v7880 = vpop.f32.mrf.mxu0
  %v7881 = vadd.f32 %v7518, %v7880
  %v7882 = vpop.f32.mrf.mxu0
  %7883 = vmatprep.mubr.bf16.mxu0 %v7274
  %7884 = vmatmul.mubr.bf16.gmra.mxu0 %v7193
  %v7885 = vpop.f32.mrf.mxu0
  %v7886 = vadd.f32 %v7518, %v7885
  %v7887 = vpop.f32.mrf.mxu0
  %v7888 = vpop.f32.mrf.mxu0
  %v7889 = vadd.f32 %v7518, %v7888
  %v7890 = vpop.f32.mrf.mxu0
  %7891 = vmatprep.mubr.bf16.mxu0 %v7278
  %7892 = vmatmul.mubr.bf16.gmra.mxu0 %v7196
  %v7893 = vpop.f32.mrf.mxu0
  %v7894 = vadd.f32 %v7518, %v7893
  %v7895 = vpop.f32.mrf.mxu0
  %v7896 = vpop.f32.mrf.mxu0
  %v7897 = vadd.f32 %v7518, %v7896
  %v7898 = vpop.f32.mrf.mxu0
  %7899 = vmatprep.mubr.bf16.mxu0 %v7282
  %7900 = vmatmul.mubr.bf16.gmra.mxu0 %v7199
  %v7901 = vpop.f32.mrf.mxu0
  %v7902 = vadd.f32 %v7518, %v7901
  %v7903 = vpop.f32.mrf.mxu0
  %v7904 = vpop.f32.mrf.mxu0
  %v7905 = vadd.f32 %v7518, %v7904
  %v7906 = vpop.f32.mrf.mxu0
  %7907 = vmatprep.mubr.bf16.mxu0 %v7286
  %7908 = vmatmul.mubr.bf16.gmra.mxu0 %v7202
  %v7909 = vpop.f32.mrf.mxu0
  %v7910 = vadd.f32 %v7518, %v7909
  %v7911 = vpop.f32.mrf.mxu0
  %v7912 = vpop.f32.mrf.mxu0
  %v7913 = vadd.f32 %v7518, %v7912
  %v7914 = vpop.f32.mrf.mxu0
  %7915 = vmatprep.mubr.bf16.mxu0 %v7290
  %7916 = vmatmul.mubr.bf16.gmra.mxu0 %v7205
  %v7917 = vpop.f32.mrf.mxu0
  %v7918 = vadd.f32 %v7518, %v7917
  %v7919 = vpop.f32.mrf.mxu0
  %v7920 = vpop.f32.mrf.mxu0
  %v7921 = vadd.f32 %v7518, %v7920
  %v7922 = vpop.f32.mrf.mxu0
  %7923 = vmatprep.mubr.bf16.mxu0 %v7294
  %7924 = vmatmul.mubr.bf16.gmra.mxu0 %v7208
  %v7925 = vpop.f32.mrf.mxu0
  %v7926 = vadd.f32 %v7518, %v7925
  %v7927 = vpop.f32.mrf.mxu0
  %v7928 = vpop.f32.mrf.mxu0
  %v7929 = vadd.f32 %v7518, %v7928
  %v7930 = vpop.f32.mrf.mxu0
  %7931 = vmatprep.mubr.bf16.mxu0 %v7298
  %7932 = vmatmul.mubr.bf16.gmra.mxu0 %v7211
  %v7933 = vpop.f32.mrf.mxu0
  %v7934 = vadd.f32 %v7518, %v7933
  %v7935 = vpop.f32.mrf.mxu0
  %v7936 = vpop.f32.mrf.mxu0
  %v7937 = vadd.f32 %v7518, %v7936
  %v7938 = vpop.f32.mrf.mxu0
  %7939 = vmatprep.mubr.bf16.mxu0 %v7302
  %7940 = vmatmul.mubr.bf16.gmra.mxu0 %v7214
  %v7941 = vpop.f32.mrf.mxu0
  %v7942 = vadd.f32 %v7518, %v7941
  %v7943 = vpop.f32.mrf.mxu0
  %v7944 = vpop.f32.mrf.mxu0
  %v7945 = vadd.f32 %v7518, %v7944
  %v7946 = vpop.f32.mrf.mxu0
  %7947 = vmatprep.mubr.bf16.mxu0 %v7306
  %7948 = vmatmul.mubr.bf16.gmra.mxu0 %v7217
  %v7949 = vpop.f32.mrf.mxu0
  %v7950 = vadd.f32 %v7518, %v7949
  %v7951 = vpop.f32.mrf.mxu0
  %v7952 = vpop.f32.mrf.mxu0
  %v7953 = vadd.f32 %v7518, %v7952
  %v7954 = vpop.f32.mrf.mxu0
  %7955 = vmatprep.mubr.bf16.mxu0 %v7310
  %7956 = vmatmul.mubr.bf16.gmra.mxu0 %v7220
  %v7957 = vpop.f32.mrf.mxu0
  %v7958 = vadd.f32 %v7518, %v7957
  %v7959 = vpop.f32.mrf.mxu0
  %v7960 = vpop.f32.mrf.mxu0
  %v7961 = vadd.f32 %v7518, %v7960
  %v7962 = vpop.f32.mrf.mxu0
  %7963 = vmatprep.mubr.bf16.mxu0 %v7314
  %7964 = vmatmul.mubr.bf16.gmra.mxu0 %v7223
  %v7965 = vpop.f32.mrf.mxu0
  %v7966 = vadd.f32 %v7518, %v7965
  %v7967 = vpop.f32.mrf.mxu0
  %v7968 = vpop.f32.mrf.mxu0
  %v7969 = vadd.f32 %v7518, %v7968
  %v7970 = vpop.f32.mrf.mxu0
  %7971 = vmatprep.mubr.bf16.mxu0 %v7318
  %7972 = vmatmul.mubr.bf16.gmra.mxu0 %v7226
  %v7973 = vpop.f32.mrf.mxu0
  %v7974 = vadd.f32 %v7518, %v7973
  %v7975 = vpop.f32.mrf.mxu0
  %v7976 = vpop.f32.mrf.mxu0
  %v7977 = vadd.f32 %v7518, %v7976
  %v7978 = vpop.f32.mrf.mxu0
  %7979 = vmatprep.mubr.bf16.mxu0 %v7322
  %7980 = vmatmul.mubr.bf16.gmra.mxu0 %v7229
  %v7981 = vpop.f32.mrf.mxu0
  %v7982 = vadd.f32 %v7518, %v7981
  %v7983 = vpop.f32.mrf.mxu0
  %v7984 = vpop.f32.mrf.mxu0
  %v7985 = vadd.f32 %v7518, %v7984
  %v7986 = vpop.f32.mrf.mxu0
  %7987 = vmatprep.mubr.bf16.mxu0 %v7326
  %7988 = vmatmul.mubr.bf16.gmra.mxu0 %v7232
  %v7989 = vpop.f32.mrf.mxu0
  %v7990 = vadd.f32 %v7518, %v7989
  %v7991 = vpop.f32.mrf.mxu0
  %v7992 = vpop.f32.mrf.mxu0
  %v7993 = vadd.f32 %v7518, %v7992
  %v7994 = vpop.f32.mrf.mxu0
  %7995 = vmatprep.mubr.bf16.mxu0 %v7330
  %7996 = vmatmul.mubr.bf16.gmra.mxu0 %v7235
  %v7997 = vpop.f32.mrf.mxu0
  %v7998 = vadd.f32 %v7518, %v7997
  %v7999 = vpop.f32.mrf.mxu0
  %v8000 = vpop.f32.mrf.mxu0
  %v8001 = vadd.f32 %v7518, %v8000
  %v8002 = vpop.f32.mrf.mxu0
  %8003 = vmatprep.mubr.bf16.mxu0 %v7334
  %8004 = vmatmul.mubr.bf16.gmra.mxu0 %v7238
  %v8005 = vpop.f32.mrf.mxu0
  %v8006 = vadd.f32 %v7518, %v8005
  %v8007 = vpop.f32.mrf.mxu0
  %v8008 = vpop.f32.mrf.mxu0
  %v8009 = vpop.f32.mrf.mxu0
  %8010 = vdwg.mxu0
  %8011 = vmatprep.subr.bf16.mxu0 0
  %8012 = vmatpush1.bf16.msra.mxu0 %v7687
  %8013 = vmatprep.subr.bf16.mxu0 0
  %8014 = vmatpush1.bf16.msra.mxu0 %v7686
  %8015 = vmatprep.subr.bf16.mxu0 0
  %8016 = vmatpush1.bf16.msra.mxu0 %v7685
  %8017 = vmatprep.subr.bf16.mxu0 0
  %8018 = vmatpush1.bf16.msra.mxu0 %v7684
  %8019 = vmatprep.subr.bf16.mxu0 0
  %8020 = vmatpush1.bf16.msra.mxu0 %v7683
  %8021 = vmatprep.subr.bf16.mxu0 0
  %8022 = vmatpush1.bf16.msra.mxu0 %v7682
  %8023 = vmatprep.subr.bf16.mxu0 0
  %8024 = vmatpush1.bf16.msra.mxu0 %v7681
  %8025 = vmatprep.subr.bf16.mxu0 0
  %8026 = vmatpush1.bf16.msra.mxu0 %v7680
  %8027 = vmatprep.subr.bf16.mxu0 0
  %8028 = vmatpush2.bf16.msra.mxu0 %v7695
  %8029 = vmatprep.subr.bf16.mxu0 0
  %8030 = vmatpush2.bf16.msra.mxu0 %v7694
  %8031 = vmatprep.subr.bf16.mxu0 0
  %8032 = vmatpush2.bf16.msra.mxu0 %v7693
  %8033 = vmatprep.subr.bf16.mxu0 0
  %8034 = vmatpush2.bf16.msra.mxu0 %v7692
  %8035 = vmatprep.subr.bf16.mxu0 0
  %8036 = vmatpush2.bf16.msra.mxu0 %v7691
  %8037 = vmatprep.subr.bf16.mxu0 0
  %8038 = vmatpush2.bf16.msra.mxu0 %v7690
  %8039 = vmatprep.subr.bf16.mxu0 0
  %8040 = vmatpush2.bf16.msra.mxu0 %v7689
  %8041 = vmatprep.subr.bf16.mxu0 0
  %8042 = vmatpush2.bf16.msra.mxu0 %v7688
  %8043 = vmatprep.mubr.bf16.mxu0 %v7175
  %8044 = vmatmul.mubr.bf16.gmra.mxu0 %v7338
  %v8045 = vpop.f32.mrf.mxu0
  %v8046 = vadd.f32 %v7822, %v8045
  %v8047 = vpop.f32.mrf.mxu0
  %v8048 = vpop.f32.mrf.mxu0
  %v8049 = vadd.f32 %v7825, %v8048
  %v8050 = vpop.f32.mrf.mxu0
  %8051 = vmatprep.mubr.bf16.mxu0 %v7178
  %8052 = vmatmul.mubr.bf16.gmra.mxu0 %v7342
  %v8053 = vpop.f32.mrf.mxu0
  %v8054 = vadd.f32 %v7830, %v8053
  %v8055 = vpop.f32.mrf.mxu0
  %v8056 = vpop.f32.mrf.mxu0
  %v8057 = vadd.f32 %v7833, %v8056
  %v8058 = vpop.f32.mrf.mxu0
  %8059 = vmatprep.mubr.bf16.mxu0 %v7181
  %8060 = vmatmul.mubr.bf16.gmra.mxu0 %v7346
  %v8061 = vpop.f32.mrf.mxu0
  %v8062 = vadd.f32 %v7838, %v8061
  %v8063 = vpop.f32.mrf.mxu0
  %v8064 = vpop.f32.mrf.mxu0
  %v8065 = vadd.f32 %v7841, %v8064
  %v8066 = vpop.f32.mrf.mxu0
  %8067 = vmatprep.mubr.bf16.mxu0 %v7184
  %8068 = vmatmul.mubr.bf16.gmra.mxu0 %v7350
  %v8069 = vpop.f32.mrf.mxu0
  %v8070 = vadd.f32 %v7846, %v8069
  %v8071 = vpop.f32.mrf.mxu0
  %v8072 = vpop.f32.mrf.mxu0
  %v8073 = vadd.f32 %v7849, %v8072
  %v8074 = vpop.f32.mrf.mxu0
  %8075 = vmatprep.mubr.bf16.mxu0 %v7187
  %8076 = vmatmul.mubr.bf16.gmra.mxu0 %v7354
  %v8077 = vpop.f32.mrf.mxu0
  %v8078 = vadd.f32 %v7854, %v8077
  %v8079 = vpop.f32.mrf.mxu0
  %v8080 = vpop.f32.mrf.mxu0
  %v8081 = vadd.f32 %v7857, %v8080
  %v8082 = vpop.f32.mrf.mxu0
  %8083 = vmatprep.mubr.bf16.mxu0 %v7190
  %8084 = vmatmul.mubr.bf16.gmra.mxu0 %v7358
  %v8085 = vpop.f32.mrf.mxu0
  %v8086 = vadd.f32 %v7862, %v8085
  %v8087 = vpop.f32.mrf.mxu0
  %v8088 = vpop.f32.mrf.mxu0
  %v8089 = vadd.f32 %v7865, %v8088
  %v8090 = vpop.f32.mrf.mxu0
  %8091 = vmatprep.mubr.bf16.mxu0 %v7193
  %8092 = vmatmul.mubr.bf16.gmra.mxu0 %v7362
  %v8093 = vpop.f32.mrf.mxu0
  %v8094 = vadd.f32 %v7870, %v8093
  %v8095 = vpop.f32.mrf.mxu0
  %v8096 = vpop.f32.mrf.mxu0
  %v8097 = vadd.f32 %v7873, %v8096
  %v8098 = vpop.f32.mrf.mxu0
  %8099 = vmatprep.mubr.bf16.mxu0 %v7196
  %8100 = vmatmul.mubr.bf16.gmra.mxu0 %v7366
  %v8101 = vpop.f32.mrf.mxu0
  %v8102 = vadd.f32 %v7878, %v8101
  %v8103 = vpop.f32.mrf.mxu0
  %v8104 = vpop.f32.mrf.mxu0
  %v8105 = vadd.f32 %v7881, %v8104
  %v8106 = vpop.f32.mrf.mxu0
  %8107 = vmatprep.mubr.bf16.mxu0 %v7199
  %8108 = vmatmul.mubr.bf16.gmra.mxu0 %v7370
  %v8109 = vpop.f32.mrf.mxu0
  %v8110 = vadd.f32 %v7886, %v8109
  %v8111 = vpop.f32.mrf.mxu0
  %v8112 = vpop.f32.mrf.mxu0
  %v8113 = vadd.f32 %v7889, %v8112
  %v8114 = vpop.f32.mrf.mxu0
  %8115 = vmatprep.mubr.bf16.mxu0 %v7202
  %8116 = vmatmul.mubr.bf16.gmra.mxu0 %v7374
  %v8117 = vpop.f32.mrf.mxu0
  %v8118 = vadd.f32 %v7894, %v8117
  %v8119 = vpop.f32.mrf.mxu0
  %v8120 = vpop.f32.mrf.mxu0
  %v8121 = vadd.f32 %v7897, %v8120
  %v8122 = vpop.f32.mrf.mxu0
  %8123 = vmatprep.mubr.bf16.mxu0 %v7205
  %8124 = vmatmul.mubr.bf16.gmra.mxu0 %v7378
  %v8125 = vpop.f32.mrf.mxu0
  %v8126 = vadd.f32 %v7902, %v8125
  %v8127 = vpop.f32.mrf.mxu0
  %v8128 = vpop.f32.mrf.mxu0
  %v8129 = vadd.f32 %v7905, %v8128
  %v8130 = vpop.f32.mrf.mxu0
  %8131 = vmatprep.mubr.bf16.mxu0 %v7208
  %8132 = vmatmul.mubr.bf16.gmra.mxu0 %v7382
  %v8133 = vpop.f32.mrf.mxu0
  %v8134 = vadd.f32 %v7910, %v8133
  %v8135 = vpop.f32.mrf.mxu0
  %v8136 = vpop.f32.mrf.mxu0
  %v8137 = vadd.f32 %v7913, %v8136
  %v8138 = vpop.f32.mrf.mxu0
  %8139 = vmatprep.mubr.bf16.mxu0 %v7211
  %8140 = vmatmul.mubr.bf16.gmra.mxu0 %v7386
  %v8141 = vpop.f32.mrf.mxu0
  %v8142 = vadd.f32 %v7918, %v8141
  %v8143 = vpop.f32.mrf.mxu0
  %v8144 = vpop.f32.mrf.mxu0
  %v8145 = vadd.f32 %v7921, %v8144
  %v8146 = vpop.f32.mrf.mxu0
  %8147 = vmatprep.mubr.bf16.mxu0 %v7214
  %8148 = vmatmul.mubr.bf16.gmra.mxu0 %v7390
  %v8149 = vpop.f32.mrf.mxu0
  %v8150 = vadd.f32 %v7926, %v8149
  %v8151 = vpop.f32.mrf.mxu0
  %v8152 = vpop.f32.mrf.mxu0
  %v8153 = vadd.f32 %v7929, %v8152
  %v8154 = vpop.f32.mrf.mxu0
  %8155 = vmatprep.mubr.bf16.mxu0 %v7217
  %8156 = vmatmul.mubr.bf16.gmra.mxu0 %v7394
  %v8157 = vpop.f32.mrf.mxu0
  %v8158 = vadd.f32 %v7934, %v8157
  %v8159 = vpop.f32.mrf.mxu0
  %v8160 = vpop.f32.mrf.mxu0
  %v8161 = vadd.f32 %v7937, %v8160
  %v8162 = vpop.f32.mrf.mxu0
  %8163 = vmatprep.mubr.bf16.mxu0 %v7220
  %8164 = vmatmul.mubr.bf16.gmra.mxu0 %v7398
  %v8165 = vpop.f32.mrf.mxu0
  %v8166 = vadd.f32 %v7942, %v8165
  %v8167 = vpop.f32.mrf.mxu0
  %v8168 = vpop.f32.mrf.mxu0
  %v8169 = vadd.f32 %v7945, %v8168
  %v8170 = vpop.f32.mrf.mxu0
  %8171 = vmatprep.mubr.bf16.mxu0 %v7223
  %8172 = vmatmul.mubr.bf16.gmra.mxu0 %v7402
  %v8173 = vpop.f32.mrf.mxu0
  %v8174 = vadd.f32 %v7950, %v8173
  %v8175 = vpop.f32.mrf.mxu0
  %v8176 = vpop.f32.mrf.mxu0
  %v8177 = vadd.f32 %v7953, %v8176
  %v8178 = vpop.f32.mrf.mxu0
  %8179 = vmatprep.mubr.bf16.mxu0 %v7226
  %8180 = vmatmul.mubr.bf16.gmra.mxu0 %v7406
  %v8181 = vpop.f32.mrf.mxu0
  %v8182 = vadd.f32 %v7958, %v8181
  %v8183 = vpop.f32.mrf.mxu0
  %v8184 = vpop.f32.mrf.mxu0
  %v8185 = vadd.f32 %v7961, %v8184
  %v8186 = vpop.f32.mrf.mxu0
  %8187 = vmatprep.mubr.bf16.mxu0 %v7229
  %8188 = vmatmul.mubr.bf16.gmra.mxu0 %v7410
  %v8189 = vpop.f32.mrf.mxu0
  %v8190 = vadd.f32 %v7966, %v8189
  %v8191 = vpop.f32.mrf.mxu0
  %v8192 = vpop.f32.mrf.mxu0
  %v8193 = vadd.f32 %v7969, %v8192
  %v8194 = vpop.f32.mrf.mxu0
  %8195 = vmatprep.mubr.bf16.mxu0 %v7232
  %8196 = vmatmul.mubr.bf16.gmra.mxu0 %v7414
  %v8197 = vpop.f32.mrf.mxu0
  %v8198 = vadd.f32 %v7974, %v8197
  %v8199 = vpop.f32.mrf.mxu0
  %v8200 = vpop.f32.mrf.mxu0
  %v8201 = vadd.f32 %v7977, %v8200
  %v8202 = vpop.f32.mrf.mxu0
  %8203 = vmatprep.mubr.bf16.mxu0 %v7235
  %8204 = vmatmul.mubr.bf16.gmra.mxu0 %v7418
  %v8205 = vpop.f32.mrf.mxu0
  %v8206 = vadd.f32 %v7982, %v8205
  %v8207 = vpop.f32.mrf.mxu0
  %v8208 = vpop.f32.mrf.mxu0
  %v8209 = vadd.f32 %v7985, %v8208
  %v8210 = vpop.f32.mrf.mxu0
  %8211 = vmatprep.mubr.bf16.mxu0 %v7433
  %8212 = vmatmul.mubr.bf16.gmra.mxu0 %v7422
  %v8213 = vpop.f32.mrf.mxu0
  %v8214 = vadd.f32 %v7990, %v8213
  %v8215 = vpop.f32.mrf.mxu0
  %v8216 = vpop.f32.mrf.mxu0
  %v8217 = vadd.f32 %v7993, %v8216
  %v8218 = vpop.f32.mrf.mxu0
  %8219 = vmatprep.mubr.bf16.mxu0 %v7436
  %8220 = vmatmul.mubr.bf16.gmra.mxu0 %v7426
  %v8221 = vpop.f32.mrf.mxu0
  %v8222 = vadd.f32 %v7998, %v8221
  %v8223 = vpop.f32.mrf.mxu0
  %v8224 = vpop.f32.mrf.mxu0
  %v8225 = vadd.f32 %v8001, %v8224
  %v8226 = vpop.f32.mrf.mxu0
  %8227 = vmatprep.mubr.bf16.mxu0 %v7439
  %8228 = vmatmul.mubr.bf16.gmra.mxu0 %v7430
  %v8229 = vpop.f32.mrf.mxu0
  %v8230 = vadd.f32 %v8006, %v8229
  %v8231 = vpop.f32.mrf.mxu0
  %v8232 = vpop.f32.mrf.mxu0
  %v8233 = vpop.f32.mrf.mxu0
  %8234 = vdwg.mxu0
  %8235 = vmatprep.subr.bf16.mxu0 0
  %8236 = vmatpush1.bf16.msra.mxu0 0
  %8237 = vmatprep.subr.bf16.mxu0 0
  %8238 = vmatpush1.bf16.msra.mxu0 0
  %8239 = vmatprep.subr.bf16.mxu0 0
  %8240 = vmatpush1.bf16.msra.mxu0 0
  %8241 = vmatprep.subr.bf16.mxu0 0
  %8242 = vmatpush1.bf16.msra.mxu0 0
  %8243 = vmatprep.subr.bf16.mxu0 0
  %8244 = vmatpush1.bf16.msra.mxu0 %v7699
  %8245 = vmatprep.subr.bf16.mxu0 0
  %8246 = vmatpush1.bf16.msra.mxu0 %v7698
  %8247 = vmatprep.subr.bf16.mxu0 0
  %8248 = vmatpush1.bf16.msra.mxu0 %v7697
  %8249 = vmatprep.subr.bf16.mxu0 0
  %8250 = vmatpush1.bf16.msra.mxu0 %v7696
  %8251 = vmatprep.subr.bf16.mxu0 0
  %8252 = vmatpush2.bf16.msra.mxu0 0
  %8253 = vmatprep.subr.bf16.mxu0 0
  %8254 = vmatpush2.bf16.msra.mxu0 0
  %8255 = vmatprep.subr.bf16.mxu0 0
  %8256 = vmatpush2.bf16.msra.mxu0 0
  %8257 = vmatprep.subr.bf16.mxu0 0
  %8258 = vmatpush2.bf16.msra.mxu0 0
  %8259 = vmatprep.subr.bf16.mxu0 0
  %8260 = vmatpush2.bf16.msra.mxu0 0
  %8261 = vmatprep.subr.bf16.mxu0 0
  %8262 = vmatpush2.bf16.msra.mxu0 0
  %8263 = vmatprep.subr.bf16.mxu0 0
  %8264 = vmatpush2.bf16.msra.mxu0 0
  %8265 = vmatprep.subr.bf16.mxu0 0
  %8266 = vmatpush2.bf16.msra.mxu0 0
  %8267 = vmatprep.mubr.bf16.mxu0 0
  %8268 = vmatmul.mubr.bf16.gmra.mxu0 %v7736
  %v8269 = vpop.f32.mrf.mxu0
  %v8270 = vadd.f32 %v8046, %v8269
  %v8271 = vpop.f32.mrf.mxu0
  %v8272 = vpop.f32.mrf.mxu0
  %v8273 = vadd.f32 %v8049, %v8272
  %v8274 = vpop.f32.mrf.mxu0
  %8275 = vmatprep.mubr.bf16.mxu0 0
  %8276 = vmatmul.mubr.bf16.gmra.mxu0 %v7738
  %v8277 = vpop.f32.mrf.mxu0
  %v8278 = vadd.f32 %v8054, %v8277
  %v8279 = vpop.f32.mrf.mxu0
  %v8280 = vpop.f32.mrf.mxu0
  %v8281 = vadd.f32 %v8057, %v8280
  %v8282 = vpop.f32.mrf.mxu0
  %8283 = vmatprep.mubr.bf16.mxu0 0
  %8284 = vmatmul.mubr.bf16.gmra.mxu0 %v7740
  %v8285 = vpop.f32.mrf.mxu0
  %v8286 = vadd.f32 %v8062, %v8285
  %v8287 = vpop.f32.mrf.mxu0
  %v8288 = vpop.f32.mrf.mxu0
  %v8289 = vadd.f32 %v8065, %v8288
  %v8290 = vpop.f32.mrf.mxu0
  %8291 = vmatprep.mubr.bf16.mxu0 0
  %8292 = vmatmul.mubr.bf16.gmra.mxu0 %v7742
  %v8293 = vpop.f32.mrf.mxu0
  %v8294 = vadd.f32 %v8070, %v8293
  %v8295 = vpop.f32.mrf.mxu0
  %v8296 = vpop.f32.mrf.mxu0
  %v8297 = vadd.f32 %v8073, %v8296
  %v8298 = vpop.f32.mrf.mxu0
  %8299 = vmatprep.mubr.bf16.mxu0 0
  %8300 = vmatmul.mubr.bf16.gmra.mxu0 %v7744
  %v8301 = vpop.f32.mrf.mxu0
  %v8302 = vadd.f32 %v8078, %v8301
  %v8303 = vpop.f32.mrf.mxu0
  %v8304 = vpop.f32.mrf.mxu0
  %v8305 = vadd.f32 %v8081, %v8304
  %v8306 = vpop.f32.mrf.mxu0
  %8307 = vmatprep.mubr.bf16.mxu0 0
  %8308 = vmatmul.mubr.bf16.gmra.mxu0 %v7746
  %v8309 = vpop.f32.mrf.mxu0
  %v8310 = vadd.f32 %v8086, %v8309
  %v8311 = vpop.f32.mrf.mxu0
  %v8312 = vpop.f32.mrf.mxu0
  %v8313 = vadd.f32 %v8089, %v8312
  %v8314 = vpop.f32.mrf.mxu0
  %8315 = vmatprep.mubr.bf16.mxu0 0
  %8316 = vmatmul.mubr.bf16.gmra.mxu0 %v7748
  %v8317 = vpop.f32.mrf.mxu0
  %v8318 = vadd.f32 %v8094, %v8317
  %v8319 = vpop.f32.mrf.mxu0
  %v8320 = vpop.f32.mrf.mxu0
  %v8321 = vadd.f32 %v8097, %v8320
  %v8322 = vpop.f32.mrf.mxu0
  %8323 = vmatprep.mubr.bf16.mxu0 0
  %8324 = vmatmul.mubr.bf16.gmra.mxu0 %v7750
  %v8325 = vpop.f32.mrf.mxu0
  %v8326 = vadd.f32 %v8102, %v8325
  %v8327 = vpop.f32.mrf.mxu0
  %v8328 = vpop.f32.mrf.mxu0
  %v8329 = vadd.f32 %v8105, %v8328
  %v8330 = vpop.f32.mrf.mxu0
  %8331 = vmatprep.mubr.bf16.mxu0 0
  %8332 = vmatmul.mubr.bf16.gmra.mxu0 %v7752
  %v8333 = vpop.f32.mrf.mxu0
  %v8334 = vadd.f32 %v8110, %v8333
  %v8335 = vpop.f32.mrf.mxu0
  %v8336 = vpop.f32.mrf.mxu0
  %v8337 = vadd.f32 %v8113, %v8336
  %v8338 = vpop.f32.mrf.mxu0
  %8339 = vmatprep.mubr.bf16.mxu0 0
  %8340 = vmatmul.mubr.bf16.gmra.mxu0 %v7754
  %v8341 = vpop.f32.mrf.mxu0
  %v8342 = vadd.f32 %v8118, %v8341
  %v8343 = vpop.f32.mrf.mxu0
  %v8344 = vpop.f32.mrf.mxu0
  %v8345 = vadd.f32 %v8121, %v8344
  %v8346 = vpop.f32.mrf.mxu0
  %8347 = vmatprep.mubr.bf16.mxu0 0
  %8348 = vmatmul.mubr.bf16.gmra.mxu0 %v7756
  %v8349 = vpop.f32.mrf.mxu0
  %v8350 = vadd.f32 %v8126, %v8349
  %v8351 = vpop.f32.mrf.mxu0
  %v8352 = vpop.f32.mrf.mxu0
  %v8353 = vadd.f32 %v8129, %v8352
  %v8354 = vpop.f32.mrf.mxu0
  %8355 = vmatprep.mubr.bf16.mxu0 0
  %8356 = vmatmul.mubr.bf16.gmra.mxu0 %v7758
  %v8357 = vpop.f32.mrf.mxu0
  %v8358 = vadd.f32 %v8134, %v8357
  %v8359 = vpop.f32.mrf.mxu0
  %v8360 = vpop.f32.mrf.mxu0
  %v8361 = vadd.f32 %v8137, %v8360
  %v8362 = vpop.f32.mrf.mxu0
  %8363 = vmatprep.mubr.bf16.mxu0 0
  %8364 = vmatmul.mubr.bf16.gmra.mxu0 %v7760
  %v8365 = vpop.f32.mrf.mxu0
  %v8366 = vadd.f32 %v8142, %v8365
  %v8367 = vpop.f32.mrf.mxu0
  %v8368 = vpop.f32.mrf.mxu0
  %v8369 = vadd.f32 %v8145, %v8368
  %v8370 = vpop.f32.mrf.mxu0
  %8371 = vmatprep.mubr.bf16.mxu0 0
  %8372 = vmatmul.mubr.bf16.gmra.mxu0 %v7762
  %v8373 = vpop.f32.mrf.mxu0
  %v8374 = vadd.f32 %v8150, %v8373
  %v8375 = vpop.f32.mrf.mxu0
  %v8376 = vpop.f32.mrf.mxu0
  %v8377 = vadd.f32 %v8153, %v8376
  %v8378 = vpop.f32.mrf.mxu0
  %8379 = vmatprep.mubr.bf16.mxu0 0
  %8380 = vmatmul.mubr.bf16.gmra.mxu0 %v7764
  %v8381 = vpop.f32.mrf.mxu0
  %v8382 = vadd.f32 %v8158, %v8381
  %v8383 = vpop.f32.mrf.mxu0
  %v8384 = vpop.f32.mrf.mxu0
  %v8385 = vadd.f32 %v8161, %v8384
  %v8386 = vpop.f32.mrf.mxu0
  %8387 = vmatprep.mubr.bf16.mxu0 0
  %8388 = vmatmul.mubr.bf16.gmra.mxu0 %v7766
  %v8389 = vpop.f32.mrf.mxu0
  %v8390 = vadd.f32 %v8166, %v8389
  %v8391 = vpop.f32.mrf.mxu0
  %v8392 = vpop.f32.mrf.mxu0
  %v8393 = vadd.f32 %v8169, %v8392
  %v8394 = vpop.f32.mrf.mxu0
  %8395 = vmatprep.mubr.bf16.mxu0 0
  %8396 = vmatmul.mubr.bf16.gmra.mxu0 %v7768
  %v8397 = vpop.f32.mrf.mxu0
  %v8398 = vadd.f32 %v8174, %v8397
  %v8399 = vpop.f32.mrf.mxu0
  %v8400 = vpop.f32.mrf.mxu0
  %v8401 = vadd.f32 %v8177, %v8400
  %v8402 = vpop.f32.mrf.mxu0
  %8403 = vmatprep.mubr.bf16.mxu0 0
  %8404 = vmatmul.mubr.bf16.gmra.mxu0 %v7770
  %v8405 = vpop.f32.mrf.mxu0
  %v8406 = vadd.f32 %v8182, %v8405
  %v8407 = vpop.f32.mrf.mxu0
  %v8408 = vpop.f32.mrf.mxu0
  %v8409 = vadd.f32 %v8185, %v8408
  %v8410 = vpop.f32.mrf.mxu0
  %8411 = vmatprep.mubr.bf16.mxu0 0
  %8412 = vmatmul.mubr.bf16.gmra.mxu0 %v7772
  %v8413 = vpop.f32.mrf.mxu0
  %v8414 = vadd.f32 %v8190, %v8413
  %v8415 = vpop.f32.mrf.mxu0
  %v8416 = vpop.f32.mrf.mxu0
  %v8417 = vadd.f32 %v8193, %v8416
  %v8418 = vpop.f32.mrf.mxu0
  %8419 = vmatprep.mubr.bf16.mxu0 0
  %8420 = vmatmul.mubr.bf16.gmra.mxu0 %v7774
  %v8421 = vpop.f32.mrf.mxu0
  %v8422 = vadd.f32 %v8198, %v8421
  %v8423 = vpop.f32.mrf.mxu0
  %v8424 = vpop.f32.mrf.mxu0
  %v8425 = vadd.f32 %v8201, %v8424
  %v8426 = vpop.f32.mrf.mxu0
  %8427 = vmatprep.mubr.bf16.mxu0 0
  %8428 = vmatmul.mubr.bf16.gmra.mxu0 %v7776
  %v8429 = vpop.f32.mrf.mxu0
  %v8430 = vadd.f32 %v8206, %v8429
  %v8431 = vpop.f32.mrf.mxu0
  %v8432 = vpop.f32.mrf.mxu0
  %v8433 = vadd.f32 %v8209, %v8432
  %v8434 = vpop.f32.mrf.mxu0
  %8435 = vmatprep.mubr.bf16.mxu0 0
  %8436 = vmatmul.mubr.bf16.gmra.mxu0 %v7779
  %v8437 = vpop.f32.mrf.mxu0
  %v8438 = vadd.f32 %v8214, %v8437
  %v8439 = vpop.f32.mrf.mxu0
  %v8440 = vpop.f32.mrf.mxu0
  %v8441 = vadd.f32 %v8217, %v8440
  %v8442 = vpop.f32.mrf.mxu0
  %8443 = vmatprep.mubr.bf16.mxu0 0
  %8444 = vmatmul.mubr.bf16.gmra.mxu0 %v7782
  %v8445 = vpop.f32.mrf.mxu0
  %v8446 = vadd.f32 %v8222, %v8445
  %v8447 = vpop.f32.mrf.mxu0
  %v8448 = vpop.f32.mrf.mxu0
  %v8449 = vadd.f32 %v8225, %v8448
  %v8450 = vpop.f32.mrf.mxu0
  %8451 = vmatprep.mubr.bf16.mxu0 0
  %8452 = vmatmul.mubr.bf16.gmra.mxu0 %v7785
  %v8453 = vpop.f32.mrf.mxu0
  %v8454 = vadd.f32 %v8230, %v8453
  %v8455 = vpop.f32.mrf.mxu0
  %v8456 = vpop.f32.mrf.mxu0
  %v8457 = vpop.f32.mrf.mxu0
  %8458 = vdwg.mxu0
  %vm8459 = vcmp.gt.f32.partialorder %v8270, 0.0
  %vm8460 = vcmp.gt.f32.partialorder %v8273, 0.0
  %vm8461 = vcmp.gt.f32.partialorder %v8278, 0.0
  %vm8462 = vcmp.gt.f32.partialorder %v8281, 0.0
  %vm8463 = vcmp.gt.f32.partialorder %v8286, 0.0
  %vm8464 = vcmp.gt.f32.partialorder %v8289, 0.0
  %vm8465 = vcmp.gt.f32.partialorder %v8294, 0.0
  %vm8466 = vcmp.gt.f32.partialorder %v8297, 0.0
  %vm8467 = vcmp.gt.f32.partialorder %v8302, 0.0
  %vm8468 = vcmp.gt.f32.partialorder %v8305, 0.0
  %vm8469 = vcmp.gt.f32.partialorder %v8310, 0.0
  %vm8470 = vcmp.gt.f32.partialorder %v8313, 0.0
  %vm8471 = vcmp.gt.f32.partialorder %v8318, 0.0
  %vm8472 = vcmp.gt.f32.partialorder %v8321, 0.0
  %vm8473 = vcmp.gt.f32.partialorder %v8326, 0.0
  %vm8474 = vcmp.gt.f32.partialorder %v8329, 0.0
  %vm8475 = vcmp.gt.f32.partialorder %v8334, 0.0
  %vm8476 = vcmp.gt.f32.partialorder %v8337, 0.0
  %vm8477 = vcmp.gt.f32.partialorder %v8342, 0.0
  %vm8478 = vcmp.gt.f32.partialorder %v8345, 0.0
  %vm8479 = vcmp.gt.f32.partialorder %v8350, 0.0
  %vm8480 = vcmp.gt.f32.partialorder %v8353, 0.0
  %vm8481 = vcmp.gt.f32.partialorder %v8358, 0.0
  %vm8482 = vcmp.gt.f32.partialorder %v8361, 0.0
  %vm8483 = vcmp.gt.f32.partialorder %v8366, 0.0
  %vm8484 = vcmp.gt.f32.partialorder %v8369, 0.0
  %vm8485 = vcmp.gt.f32.partialorder %v8374, 0.0
  %vm8486 = vcmp.gt.f32.partialorder %v8377, 0.0
  %vm8487 = vcmp.gt.f32.partialorder %v8382, 0.0
  %vm8488 = vcmp.gt.f32.partialorder %v8385, 0.0
  %vm8489 = vcmp.gt.f32.partialorder %v8390, 0.0
  %vm8490 = vcmp.gt.f32.partialorder %v8393, 0.0
  %vm8491 = vcmp.gt.f32.partialorder %v8398, 0.0
  %vm8492 = vcmp.gt.f32.partialorder %v8401, 0.0
  %vm8493 = vcmp.gt.f32.partialorder %v8406, 0.0
  %vm8494 = vcmp.gt.f32.partialorder %v8409, 0.0
  %vm8495 = vcmp.gt.f32.partialorder %v8414, 0.0
  %vm8496 = vcmp.gt.f32.partialorder %v8417, 0.0
  %vm8497 = vcmp.gt.f32.partialorder %v8422, 0.0
  %vm8498 = vcmp.gt.f32.partialorder %v8425, 0.0
  %vm8499 = vcmp.gt.f32.partialorder %v8430, 0.0
  %vm8500 = vcmp.gt.f32.partialorder %v8433, 0.0
  %vm8501 = vcmp.gt.f32.partialorder %v8438, 0.0
  %vm8502 = vcmp.gt.f32.partialorder %v8441, 0.0
  %vm8503 = vcmp.gt.f32.partialorder %v8446, 0.0
  %vm8504 = vcmp.gt.f32.partialorder %v8449, 0.0
  %vm8505 = vcmp.gt.f32.partialorder %v8454, 0.0
  %v8506 = vmul.f32 %v8270, 0.01
  %v8507 = vmul.f32 %v8273, 0.01
  %v8508 = vmul.f32 %v8278, 0.01
  %v8509 = vmul.f32 %v8281, 0.01
  %v8510 = vmul.f32 %v8286, 0.01
  %v8511 = vmul.f32 %v8289, 0.01
  %v8512 = vmul.f32 %v8294, 0.01
  %v8513 = vmul.f32 %v8297, 0.01
  %v8514 = vmul.f32 %v8302, 0.01
  %v8515 = vmul.f32 %v8305, 0.01
  %v8516 = vmul.f32 %v8310, 0.01
  %v8517 = vmul.f32 %v8313, 0.01
  %v8518 = vmul.f32 %v8318, 0.01
  %v8519 = vmul.f32 %v8321, 0.01
  %v8520 = vmul.f32 %v8326, 0.01
  %v8521 = vmul.f32 %v8329, 0.01
  %v8522 = vmul.f32 %v8334, 0.01
  %v8523 = vmul.f32 %v8337, 0.01
  %v8524 = vmul.f32 %v8342, 0.01
  %v8525 = vmul.f32 %v8345, 0.01
  %v8526 = vmul.f32 %v8350, 0.01
  %v8527 = vmul.f32 %v8353, 0.01
  %v8528 = vmul.f32 %v8358, 0.01
  %v8529 = vmul.f32 %v8361, 0.01
  %v8530 = vmul.f32 %v8366, 0.01
  %v8531 = vmul.f32 %v8369, 0.01
  %v8532 = vmul.f32 %v8374, 0.01
  %v8533 = vmul.f32 %v8377, 0.01
  %v8534 = vmul.f32 %v8382, 0.01
  %v8535 = vmul.f32 %v8385, 0.01
  %v8536 = vmul.f32 %v8390, 0.01
  %v8537 = vmul.f32 %v8393, 0.01
  %v8538 = vmul.f32 %v8398, 0.01
  %v8539 = vmul.f32 %v8401, 0.01
  %v8540 = vmul.f32 %v8406, 0.01
  %v8541 = vmul.f32 %v8409, 0.01
  %v8542 = vmul.f32 %v8414, 0.01
  %v8543 = vmul.f32 %v8417, 0.01
  %v8544 = vmul.f32 %v8422, 0.01
  %v8545 = vmul.f32 %v8425, 0.01
  %v8546 = vmul.f32 %v8430, 0.01
  %v8547 = vmul.f32 %v8433, 0.01
  %v8548 = vmul.f32 %v8438, 0.01
  %v8549 = vmul.f32 %v8441, 0.01
  %v8550 = vmul.f32 %v8446, 0.01
  %v8551 = vmul.f32 %v8449, 0.01
  %v8552 = vmul.f32 %v8454, 0.01
  %v8553 = vsel %vm8459, %v8270, %v8506
  %v8554 = vsel %vm8460, %v8273, %v8507
  %v8555 = vsel %vm8461, %v8278, %v8508
  %v8556 = vsel %vm8462, %v8281, %v8509
  %v8557 = vsel %vm8463, %v8286, %v8510
  %v8558 = vsel %vm8464, %v8289, %v8511
  %v8559 = vsel %vm8465, %v8294, %v8512
  %v8560 = vsel %vm8466, %v8297, %v8513
  %v8561 = vsel %vm8467, %v8302, %v8514
  %v8562 = vsel %vm8468, %v8305, %v8515
  %v8563 = vsel %vm8469, %v8310, %v8516
  %v8564 = vsel %vm8470, %v8313, %v8517
  %v8565 = vsel %vm8471, %v8318, %v8518
  %v8566 = vsel %vm8472, %v8321, %v8519
  %v8567 = vsel %vm8473, %v8326, %v8520
  %v8568 = vsel %vm8474, %v8329, %v8521
  %v8569 = vsel %vm8475, %v8334, %v8522
  %v8570 = vsel %vm8476, %v8337, %v8523
  %v8571 = vsel %vm8477, %v8342, %v8524
  %v8572 = vsel %vm8478, %v8345, %v8525
  %v8573 = vsel %vm8479, %v8350, %v8526
  %v8574 = vsel %vm8480, %v8353, %v8527
  %v8575 = vsel %vm8481, %v8358, %v8528
  %v8576 = vsel %vm8482, %v8361, %v8529
  %v8577 = vsel %vm8483, %v8366, %v8530
  %v8578 = vsel %vm8484, %v8369, %v8531
  %v8579 = vsel %vm8485, %v8374, %v8532
  %v8580 = vsel %vm8486, %v8377, %v8533
  %v8581 = vsel %vm8487, %v8382, %v8534
  %v8582 = vsel %vm8488, %v8385, %v8535
  %v8583 = vsel %vm8489, %v8390, %v8536
  %v8584 = vsel %vm8490, %v8393, %v8537
  %v8585 = vsel %vm8491, %v8398, %v8538
  %v8586 = vsel %vm8492, %v8401, %v8539
  %v8587 = vsel %vm8493, %v8406, %v8540
  %v8588 = vsel %vm8494, %v8409, %v8541
  %v8589 = vsel %vm8495, %v8414, %v8542
  %v8590 = vsel %vm8496, %v8417, %v8543
  %v8591 = vsel %vm8497, %v8422, %v8544
  %v8592 = vsel %vm8498, %v8425, %v8545
  %v8593 = vsel %vm8499, %v8430, %v8546
  %v8594 = vsel %vm8500, %v8433, %v8547
  %v8595 = vsel %vm8501, %v8438, %v8548
  %v8596 = vsel %vm8502, %v8441, %v8549
  %v8597 = vsel %vm8503, %v8446, %v8550
  %v8598 = vsel %vm8504, %v8449, %v8551
  %v8599 = vsel %vm8505, %v8454, %v8552
  %v8600 = vpack.c.bf16 %v8554, %v8553
  %v8601 = vpack.c.bf16 %v8556, %v8555
  %v8602 = vpack.c.bf16 %v8558, %v8557
  %v8603 = vpack.c.bf16 %v8560, %v8559
  %v8604 = vpack.c.bf16 %v8562, %v8561
  %v8605 = vpack.c.bf16 %v8564, %v8563
  %v8606 = vpack.c.bf16 %v8566, %v8565
  %v8607 = vpack.c.bf16 %v8568, %v8567
  %v8608 = vpack.c.bf16 %v8570, %v8569
  %v8609 = vpack.c.bf16 %v8572, %v8571
  %v8610 = vpack.c.bf16 %v8574, %v8573
  %v8611 = vpack.c.bf16 %v8576, %v8575
  %v8612 = vpack.c.bf16 %v8578, %v8577
  %v8613 = vpack.c.bf16 %v8580, %v8579
  %v8614 = vpack.c.bf16 %v8582, %v8581
  %v8615 = vpack.c.bf16 %v8584, %v8583
  %v8616 = vpack.c.bf16 %v8586, %v8585
  %v8617 = vpack.c.bf16 %v8588, %v8587
  %v8618 = vpack.c.bf16 %v8590, %v8589
  %v8619 = vpack.c.bf16 %v8592, %v8591
  %v8620 = vpack.c.bf16 %v8594, %v8593
  %v8621 = vpack.c.bf16 %v8596, %v8595
  %v8622 = vpack.c.bf16 %v8598, %v8597
  %v8623 = vpack.c.bf16 %v8599, %v8599
  %v8624 = vld [vmem:[%s19] sm:$0xf]
  %v8627 = vunpack.c.l.s4 1966171168
  %v8628 = vunpack.c.0.s8 %v8627
  %v8629 = vlaneseq
  %v8630 = vshrl.u32 %v8629, 7
  %v8631 = vsub.s32 %v8628, %v8630
  %v8632 = vrot.slane %v8624, %v8631
  %v8633 = vcombine.high %v8632, %v8632
  %v8635 = vunpack.c.l.s4 1966171168
  %v8636 = vunpack.c.0.s8 %v8635
  %v8637 = vlaneseq
  %v8638 = vshrl.u32 %v8637, 7
  %v8639 = vsub.s32 %v8636, %v8638
  %v8640 = vrot.slane %v8632, %v8639
  %v8642 = vunpack.c.l.s4 1966171168
  %v8643 = vunpack.c.0.s8 %v8642
  %v8644 = vlaneseq
  %v8645 = vshrl.u32 %v8644, 7
  %v8646 = vsub.s32 %v8643, %v8645
  %v8647 = vrot.slane %v8633, %v8646
  %v8648 = vcombine.high %v8640, %v8640
  %v8649 = vcombine.high %v8647, %v8647
  %vm8653 = vcmask 211968
  %v8655 = vsel %vm8653, %v8649, 0
  %v8657 = vsel %vm2579, %v6733, 0
  %8659 = vmatprep.subr.bf16.mxu0 0
  %8660 = vmatpush1.bf16.msra.mxu0 %v6715
  %8661 = vmatprep.subr.bf16.mxu0 0
  %8662 = vmatpush1.bf16.msra.mxu0 %v6714
  %8663 = vmatprep.subr.bf16.mxu0 0
  %8664 = vmatpush1.bf16.msra.mxu0 %v6713
  %8665 = vmatprep.subr.bf16.mxu0 0
  %8666 = vmatpush1.bf16.msra.mxu0 %v6712
  %8667 = vmatprep.subr.bf16.mxu0 0
  %8668 = vmatpush1.bf16.msra.mxu0 %v6711
  %8669 = vmatprep.subr.bf16.mxu0 0
  %8670 = vmatpush1.bf16.msra.mxu0 %v6710
  %8671 = vmatprep.subr.bf16.mxu0 0
  %8672 = vmatpush1.bf16.msra.mxu0 %v6709
  %8673 = vmatprep.subr.bf16.mxu0 0
  %8674 = vmatpush1.bf16.msra.mxu0 %v6708
  %8675 = vmatprep.subr.bf16.mxu0 0
  %8676 = vmatpush2.bf16.msra.mxu0 %v6723
  %8677 = vmatprep.subr.bf16.mxu0 0
  %8678 = vmatpush2.bf16.msra.mxu0 %v6722
  %8679 = vmatprep.subr.bf16.mxu0 0
  %8680 = vmatpush2.bf16.msra.mxu0 %v6721
  %8681 = vmatprep.subr.bf16.mxu0 0
  %8682 = vmatpush2.bf16.msra.mxu0 %v6720
  %8683 = vmatprep.subr.bf16.mxu0 0
  %8684 = vmatpush2.bf16.msra.mxu0 %v6719
  %8685 = vmatprep.subr.bf16.mxu0 0
  %8686 = vmatpush2.bf16.msra.mxu0 %v6718
  %8687 = vmatprep.subr.bf16.mxu0 0
  %8688 = vmatpush2.bf16.msra.mxu0 %v6717
  %8689 = vmatprep.subr.bf16.mxu0 0
  %8690 = vmatpush2.bf16.msra.mxu0 %v6716
  %8691 = vmatprep.mubr.bf16.mxu0 %v8647
  %8692 = vmatmul.mubr.bf16.gmra.mxu0 %v8640
  %v8693 = vpop.f32.mrf.mxu0
  %v8694 = vadd.f32 0.0, %v8693
  %v8695 = vpop.f32.mrf.mxu0
  %v8696 = vpop.f32.mrf.mxu0
  %v8697 = vpop.f32.mrf.mxu0
  %8698 = vdwg.mxu0
  %8699 = vmatprep.subr.bf16.mxu0 0
  %8700 = vmatpush1.bf16.msra.mxu0 %v6731
  %8701 = vmatprep.subr.bf16.mxu0 0
  %8702 = vmatpush1.bf16.msra.mxu0 %v6730
  %8703 = vmatprep.subr.bf16.mxu0 0
  %8704 = vmatpush1.bf16.msra.mxu0 %v6729
  %8705 = vmatprep.subr.bf16.mxu0 0
  %8706 = vmatpush1.bf16.msra.mxu0 %v6728
  %8707 = vmatprep.subr.bf16.mxu0 0
  %8708 = vmatpush1.bf16.msra.mxu0 %v6727
  %8709 = vmatprep.subr.bf16.mxu0 0
  %8710 = vmatpush1.bf16.msra.mxu0 %v6726
  %8711 = vmatprep.subr.bf16.mxu0 0
  %8712 = vmatpush1.bf16.msra.mxu0 %v6725
  %8713 = vmatprep.subr.bf16.mxu0 0
  %8714 = vmatpush1.bf16.msra.mxu0 %v6724
  %8715 = vmatprep.subr.bf16.mxu0 0
  %8716 = vmatpush2.bf16.msra.mxu0 0
  %8717 = vmatprep.subr.bf16.mxu0 0
  %8718 = vmatpush2.bf16.msra.mxu0 0
  %8719 = vmatprep.subr.bf16.mxu0 0
  %8720 = vmatpush2.bf16.msra.mxu0 0
  %8721 = vmatprep.subr.bf16.mxu0 0
  %8722 = vmatpush2.bf16.msra.mxu0 0
  %8723 = vmatprep.subr.bf16.mxu0 0
  %8724 = vmatpush2.bf16.msra.mxu0 0
  %8725 = vmatprep.subr.bf16.mxu0 0
  %8726 = vmatpush2.bf16.msra.mxu0 0
  %8727 = vmatprep.subr.bf16.mxu0 0
  %8728 = vmatpush2.bf16.msra.mxu0 %v8657
  %8729 = vmatprep.subr.bf16.mxu0 0
  %8730 = vmatpush2.bf16.msra.mxu0 %v6732
  %8731 = vmatprep.mubr.bf16.mxu0 %v8655
  %8732 = vmatmul.mubr.bf16.gmra.mxu0 %v8648
  %v8733 = vpop.f32.mrf.mxu0
  %v8734 = vadd.f32 %v8694, %v8733
  %v8735 = vpop.f32.mrf.mxu0
  %v8736 = vpop.f32.mrf.mxu0
  %v8737 = vpop.f32.mrf.mxu0
  %8738 = vdwg.mxu0
  %v8739 = vmul.f32 %v8734, 0.01
  %v8740 = vld [vmem:[%s21] sm:$0x7]
  %v8743 = vunpack.c.l.s4 1966171168
  %v8744 = vunpack.c.0.s8 %v8743
  %v8745 = vlaneseq
  %v8746 = vshrl.u32 %v8745, 7
  %v8747 = vsub.s32 %v8744, %v8746
  %v8748 = vrot.slane %v8740, %v8747
  %v8749 = vcombine.high %v8748, %v8748
  %v8751 = vunpack.c.l.s4 1966171168
  %v8752 = vunpack.c.0.s8 %v8751
  %v8753 = vlaneseq
  %v8754 = vshrl.u32 %v8753, 7
  %v8755 = vsub.s32 %v8752, %v8754
  %v8756 = vrot.slane %v8748, %v8755
  %v8758 = vunpack.c.l.s4 1966171168
  %v8759 = vunpack.c.0.s8 %v8758
  %v8760 = vlaneseq
  %v8761 = vshrl.u32 %v8760, 7
  %v8762 = vsub.s32 %v8759, %v8761
  %v8763 = vrot.slane %v8749, %v8762
  %v8764 = vcombine.high %v8756, %v8756
  %vm8767 = vcmask 982016
  %v8769 = vsel %vm8767, %v8764, 0
  %v8772 = vsel %vm2578, %v8623, 0
  %8774 = vmatprep.subr.bf16.mxu0 0
  %8775 = vmatpush1.bf16.msra.mxu0 %v8607
  %8776 = vmatprep.subr.bf16.mxu0 0
  %8777 = vmatpush1.bf16.msra.mxu0 %v8606
  %8778 = vmatprep.subr.bf16.mxu0 0
  %8779 = vmatpush1.bf16.msra.mxu0 %v8605
  %8780 = vmatprep.subr.bf16.mxu0 0
  %8781 = vmatpush1.bf16.msra.mxu0 %v8604
  %8782 = vmatprep.subr.bf16.mxu0 0
  %8783 = vmatpush1.bf16.msra.mxu0 %v8603
  %8784 = vmatprep.subr.bf16.mxu0 0
  %8785 = vmatpush1.bf16.msra.mxu0 %v8602
  %8786 = vmatprep.subr.bf16.mxu0 0
  %8787 = vmatpush1.bf16.msra.mxu0 %v8601
  %8788 = vmatprep.subr.bf16.mxu0 0
  %8789 = vmatpush1.bf16.msra.mxu0 %v8600
  %8790 = vmatprep.subr.bf16.mxu0 0
  %8791 = vmatpush2.bf16.msra.mxu0 %v8615
  %8792 = vmatprep.subr.bf16.mxu0 0
  %8793 = vmatpush2.bf16.msra.mxu0 %v8614
  %8794 = vmatprep.subr.bf16.mxu0 0
  %8795 = vmatpush2.bf16.msra.mxu0 %v8613
  %8796 = vmatprep.subr.bf16.mxu0 0
  %8797 = vmatpush2.bf16.msra.mxu0 %v8612
  %8798 = vmatprep.subr.bf16.mxu0 0
  %8799 = vmatpush2.bf16.msra.mxu0 %v8611
  %8800 = vmatprep.subr.bf16.mxu0 0
  %8801 = vmatpush2.bf16.msra.mxu0 %v8610
  %8802 = vmatprep.subr.bf16.mxu0 0
  %8803 = vmatpush2.bf16.msra.mxu0 %v8609
  %8804 = vmatprep.subr.bf16.mxu0 0
  %8805 = vmatpush2.bf16.msra.mxu0 %v8608
  %8806 = vmatprep.mubr.bf16.mxu0 %v8763
  %8807 = vmatmul.mubr.bf16.gmra.mxu0 %v8756
  %v8808 = vpop.f32.mrf.mxu0
  %v8809 = vadd.f32 0.0, %v8808
  %v8810 = vpop.f32.mrf.mxu0
  %v8811 = vpop.f32.mrf.mxu0
  %v8812 = vpop.f32.mrf.mxu0
  %8813 = vdwg.mxu0
  %8814 = vmatprep.subr.bf16.mxu0 0
  %8815 = vmatpush1.bf16.msra.mxu0 %v8772
  %8816 = vmatprep.subr.bf16.mxu0 0
  %8817 = vmatpush1.bf16.msra.mxu0 %v8622
  %8818 = vmatprep.subr.bf16.mxu0 0
  %8819 = vmatpush1.bf16.msra.mxu0 %v8621
  %8820 = vmatprep.subr.bf16.mxu0 0
  %8821 = vmatpush1.bf16.msra.mxu0 %v8620
  %8822 = vmatprep.subr.bf16.mxu0 0
  %8823 = vmatpush1.bf16.msra.mxu0 %v8619
  %8824 = vmatprep.subr.bf16.mxu0 0
  %8825 = vmatpush1.bf16.msra.mxu0 %v8618
  %8826 = vmatprep.subr.bf16.mxu0 0
  %8827 = vmatpush1.bf16.msra.mxu0 %v8617
  %8828 = vmatprep.subr.bf16.mxu0 0
  %8829 = vmatpush1.bf16.msra.mxu0 %v8616
  %8830 = vmatprep.subr.bf16.mxu0 0
  %8831 = vmatpush2.bf16.msra.mxu0 0
  %8832 = vmatprep.subr.bf16.mxu0 0
  %8833 = vmatpush2.bf16.msra.mxu0 0
  %8834 = vmatprep.subr.bf16.mxu0 0
  %8835 = vmatpush2.bf16.msra.mxu0 0
  %8836 = vmatprep.subr.bf16.mxu0 0
  %8837 = vmatpush2.bf16.msra.mxu0 0
  %8838 = vmatprep.subr.bf16.mxu0 0
  %8839 = vmatpush2.bf16.msra.mxu0 0
  %8840 = vmatprep.subr.bf16.mxu0 0
  %8841 = vmatpush2.bf16.msra.mxu0 0
  %8842 = vmatprep.subr.bf16.mxu0 0
  %8843 = vmatpush2.bf16.msra.mxu0 0
  %8844 = vmatprep.subr.bf16.mxu0 0
  %8845 = vmatpush2.bf16.msra.mxu0 0
  %8846 = vmatprep.mubr.bf16.mxu0 0
  %8847 = vmatmul.mubr.bf16.gmra.mxu0 %v8769
  %v8848 = vpop.f32.mrf.mxu0
  %v8849 = vadd.f32 %v8809, %v8848
  %v8850 = vpop.f32.mrf.mxu0
  %v8851 = vpop.f32.mrf.mxu0
  %v8852 = vpop.f32.mrf.mxu0
  %8853 = vdwg.mxu0
  %v8854 = vmul.f32 %v8849, 0.015625
  %v8855 = vpack.c.bf16 %v8739, %v8739
  %v8856 = vld [vmem:[%s23] sm:$0xf]
  %v8857 = vld [vmem:[%s23 + $0x4] sm:$0xf]
  %v8858 = vld [vmem:[%s23 + $0x8] sm:$0xf]
  %v8859 = vld [vmem:[%s23 + $0xc] sm:$0xf]
  %v8860 = vld [vmem:[%s23 + $0x10] sm:$0xf]
  %v8861 = vld [vmem:[%s23 + $0x14] sm:$0xf]
  %v8862 = vld [vmem:[%s23 + $0x18] sm:$0xf]
  %v8863 = vld [vmem:[%s23 + $0x1c] sm:$0xf]
  %v8864 = vld [vmem:[%s23 + $0x20] sm:$0xf]
  %v8865 = vld [vmem:[%s23 + $0x24] sm:$0xf]
  %v8866 = vld [vmem:[%s23 + $0x28] sm:$0xf]
  %v8867 = vld [vmem:[%s23 + $0x2c] sm:$0xf]
  %v8868 = vld [vmem:[%s25] sm:$0x1]
  %v8870 = vlaneseq
  %v8871 = vshrl.u32 %v8870, 7
  %v8872 = vsub.s32 0, %v8871
  %v8873 = vrot.slane %v8868, %v8872
  %v8887 = vunpack.c.l.b16 %v8856
  %v8888 = vunpack.c.l.b16 %v8857
  %v8889 = vunpack.c.l.b16 %v8858
  %v8890 = vunpack.c.l.b16 %v8859
  %v8891 = vunpack.c.l.b16 %v8860
  %v8892 = vunpack.c.l.b16 %v8861
  %v8893 = vunpack.c.l.b16 %v8862
  %v8894 = vunpack.c.l.b16 %v8863
  %v8895 = vunpack.c.l.b16 %v8864
  %v8896 = vunpack.c.l.b16 %v8865
  %v8897 = vunpack.c.l.b16 %v8866
  %v8898 = vunpack.c.l.b16 %v8867
  %v8899 = vpack.c.b16 %v8888, %v8887
  %v8900 = vpack.c.b16 %v8890, %v8889
  %v8901 = vpack.c.b16 %v8892, %v8891
  %v8902 = vpack.c.b16 %v8894, %v8893
  %v8903 = vpack.c.b16 %v8896, %v8895
  %v8904 = vpack.c.b16 %v8898, %v8897
  %v8912 = vsel %vm4075, %v8855, 0
  %8914 = vmatprep.subr.bf16.mxu0 0
  %8915 = vmatpush1.bf16.msra.mxu0 0
  %8916 = vmatprep.subr.bf16.mxu0 0
  %8917 = vmatpush1.bf16.msra.mxu0 0
  %8918 = vmatprep.subr.bf16.mxu0 0
  %8919 = vmatpush1.bf16.msra.mxu0 %v8904
  %8920 = vmatprep.subr.bf16.mxu0 0
  %8921 = vmatpush1.bf16.msra.mxu0 %v8903
  %8922 = vmatprep.subr.bf16.mxu0 0
  %8923 = vmatpush1.bf16.msra.mxu0 %v8902
  %8924 = vmatprep.subr.bf16.mxu0 0
  %8925 = vmatpush1.bf16.msra.mxu0 %v8901
  %8926 = vmatprep.subr.bf16.mxu0 0
  %8927 = vmatpush1.bf16.msra.mxu0 %v8900
  %8928 = vmatprep.subr.bf16.mxu0 0
  %8929 = vmatpush1.bf16.msra.mxu0 %v8899
  %8930 = vmatprep.subr.bf16.mxu0 0
  %8931 = vmatpush2.bf16.msra.mxu0 0
  %8932 = vmatprep.subr.bf16.mxu0 0
  %8933 = vmatpush2.bf16.msra.mxu0 0
  %8934 = vmatprep.subr.bf16.mxu0 0
  %8935 = vmatpush2.bf16.msra.mxu0 0
  %8936 = vmatprep.subr.bf16.mxu0 0
  %8937 = vmatpush2.bf16.msra.mxu0 0
  %8938 = vmatprep.subr.bf16.mxu0 0
  %8939 = vmatpush2.bf16.msra.mxu0 0
  %8940 = vmatprep.subr.bf16.mxu0 0
  %8941 = vmatpush2.bf16.msra.mxu0 0
  %8942 = vmatprep.subr.bf16.mxu0 0
  %8943 = vmatpush2.bf16.msra.mxu0 0
  %8944 = vmatprep.subr.bf16.mxu0 0
  %8945 = vmatpush2.bf16.msra.mxu0 0
  %8946 = vmatprep.mubr.bf16.mxu0 0
  %8947 = vmatmul.mubr.bf16.gmra.mxu0 %v8912
  %v8948 = vpop.f32.mrf.mxu0
  %v8949 = vadd.f32 %v8873, %v8948
  %v8950 = vpop.f32.mrf.mxu0
  %v8951 = vpop.f32.mrf.mxu0
  %v8952 = vpop.f32.mrf.mxu0
  %8953 = vdwg.mxu0
  %vm8954 = vcmp.gt.f32.partialorder %v8949, 0.0
  %v8955 = vmul.f32 %v8949, 0.01
  %v8956 = vsel %vm8954, %v8949, %v8955
  %v8957 = vpack.c.bf16 %v8956, %v8956
  %v8958 = vld [vmem:[%s27] sm:$0xf]
  %v8959 = vld [vmem:[%s27 + $0x4] sm:$0xf]
  %v8960 = vld [vmem:[%s27 + $0x8] sm:$0xf]
  %v8961 = vld [vmem:[%s27 + $0xc] sm:$0xf]
  %v8962 = vld [vmem:[%s27 + $0x10] sm:$0xf]
  %v8963 = vld [vmem:[%s27 + $0x14] sm:$0xf]
  %v8964 = vld [vmem:[%s27 + $0x18] sm:$0xf]
  %v8965 = vld [vmem:[%s27 + $0x1c] sm:$0xf]
  %v8966 = vld [vmem:[%s29] sm:$0x1]
  %v8968 = vlaneseq
  %v8969 = vshrl.u32 %v8968, 7
  %v8970 = vsub.s32 0, %v8969
  %v8971 = vrot.slane %v8966, %v8970
  %v8981 = vunpack.c.l.b16 %v8958
  %v8982 = vunpack.c.l.b16 %v8959
  %v8983 = vunpack.c.l.b16 %v8960
  %v8984 = vunpack.c.l.b16 %v8961
  %v8985 = vunpack.c.l.b16 %v8962
  %v8986 = vunpack.c.l.b16 %v8963
  %v8987 = vunpack.c.l.b16 %v8964
  %v8988 = vunpack.c.l.b16 %v8965
  %v8989 = vpack.c.b16 %v8982, %v8981
  %v8990 = vpack.c.b16 %v8984, %v8983
  %v8991 = vpack.c.b16 %v8986, %v8985
  %v8992 = vpack.c.b16 %v8988, %v8987
  %v8998 = vsel %vm3961, %v8957, 0
  %9000 = vmatprep.subr.bf16.mxu0 0
  %9001 = vmatpush1.bf16.msra.mxu0 0
  %9002 = vmatprep.subr.bf16.mxu0 0
  %9003 = vmatpush1.bf16.msra.mxu0 0
  %9004 = vmatprep.subr.bf16.mxu0 0
  %9005 = vmatpush1.bf16.msra.mxu0 0
  %9006 = vmatprep.subr.bf16.mxu0 0
  %9007 = vmatpush1.bf16.msra.mxu0 0
  %9008 = vmatprep.subr.bf16.mxu0 0
  %9009 = vmatpush1.bf16.msra.mxu0 %v8992
  %9010 = vmatprep.subr.bf16.mxu0 0
  %9011 = vmatpush1.bf16.msra.mxu0 %v8991
  %9012 = vmatprep.subr.bf16.mxu0 0
  %9013 = vmatpush1.bf16.msra.mxu0 %v8990
  %9014 = vmatprep.subr.bf16.mxu0 0
  %9015 = vmatpush1.bf16.msra.mxu0 %v8989
  %9016 = vmatprep.subr.bf16.mxu0 0
  %9017 = vmatpush2.bf16.msra.mxu0 0
  %9018 = vmatprep.subr.bf16.mxu0 0
  %9019 = vmatpush2.bf16.msra.mxu0 0
  %9020 = vmatprep.subr.bf16.mxu0 0
  %9021 = vmatpush2.bf16.msra.mxu0 0
  %9022 = vmatprep.subr.bf16.mxu0 0
  %9023 = vmatpush2.bf16.msra.mxu0 0
  %9024 = vmatprep.subr.bf16.mxu0 0
  %9025 = vmatpush2.bf16.msra.mxu0 0
  %9026 = vmatprep.subr.bf16.mxu0 0
  %9027 = vmatpush2.bf16.msra.mxu0 0
  %9028 = vmatprep.subr.bf16.mxu0 0
  %9029 = vmatpush2.bf16.msra.mxu0 0
  %9030 = vmatprep.subr.bf16.mxu0 0
  %9031 = vmatpush2.bf16.msra.mxu0 0
  %9032 = vmatprep.mubr.bf16.mxu0 0
  %9033 = vmatmul.mubr.bf16.gmra.mxu0 %v8998
  %v9034 = vpop.f32.mrf.mxu0
  %v9035 = vadd.f32 %v8971, %v9034
  %v9036 = vpop.f32.mrf.mxu0
  %v9037 = vpop.f32.mrf.mxu0
  %v9038 = vpop.f32.mrf.mxu0
  %9039 = vdwg.mxu0
  %vm9040 = vcmp.gt.f32.partialorder %v9035, 0.0
  %v9041 = vmul.f32 %v9035, 0.01
  %v9042 = vsel %vm9040, %v9035, %v9041
  %v9043 = vpack.c.bf16 %v9042, %v9042
  %v9044 = vld [vmem:[%s31] sm:$0xff]
  %v9045 = vld [vmem:[%s31 + $0x8] sm:$0xff]
  %v9046 = vld [vmem:[%s31 + $0x10] sm:$0xff]
  %v9047 = vld [vmem:[%s31 + $0x18] sm:$0xff]
  %v9048 = vld [vmem:[%s31 + $0x20] sm:$0xff]
  %v9049 = vld [vmem:[%s31 + $0x28] sm:$0xff]
  %v9050 = vld [vmem:[%s31 + $0x30] sm:$0xff]
  %v9051 = vld [vmem:[%s31 + $0x38] sm:$0xff]
  %v9052 = vld [vmem:[%s33] sm:$0x3]
  %v9054 = vlaneseq
  %v9055 = vshrl.u32 %v9054, 7
  %v9056 = vsub.s32 0, %v9055
  %v9057 = vrot.slane %v9052, %v9056
  %v9058 = vlaneseq
  %v9059 = vshrl.u32 %v9058, 7
  %v9060 = vsub.s32 1, %v9059
  %v9061 = vrot.slane %v9052, %v9060
  %v9072 = vunpack.c.l.b16 %v9044
  %v9073 = vunpack.c.h.b16 %v9044
  %v9074 = vunpack.c.l.b16 %v9045
  %v9075 = vunpack.c.h.b16 %v9045
  %v9076 = vunpack.c.l.b16 %v9046
  %v9077 = vunpack.c.h.b16 %v9046
  %v9078 = vunpack.c.l.b16 %v9047
  %v9079 = vunpack.c.h.b16 %v9047
  %v9080 = vunpack.c.l.b16 %v9048
  %v9081 = vunpack.c.h.b16 %v9048
  %v9082 = vunpack.c.l.b16 %v9049
  %v9083 = vunpack.c.h.b16 %v9049
  %v9084 = vunpack.c.l.b16 %v9050
  %v9085 = vunpack.c.h.b16 %v9050
  %v9086 = vunpack.c.l.b16 %v9051
  %v9087 = vunpack.c.h.b16 %v9051
  %v9088 = vpack.c.b16 %v9074, %v9072
  %v9089 = vpack.c.b16 %v9075, %v9073
  %v9090 = vpack.c.b16 %v9078, %v9076
  %v9091 = vpack.c.b16 %v9079, %v9077
  %v9092 = vpack.c.b16 %v9082, %v9080
  %v9093 = vpack.c.b16 %v9083, %v9081
  %v9094 = vpack.c.b16 %v9086, %v9084
  %v9095 = vpack.c.b16 %v9087, %v9085
  %v9105 = vsel %vm3961, %v9043, 0
  %9107 = vmatprep.subr.bf16.mxu0 0
  %9108 = vmatpush1.bf16.msra.mxu0 0
  %9109 = vmatprep.subr.bf16.mxu0 0
  %9110 = vmatpush1.bf16.msra.mxu0 0
  %9111 = vmatprep.subr.bf16.mxu0 0
  %9112 = vmatpush1.bf16.msra.mxu0 0
  %9113 = vmatprep.subr.bf16.mxu0 0
  %9114 = vmatpush1.bf16.msra.mxu0 0
  %9115 = vmatprep.subr.bf16.mxu0 %v9095
  %9116 = vmatpush1.bf16.msra.mxu0 %v9094
  %9117 = vmatprep.subr.bf16.mxu0 %v9093
  %9118 = vmatpush1.bf16.msra.mxu0 %v9092
  %9119 = vmatprep.subr.bf16.mxu0 %v9091
  %9120 = vmatpush1.bf16.msra.mxu0 %v9090
  %9121 = vmatprep.subr.bf16.mxu0 %v9089
  %9122 = vmatpush1.bf16.msra.mxu0 %v9088
  %9123 = vmatprep.subr.bf16.mxu0 0
  %9124 = vmatpush2.bf16.msra.mxu0 0
  %9125 = vmatprep.subr.bf16.mxu0 0
  %9126 = vmatpush2.bf16.msra.mxu0 0
  %9127 = vmatprep.subr.bf16.mxu0 0
  %9128 = vmatpush2.bf16.msra.mxu0 0
  %9129 = vmatprep.subr.bf16.mxu0 0
  %9130 = vmatpush2.bf16.msra.mxu0 0
  %9131 = vmatprep.subr.bf16.mxu0 0
  %9132 = vmatpush2.bf16.msra.mxu0 0
  %9133 = vmatprep.subr.bf16.mxu0 0
  %9134 = vmatpush2.bf16.msra.mxu0 0
  %9135 = vmatprep.subr.bf16.mxu0 0
  %9136 = vmatpush2.bf16.msra.mxu0 0
  %9137 = vmatprep.subr.bf16.mxu0 0
  %9138 = vmatpush2.bf16.msra.mxu0 0
  %9139 = vmatprep.mubr.bf16.mxu0 0
  %9140 = vmatmul.mubr.bf16.gmra.mxu0 %v9105
  %v9141 = vpop.f32.mrf.mxu0
  %v9142 = vadd.f32 %v9057, %v9141
  %v9143 = vpop.f32.mrf.mxu0
  %v9144 = vadd.f32 %v9061, %v9143
  %v9145 = vpop.f32.mrf.mxu0
  %v9146 = vpop.f32.mrf.mxu0
  %9147 = vdwg.mxu0
  %v9148 = vld [vmem:[%s35] sm:$0xff]
  %v9149 = vld [vmem:[%s35 + $0x8] sm:$0xff]
  %v9150 = vld [vmem:[%s35 + $0x10] sm:$0xff]
  %v9151 = vld [vmem:[%s35 + $0x18] sm:$0xff]
  %v9152 = vld [vmem:[%s35 + $0x20] sm:$0xff]
  %v9153 = vld [vmem:[%s35 + $0x28] sm:$0xff]
  %v9154 = vld [vmem:[%s35 + $0x30] sm:$0xff]
  %v9155 = vld [vmem:[%s35 + $0x38] sm:$0xff]
  %v9156 = vld [vmem:[%s35 + $0x40] sm:$0xff]
  %v9157 = vld [vmem:[%s35 + $0x48] sm:$0xff]
  %v9158 = vld [vmem:[%s35 + $0x50] sm:$0xff]
  %v9159 = vld [vmem:[%s35 + $0x58] sm:$0xff]
  %v9160 = vld [vmem:[%s35 + $0x60] sm:$0xff]
  %v9161 = vld [vmem:[%s35 + $0x68] sm:$0xff]
  %v9162 = vld [vmem:[%s35 + $0x70] sm:$0xff]
  %v9163 = vld [vmem:[%s35 + $0x78] sm:$0xff]
  %v9164 = vld [vmem:[%s35 + $0x80] sm:$0xff]
  %v9165 = vld [vmem:[%s35 + $0x88] sm:$0xff]
  %v9166 = vld [vmem:[%s35 + $0x90] sm:$0xff]
  %v9167 = vld [vmem:[%s35 + $0x98] sm:$0x1]
  %vm9168 = vcmask 203776
  %v9170 = vsel %vm9168, %v9144, 0
  %vm9172 = vcmask 1040384
  %v9174 = vsel %vm9172, %v9167, 0
  %9176 = vmatprep.subr.mxu0 0.0
  %9177 = vmatpush1.msra.mxu0 %v9163
  %9178 = vmatprep.subr.mxu0 0.0
  %9179 = vmatpush1.msra.mxu0 %v9162
  %9180 = vmatprep.subr.mxu0 0.0
  %9181 = vmatpush1.msra.mxu0 %v9161
  %9182 = vmatprep.subr.mxu0 0.0
  %9183 = vmatpush1.msra.mxu0 %v9160
  %9184 = vmatprep.subr.mxu0 0.0
  %9185 = vmatpush1.msra.mxu0 %v9159
  %9186 = vmatprep.subr.mxu0 0.0
  %9187 = vmatpush1.msra.mxu0 %v9158
  %9188 = vmatprep.subr.mxu0 0.0
  %9189 = vmatpush1.msra.mxu0 %v9157
  %9190 = vmatprep.subr.mxu0 0.0
  %9191 = vmatpush1.msra.mxu0 %v9156
  %9192 = vmatprep.subr.mxu0 0.0
  %9193 = vmatpush1.msra.mxu0 %v9155
  %9194 = vmatprep.subr.mxu0 0.0
  %9195 = vmatpush1.msra.mxu0 %v9154
  %9196 = vmatprep.subr.mxu0 0.0
  %9197 = vmatpush1.msra.mxu0 %v9153
  %9198 = vmatprep.subr.mxu0 0.0
  %9199 = vmatpush1.msra.mxu0 %v9152
  %9200 = vmatprep.subr.mxu0 0.0
  %9201 = vmatpush1.msra.mxu0 %v9151
  %9202 = vmatprep.subr.mxu0 0.0
  %9203 = vmatpush1.msra.mxu0 %v9150
  %9204 = vmatprep.subr.mxu0 0.0
  %9205 = vmatpush1.msra.mxu0 %v9149
  %9206 = vmatprep.subr.mxu0 0.0
  %9207 = vmatpush1.msra.mxu0 %v9148
  %9208 = vmatprep.subr.mxu0 0.0
  %9209 = vmatpush2.msra.mxu0 0.0
  %9210 = vmatprep.subr.mxu0 0.0
  %9211 = vmatpush2.msra.mxu0 0.0
  %9212 = vmatprep.subr.mxu0 0.0
  %9213 = vmatpush2.msra.mxu0 0.0
  %9214 = vmatprep.subr.mxu0 0.0
  %9215 = vmatpush2.msra.mxu0 0.0
  %9216 = vmatprep.subr.mxu0 0.0
  %9217 = vmatpush2.msra.mxu0 0.0
  %9218 = vmatprep.subr.mxu0 0.0
  %9219 = vmatpush2.msra.mxu0 0.0
  %9220 = vmatprep.subr.mxu0 0.0
  %9221 = vmatpush2.msra.mxu0 0.0
  %9222 = vmatprep.subr.mxu0 0.0
  %9223 = vmatpush2.msra.mxu0 0.0
  %9224 = vmatprep.subr.mxu0 0.0
  %9225 = vmatpush2.msra.mxu0 0.0
  %9226 = vmatprep.subr.mxu0 0.0
  %9227 = vmatpush2.msra.mxu0 0.0
  %9228 = vmatprep.subr.mxu0 0.0
  %9229 = vmatpush2.msra.mxu0 0.0
  %9230 = vmatprep.subr.mxu0 0.0
  %9231 = vmatpush2.msra.mxu0 0.0
  %9232 = vmatprep.subr.mxu0 0.0
  %9233 = vmatpush2.msra.mxu0 %v9174
  %9234 = vmatprep.subr.mxu0 0.0
  %9235 = vmatpush2.msra.mxu0 %v9166
  %9236 = vmatprep.subr.mxu0 0.0
  %9237 = vmatpush2.msra.mxu0 %v9165
  %9238 = vmatprep.subr.mxu0 0.0
  %9239 = vmatpush2.msra.mxu0 %v9164
  %9240 = vmatprep.mubr.f32.mxu0 %v9170
  %9241 = vmatmul.mubr.f32.gmra.mxu0 %v9142
  %v9242 = vpop.f32.mrf.mxu0
  %v9243 = vadd.f32 0.0, %v9242
  %v9244 = vpop.f32.mrf.mxu0
  %9245 = vdwg.mxu0
  %vm9246 = vcmask 828416
  %v9247 = vsel %vm9246, %v9243, -inf
  %9248 = vmax.xlane.f32.xlu0 %v9247
  %v9249 = vpop.xlane.xlu0 %9248
  %v9250 = vsub.f32 %v9243, %v9249
  %v9251 = vmul.f32 %v9250, 1.442695
  %v9252 = vpow.pop %v9251
  %v9253 = vld [vmem:[%s37] sm:$0xff]
  %v9254 = vld [vmem:[%s37 + $0x8] sm:$0xff]
  %v9255 = vld [vmem:[%s37 + $0x10] sm:$0xff]
  %v9256 = vld [vmem:[%s37 + $0x18] sm:$0xff]
  %v9257 = vld [vmem:[%s37 + $0x20] sm:$0xff]
  %v9258 = vld [vmem:[%s37 + $0x28] sm:$0xff]
  %v9259 = vld [vmem:[%s37 + $0x30] sm:$0xff]
  %v9260 = vld [vmem:[%s37 + $0x38] sm:$0xff]
  %v9261 = vld [vmem:[%s37 + $0x40] sm:$0xff]
  %v9262 = vld [vmem:[%s37 + $0x48] sm:$0xff]
  %v9263 = vld [vmem:[%s37 + $0x50] sm:$0xff]
  %v9264 = vld [vmem:[%s37 + $0x58] sm:$0xff]
  %v9265 = vld [vmem:[%s37 + $0x60] sm:$0x3f]
  %vm9266 = vcmask 834560
  %v9268 = vsel %vm9266, %v9252, 0
  %v9271 = vsel %vm555, %v9265, 0
  %9273 = vmatprep.subr.mxu0 0.0
  %9274 = vmatpush1.msra.mxu0 0.0
  %9275 = vmatprep.subr.mxu0 0.0
  %9276 = vmatpush1.msra.mxu0 0.0
  %9277 = vmatprep.subr.mxu0 0.0
  %9278 = vmatpush1.msra.mxu0 0.0
  %9279 = vmatprep.subr.mxu0 0.0
  %9280 = vmatpush1.msra.mxu0 %v9271
  %9281 = vmatprep.subr.mxu0 0.0
  %9282 = vmatpush1.msra.mxu0 %v9264
  %9283 = vmatprep.subr.mxu0 0.0
  %9284 = vmatpush1.msra.mxu0 %v9263
  %9285 = vmatprep.subr.mxu0 0.0
  %9286 = vmatpush1.msra.mxu0 %v9262
  %9287 = vmatprep.subr.mxu0 0.0
  %9288 = vmatpush1.msra.mxu0 %v9261
  %9289 = vmatprep.subr.mxu0 0.0
  %9290 = vmatpush1.msra.mxu0 %v9260
  %9291 = vmatprep.subr.mxu0 0.0
  %9292 = vmatpush1.msra.mxu0 %v9259
  %9293 = vmatprep.subr.mxu0 0.0
  %9294 = vmatpush1.msra.mxu0 %v9258
  %9295 = vmatprep.subr.mxu0 0.0
  %9296 = vmatpush1.msra.mxu0 %v9257
  %9297 = vmatprep.subr.mxu0 0.0
  %9298 = vmatpush1.msra.mxu0 %v9256
  %9299 = vmatprep.subr.mxu0 0.0
  %9300 = vmatpush1.msra.mxu0 %v9255
  %9301 = vmatprep.subr.mxu0 0.0
  %9302 = vmatpush1.msra.mxu0 %v9254
  %9303 = vmatprep.subr.mxu0 0.0
  %9304 = vmatpush1.msra.mxu0 %v9253
  %9305 = vmatprep.subr.mxu0 0.0
  %9306 = vmatpush2.msra.mxu0 0.0
  %9307 = vmatprep.subr.mxu0 0.0
  %9308 = vmatpush2.msra.mxu0 0.0
  %9309 = vmatprep.subr.mxu0 0.0
  %9310 = vmatpush2.msra.mxu0 0.0
  %9311 = vmatprep.subr.mxu0 0.0
  %9312 = vmatpush2.msra.mxu0 0.0
  %9313 = vmatprep.subr.mxu0 0.0
  %9314 = vmatpush2.msra.mxu0 0.0
  %9315 = vmatprep.subr.mxu0 0.0
  %9316 = vmatpush2.msra.mxu0 0.0
  %9317 = vmatprep.subr.mxu0 0.0
  %9318 = vmatpush2.msra.mxu0 0.0
  %9319 = vmatprep.subr.mxu0 0.0
  %9320 = vmatpush2.msra.mxu0 0.0
  %9321 = vmatprep.subr.mxu0 0.0
  %9322 = vmatpush2.msra.mxu0 0.0
  %9323 = vmatprep.subr.mxu0 0.0
  %9324 = vmatpush2.msra.mxu0 0.0
  %9325 = vmatprep.subr.mxu0 0.0
  %9326 = vmatpush2.msra.mxu0 0.0
  %9327 = vmatprep.subr.mxu0 0.0
  %9328 = vmatpush2.msra.mxu0 0.0
  %9329 = vmatprep.subr.mxu0 0.0
  %9330 = vmatpush2.msra.mxu0 0.0
  %9331 = vmatprep.subr.mxu0 0.0
  %9332 = vmatpush2.msra.mxu0 0.0
  %9333 = vmatprep.subr.mxu0 0.0
  %9334 = vmatpush2.msra.mxu0 0.0
  %9335 = vmatprep.subr.mxu0 0.0
  %9336 = vmatpush2.msra.mxu0 0.0
  %9337 = vmatprep.mubr.f32.mxu0 0.0
  %9338 = vmatmul.mubr.f32.gmra.mxu0 %v9268
  %v9339 = vpop.f32.mrf.mxu0
  %v9340 = vadd.f32 0.0, %v9339
  %v9341 = vpop.f32.mrf.mxu0
  %9342 = vdwg.mxu0
  %v9343 = vrcp.pop %v9340
  %v9344 = vmul.f32 1.0, %v9343
  %v9345 = vld [vmem:[%s39] sm:$0x3]
  %v9347 = vsel %vm2016, %v9344, 0
  %vm9349 = vcmask 1041408
  %v9351 = vsel %vm9349, %v9345, 0
  %9353 = vmatprep.subr.mxu0 0.0
  %9354 = vmatpush1.msra.mxu0 0.0
  %9355 = vmatprep.subr.mxu0 0.0
  %9356 = vmatpush1.msra.mxu0 0.0
  %9357 = vmatprep.subr.mxu0 0.0
  %9358 = vmatpush1.msra.mxu0 0.0
  %9359 = vmatprep.subr.mxu0 0.0
  %9360 = vmatpush1.msra.mxu0 0.0
  %9361 = vmatprep.subr.mxu0 0.0
  %9362 = vmatpush1.msra.mxu0 0.0
  %9363 = vmatprep.subr.mxu0 0.0
  %9364 = vmatpush1.msra.mxu0 0.0
  %9365 = vmatprep.subr.mxu0 0.0
  %9366 = vmatpush1.msra.mxu0 0.0
  %9367 = vmatprep.subr.mxu0 0.0
  %9368 = vmatpush1.msra.mxu0 0.0
  %9369 = vmatprep.subr.mxu0 0.0
  %9370 = vmatpush1.msra.mxu0 0.0
  %9371 = vmatprep.subr.mxu0 0.0
  %9372 = vmatpush1.msra.mxu0 0.0
  %9373 = vmatprep.subr.mxu0 0.0
  %9374 = vmatpush1.msra.mxu0 0.0
  %9375 = vmatprep.subr.mxu0 0.0
  %9376 = vmatpush1.msra.mxu0 0.0
  %9377 = vmatprep.subr.mxu0 0.0
  %9378 = vmatpush1.msra.mxu0 0.0
  %9379 = vmatprep.subr.mxu0 0.0
  %9380 = vmatpush1.msra.mxu0 0.0
  %9381 = vmatprep.subr.mxu0 0.0
  %9382 = vmatpush1.msra.mxu0 0.0
  %9383 = vmatprep.subr.mxu0 0.0
  %9384 = vmatpush1.msra.mxu0 %v9351
  %9385 = vmatprep.subr.mxu0 0.0
  %9386 = vmatpush2.msra.mxu0 0.0
  %9387 = vmatprep.subr.mxu0 0.0
  %9388 = vmatpush2.msra.mxu0 0.0
  %9389 = vmatprep.subr.mxu0 0.0
  %9390 = vmatpush2.msra.mxu0 0.0
  %9391 = vmatprep.subr.mxu0 0.0
  %9392 = vmatpush2.msra.mxu0 0.0
  %9393 = vmatprep.subr.mxu0 0.0
  %9394 = vmatpush2.msra.mxu0 0.0
  %9395 = vmatprep.subr.mxu0 0.0
  %9396 = vmatpush2.msra.mxu0 0.0
  %9397 = vmatprep.subr.mxu0 0.0
  %9398 = vmatpush2.msra.mxu0 0.0
  %9399 = vmatprep.subr.mxu0 0.0
  %9400 = vmatpush2.msra.mxu0 0.0
  %9401 = vmatprep.subr.mxu0 0.0
  %9402 = vmatpush2.msra.mxu0 0.0
  %9403 = vmatprep.subr.mxu0 0.0
  %9404 = vmatpush2.msra.mxu0 0.0
  %9405 = vmatprep.subr.mxu0 0.0
  %9406 = vmatpush2.msra.mxu0 0.0
  %9407 = vmatprep.subr.mxu0 0.0
  %9408 = vmatpush2.msra.mxu0 0.0
  %9409 = vmatprep.subr.mxu0 0.0
  %9410 = vmatpush2.msra.mxu0 0.0
  %9411 = vmatprep.subr.mxu0 0.0
  %9412 = vmatpush2.msra.mxu0 0.0
  %9413 = vmatprep.subr.mxu0 0.0
  %9414 = vmatpush2.msra.mxu0 0.0
  %9415 = vmatprep.subr.mxu0 0.0
  %9416 = vmatpush2.msra.mxu0 0.0
  %9417 = vmatprep.mubr.f32.mxu0 0.0
  %9418 = vmatmul.mubr.f32.gmra.mxu0 %v9347
  %v9419 = vpop.f32.mrf.mxu0
  %v9420 = vadd.f32 0.0, %v9419
  %v9421 = vpop.f32.mrf.mxu0
  %9422 = vdwg.mxu0
  %v9423 = vmul.f32 %v9252, %v9420
  %v9424 = vmax.f32 %v9423, 0.001
  %v9425 = vld [vmem:[%s41] sm:$0xff]
  %v9426 = vld [vmem:[%s41 + $0x8] sm:$0xff]
  %v9427 = vld [vmem:[%s41 + $0x10] sm:$0xff]
  %v9428 = vld [vmem:[%s41 + $0x18] sm:$0xff]
  %v9429 = vld [vmem:[%s41 + $0x20] sm:$0xff]
  %v9430 = vld [vmem:[%s41 + $0x28] sm:$0xff]
  %v9431 = vld [vmem:[%s41 + $0x30] sm:$0xff]
  %v9432 = vld [vmem:[%s41 + $0x38] sm:$0xff]
  %v9433 = vld [vmem:[%s41 + $0x40] sm:$0xff]
  %v9434 = vld [vmem:[%s41 + $0x48] sm:$0xff]
  %v9435 = vld [vmem:[%s41 + $0x50] sm:$0xff]
  %v9436 = vld [vmem:[%s41 + $0x58] sm:$0xff]
  %v9437 = vld [vmem:[%s41 + $0x60] sm:$0x3f]
  %v9439 = vsel %vm9266, %v9424, 0
  %v9442 = vsel %vm555, %v9437, 0
  %9444 = vmatprep.subr.mxu0 0.0
  %9445 = vmatpush1.msra.mxu0 0.0
  %9446 = vmatprep.subr.mxu0 0.0
  %9447 = vmatpush1.msra.mxu0 0.0
  %9448 = vmatprep.subr.mxu0 0.0
  %9449 = vmatpush1.msra.mxu0 0.0
  %9450 = vmatprep.subr.mxu0 0.0
  %9451 = vmatpush1.msra.mxu0 %v9442
  %9452 = vmatprep.subr.mxu0 0.0
  %9453 = vmatpush1.msra.mxu0 %v9436
  %9454 = vmatprep.subr.mxu0 0.0
  %9455 = vmatpush1.msra.mxu0 %v9435
  %9456 = vmatprep.subr.mxu0 0.0
  %9457 = vmatpush1.msra.mxu0 %v9434
  %9458 = vmatprep.subr.mxu0 0.0
  %9459 = vmatpush1.msra.mxu0 %v9433
  %9460 = vmatprep.subr.mxu0 0.0
  %9461 = vmatpush1.msra.mxu0 %v9432
  %9462 = vmatprep.subr.mxu0 0.0
  %9463 = vmatpush1.msra.mxu0 %v9431
  %9464 = vmatprep.subr.mxu0 0.0
  %9465 = vmatpush1.msra.mxu0 %v9430
  %9466 = vmatprep.subr.mxu0 0.0
  %9467 = vmatpush1.msra.mxu0 %v9429
  %9468 = vmatprep.subr.mxu0 0.0
  %9469 = vmatpush1.msra.mxu0 %v9428
  %9470 = vmatprep.subr.mxu0 0.0
  %9471 = vmatpush1.msra.mxu0 %v9427
  %9472 = vmatprep.subr.mxu0 0.0
  %9473 = vmatpush1.msra.mxu0 %v9426
  %9474 = vmatprep.subr.mxu0 0.0
  %9475 = vmatpush1.msra.mxu0 %v9425
  %9476 = vmatprep.subr.mxu0 0.0
  %9477 = vmatpush2.msra.mxu0 0.0
  %9478 = vmatprep.subr.mxu0 0.0
  %9479 = vmatpush2.msra.mxu0 0.0
  %9480 = vmatprep.subr.mxu0 0.0
  %9481 = vmatpush2.msra.mxu0 0.0
  %9482 = vmatprep.subr.mxu0 0.0
  %9483 = vmatpush2.msra.mxu0 0.0
  %9484 = vmatprep.subr.mxu0 0.0
  %9485 = vmatpush2.msra.mxu0 0.0
  %9486 = vmatprep.subr.mxu0 0.0
  %9487 = vmatpush2.msra.mxu0 0.0
  %9488 = vmatprep.subr.mxu0 0.0
  %9489 = vmatpush2.msra.mxu0 0.0
  %9490 = vmatprep.subr.mxu0 0.0
  %9491 = vmatpush2.msra.mxu0 0.0
  %9492 = vmatprep.subr.mxu0 0.0
  %9493 = vmatpush2.msra.mxu0 0.0
  %9494 = vmatprep.subr.mxu0 0.0
  %9495 = vmatpush2.msra.mxu0 0.0
  %9496 = vmatprep.subr.mxu0 0.0
  %9497 = vmatpush2.msra.mxu0 0.0
  %9498 = vmatprep.subr.mxu0 0.0
  %9499 = vmatpush2.msra.mxu0 0.0
  %9500 = vmatprep.subr.mxu0 0.0
  %9501 = vmatpush2.msra.mxu0 0.0
  %9502 = vmatprep.subr.mxu0 0.0
  %9503 = vmatpush2.msra.mxu0 0.0
  %9504 = vmatprep.subr.mxu0 0.0
  %9505 = vmatpush2.msra.mxu0 0.0
  %9506 = vmatprep.subr.mxu0 0.0
  %9507 = vmatpush2.msra.mxu0 0.0
  %9508 = vmatprep.mubr.f32.mxu0 0.0
  %9509 = vmatmul.mubr.f32.gmra.mxu0 %v9439
  %v9510 = vpop.f32.mrf.mxu0
  %v9511 = vadd.f32 0.0, %v9510
  %v9512 = vpop.f32.mrf.mxu0
  %9513 = vdwg.mxu0
  %v9514 = vpack.c.bf16 %v8854, %v8854
  %v9515 = vld [vmem:[%s43] sm:$0xf]
  %v9516 = vld [vmem:[%s43 + $0x4] sm:$0xf]
  %v9517 = vld [vmem:[%s43 + $0x8] sm:$0xf]
  %v9518 = vld [vmem:[%s43 + $0xc] sm:$0xf]
  %v9519 = vld [vmem:[%s43 + $0x10] sm:$0xf]
  %v9520 = vld [vmem:[%s43 + $0x14] sm:$0xf]
  %v9521 = vld [vmem:[%s43 + $0x18] sm:$0xf]
  %v9522 = vld [vmem:[%s43 + $0x1c] sm:$0xf]
  %v9523 = vld [vmem:[%s45] sm:$0x1]
  %v9525 = vlaneseq
  %v9526 = vshrl.u32 %v9525, 7
  %v9527 = vsub.s32 0, %v9526
  %v9528 = vrot.slane %v9523, %v9527
  %v9538 = vunpack.c.l.b16 %v9515
  %v9539 = vunpack.c.l.b16 %v9516
  %v9540 = vunpack.c.l.b16 %v9517
  %v9541 = vunpack.c.l.b16 %v9518
  %v9542 = vunpack.c.l.b16 %v9519
  %v9543 = vunpack.c.l.b16 %v9520
  %v9544 = vunpack.c.l.b16 %v9521
  %v9545 = vunpack.c.l.b16 %v9522
  %v9546 = vpack.c.b16 %v9539, %v9538
  %v9547 = vpack.c.b16 %v9541, %v9540
  %v9548 = vpack.c.b16 %v9543, %v9542
  %v9549 = vpack.c.b16 %v9545, %v9544
  %v9555 = vsel %vm3961, %v9514, 0
  %9557 = vmatprep.subr.bf16.mxu0 0
  %9558 = vmatpush1.bf16.msra.mxu0 0
  %9559 = vmatprep.subr.bf16.mxu0 0
  %9560 = vmatpush1.bf16.msra.mxu0 0
  %9561 = vmatprep.subr.bf16.mxu0 0
  %9562 = vmatpush1.bf16.msra.mxu0 0
  %9563 = vmatprep.subr.bf16.mxu0 0
  %9564 = vmatpush1.bf16.msra.mxu0 0
  %9565 = vmatprep.subr.bf16.mxu0 0
  %9566 = vmatpush1.bf16.msra.mxu0 %v9549
  %9567 = vmatprep.subr.bf16.mxu0 0
  %9568 = vmatpush1.bf16.msra.mxu0 %v9548
  %9569 = vmatprep.subr.bf16.mxu0 0
  %9570 = vmatpush1.bf16.msra.mxu0 %v9547
  %9571 = vmatprep.subr.bf16.mxu0 0
  %9572 = vmatpush1.bf16.msra.mxu0 %v9546
  %9573 = vmatprep.subr.bf16.mxu0 0
  %9574 = vmatpush2.bf16.msra.mxu0 0
  %9575 = vmatprep.subr.bf16.mxu0 0
  %9576 = vmatpush2.bf16.msra.mxu0 0
  %9577 = vmatprep.subr.bf16.mxu0 0
  %9578 = vmatpush2.bf16.msra.mxu0 0
  %9579 = vmatprep.subr.bf16.mxu0 0
  %9580 = vmatpush2.bf16.msra.mxu0 0
  %9581 = vmatprep.subr.bf16.mxu0 0
  %9582 = vmatpush2.bf16.msra.mxu0 0
  %9583 = vmatprep.subr.bf16.mxu0 0
  %9584 = vmatpush2.bf16.msra.mxu0 0
  %9585 = vmatprep.subr.bf16.mxu0 0
  %9586 = vmatpush2.bf16.msra.mxu0 0
  %9587 = vmatprep.subr.bf16.mxu0 0
  %9588 = vmatpush2.bf16.msra.mxu0 0
  %9589 = vmatprep.mubr.bf16.mxu0 0
  %9590 = vmatmul.mubr.bf16.gmra.mxu0 %v9555
  %v9591 = vpop.f32.mrf.mxu0
  %v9592 = vadd.f32 %v9528, %v9591
  %v9593 = vpop.f32.mrf.mxu0
  %v9594 = vpop.f32.mrf.mxu0
  %v9595 = vpop.f32.mrf.mxu0
  %9596 = vdwg.mxu0
  %vm9597 = vcmp.gt.f32.partialorder %v9592, 0.0
  %v9598 = vmul.f32 %v9592, 0.01
  %v9599 = vsel %vm9597, %v9592, %v9598
  %v9600 = vpack.c.bf16 %v9599, %v9599
  %v9601 = vld [vmem:[%s47] sm:$0xf]
  %v9602 = vld [vmem:[%s47 + $0x4] sm:$0xf]
  %v9603 = vld [vmem:[%s47 + $0x8] sm:$0xf]
  %v9604 = vld [vmem:[%s47 + $0xc] sm:$0xf]
  %v9605 = vld [vmem:[%s47 + $0x10] sm:$0xf]
  %v9606 = vld [vmem:[%s47 + $0x14] sm:$0xf]
  %v9607 = vld [vmem:[%s47 + $0x18] sm:$0xf]
  %v9608 = vld [vmem:[%s47 + $0x1c] sm:$0xf]
  %v9609 = vld [vmem:[%s47 + $0x20] sm:$0xf]
  %v9610 = vld [vmem:[%s47 + $0x24] sm:$0xf]
  %v9611 = vld [vmem:[%s47 + $0x28] sm:$0xf]
  %v9612 = vld [vmem:[%s47 + $0x2c] sm:$0xf]
  %v9613 = vld [vmem:[%s47 + $0x30] sm:$0xf]
  %v9614 = vld [vmem:[%s47 + $0x34] sm:$0xf]
  %v9615 = vld [vmem:[%s47 + $0x38] sm:$0xf]
  %v9616 = vld [vmem:[%s47 + $0x3c] sm:$0xf]
  %v9617 = vld [vmem:[%s49] sm:$0x1]
  %v9619 = vlaneseq
  %v9620 = vshrl.u32 %v9619, 7
  %v9621 = vsub.s32 0, %v9620
  %v9622 = vrot.slane %v9617, %v9621
  %v9640 = vunpack.c.l.b16 %v9601
  %v9641 = vunpack.c.l.b16 %v9602
  %v9642 = vunpack.c.l.b16 %v9603
  %v9643 = vunpack.c.l.b16 %v9604
  %v9644 = vunpack.c.l.b16 %v9605
  %v9645 = vunpack.c.l.b16 %v9606
  %v9646 = vunpack.c.l.b16 %v9607
  %v9647 = vunpack.c.l.b16 %v9608
  %v9648 = vunpack.c.l.b16 %v9609
  %v9649 = vunpack.c.l.b16 %v9610
  %v9650 = vunpack.c.l.b16 %v9611
  %v9651 = vunpack.c.l.b16 %v9612
  %v9652 = vunpack.c.l.b16 %v9613
  %v9653 = vunpack.c.l.b16 %v9614
  %v9654 = vunpack.c.l.b16 %v9615
  %v9655 = vunpack.c.l.b16 %v9616
  %v9656 = vpack.c.b16 %v9641, %v9640
  %v9657 = vpack.c.b16 %v9643, %v9642
  %v9658 = vpack.c.b16 %v9645, %v9644
  %v9659 = vpack.c.b16 %v9647, %v9646
  %v9660 = vpack.c.b16 %v9649, %v9648
  %v9661 = vpack.c.b16 %v9651, %v9650
  %v9662 = vpack.c.b16 %v9653, %v9652
  %v9663 = vpack.c.b16 %v9655, %v9654
  %9672 = vmatprep.subr.bf16.mxu0 0
  %9673 = vmatpush1.bf16.msra.mxu0 %v9663
  %9674 = vmatprep.subr.bf16.mxu0 0
  %9675 = vmatpush1.bf16.msra.mxu0 %v9662
  %9676 = vmatprep.subr.bf16.mxu0 0
  %9677 = vmatpush1.bf16.msra.mxu0 %v9661
  %9678 = vmatprep.subr.bf16.mxu0 0
  %9679 = vmatpush1.bf16.msra.mxu0 %v9660
  %9680 = vmatprep.subr.bf16.mxu0 0
  %9681 = vmatpush1.bf16.msra.mxu0 %v9659
  %9682 = vmatprep.subr.bf16.mxu0 0
  %9683 = vmatpush1.bf16.msra.mxu0 %v9658
  %9684 = vmatprep.subr.bf16.mxu0 0
  %9685 = vmatpush1.bf16.msra.mxu0 %v9657
  %9686 = vmatprep.subr.bf16.mxu0 0
  %9687 = vmatpush1.bf16.msra.mxu0 %v9656
  %9688 = vmatprep.subr.bf16.mxu0 0
  %9689 = vmatpush2.bf16.msra.mxu0 0
  %9690 = vmatprep.subr.bf16.mxu0 0
  %9691 = vmatpush2.bf16.msra.mxu0 0
  %9692 = vmatprep.subr.bf16.mxu0 0
  %9693 = vmatpush2.bf16.msra.mxu0 0
  %9694 = vmatprep.subr.bf16.mxu0 0
  %9695 = vmatpush2.bf16.msra.mxu0 0
  %9696 = vmatprep.subr.bf16.mxu0 0
  %9697 = vmatpush2.bf16.msra.mxu0 0
  %9698 = vmatprep.subr.bf16.mxu0 0
  %9699 = vmatpush2.bf16.msra.mxu0 0
  %9700 = vmatprep.subr.bf16.mxu0 0
  %9701 = vmatpush2.bf16.msra.mxu0 0
  %9702 = vmatprep.subr.bf16.mxu0 0
  %9703 = vmatpush2.bf16.msra.mxu0 0
  %9704 = vmatprep.mubr.bf16.mxu0 0
  %9705 = vmatmul.mubr.bf16.gmra.mxu0 %v9600
  %v9706 = vpop.f32.mrf.mxu0
  %v9707 = vadd.f32 %v9622, %v9706
  %v9708 = vpop.f32.mrf.mxu0
  %v9709 = vpop.f32.mrf.mxu0
  %v9710 = vpop.f32.mrf.mxu0
  %9711 = vdwg.mxu0
  %vm9712 = vcmp.gt.f32.partialorder %v9707, 0.0
  %v9713 = vmul.f32 %v9707, 0.01
  %v9714 = vsel %vm9712, %v9707, %v9713
  %v9715 = vpack.c.bf16 %v9714, %v9714
  %v9716 = vld [vmem:[%s51] sm:$0xff]
  %v9717 = vld [vmem:[%s51 + $0x8] sm:$0xf]
  %v9718 = vld [vmem:[%s51 + $0xc] sm:$0xff]
  %v9719 = vld [vmem:[%s51 + $0x14] sm:$0xf]
  %v9720 = vld [vmem:[%s51 + $0x18] sm:$0xff]
  %v9721 = vld [vmem:[%s51 + $0x20] sm:$0xf]
  %v9722 = vld [vmem:[%s51 + $0x24] sm:$0xff]
  %v9723 = vld [vmem:[%s51 + $0x2c] sm:$0xf]
  %v9724 = vld [vmem:[%s51 + $0x30] sm:$0xff]
  %v9725 = vld [vmem:[%s51 + $0x38] sm:$0xf]
  %v9726 = vld [vmem:[%s51 + $0x3c] sm:$0xff]
  %v9727 = vld [vmem:[%s51 + $0x44] sm:$0xf]
  %v9728 = vld [vmem:[%s51 + $0x48] sm:$0xff]
  %v9729 = vld [vmem:[%s51 + $0x50] sm:$0xf]
  %v9730 = vld [vmem:[%s51 + $0x54] sm:$0xff]
  %v9731 = vld [vmem:[%s51 + $0x5c] sm:$0xf]
  %v9732 = vld [vmem:[%s51 + $0x60] sm:$0xff]
  %v9733 = vld [vmem:[%s51 + $0x68] sm:$0xf]
  %v9734 = vld [vmem:[%s51 + $0x6c] sm:$0xff]
  %v9735 = vld [vmem:[%s51 + $0x74] sm:$0xf]
  %v9736 = vld [vmem:[%s51 + $0x78] sm:$0xff]
  %v9737 = vld [vmem:[%s51 + $0x80] sm:$0xf]
  %v9738 = vld [vmem:[%s51 + $0x84] sm:$0xff]
  %v9739 = vld [vmem:[%s51 + $0x8c] sm:$0xf]
  %v9740 = vld [vmem:[%s51 + $0x90] sm:$0xff]
  %v9741 = vld [vmem:[%s51 + $0x98] sm:$0xf]
  %v9742 = vld [vmem:[%s51 + $0x9c] sm:$0xff]
  %v9743 = vld [vmem:[%s51 + $0xa4] sm:$0xf]
  %v9744 = vld [vmem:[%s51 + $0xa8] sm:$0xff]
  %v9745 = vld [vmem:[%s51 + $0xb0] sm:$0xf]
  %v9746 = vld [vmem:[%s51 + $0xb4] sm:$0xff]
  %v9747 = vld [vmem:[%s51 + $0xbc] sm:$0xf]
  %v9748 = vld [vmem:[%s53] sm:$0x7]
  %v9750 = vlaneseq
  %v9751 = vshrl.u32 %v9750, 7
  %v9752 = vsub.s32 0, %v9751
  %v9753 = vrot.slane %v9748, %v9752
  %v9754 = vlaneseq
  %v9755 = vshrl.u32 %v9754, 7
  %v9756 = vsub.s32 1, %v9755
  %v9757 = vrot.slane %v9748, %v9756
  %v9758 = vlaneseq
  %v9759 = vshrl.u32 %v9758, 7
  %v9760 = vsub.s32 2, %v9759
  %v9761 = vrot.slane %v9748, %v9760
  %v9797 = vunpack.c.l.b16 %v9716
  %v9798 = vunpack.c.h.b16 %v9716
  %v9799 = vunpack.c.l.b16 %v9717
  %v9800 = vunpack.c.l.b16 %v9718
  %v9801 = vunpack.c.h.b16 %v9718
  %v9802 = vunpack.c.l.b16 %v9719
  %v9803 = vunpack.c.l.b16 %v9720
  %v9804 = vunpack.c.h.b16 %v9720
  %v9805 = vunpack.c.l.b16 %v9721
  %v9806 = vunpack.c.l.b16 %v9722
  %v9807 = vunpack.c.h.b16 %v9722
  %v9808 = vunpack.c.l.b16 %v9723
  %v9809 = vunpack.c.l.b16 %v9724
  %v9810 = vunpack.c.h.b16 %v9724
  %v9811 = vunpack.c.l.b16 %v9725
  %v9812 = vunpack.c.l.b16 %v9726
  %v9813 = vunpack.c.h.b16 %v9726
  %v9814 = vunpack.c.l.b16 %v9727
  %v9815 = vunpack.c.l.b16 %v9728
  %v9816 = vunpack.c.h.b16 %v9728
  %v9817 = vunpack.c.l.b16 %v9729
  %v9818 = vunpack.c.l.b16 %v9730
  %v9819 = vunpack.c.h.b16 %v9730
  %v9820 = vunpack.c.l.b16 %v9731
  %v9821 = vunpack.c.l.b16 %v9732
  %v9822 = vunpack.c.h.b16 %v9732
  %v9823 = vunpack.c.l.b16 %v9733
  %v9824 = vunpack.c.l.b16 %v9734
  %v9825 = vunpack.c.h.b16 %v9734
  %v9826 = vunpack.c.l.b16 %v9735
  %v9827 = vunpack.c.l.b16 %v9736
  %v9828 = vunpack.c.h.b16 %v9736
  %v9829 = vunpack.c.l.b16 %v9737
  %v9830 = vunpack.c.l.b16 %v9738
  %v9831 = vunpack.c.h.b16 %v9738
  %v9832 = vunpack.c.l.b16 %v9739
  %v9833 = vunpack.c.l.b16 %v9740
  %v9834 = vunpack.c.h.b16 %v9740
  %v9835 = vunpack.c.l.b16 %v9741
  %v9836 = vunpack.c.l.b16 %v9742
  %v9837 = vunpack.c.h.b16 %v9742
  %v9838 = vunpack.c.l.b16 %v9743
  %v9839 = vunpack.c.l.b16 %v9744
  %v9840 = vunpack.c.h.b16 %v9744
  %v9841 = vunpack.c.l.b16 %v9745
  %v9842 = vunpack.c.l.b16 %v9746
  %v9843 = vunpack.c.h.b16 %v9746
  %v9844 = vunpack.c.l.b16 %v9747
  %v9845 = vpack.c.b16 %v9800, %v9797
  %v9846 = vpack.c.b16 %v9801, %v9798
  %v9847 = vpack.c.b16 %v9802, %v9799
  %v9848 = vpack.c.b16 %v9806, %v9803
  %v9849 = vpack.c.b16 %v9807, %v9804
  %v9850 = vpack.c.b16 %v9808, %v9805
  %v9851 = vpack.c.b16 %v9812, %v9809
  %v9852 = vpack.c.b16 %v9813, %v9810
  %v9853 = vpack.c.b16 %v9814, %v9811
  %v9854 = vpack.c.b16 %v9818, %v9815
  %v9855 = vpack.c.b16 %v9819, %v9816
  %v9856 = vpack.c.b16 %v9820, %v9817
  %v9857 = vpack.c.b16 %v9824, %v9821
  %v9858 = vpack.c.b16 %v9825, %v9822
  %v9859 = vpack.c.b16 %v9826, %v9823
  %v9860 = vpack.c.b16 %v9830, %v9827
  %v9861 = vpack.c.b16 %v9831, %v9828
  %v9862 = vpack.c.b16 %v9832, %v9829
  %v9863 = vpack.c.b16 %v9836, %v9833
  %v9864 = vpack.c.b16 %v9837, %v9834
  %v9865 = vpack.c.b16 %v9838, %v9835
  %v9866 = vpack.c.b16 %v9842, %v9839
  %v9867 = vpack.c.b16 %v9843, %v9840
  %v9868 = vpack.c.b16 %v9844, %v9841
  %9893 = vmatprep.subr.bf16.mxu0 %v9867
  %9894 = vmatpush1.bf16.msra.mxu0 %v9866
  %9895 = vmatprep.subr.bf16.mxu0 %v9864
  %9896 = vmatpush1.bf16.msra.mxu0 %v9863
  %9897 = vmatprep.subr.bf16.mxu0 %v9861
  %9898 = vmatpush1.bf16.msra.mxu0 %v9860
  %9899 = vmatprep.subr.bf16.mxu0 %v9858
  %9900 = vmatpush1.bf16.msra.mxu0 %v9857
  %9901 = vmatprep.subr.bf16.mxu0 %v9855
  %9902 = vmatpush1.bf16.msra.mxu0 %v9854
  %9903 = vmatprep.subr.bf16.mxu0 %v9852
  %9904 = vmatpush1.bf16.msra.mxu0 %v9851
  %9905 = vmatprep.subr.bf16.mxu0 %v9849
  %9906 = vmatpush1.bf16.msra.mxu0 %v9848
  %9907 = vmatprep.subr.bf16.mxu0 %v9846
  %9908 = vmatpush1.bf16.msra.mxu0 %v9845
  %9909 = vmatprep.subr.bf16.mxu0 0
  %9910 = vmatpush2.bf16.msra.mxu0 0
  %9911 = vmatprep.subr.bf16.mxu0 0
  %9912 = vmatpush2.bf16.msra.mxu0 0
  %9913 = vmatprep.subr.bf16.mxu0 0
  %9914 = vmatpush2.bf16.msra.mxu0 0
  %9915 = vmatprep.subr.bf16.mxu0 0
  %9916 = vmatpush2.bf16.msra.mxu0 0
  %9917 = vmatprep.subr.bf16.mxu0 0
  %9918 = vmatpush2.bf16.msra.mxu0 0
  %9919 = vmatprep.subr.bf16.mxu0 0
  %9920 = vmatpush2.bf16.msra.mxu0 0
  %9921 = vmatprep.subr.bf16.mxu0 0
  %9922 = vmatpush2.bf16.msra.mxu0 0
  %9923 = vmatprep.subr.bf16.mxu0 0
  %9924 = vmatpush2.bf16.msra.mxu0 0
  %9925 = vmatprep.mubr.bf16.mxu0 0
  %9926 = vmatmul.mubr.bf16.gmra.mxu0 %v9715
  %v9927 = vpop.f32.mrf.mxu0
  %v9928 = vadd.f32 %v9753, %v9927
  %v9929 = vpop.f32.mrf.mxu0
  %v9930 = vadd.f32 %v9757, %v9929
  %v9931 = vpop.f32.mrf.mxu0
  %v9932 = vpop.f32.mrf.mxu0
  %9933 = vdwg.mxu0
  %9934 = vmatprep.subr.bf16.mxu0 0
  %9935 = vmatpush1.bf16.msra.mxu0 %v9868
  %9936 = vmatprep.subr.bf16.mxu0 0
  %9937 = vmatpush1.bf16.msra.mxu0 %v9865
  %9938 = vmatprep.subr.bf16.mxu0 0
  %9939 = vmatpush1.bf16.msra.mxu0 %v9862
  %9940 = vmatprep.subr.bf16.mxu0 0
  %9941 = vmatpush1.bf16.msra.mxu0 %v9859
  %9942 = vmatprep.subr.bf16.mxu0 0
  %9943 = vmatpush1.bf16.msra.mxu0 %v9856
  %9944 = vmatprep.subr.bf16.mxu0 0
  %9945 = vmatpush1.bf16.msra.mxu0 %v9853
  %9946 = vmatprep.subr.bf16.mxu0 0
  %9947 = vmatpush1.bf16.msra.mxu0 %v9850
  %9948 = vmatprep.subr.bf16.mxu0 0
  %9949 = vmatpush1.bf16.msra.mxu0 %v9847
  %9950 = vmatprep.subr.bf16.mxu0 0
  %9951 = vmatpush2.bf16.msra.mxu0 0
  %9952 = vmatprep.subr.bf16.mxu0 0
  %9953 = vmatpush2.bf16.msra.mxu0 0
  %9954 = vmatprep.subr.bf16.mxu0 0
  %9955 = vmatpush2.bf16.msra.mxu0 0
  %9956 = vmatprep.subr.bf16.mxu0 0
  %9957 = vmatpush2.bf16.msra.mxu0 0
  %9958 = vmatprep.subr.bf16.mxu0 0
  %9959 = vmatpush2.bf16.msra.mxu0 0
  %9960 = vmatprep.subr.bf16.mxu0 0
  %9961 = vmatpush2.bf16.msra.mxu0 0
  %9962 = vmatprep.subr.bf16.mxu0 0
  %9963 = vmatpush2.bf16.msra.mxu0 0
  %9964 = vmatprep.subr.bf16.mxu0 0
  %9965 = vmatpush2.bf16.msra.mxu0 0
  %9966 = vmatprep.mubr.bf16.mxu0 0
  %9967 = vmatmul.mubr.bf16.gmra.mxu0 %v9715
  %v9968 = vpop.f32.mrf.mxu0
  %v9969 = vadd.f32 %v9761, %v9968
  %v9970 = vpop.f32.mrf.mxu0
  %v9971 = vpop.f32.mrf.mxu0
  %v9972 = vpop.f32.mrf.mxu0
  %9973 = vdwg.mxu0
  %v9974 = vld [vmem:[%s55] sm:$0xff]
  %v9975 = vld [vmem:[%s55 + $0x8] sm:$0xff]
  %v9976 = vld [vmem:[%s55 + $0x10] sm:$0xff]
  %v9977 = vld [vmem:[%s55 + $0x18] sm:$0xff]
  %v9978 = vld [vmem:[%s55 + $0x20] sm:$0xff]
  %v9979 = vld [vmem:[%s55 + $0x28] sm:$0xff]
  %v9980 = vld [vmem:[%s55 + $0x30] sm:$0xff]
  %v9981 = vld [vmem:[%s55 + $0x38] sm:$0xff]
  %v9982 = vld [vmem:[%s55 + $0x40] sm:$0xff]
  %v9983 = vld [vmem:[%s55 + $0x48] sm:$0xff]
  %v9984 = vld [vmem:[%s55 + $0x50] sm:$0xff]
  %v9985 = vld [vmem:[%s55 + $0x58] sm:$0xff]
  %v9986 = vld [vmem:[%s55 + $0x60] sm:$0xff]
  %v9987 = vld [vmem:[%s55 + $0x68] sm:$0xff]
  %v9988 = vld [vmem:[%s55 + $0x70] sm:$0xff]
  %v9989 = vld [vmem:[%s55 + $0x78] sm:$0xff]
  %v9990 = vld [vmem:[%s55 + $0x80] sm:$0xff]
  %v9991 = vld [vmem:[%s55 + $0x88] sm:$0xff]
  %v9992 = vld [vmem:[%s55 + $0x90] sm:$0xff]
  %v9993 = vld [vmem:[%s55 + $0x98] sm:$0xff]
  %v9994 = vld [vmem:[%s55 + $0xa0] sm:$0xff]
  %v9995 = vld [vmem:[%s55 + $0xa8] sm:$0xff]
  %v9996 = vld [vmem:[%s55 + $0xb0] sm:$0xff]
  %v9997 = vld [vmem:[%s55 + $0xb8] sm:$0xff]
  %v9998 = vld [vmem:[%s55 + $0xc0] sm:$0xff]
  %v9999 = vld [vmem:[%s55 + $0xc8] sm:$0xff]
  %v10000 = vld [vmem:[%s55 + $0xd0] sm:$0xff]
  %v10001 = vld [vmem:[%s55 + $0xd8] sm:$0xff]
  %v10002 = vld [vmem:[%s55 + $0xe0] sm:$0xff]
  %v10003 = vld [vmem:[%s55 + $0xe8] sm:$0xff]
  %v10004 = vld [vmem:[%s55 + $0xf0] sm:$0xff]
  %v10005 = vld [vmem:[%s55 + $0xf8] sm:$0xff]
  %v10006 = vld [vmem:[%s55 + $0x100] sm:$0xff]
  %v10007 = vld [vmem:[%s55 + $0x108] sm:$0xff]
  %v10008 = vld [vmem:[%s55 + $0x110] sm:$0xff]
  %v10009 = vld [vmem:[%s55 + $0x118] sm:$0xff]
  %v10010 = vld [vmem:[%s55 + $0x120] sm:$0xff]
  %v10011 = vld [vmem:[%s55 + $0x128] sm:$0xff]
  %v10012 = vld [vmem:[%s55 + $0x130] sm:$0xff]
  %v10013 = vld [vmem:[%s55 + $0x138] sm:$0xff]
  %v10014 = vld [vmem:[%s55 + $0x140] sm:$0xff]
  %v10015 = vld [vmem:[%s55 + $0x148] sm:$0xff]
  %v10016 = vld [vmem:[%s55 + $0x150] sm:$0xff]
  %v10017 = vld [vmem:[%s55 + $0x158] sm:$0xff]
  %v10018 = vld [vmem:[%s55 + $0x160] sm:$0xff]
  %v10019 = vld [vmem:[%s55 + $0x168] sm:$0xff]
  %v10020 = vld [vmem:[%s55 + $0x170] sm:$0xff]
  %v10021 = vld [vmem:[%s55 + $0x178] sm:$0xff]
  %v10022 = vld [vmem:[%s55 + $0x180] sm:$0xff]
  %v10023 = vld [vmem:[%s55 + $0x188] sm:$0xff]
  %v10024 = vld [vmem:[%s55 + $0x190] sm:$0xff]
  %v10025 = vld [vmem:[%s55 + $0x198] sm:$0xff]
  %v10026 = vld [vmem:[%s55 + $0x1a0] sm:$0xff]
  %v10027 = vld [vmem:[%s55 + $0x1a8] sm:$0xff]
  %v10028 = vld [vmem:[%s55 + $0x1b0] sm:$0xff]
  %v10029 = vld [vmem:[%s55 + $0x1b8] sm:$0xff]
  %v10030 = vld [vmem:[%s55 + $0x1c0] sm:$0xff]
  %v10031 = vld [vmem:[%s55 + $0x1c8] sm:$0xff]
  %v10032 = vld [vmem:[%s55 + $0x1d0] sm:$0xff]
  %v10033 = vld [vmem:[%s55 + $0x1d8] sm:$0xff]
  %v10034 = vld [vmem:[%s55 + $0x1e0] sm:$0xff]
  %v10035 = vld [vmem:[%s55 + $0x1e8] sm:$0xff]
  %v10036 = vld [vmem:[%s55 + $0x1f0] sm:$0xff]
  %v10037 = vld [vmem:[%s55 + $0x1f8] sm:$0xff]
  %v10038 = vld [vmem:[%s55 + $0x200] sm:$0xff]
  %v10039 = vld [vmem:[%s55 + $0x208] sm:$0xff]
  %v10040 = vld [vmem:[%s55 + $0x210] sm:$0xff]
  %v10041 = vld [vmem:[%s55 + $0x218] sm:$0xff]
  %v10042 = vld [vmem:[%s55 + $0x220] sm:$0xff]
  %v10043 = vld [vmem:[%s55 + $0x228] sm:$0xff]
  %v10044 = vld [vmem:[%s55 + $0x230] sm:$0xff]
  %v10045 = vld [vmem:[%s55 + $0x238] sm:$0xff]
  %v10046 = vld [vmem:[%s55 + $0x240] sm:$0xff]
  %v10047 = vld [vmem:[%s55 + $0x248] sm:$0xff]
  %v10048 = vld [vmem:[%s55 + $0x250] sm:$0xff]
  %v10049 = vld [vmem:[%s55 + $0x258] sm:$0xff]
  %v10050 = vld [vmem:[%s55 + $0x260] sm:$0x3]
  %v10051 = vld [vmem:[%s55 + $0x268] sm:$0x3]
  %vm10052 = vcmask 408576
  %v10054 = vsel %vm10052, %v9969, 0
  %v10057 = vsel %vm9349, %v10050, 0
  %v10060 = vsel %vm9349, %v10051, 0
  %10062 = vmatprep.subr.mxu0 %v10005
  %10063 = vmatpush1.msra.mxu0 %v10004
  %10064 = vmatprep.subr.mxu0 %v10003
  %10065 = vmatpush1.msra.mxu0 %v10002
  %10066 = vmatprep.subr.mxu0 %v10001
  %10067 = vmatpush1.msra.mxu0 %v10000
  %10068 = vmatprep.subr.mxu0 %v9999
  %10069 = vmatpush1.msra.mxu0 %v9998
  %10070 = vmatprep.subr.mxu0 %v9997
  %10071 = vmatpush1.msra.mxu0 %v9996
  %10072 = vmatprep.subr.mxu0 %v9995
  %10073 = vmatpush1.msra.mxu0 %v9994
  %10074 = vmatprep.subr.mxu0 %v9993
  %10075 = vmatpush1.msra.mxu0 %v9992
  %10076 = vmatprep.subr.mxu0 %v9991
  %10077 = vmatpush1.msra.mxu0 %v9990
  %10078 = vmatprep.subr.mxu0 %v9989
  %10079 = vmatpush1.msra.mxu0 %v9988
  %10080 = vmatprep.subr.mxu0 %v9987
  %10081 = vmatpush1.msra.mxu0 %v9986
  %10082 = vmatprep.subr.mxu0 %v9985
  %10083 = vmatpush1.msra.mxu0 %v9984
  %10084 = vmatprep.subr.mxu0 %v9983
  %10085 = vmatpush1.msra.mxu0 %v9982
  %10086 = vmatprep.subr.mxu0 %v9981
  %10087 = vmatpush1.msra.mxu0 %v9980
  %10088 = vmatprep.subr.mxu0 %v9979
  %10089 = vmatpush1.msra.mxu0 %v9978
  %10090 = vmatprep.subr.mxu0 %v9977
  %10091 = vmatpush1.msra.mxu0 %v9976
  %10092 = vmatprep.subr.mxu0 %v9975
  %10093 = vmatpush1.msra.mxu0 %v9974
  %10094 = vmatprep.subr.mxu0 %v10037
  %10095 = vmatpush2.msra.mxu0 %v10036
  %10096 = vmatprep.subr.mxu0 %v10035
  %10097 = vmatpush2.msra.mxu0 %v10034
  %10098 = vmatprep.subr.mxu0 %v10033
  %10099 = vmatpush2.msra.mxu0 %v10032
  %10100 = vmatprep.subr.mxu0 %v10031
  %10101 = vmatpush2.msra.mxu0 %v10030
  %10102 = vmatprep.subr.mxu0 %v10029
  %10103 = vmatpush2.msra.mxu0 %v10028
  %10104 = vmatprep.subr.mxu0 %v10027
  %10105 = vmatpush2.msra.mxu0 %v10026
  %10106 = vmatprep.subr.mxu0 %v10025
  %10107 = vmatpush2.msra.mxu0 %v10024
  %10108 = vmatprep.subr.mxu0 %v10023
  %10109 = vmatpush2.msra.mxu0 %v10022
  %10110 = vmatprep.subr.mxu0 %v10021
  %10111 = vmatpush2.msra.mxu0 %v10020
  %10112 = vmatprep.subr.mxu0 %v10019
  %10113 = vmatpush2.msra.mxu0 %v10018
  %10114 = vmatprep.subr.mxu0 %v10017
  %10115 = vmatpush2.msra.mxu0 %v10016
  %10116 = vmatprep.subr.mxu0 %v10015
  %10117 = vmatpush2.msra.mxu0 %v10014
  %10118 = vmatprep.subr.mxu0 %v10013
  %10119 = vmatpush2.msra.mxu0 %v10012
  %10120 = vmatprep.subr.mxu0 %v10011
  %10121 = vmatpush2.msra.mxu0 %v10010
  %10122 = vmatprep.subr.mxu0 %v10009
  %10123 = vmatpush2.msra.mxu0 %v10008
  %10124 = vmatprep.subr.mxu0 %v10007
  %10125 = vmatpush2.msra.mxu0 %v10006
  %10126 = vmatprep.mubr.f32.mxu0 %v9930
  %10127 = vmatmul.mubr.f32.gmra.mxu0 %v9928
  %v10128 = vpop.f32.mrf.mxu0
  %v10129 = vadd.f32 0.0, %v10128
  %v10130 = vpop.f32.mrf.mxu0
  %v10131 = vadd.f32 0.0, %v10130
  %10132 = vdwg.mxu0
  %10133 = vmatprep.subr.mxu0 0.0
  %10134 = vmatpush1.msra.mxu0 0.0
  %10135 = vmatprep.subr.mxu0 0.0
  %10136 = vmatpush1.msra.mxu0 0.0
  %10137 = vmatprep.subr.mxu0 0.0
  %10138 = vmatpush1.msra.mxu0 0.0
  %10139 = vmatprep.subr.mxu0 0.0
  %10140 = vmatpush1.msra.mxu0 0.0
  %10141 = vmatprep.subr.mxu0 0.0
  %10142 = vmatpush1.msra.mxu0 0.0
  %10143 = vmatprep.subr.mxu0 0.0
  %10144 = vmatpush1.msra.mxu0 0.0
  %10145 = vmatprep.subr.mxu0 0.0
  %10146 = vmatpush1.msra.mxu0 0.0
  %10147 = vmatprep.subr.mxu0 0.0
  %10148 = vmatpush1.msra.mxu0 0.0
  %10149 = vmatprep.subr.mxu0 0.0
  %10150 = vmatpush1.msra.mxu0 0.0
  %10151 = vmatprep.subr.mxu0 %v10060
  %10152 = vmatpush1.msra.mxu0 %v10057
  %10153 = vmatprep.subr.mxu0 %v10049
  %10154 = vmatpush1.msra.mxu0 %v10048
  %10155 = vmatprep.subr.mxu0 %v10047
  %10156 = vmatpush1.msra.mxu0 %v10046
  %10157 = vmatprep.subr.mxu0 %v10045
  %10158 = vmatpush1.msra.mxu0 %v10044
  %10159 = vmatprep.subr.mxu0 %v10043
  %10160 = vmatpush1.msra.mxu0 %v10042
  %10161 = vmatprep.subr.mxu0 %v10041
  %10162 = vmatpush1.msra.mxu0 %v10040
  %10163 = vmatprep.subr.mxu0 %v10039
  %10164 = vmatpush1.msra.mxu0 %v10038
  %10165 = vmatprep.subr.mxu0 0.0
  %10166 = vmatpush2.msra.mxu0 0.0
  %10167 = vmatprep.subr.mxu0 0.0
  %10168 = vmatpush2.msra.mxu0 0.0
  %10169 = vmatprep.subr.mxu0 0.0
  %10170 = vmatpush2.msra.mxu0 0.0
  %10171 = vmatprep.subr.mxu0 0.0
  %10172 = vmatpush2.msra.mxu0 0.0
  %10173 = vmatprep.subr.mxu0 0.0
  %10174 = vmatpush2.msra.mxu0 0.0
  %10175 = vmatprep.subr.mxu0 0.0
  %10176 = vmatpush2.msra.mxu0 0.0
  %10177 = vmatprep.subr.mxu0 0.0
  %10178 = vmatpush2.msra.mxu0 0.0
  %10179 = vmatprep.subr.mxu0 0.0
  %10180 = vmatpush2.msra.mxu0 0.0
  %10181 = vmatprep.subr.mxu0 0.0
  %10182 = vmatpush2.msra.mxu0 0.0
  %10183 = vmatprep.subr.mxu0 0.0
  %10184 = vmatpush2.msra.mxu0 0.0
  %10185 = vmatprep.subr.mxu0 0.0
  %10186 = vmatpush2.msra.mxu0 0.0
  %10187 = vmatprep.subr.mxu0 0.0
  %10188 = vmatpush2.msra.mxu0 0.0
  %10189 = vmatprep.subr.mxu0 0.0
  %10190 = vmatpush2.msra.mxu0 0.0
  %10191 = vmatprep.subr.mxu0 0.0
  %10192 = vmatpush2.msra.mxu0 0.0
  %10193 = vmatprep.subr.mxu0 0.0
  %10194 = vmatpush2.msra.mxu0 0.0
  %10195 = vmatprep.subr.mxu0 0.0
  %10196 = vmatpush2.msra.mxu0 0.0
  %10197 = vmatprep.mubr.f32.mxu0 0.0
  %10198 = vmatmul.mubr.f32.gmra.mxu0 %v10054
  %v10199 = vpop.f32.mrf.mxu0
  %v10200 = vadd.f32 %v10129, %v10199
  %v10201 = vpop.f32.mrf.mxu0
  %v10202 = vadd.f32 %v10131, %v10201
  %10203 = vdwg.mxu0
  %v10204 = vsel %vm9349, %v10200, -inf
  %vm10205 = vcmask 1033216
  %v10206 = vsel %vm10205, %v10202, -inf
  %v10207 = vmax.f32 %v10204, %v10206
  %10208 = vmax.xlane.f32.xlu0 %v10207
  %v10209 = vpop.xlane.xlu0 %10208
  %v10210 = vsub.f32 %v10200, %v10209
  %v10211 = vsub.f32 %v10202, %v10209
  %v10212 = vmul.f32 %v10210, 1.442695
  %v10213 = vpow.pop %v10212
  %v10214 = vmul.f32 %v10211, 1.442695
  %v10215 = vpow.pop %v10214
  %v10216 = vld [vmem:[%s57] sm:$0xff]
  %v10217 = vld [vmem:[%s57 + $0x8] sm:$0xff]
  %v10218 = vld [vmem:[%s57 + $0x10] sm:$0xff]
  %v10219 = vld [vmem:[%s57 + $0x18] sm:$0xff]
  %v10220 = vld [vmem:[%s57 + $0x20] sm:$0xff]
  %v10221 = vld [vmem:[%s57 + $0x28] sm:$0xff]
  %v10222 = vld [vmem:[%s57 + $0x30] sm:$0xff]
  %v10223 = vld [vmem:[%s57 + $0x38] sm:$0xff]
  %v10224 = vld [vmem:[%s57 + $0x40] sm:$0xff]
  %v10225 = vld [vmem:[%s57 + $0x48] sm:$0xff]
  %v10226 = vld [vmem:[%s57 + $0x50] sm:$0xff]
  %v10227 = vld [vmem:[%s57 + $0x58] sm:$0xff]
  %v10228 = vld [vmem:[%s57 + $0x60] sm:$0xff]
  %v10229 = vld [vmem:[%s57 + $0x68] sm:$0xff]
  %v10230 = vld [vmem:[%s57 + $0x70] sm:$0xff]
  %v10231 = vld [vmem:[%s57 + $0x78] sm:$0xff]
  %v10232 = vld [vmem:[%s57 + $0x80] sm:$0xff]
  %v10233 = vld [vmem:[%s57 + $0x88] sm:$0xff]
  %v10234 = vld [vmem:[%s57 + $0x90] sm:$0xff]
  %v10235 = vld [vmem:[%s57 + $0x98] sm:$0xff]
  %v10236 = vld [vmem:[%s57 + $0xa0] sm:$0xff]
  %v10237 = vld [vmem:[%s57 + $0xa8] sm:$0xff]
  %v10238 = vld [vmem:[%s57 + $0xb0] sm:$0xff]
  %v10239 = vld [vmem:[%s57 + $0xb8] sm:$0xff]
  %v10240 = vld [vmem:[%s57 + $0xc0] sm:$0xff]
  %v10241 = vld [vmem:[%s57 + $0xc8] sm:$0xff]
  %v10242 = vld [vmem:[%s57 + $0xd0] sm:$0xff]
  %v10243 = vld [vmem:[%s57 + $0xd8] sm:$0xff]
  %v10244 = vld [vmem:[%s57 + $0xe0] sm:$0xff]
  %v10245 = vld [vmem:[%s57 + $0xe8] sm:$0xff]
  %v10246 = vld [vmem:[%s57 + $0xf0] sm:$0xff]
  %v10247 = vld [vmem:[%s57 + $0xf8] sm:$0x7f]
  %vm10248 = vcmask 1039360
  %v10250 = vsel %vm10248, %v10215, 0
  %v10253 = vsel %vm255, %v10247, 0
  %10255 = vmatprep.subr.mxu0 0.0
  %10256 = vmatpush1.msra.mxu0 %v10231
  %10257 = vmatprep.subr.mxu0 0.0
  %10258 = vmatpush1.msra.mxu0 %v10230
  %10259 = vmatprep.subr.mxu0 0.0
  %10260 = vmatpush1.msra.mxu0 %v10229
  %10261 = vmatprep.subr.mxu0 0.0
  %10262 = vmatpush1.msra.mxu0 %v10228
  %10263 = vmatprep.subr.mxu0 0.0
  %10264 = vmatpush1.msra.mxu0 %v10227
  %10265 = vmatprep.subr.mxu0 0.0
  %10266 = vmatpush1.msra.mxu0 %v10226
  %10267 = vmatprep.subr.mxu0 0.0
  %10268 = vmatpush1.msra.mxu0 %v10225
  %10269 = vmatprep.subr.mxu0 0.0
  %10270 = vmatpush1.msra.mxu0 %v10224
  %10271 = vmatprep.subr.mxu0 0.0
  %10272 = vmatpush1.msra.mxu0 %v10223
  %10273 = vmatprep.subr.mxu0 0.0
  %10274 = vmatpush1.msra.mxu0 %v10222
  %10275 = vmatprep.subr.mxu0 0.0
  %10276 = vmatpush1.msra.mxu0 %v10221
  %10277 = vmatprep.subr.mxu0 0.0
  %10278 = vmatpush1.msra.mxu0 %v10220
  %10279 = vmatprep.subr.mxu0 0.0
  %10280 = vmatpush1.msra.mxu0 %v10219
  %10281 = vmatprep.subr.mxu0 0.0
  %10282 = vmatpush1.msra.mxu0 %v10218
  %10283 = vmatprep.subr.mxu0 0.0
  %10284 = vmatpush1.msra.mxu0 %v10217
  %10285 = vmatprep.subr.mxu0 0.0
  %10286 = vmatpush1.msra.mxu0 %v10216
  %10287 = vmatprep.subr.mxu0 0.0
  %10288 = vmatpush2.msra.mxu0 %v10253
  %10289 = vmatprep.subr.mxu0 0.0
  %10290 = vmatpush2.msra.mxu0 %v10246
  %10291 = vmatprep.subr.mxu0 0.0
  %10292 = vmatpush2.msra.mxu0 %v10245
  %10293 = vmatprep.subr.mxu0 0.0
  %10294 = vmatpush2.msra.mxu0 %v10244
  %10295 = vmatprep.subr.mxu0 0.0
  %10296 = vmatpush2.msra.mxu0 %v10243
  %10297 = vmatprep.subr.mxu0 0.0
  %10298 = vmatpush2.msra.mxu0 %v10242
  %10299 = vmatprep.subr.mxu0 0.0
  %10300 = vmatpush2.msra.mxu0 %v10241
  %10301 = vmatprep.subr.mxu0 0.0
  %10302 = vmatpush2.msra.mxu0 %v10240
  %10303 = vmatprep.subr.mxu0 0.0
  %10304 = vmatpush2.msra.mxu0 %v10239
  %10305 = vmatprep.subr.mxu0 0.0
  %10306 = vmatpush2.msra.mxu0 %v10238
  %10307 = vmatprep.subr.mxu0 0.0
  %10308 = vmatpush2.msra.mxu0 %v10237
  %10309 = vmatprep.subr.mxu0 0.0
  %10310 = vmatpush2.msra.mxu0 %v10236
  %10311 = vmatprep.subr.mxu0 0.0
  %10312 = vmatpush2.msra.mxu0 %v10235
  %10313 = vmatprep.subr.mxu0 0.0
  %10314 = vmatpush2.msra.mxu0 %v10234
  %10315 = vmatprep.subr.mxu0 0.0
  %10316 = vmatpush2.msra.mxu0 %v10233
  %10317 = vmatprep.subr.mxu0 0.0
  %10318 = vmatpush2.msra.mxu0 %v10232
  %10319 = vmatprep.mubr.f32.mxu0 %v10250
  %10320 = vmatmul.mubr.f32.gmra.mxu0 %v10213
  %v10321 = vpop.f32.mrf.mxu0
  %v10322 = vadd.f32 0.0, %v10321
  %v10323 = vpop.f32.mrf.mxu0
  %10324 = vdwg.mxu0
  %v10325 = vrcp.pop %v10322
  %v10326 = vmul.f32 1.0, %v10325
  %v10327 = vld [vmem:[%s59] sm:$0x1f]
  %v10328 = vld [vmem:[%s59 + $0x8] sm:$0x1f]
  %v10330 = vsel %vm2199, %v10326, 0
  %v10333 = vsel %vm2579, %v10327, 0
  %v10336 = vsel %vm2579, %v10328, 0
  %10338 = vmatprep.subr.mxu0 0.0
  %10339 = vmatpush1.msra.mxu0 0.0
  %10340 = vmatprep.subr.mxu0 0.0
  %10341 = vmatpush1.msra.mxu0 0.0
  %10342 = vmatprep.subr.mxu0 0.0
  %10343 = vmatpush1.msra.mxu0 0.0
  %10344 = vmatprep.subr.mxu0 0.0
  %10345 = vmatpush1.msra.mxu0 0.0
  %10346 = vmatprep.subr.mxu0 0.0
  %10347 = vmatpush1.msra.mxu0 0.0
  %10348 = vmatprep.subr.mxu0 0.0
  %10349 = vmatpush1.msra.mxu0 0.0
  %10350 = vmatprep.subr.mxu0 0.0
  %10351 = vmatpush1.msra.mxu0 0.0
  %10352 = vmatprep.subr.mxu0 0.0
  %10353 = vmatpush1.msra.mxu0 0.0
  %10354 = vmatprep.subr.mxu0 0.0
  %10355 = vmatpush1.msra.mxu0 0.0
  %10356 = vmatprep.subr.mxu0 0.0
  %10357 = vmatpush1.msra.mxu0 0.0
  %10358 = vmatprep.subr.mxu0 0.0
  %10359 = vmatpush1.msra.mxu0 0.0
  %10360 = vmatprep.subr.mxu0 0.0
  %10361 = vmatpush1.msra.mxu0 0.0
  %10362 = vmatprep.subr.mxu0 0.0
  %10363 = vmatpush1.msra.mxu0 0.0
  %10364 = vmatprep.subr.mxu0 0.0
  %10365 = vmatpush1.msra.mxu0 0.0
  %10366 = vmatprep.subr.mxu0 0.0
  %10367 = vmatpush1.msra.mxu0 0.0
  %10368 = vmatprep.subr.mxu0 %v10336
  %10369 = vmatpush1.msra.mxu0 %v10333
  %10370 = vmatprep.subr.mxu0 0.0
  %10371 = vmatpush2.msra.mxu0 0.0
  %10372 = vmatprep.subr.mxu0 0.0
  %10373 = vmatpush2.msra.mxu0 0.0
  %10374 = vmatprep.subr.mxu0 0.0
  %10375 = vmatpush2.msra.mxu0 0.0
  %10376 = vmatprep.subr.mxu0 0.0
  %10377 = vmatpush2.msra.mxu0 0.0
  %10378 = vmatprep.subr.mxu0 0.0
  %10379 = vmatpush2.msra.mxu0 0.0
  %10380 = vmatprep.subr.mxu0 0.0
  %10381 = vmatpush2.msra.mxu0 0.0
  %10382 = vmatprep.subr.mxu0 0.0
  %10383 = vmatpush2.msra.mxu0 0.0
  %10384 = vmatprep.subr.mxu0 0.0
  %10385 = vmatpush2.msra.mxu0 0.0
  %10386 = vmatprep.subr.mxu0 0.0
  %10387 = vmatpush2.msra.mxu0 0.0
  %10388 = vmatprep.subr.mxu0 0.0
  %10389 = vmatpush2.msra.mxu0 0.0
  %10390 = vmatprep.subr.mxu0 0.0
  %10391 = vmatpush2.msra.mxu0 0.0
  %10392 = vmatprep.subr.mxu0 0.0
  %10393 = vmatpush2.msra.mxu0 0.0
  %10394 = vmatprep.subr.mxu0 0.0
  %10395 = vmatpush2.msra.mxu0 0.0
  %10396 = vmatprep.subr.mxu0 0.0
  %10397 = vmatpush2.msra.mxu0 0.0
  %10398 = vmatprep.subr.mxu0 0.0
  %10399 = vmatpush2.msra.mxu0 0.0
  %10400 = vmatprep.subr.mxu0 0.0
  %10401 = vmatpush2.msra.mxu0 0.0
  %10402 = vmatprep.mubr.f32.mxu0 0.0
  %10403 = vmatmul.mubr.f32.gmra.mxu0 %v10330
  %v10404 = vpop.f32.mrf.mxu0
  %v10405 = vadd.f32 0.0, %v10404
  %v10406 = vpop.f32.mrf.mxu0
  %v10407 = vadd.f32 0.0, %v10406
  %10408 = vdwg.mxu0
  %v10409 = vmul.f32 %v10213, %v10405
  %v10410 = vmul.f32 %v10215, %v10407
  %v10411 = vmax.f32 %v10409, 0.001
  %v10412 = vmax.f32 %v10410, 0.001
  %v10413 = vld [vmem:[%s61] sm:$0xff]
  %v10414 = vld [vmem:[%s61 + $0x8] sm:$0xff]
  %v10415 = vld [vmem:[%s61 + $0x10] sm:$0xff]
  %v10416 = vld [vmem:[%s61 + $0x18] sm:$0xff]
  %v10417 = vld [vmem:[%s61 + $0x20] sm:$0xff]
  %v10418 = vld [vmem:[%s61 + $0x28] sm:$0xff]
  %v10419 = vld [vmem:[%s61 + $0x30] sm:$0xff]
  %v10420 = vld [vmem:[%s61 + $0x38] sm:$0xff]
  %v10421 = vld [vmem:[%s61 + $0x40] sm:$0xff]
  %v10422 = vld [vmem:[%s61 + $0x48] sm:$0xff]
  %v10423 = vld [vmem:[%s61 + $0x50] sm:$0xff]
  %v10424 = vld [vmem:[%s61 + $0x58] sm:$0xff]
  %v10425 = vld [vmem:[%s61 + $0x60] sm:$0xff]
  %v10426 = vld [vmem:[%s61 + $0x68] sm:$0xff]
  %v10427 = vld [vmem:[%s61 + $0x70] sm:$0xff]
  %v10428 = vld [vmem:[%s61 + $0x78] sm:$0xff]
  %v10429 = vld [vmem:[%s61 + $0x80] sm:$0xff]
  %v10430 = vld [vmem:[%s61 + $0x88] sm:$0xff]
  %v10431 = vld [vmem:[%s61 + $0x90] sm:$0xff]
  %v10432 = vld [vmem:[%s61 + $0x98] sm:$0xff]
  %v10433 = vld [vmem:[%s61 + $0xa0] sm:$0xff]
  %v10434 = vld [vmem:[%s61 + $0xa8] sm:$0xff]
  %v10435 = vld [vmem:[%s61 + $0xb0] sm:$0xff]
  %v10436 = vld [vmem:[%s61 + $0xb8] sm:$0xff]
  %v10437 = vld [vmem:[%s61 + $0xc0] sm:$0xff]
  %v10438 = vld [vmem:[%s61 + $0xc8] sm:$0xff]
  %v10439 = vld [vmem:[%s61 + $0xd0] sm:$0xff]
  %v10440 = vld [vmem:[%s61 + $0xd8] sm:$0xff]
  %v10441 = vld [vmem:[%s61 + $0xe0] sm:$0xff]
  %v10442 = vld [vmem:[%s61 + $0xe8] sm:$0xff]
  %v10443 = vld [vmem:[%s61 + $0xf0] sm:$0xff]
  %v10444 = vld [vmem:[%s61 + $0xf8] sm:$0x7f]
  %v10446 = vsel %vm10248, %v10412, 0
  %v10449 = vsel %vm255, %v10444, 0
  %10451 = vmatprep.subr.mxu0 0.0
  %10452 = vmatpush1.msra.mxu0 %v10428
  %10453 = vmatprep.subr.mxu0 0.0
  %10454 = vmatpush1.msra.mxu0 %v10427
  %10455 = vmatprep.subr.mxu0 0.0
  %10456 = vmatpush1.msra.mxu0 %v10426
  %10457 = vmatprep.subr.mxu0 0.0
  %10458 = vmatpush1.msra.mxu0 %v10425
  %10459 = vmatprep.subr.mxu0 0.0
  %10460 = vmatpush1.msra.mxu0 %v10424
  %10461 = vmatprep.subr.mxu0 0.0
  %10462 = vmatpush1.msra.mxu0 %v10423
  %10463 = vmatprep.subr.mxu0 0.0
  %10464 = vmatpush1.msra.mxu0 %v10422
  %10465 = vmatprep.subr.mxu0 0.0
  %10466 = vmatpush1.msra.mxu0 %v10421
  %10467 = vmatprep.subr.mxu0 0.0
  %10468 = vmatpush1.msra.mxu0 %v10420
  %10469 = vmatprep.subr.mxu0 0.0
  %10470 = vmatpush1.msra.mxu0 %v10419
  %10471 = vmatprep.subr.mxu0 0.0
  %10472 = vmatpush1.msra.mxu0 %v10418
  %10473 = vmatprep.subr.mxu0 0.0
  %10474 = vmatpush1.msra.mxu0 %v10417
  %10475 = vmatprep.subr.mxu0 0.0
  %10476 = vmatpush1.msra.mxu0 %v10416
  %10477 = vmatprep.subr.mxu0 0.0
  %10478 = vmatpush1.msra.mxu0 %v10415
  %10479 = vmatprep.subr.mxu0 0.0
  %10480 = vmatpush1.msra.mxu0 %v10414
  %10481 = vmatprep.subr.mxu0 0.0
  %10482 = vmatpush1.msra.mxu0 %v10413
  %10483 = vmatprep.subr.mxu0 0.0
  %10484 = vmatpush2.msra.mxu0 %v10449
  %10485 = vmatprep.subr.mxu0 0.0
  %10486 = vmatpush2.msra.mxu0 %v10443
  %10487 = vmatprep.subr.mxu0 0.0
  %10488 = vmatpush2.msra.mxu0 %v10442
  %10489 = vmatprep.subr.mxu0 0.0
  %10490 = vmatpush2.msra.mxu0 %v10441
  %10491 = vmatprep.subr.mxu0 0.0
  %10492 = vmatpush2.msra.mxu0 %v10440
  %10493 = vmatprep.subr.mxu0 0.0
  %10494 = vmatpush2.msra.mxu0 %v10439
  %10495 = vmatprep.subr.mxu0 0.0
  %10496 = vmatpush2.msra.mxu0 %v10438
  %10497 = vmatprep.subr.mxu0 0.0
  %10498 = vmatpush2.msra.mxu0 %v10437
  %10499 = vmatprep.subr.mxu0 0.0
  %10500 = vmatpush2.msra.mxu0 %v10436
  %10501 = vmatprep.subr.mxu0 0.0
  %10502 = vmatpush2.msra.mxu0 %v10435
  %10503 = vmatprep.subr.mxu0 0.0
  %10504 = vmatpush2.msra.mxu0 %v10434
  %10505 = vmatprep.subr.mxu0 0.0
  %10506 = vmatpush2.msra.mxu0 %v10433
  %10507 = vmatprep.subr.mxu0 0.0
  %10508 = vmatpush2.msra.mxu0 %v10432
  %10509 = vmatprep.subr.mxu0 0.0
  %10510 = vmatpush2.msra.mxu0 %v10431
  %10511 = vmatprep.subr.mxu0 0.0
  %10512 = vmatpush2.msra.mxu0 %v10430
  %10513 = vmatprep.subr.mxu0 0.0
  %10514 = vmatpush2.msra.mxu0 %v10429
  %10515 = vmatprep.mubr.f32.mxu0 %v10446
  %10516 = vmatmul.mubr.f32.gmra.mxu0 %v10411
  %v10517 = vpop.f32.mrf.mxu0
  %v10518 = vadd.f32 0.0, %v10517
  %v10519 = vpop.f32.mrf.mxu0
  %10520 = vdwg.mxu0
  %10522 = vrot.lane.b32.xlu0 %v10518, 2
  %v10523 = vpop.permute.xlu0 %10522
  %v10525 = vsel %vm2016, %v9511, %v10523
  %vm10526 = vcmask 50176
  %10527 = vst.msk [vmem:[%s63] sm:$0x3] %vm10526, %v10525
  // Predicated region
  $region126: #{deep_q_proj_forward.1} parent=0 // pred_check
    _
  $region127: #{deep_q_proj_forward.1} parent=0 // pred_check_branch
    %10529 = sbr.rel (0) target = $region129
  $region128: #{deep_q_proj_forward.1} parent=0 // pred_region
    _
  $region129: #{deep_q_proj_forward.1} parent=0 // pred_fallthru
    _
  // Predicated region
  $region130: #{deep_q_proj_forward.1} parent=0 // pred_check
    _
  $region131: #{deep_q_proj_forward.1} parent=0 // pred_check_branch
    %10531 = sbr.rel (0) target = $region133
  $region132: #{deep_q_proj_forward.1} parent=0 // pred_region
    _
  $region133: #{deep_q_proj_forward.1} parent=0 // pred_fallthru
    _

</llo_original>
